<compile_context>
chip_gen: v6e
topology: v6e:2x2x1
jax: 0.10.0
libtpu: 0.0.40
codegen_flags: <defaults>
</compile_context>

<pallas_src>
import jax
import jax.numpy as jnp
from jax import lax
from jax.experimental import pallas as pl
from jax.experimental.pallas import tpu as pltpu

NODE_FEAT = 8          # node_feature_len
NUM_FEATURE = 250      # num_feature
NUM_NODE = 750         # chosen for conv-stack shape consistency (see header)
MAX_DIFF = 0.01
BN_EPS = 1e-5

CONCAT_LEN = NUM_FEATURE + NUM_NODE   # 1000
POOL2_LEN = CONCAT_LEN // 4           # 250  (after two MaxPool1d(2))
C1, C2, C3 = 32, 64, 128
KSIZE = 5
NUM_CLASSES = 12
FC1_N = 64
TAIL_K = C2 * POOL2_LEN               # 16000
TAIL_TK = 3200                        # 16000 / 3200 = 5 grid steps, 128-aligned


# ---------------------------------------------------------------------------
# Kernel 1: linear1  (Linear(250,250) with BN folded) + ReLU
# ---------------------------------------------------------------------------
def _linear1_kernel(x_ref, w_ref, b_ref, o_ref):
    y = jnp.dot(x_ref[...], w_ref[...], preferred_element_type=jnp.float32)
    o_ref[...] = jnp.maximum(y + b_ref[...], 0.0)


def linear1(x, w, b):
    B, K = x.shape
    N = w.shape[1]
    return pl.pallas_call(
        _linear1_kernel,
        out_shape=jax.ShapeDtypeStruct((B, N), jnp.float32),
        grid=(1,),
        in_specs=[
            pl.BlockSpec((B, K), lambda i: (0, 0)),
            pl.BlockSpec((K, N), lambda i: (0, 0)),
            pl.BlockSpec((1, N), lambda i: (0, 0)),
        ],
        out_specs=pl.BlockSpec((B, N), lambda i: (0, 0)),
    )(x, w, b)


# ---------------------------------------------------------------------------
# Kernel 2: per-batch GCNConv (+ folded BatchNorm2d(1)) + ReLU + feature mean.
# Works in transposed (features-on-sublanes, nodes-on-lanes) layout so the
# final feature-mean lands directly as a lane-dense (1, N) row -> no masked
# (N,1) stores, no in-kernel transposes.  Aggregation matmul in bf16 (adjacency
# is exactly 0/1), f32 accumulation.
# ---------------------------------------------------------------------------
def _gcn_kernel(x_ref, xt_ref, wt_ref, b_ref, o_ref):
    x0c = x_ref[0][:, 0:1]                       # (N, 1) node feature 0, column
    xt = xt_ref[0]                               # (F, N) transposed node features
    x0r = xt[0:1, :]                             # (1, N) node feature 0, row
    d = x0c - x0r                                # (N, N) pairwise diffs (f32)
    adj = (d * d < MAX_DIFF).astype(jnp.bfloat16)          # 0/1; self-loops on diag
    ones_row = jnp.ones((1, adj.shape[0]), jnp.bfloat16)
    deg = jnp.dot(ones_row, adj, preferred_element_type=jnp.float32)   # (1, N), exact
    dinv = lax.rsqrt(deg)                        # deg >= 1 (self-loops)
    # (X W)^T scaled by D^-1/2 on the node axis
    zt = jnp.dot(wt_ref[...], xt, preferred_element_type=jnp.float32) * dinv   # (F, N)
    # D^-1/2 A D^-1/2 X W  (adjacency is symmetric)  -- bf16 MXU, f32 accumulate
    ht = jnp.dot(zt.astype(jnp.bfloat16), adj,
                 preferred_element_type=jnp.float32) * dinv                    # (F, N)
    ht = jnp.maximum(ht + b_ref[...], 0.0)       # GCN bias + folded BN2d(1) + ReLU
    o_ref[0] = jnp.mean(ht, axis=0, keepdims=True)          # (1, N) lane-dense row


def gcn_block(x_graph, w_gt, b_gcol):
    B, N, F = x_graph.shape
    x_graph_t = jnp.transpose(x_graph, (0, 2, 1))           # (B, F, N) tiny glue copy
    out = pl.pallas_call(
        _gcn_kernel,
        out_shape=jax.ShapeDtypeStruct((B, 1, N), jnp.float32),
        grid=(B,),
        in_specs=[
            pl.BlockSpec((1, N, F), lambda b: (b, 0, 0)),
            pl.BlockSpec((1, F, N), lambda b: (b, 0, 0)),
            pl.BlockSpec((F, F), lambda b: (0, 0)),
            pl.BlockSpec((F, 1), lambda b: (0, 0)),
        ],
        out_specs=pl.BlockSpec((1, 1, N), lambda b: (b, 0, 0)),
        compiler_params=pltpu.CompilerParams(
            dimension_semantics=("parallel",), vmem_limit_bytes=32 << 20),
    )(x_graph, x_graph_t, w_gt, b_gcol)
    return out.reshape(B, N)


# ---------------------------------------------------------------------------
# Kernel 3: fused conv1(1->32,k=5,p=2)+BN+ReLU+MaxPool(2)
#                 + conv2(32->64,k=5,p=2)+BN+ReLU+MaxPool(2), one batch item
# per grid step.  conv1 is 5 VPU broadcast-FMAs on mod-4 polyphase patches
# (built in glue); the +/-1 spatial shifts needed for conv2 are expressed as
# matmuls against iota-built shift matrices (zero-padding boundaries for free).
# ---------------------------------------------------------------------------
def _convstack_kernel(p_ref, w1_ref, b1_ref, w2_ref, b2_ref, o_ref):
    n = o_ref.shape[-1]                          # 250
    w1 = w1_ref[...]                             # (32, 5)   BN folded
    b1 = b1_ref[...]                             # (32, 1)

    def conv1_phase(r):
        p = p_ref[0, r]                          # (5, 250)  taps at positions 4q+r
        y = jnp.zeros((w1.shape[0], n), jnp.float32)
        for t in range(KSIZE):                   # VPU broadcast FMAs (MXU stays free)
            y = y + w1[:, t:t + 1] * p[t:t + 1, :]
        return jnp.maximum(y + b1, 0.0)          # Conv + BN + ReLU

    ys = [conv1_phase(r) for r in range(4)]
    e1 = jnp.maximum(ys[0], ys[1])               # pooled conv1, even columns (32, 250)
    o1 = jnp.maximum(ys[2], ys[3])               # pooled conv1, odd columns  (32, 250)

    # +/-1 lane shifts with zero boundary, as matmuls (unambiguous, MXU-cheap).
    row = lax.broadcasted_iota(jnp.int32, (n, n), 0)
    col = lax.broadcasted_iota(jnp.int32, (n, n), 1)
    m_prev = (row == col - 1).astype(jnp.float32)    # x @ m_prev -> x[:, p-1], 0 at p=0
    m_next = (row == col + 1).astype(jnp.float32)    # x @ m_next -> x[:, p+1], 0 at p=n-1
    e1m = jnp.dot(e1, m_prev, preferred_element_type=jnp.float32)
    o1m = jnp.dot(o1, m_prev, preferred_element_type=jnp.float32)
    e1p = jnp.dot(e1, m_next, preferred_element_type=jnp.float32)
    o1p = jnp.dot(o1, m_next, preferred_element_type=jnp.float32)

    # conv2 taps (tap-major rows) for even / odd pre-pool positions.
    se = jnp.concatenate([e1m, o1m, e1, o1, e1p], axis=0)    # (160, 250)
    so = jnp.concatenate([o1m, e1, o1, e1p, o1p], axis=0)    # (160, 250)

    w2 = w2_ref[...]                             # (64, 160) BN folded, tap-major
    b2 = b2_ref[...]                             # (64, 1)
    c2e = jnp.maximum(jnp.dot(w2, se, preferred_element_type=jnp.float32) + b2, 0.0)
    c2o = jnp.maximum(jnp.dot(w2, so, preferred_element_type=jnp.float32) + b2, 0.0)
    o_ref[0] = jnp.maximum(c2e, c2o)             # MaxPool1d(2) after conv2


def conv_stack(x, w1f, b1f, w2f, b2f):
    # x: (B, 1000) concatenated [linear1 | gcn] features (single conv channel)
    B = x.shape[0]
    xp = jnp.pad(x, ((0, 0), (2, 2)))            # conv1 padding=2  -> (B, 1004)
    # mod-4 polyphase im2col: patches[b, r, t, q] = xp[b, 4q + r + t]
    phases = []
    for r in range(4):
        taps = [xp[:, r + t::4][:, :POOL2_LEN] for t in range(KSIZE)]
        phases.append(jnp.stack(taps, axis=1))   # (B, 5, 250)
    patches = jnp.stack(phases, axis=1)          # (B, 4, 5, 250)

    return pl.pallas_call(
        _convstack_kernel,
        out_shape=jax.ShapeDtypeStruct((B, C2, POOL2_LEN), jnp.float32),
        grid=(B,),
        in_specs=[
            pl.BlockSpec((1, 4, KSIZE, POOL2_LEN), lambda b: (b, 0, 0, 0)),
            pl.BlockSpec((C1, KSIZE), lambda b: (0, 0)),
            pl.BlockSpec((C1, 1), lambda b: (0, 0)),
            pl.BlockSpec((C2, C1 * KSIZE), lambda b: (0, 0)),
            pl.BlockSpec((C2, 1), lambda b: (0, 0)),
        ],
        out_specs=pl.BlockSpec((1, C2, POOL2_LEN), lambda b: (b, 0, 0)),
        compiler_params=pltpu.CompilerParams(dimension_semantics=("parallel",)),
    )(patches, w1f, b1f, w2f, b2f)


# ---------------------------------------------------------------------------
# Kernel 4: fused tail.  K-tiled conv3 (full-length Conv1d == dense, bf16
# weights, f32 accumulation) with the weight DMA double-buffered across the K
# grid, then fc1 (+folded BN) + ReLU + output Linear + log_softmax at the last
# grid step.  One launch, one tiny (B,12) store.
# ---------------------------------------------------------------------------
def _tail_kernel(x_ref, w3_ref, b3_ref, wf_ref, bf_ref, wo_ref, bo_ref,
                 o_ref, acc_ref):
    k = pl.program_id(0)

    @pl.when(k == 0)
    def _():
        acc_ref[...] = jnp.zeros_like(acc_ref)

    acc_ref[...] += jnp.dot(x_ref[...].astype(jnp.bfloat16), w3_ref[...],
                            preferred_element_type=jnp.float32)

    @pl.when(k == pl.num_programs(0) - 1)
    def _():
        h = acc_ref[...] + b3_ref[...]                         # conv3 -> (B, 128)
        h = jnp.dot(h, wf_ref[...], preferred_element_type=jnp.float32) + bf_ref[...]
        h = jnp.maximum(h, 0.0)                                # fc1 + folded BN + ReLU
        y = jnp.dot(h, wo_ref[...], preferred_element_type=jnp.float32) + bo_ref[...]
        m = jnp.max(y, axis=-1, keepdims=True)
        lse = m + jnp.log(jnp.sum(jnp.exp(y - m), axis=-1, keepdims=True))
        o_ref[...] = y - lse                                   # log_softmax(dim=1)


def tail(x_flat, w3_bf16, b3, wf, bf, wo, bo, *, tk=TAIL_TK):
    B, K = x_flat.shape
    kt = K // tk
    return pl.pallas_call(
        _tail_kernel,
        out_shape=jax.ShapeDtypeStruct((B, NUM_CLASSES), jnp.float32),
        grid=(kt,),
        in_specs=[
            pl.BlockSpec((B, tk), lambda k: (0, k)),
            pl.BlockSpec((tk, C3), lambda k: (k, 0)),
            pl.BlockSpec((1, C3), lambda k: (0, 0)),
            pl.BlockSpec((C3, FC1_N), lambda k: (0, 0)),
            pl.BlockSpec((1, FC1_N), lambda k: (0, 0)),
            pl.BlockSpec((FC1_N, NUM_CLASSES), lambda k: (0, 0)),
            pl.BlockSpec((1, NUM_CLASSES), lambda k: (0, 0)),
        ],
        out_specs=pl.BlockSpec((B, NUM_CLASSES), lambda k: (0, 0)),
        scratch_shapes=[pltpu.VMEM((B, C3), jnp.float32)],
        compiler_params=pltpu.CompilerParams(dimension_semantics=("arbitrary",)),
    )(x_flat, w3_bf16, b3, wf, bf, wo, bo)


# ---------------------------------------------------------------------------
# Parameters (deterministic synthetic init), one-time inference prep, forward
# ---------------------------------------------------------------------------
def fold_bn(gamma, beta, mean, var):
    scale = gamma * lax.rsqrt(var + BN_EPS)
    shift = beta - mean * scale
    return scale, shift


def make_params(key):
    ks = jax.random.split(key, 19)

    def w(k, shape, fan_in):
        return jax.random.normal(k, shape, jnp.float32) / jnp.sqrt(float(fan_in))

    def bn(k, n):
        k1, k2, k3, k4 = jax.random.split(k, 4)
        gamma = 1.0 + 0.1 * jax.random.normal(k1, (n,), jnp.float32)
        beta = 0.05 * jax.random.normal(k2, (n,), jnp.float32)
        mean = 0.1 * jax.random.normal(k3, (n,), jnp.float32)
        var = 0.5 + jax.random.uniform(k4, (n,), jnp.float32)
        return gamma, beta, mean, var

    return {
        "l1_w": w(ks[0], (NUM_FEATURE, 250), NUM_FEATURE),     # Linear(250, 250) (in, out)
        "l1_b": 0.01 * jax.random.normal(ks[1], (250,), jnp.float32),
        "bn_l1": bn(ks[2], 250),
        "g_w": w(ks[3], (NODE_FEAT, NODE_FEAT), NODE_FEAT),    # GCNConv(8, 8)
        "g_b": 0.01 * jax.random.normal(ks[4], (NODE_FEAT,), jnp.float32),
        "bn1": bn(ks[5], 1),                                   # BatchNorm2d(1)
        "c1_w": w(ks[6], (C1, 1, KSIZE), KSIZE),               # Conv1d(1, 32, 5, p=2)
        "c1_b": 0.01 * jax.random.normal(ks[7], (C1,), jnp.float32),
        "bn_c1": bn(ks[8], C1),
        "c2_w": w(ks[9], (C2, C1, KSIZE), C1 * KSIZE),         # Conv1d(32, 64, 5, p=2)
        "c2_b": 0.01 * jax.random.normal(ks[10], (C2,), jnp.float32),
        "bn_c2": bn(ks[11], C2),
        "c3_w": w(ks[12], (C3, C2, POOL2_LEN), C2 * POOL2_LEN),  # Conv1d(64, 128, 250)
        "c3_b": 0.01 * jax.random.normal(ks[13], (C3,), jnp.float32),
        "f1_w": w(ks[14], (C3, FC1_N), C3),                    # Linear(128, 64)
        "f1_b": 0.01 * jax.random.normal(ks[15], (FC1_N,), jnp.float32),
        "bn_f1": bn(ks[16], FC1_N),
        "out_w": w(ks[17], (FC1_N, NUM_CLASSES), FC1_N),       # Linear(64, 12)
        "out_b": 0.01 * jax.random.normal(ks[18], (NUM_CLASSES,), jnp.float32),
    }


def prepare_inference_params(p):
    """One-time weight folding / layout prep (all traced jnp ops -> jit-safe).

    BN folds, tap-major conv2 flatten, transposed GCN weight, and the conv3
    weight pre-laid-out as (16000, 128) bf16 so the tail kernel streams it.
    """
    # linear1: Linear + BatchNorm1d(250)
    s, t = fold_bn(*p["bn_l1"])
    l1_w = p["l1_w"] * s[None, :]
    l1_b = (p["l1_b"] * s + t).reshape(1, -1)

    # GCN: BatchNorm2d(1) is a scalar affine over the whole (N, F) map -> fold.
    g_gamma, g_beta, g_mu, g_var = p["bn1"]
    gs = g_gamma[0] * lax.rsqrt(g_var[0] + BN_EPS)
    gt = g_beta[0] - g_mu[0] * gs
    g_wt = (p["g_w"] * gs).T                              # (F, F), transposed layout
    g_b = (p["g_b"] * gs + gt).reshape(NODE_FEAT, 1)      # (F, 1) column

    # conv1: Conv1d(1,32,5) + per-channel eval BN folded.
    # TODO(synk): module declares nn.BatchNorm1d(500), shape-incompatible with
    #             (B,32,L); per-channel(32) eval-mode BN is used instead.
    s1, t1 = fold_bn(*p["bn_c1"])
    c1_w = p["c1_w"][:, 0, :] * s1[:, None]               # (32, 5)
    c1_b = (p["c1_b"] * s1 + t1).reshape(C1, 1)

    # conv2: Conv1d(32,64,5) + per-channel eval BN folded; tap-major flatten.
    # TODO(synk): module declares nn.BatchNorm1d(250); per-channel(64) BN used.
    s2, t2 = fold_bn(*p["bn_c2"])
    c2_w = (jnp.transpose(p["c2_w"], (0, 2, 1)).reshape(C2, C1 * KSIZE)
            * s2[:, None])                                # (64, 160)
    c2_b = (p["c2_b"] * s2 + t2).reshape(C2, 1)

    # conv3: full-length Conv1d == dense; bf16, (K, N) layout for streaming.
    c3_w = p["c3_w"].reshape(C3, TAIL_K).T.astype(jnp.bfloat16)   # (16000, 128)
    c3_b = p["c3_b"].reshape(1, C3)

    # fc1: Linear + BatchNorm1d(64) folded.
    sf, tf = fold_bn(*p["bn_f1"])
    f1_w = p["f1_w"] * sf[None, :]
    f1_b = (p["f1_b"] * sf + tf).reshape(1, FC1_N)

    return dict(l1_w=l1_w, l1_b=l1_b, g_wt=g_wt, g_b=g_b,
                c1_w=c1_w, c1_b=c1_b, c2_w=c2_w, c2_b=c2_b,
                c3_w=c3_w, c3_b=c3_b, f1_w=f1_w, f1_b=f1_b,
                out_w=p["out_w"], out_b=p["out_b"].reshape(1, NUM_CLASSES))


def model2_forward(pp, x_sample, x_graph):
    B = x_sample.shape[0]

    # linear1: Linear + BN + ReLU (+ Dropout eval = identity)
    xs = linear1(x_sample, pp["l1_w"], pp["l1_b"])                 # (B, 250)

    # gconv1 + BatchNorm2d(1) + ReLU + mean over node features
    xg = gcn_block(x_graph, pp["g_wt"], pp["g_b"])                 # (B, 750)

    # concat -> single conv channel of length 1000; fused conv1/conv2 stack.
    x = jnp.concatenate([xs, xg], axis=1)                          # (B, 1000)
    x = conv_stack(x, pp["c1_w"], pp["c1_b"], pp["c2_w"], pp["c2_b"])   # (B, 64, 250)

    # fused tail: conv3 (K-tiled, bf16 weight) + fc1 + output + log_softmax.
    x_flat = x.reshape(B, TAIL_K)                                  # row-major flatten
    return tail(x_flat, pp["c3_w"], pp["c3_b"], pp["f1_w"], pp["f1_b"],
                pp["out_w"], pp["out_b"])                          # (B, 12)


if __name__ == "__main__":
    key = jax.random.PRNGKey(0)
    kp, kx, kg = jax.random.split(key, 3)
    params = make_params(kp)
    prep = prepare_inference_params(params)

    B = 2
    x_sample = jax.random.normal(kx, (B, NUM_FEATURE), jnp.float32)
    x_graph = jax.random.normal(kg, (B, NUM_NODE, NODE_FEAT), jnp.float32)

    fwd = jax.jit(model2_forward)
    out = jax.block_until_ready(fwd(prep, x_sample, x_graph))

    assert out.shape == (B, NUM_CLASSES), out.shape
    assert bool(jnp.all(jnp.isfinite(out)))
    # log_softmax rows should exponentiate-and-sum to ~1
    assert bool(jnp.all(jnp.abs(jnp.sum(jnp.exp(out), axis=-1) - 1.0) < 1e-3))
    print("KERNEL_OK")
</pallas_src>

<mosaic_0001>
module attributes {stable_mosaic.version = 11 : i64} {
  func.func @_gcn_kernel(%arg0: i32, %arg1: memref<1x750x8xf32, #tpu.memory_space<vmem>>, %arg2: memref<1x8x750xf32, #tpu.memory_space<vmem>>, %arg3: memref<8x8xf32, #tpu.memory_space<vmem>>, %arg4: memref<8x1xf32, #tpu.memory_space<vmem>>, %arg5: memref<1x1x750xf32, #tpu.memory_space<vmem>>) attributes {dimension_semantics = [#tpu.dimension_semantics<parallel>], iteration_bounds = array<i64: 2>, scalar_prefetch = 0 : i64, scratch_operands = 0 : i64, tpu.core_type = #tpu.core_type<tc>, window_params = [{transform_indices = @transform_0, window_bounds = array<i64: 1, 750, 8>}, {transform_indices = @transform_1, window_bounds = array<i64: 1, 8, 750>}, {pipeline_mode = #tpu.pipeline_mode<synchronous>, transform_indices = @transform_2, window_bounds = array<i64: 8, 8>}, {pipeline_mode = #tpu.pipeline_mode<synchronous>, transform_indices = @transform_3, window_bounds = array<i64: 8, 1>}, {transform_indices = @transform_4, window_bounds = array<i64: 1, 1, 750>}]} {
    %c0 = arith.constant 0 : index
    %c0_0 = arith.constant 0 : index
    %c0_1 = arith.constant 0 : index
    %0 = vector.load %arg1[%c0, %c0_0, %c0_1] : memref<1x750x8xf32, #tpu.memory_space<vmem>>, vector<1x750x8xf32>
    %1 = vector.shape_cast %0 : vector<1x750x8xf32> to vector<750x8xf32>
    %2 = vector.extract_strided_slice %1 {offsets = [0, 0], sizes = [750, 1], strides = [1, 1]} : vector<750x8xf32> to vector<750x1xf32>
    %c0_2 = arith.constant 0 : index
    %c0_3 = arith.constant 0 : index
    %c0_4 = arith.constant 0 : index
    %3 = vector.load %arg2[%c0_2, %c0_3, %c0_4] : memref<1x8x750xf32, #tpu.memory_space<vmem>>, vector<1x8x750xf32>
    %4 = vector.shape_cast %3 : vector<1x8x750xf32> to vector<8x750xf32>
    %5 = vector.extract_strided_slice %4 {offsets = [0, 0], sizes = [1, 750], strides = [1, 1]} : vector<8x750xf32> to vector<1x750xf32>
    %6 = vector.broadcast %2 : vector<750x1xf32> to vector<750x750xf32>
    %7 = vector.broadcast %5 : vector<1x750xf32> to vector<750x750xf32>
    %8 = arith.subf %6, %7 : vector<750x750xf32>
    %9 = arith.mulf %8, %8 : vector<750x750xf32>
    %cst = arith.constant 0.00999999977 : f32
    %10 = vector.broadcast %cst : f32 to vector<750x750xf32>
    %11 = arith.cmpf olt, %9, %10 : vector<750x750xf32>
    %12 = arith.extui %11 : vector<750x750xi1> to vector<750x750xi32>
    %13 = arith.sitofp %12 : vector<750x750xi32> to vector<750x750xf32>
    %14 = arith.truncf %13 : vector<750x750xf32> to vector<750x750xbf16>
    %cst_5 = arith.constant 1.000000e+00 : bf16
    %15 = vector.broadcast %cst_5 : bf16 to vector<1x750xbf16>
    %cst_6 = arith.constant dense<0.000000e+00> : vector<1x750xf32>
    %16 = tpu.matmul %15, %14, %cst_6 {dimension_numbers = #tpu.dot_dimension_numbers<[1], [0], [0], [1], [0, 0, 1, 1], [], []>} : vector<1x750xbf16>, vector<750x750xbf16>, vector<1x750xf32> -> vector<1x750xf32>
    %17 = math.rsqrt %16 : vector<1x750xf32>
    %c0_7 = arith.constant 0 : index
    %c0_8 = arith.constant 0 : index
    %18 = vector.load %arg3[%c0_7, %c0_8] : memref<8x8xf32, #tpu.memory_space<vmem>>, vector<8x8xf32>
    %cst_9 = arith.constant dense<0.000000e+00> : vector<8x750xf32>
    %19 = tpu.matmul %18, %4, %cst_9 {dimension_numbers = #tpu.dot_dimension_numbers<[1], [0], [0], [1], [0, 0, 1, 1], [], []>} : vector<8x8xf32>, vector<8x750xf32>, vector<8x750xf32> -> vector<8x750xf32>
    %20 = vector.broadcast %17 : vector<1x750xf32> to vector<8x750xf32>
    %21 = arith.mulf %19, %20 : vector<8x750xf32>
    %22 = arith.truncf %21 : vector<8x750xf32> to vector<8x750xbf16>
    %cst_10 = arith.constant dense<0.000000e+00> : vector<8x750xf32>
    %23 = tpu.matmul %22, %14, %cst_10 {dimension_numbers = #tpu.dot_dimension_numbers<[1], [0], [0], [1], [0, 0, 1, 1], [], []>} : vector<8x750xbf16>, vector<750x750xbf16>, vector<8x750xf32> -> vector<8x750xf32>
    %24 = vector.broadcast %17 : vector<1x750xf32> to vector<8x750xf32>
    %25 = arith.mulf %23, %24 : vector<8x750xf32>
    %c0_11 = arith.constant 0 : index
    %c0_12 = arith.constant 0 : index
    %26 = vector.load %arg4[%c0_11, %c0_12] : memref<8x1xf32, #tpu.memory_space<vmem>>, vector<8x1xf32>
    %27 = vector.broadcast %26 : vector<8x1xf32> to vector<8x750xf32>
    %28 = arith.addf %25, %27 : vector<8x750xf32>
    %cst_13 = arith.constant 0.000000e+00 : f32
    %29 = vector.broadcast %cst_13 : f32 to vector<8x750xf32>
    %30 = arith.maximumf %28, %29 : vector<8x750xf32>
    %cst_14 = arith.constant dense<0.000000e+00> : vector<750xf32>
    %31 = vector.multi_reduction <add>, %30, %cst_14 [0] : vector<8x750xf32> to vector<750xf32>
    %32 = vector.shape_cast %31 : vector<750xf32> to vector<1x750xf32>
    %cst_15 = arith.constant 8.000000e+00 : f32
    %33 = vector.broadcast %cst_15 : f32 to vector<1x750xf32>
    %34 = arith.divf %32, %33 : vector<1x750xf32>
    %c0_16 = arith.constant 0 : index
    %c0_17 = arith.constant 0 : index
    %c0_18 = arith.constant 0 : index
    %35 = vector.load %arg5[%c0_16, %c0_17, %c0_18] : memref<1x1x750xf32, #tpu.memory_space<vmem>>, vector<1x1x750xf32>
    %36 = vector.shape_cast %35 : vector<1x1x750xf32> to vector<1x750xf32>
    %37 = vector.shape_cast %34 : vector<1x750xf32> to vector<1x1x750xf32>
    tpu.vector_store %arg5[%c0_16, %c0_17, %c0_18], %37 {strides = array<i32>} : memref<1x1x750xf32, #tpu.memory_space<vmem>>, vector<1x1x750xf32>,
    return
  }
  func.func @transform_0(%arg0: i32) -> (i32, i32, i32) {
    %c0_i32 = arith.constant 0 : i32
    %c0_i32_0 = arith.constant 0 : i32
    %c0_i32_1 = arith.constant 0 : i32
    return %arg0, %c0_i32, %c0_i32_0 : i32, i32, i32
  }
  func.func @transform_1(%arg0: i32) -> (i32, i32, i32) {
    %c0_i32 = arith.constant 0 : i32
    %c0_i32_0 = arith.constant 0 : i32
    %c0_i32_1 = arith.constant 0 : i32
    return %arg0, %c0_i32, %c0_i32_0 : i32, i32, i32
  }
  func.func @transform_2(%arg0: i32) -> (i32, i32) {
    %c0_i32 = arith.constant 0 : i32
    %c0_i32_0 = arith.constant 0 : i32
    %c0_i32_1 = arith.constant 0 : i32
    return %c0_i32, %c0_i32_0 : i32, i32
  }
  func.func @transform_3(%arg0: i32) -> (i32, i32) {
    %c0_i32 = arith.constant 0 : i32
    %c0_i32_0 = arith.constant 0 : i32
    %c0_i32_1 = arith.constant 0 : i32
    return %c0_i32, %c0_i32_0 : i32, i32
  }
  func.func @transform_4(%arg0: i32) -> (i32, i32, i32) {
    %c0_i32 = arith.constant 0 : i32
    %c0_i32_0 = arith.constant 0 : i32
    %c0_i32_1 = arith.constant 0 : i32
    return %arg0, %c0_i32, %c0_i32_0 : i32, i32, i32
  }
}

module attributes {stable_mosaic.version = 11 : i64} {
  func.func @_linear1_kernel(%arg0: i32, %arg1: memref<2x250xf32, #tpu.memory_space<vmem>>, %arg2: memref<250x250xf32, #tpu.memory_space<vmem>>, %arg3: memref<1x250xf32, #tpu.memory_space<vmem>>, %arg4: memref<2x250xf32, #tpu.memory_space<vmem>>) attributes {dimension_semantics = [#tpu.dimension_semantics<arbitrary>], iteration_bounds = array<i64: 1>, scalar_prefetch = 0 : i64, scratch_operands = 0 : i64, tpu.core_type = #tpu.core_type<tc>, window_params = [{pipeline_mode = #tpu.pipeline_mode<synchronous>, transform_indices = @transform_0, window_bounds = array<i64: 2, 250>}, {pipeline_mode = #tpu.pipeline_mode<synchronous>, transform_indices = @transform_1, window_bounds = array<i64: 250, 250>}, {pipeline_mode = #tpu.pipeline_mode<synchronous>, transform_indices = @transform_2, window_bounds = array<i64: 1, 250>}, {pipeline_mode = #tpu.pipeline_mode<synchronous>, transform_indices = @transform_3, window_bounds = array<i64: 2, 250>}]} {
    %c0 = arith.constant 0 : index
    %c0_0 = arith.constant 0 : index
    %0 = vector.load %arg1[%c0, %c0_0] : memref<2x250xf32, #tpu.memory_space<vmem>>, vector<2x250xf32>
    %c0_1 = arith.constant 0 : index
    %c0_2 = arith.constant 0 : index
    %1 = vector.load %arg2[%c0_1, %c0_2] : memref<250x250xf32, #tpu.memory_space<vmem>>, vector<250x250xf32>
    %cst = arith.constant dense<0.000000e+00> : vector<2x250xf32>
    %2 = tpu.matmul %0, %1, %cst {dimension_numbers = #tpu.dot_dimension_numbers<[1], [0], [0], [1], [0, 0, 1, 1], [], []>} : vector<2x250xf32>, vector<250x250xf32>, vector<2x250xf32> -> vector<2x250xf32>
    %c0_3 = arith.constant 0 : index
    %c0_4 = arith.constant 0 : index
    %3 = vector.load %arg3[%c0_3, %c0_4] : memref<1x250xf32, #tpu.memory_space<vmem>>, vector<1x250xf32>
    %4 = vector.broadcast %3 : vector<1x250xf32> to vector<2x250xf32>
    %5 = arith.addf %2, %4 : vector<2x250xf32>
    %cst_5 = arith.constant 0.000000e+00 : f32
    %6 = vector.broadcast %cst_5 : f32 to vector<2x250xf32>
    %7 = arith.maximumf %5, %6 : vector<2x250xf32>
    %c0_6 = arith.constant 0 : index
    %c0_7 = arith.constant 0 : index
    %8 = vector.load %arg4[%c0_6, %c0_7] : memref<2x250xf32, #tpu.memory_space<vmem>>, vector<2x250xf32>
    tpu.vector_store %arg4[%c0_6, %c0_7], %7 {strides = array<i32>} : memref<2x250xf32, #tpu.memory_space<vmem>>, vector<2x250xf32>,
    return
  }
  func.func @transform_0(%arg0: i32) -> (i32, i32) {
    %c0_i32 = arith.constant 0 : i32
    %c0_i32_0 = arith.constant 0 : i32
    %c0_i32_1 = arith.constant 0 : i32
    return %c0_i32, %c0_i32_0 : i32, i32
  }
  func.func @transform_1(%arg0: i32) -> (i32, i32) {
    %c0_i32 = arith.constant 0 : i32
    %c0_i32_0 = arith.constant 0 : i32
    %c0_i32_1 = arith.constant 0 : i32
    return %c0_i32, %c0_i32_0 : i32, i32
  }
  func.func @transform_2(%arg0: i32) -> (i32, i32) {
    %c0_i32 = arith.constant 0 : i32
    %c0_i32_0 = arith.constant 0 : i32
    %c0_i32_1 = arith.constant 0 : i32
    return %c0_i32, %c0_i32_0 : i32, i32
  }
  func.func @transform_3(%arg0: i32) -> (i32, i32) {
    %c0_i32 = arith.constant 0 : i32
    %c0_i32_0 = arith.constant 0 : i32
    %c0_i32_1 = arith.constant 0 : i32
    return %c0_i32, %c0_i32_0 : i32, i32
  }
}

module attributes {stable_mosaic.version = 11 : i64} {
  func.func @_convstack_kernel(%arg0: i32, %arg1: memref<1x4x5x250xf32, #tpu.memory_space<vmem>>, %arg2: memref<32x5xf32, #tpu.memory_space<vmem>>, %arg3: memref<32x1xf32, #tpu.memory_space<vmem>>, %arg4: memref<64x160xf32, #tpu.memory_space<vmem>>, %arg5: memref<64x1xf32, #tpu.memory_space<vmem>>, %arg6: memref<1x64x250xf32, #tpu.memory_space<vmem>>) attributes {dimension_semantics = [#tpu.dimension_semantics<parallel>], iteration_bounds = array<i64: 2>, scalar_prefetch = 0 : i64, scratch_operands = 0 : i64, tpu.core_type = #tpu.core_type<tc>, window_params = [{transform_indices = @transform_0, window_bounds = array<i64: 1, 4, 5, 250>}, {pipeline_mode = #tpu.pipeline_mode<synchronous>, transform_indices = @transform_1, window_bounds = array<i64: 32, 5>}, {pipeline_mode = #tpu.pipeline_mode<synchronous>, transform_indices = @transform_2, window_bounds = array<i64: 32, 1>}, {pipeline_mode = #tpu.pipeline_mode<synchronous>, transform_indices = @transform_3, window_bounds = array<i64: 64, 160>}, {pipeline_mode = #tpu.pipeline_mode<synchronous>, transform_indices = @transform_4, window_bounds = array<i64: 64, 1>}, {transform_indices = @transform_5, window_bounds = array<i64: 1, 64, 250>}]} {
    %c0 = arith.constant 0 : index
    %c0_0 = arith.constant 0 : index
    %0 = vector.load %arg2[%c0, %c0_0] : memref<32x5xf32, #tpu.memory_space<vmem>>, vector<32x5xf32>
    %c0_1 = arith.constant 0 : index
    %c0_2 = arith.constant 0 : index
    %1 = vector.load %arg3[%c0_1, %c0_2] : memref<32x1xf32, #tpu.memory_space<vmem>>, vector<32x1xf32>
    %c0_3 = arith.constant 0 : index
    %c0_4 = arith.constant 0 : index
    %c0_5 = arith.constant 0 : index
    %c0_6 = arith.constant 0 : index
    %2 = vector.load %arg1[%c0_3, %c0_4, %c0_5, %c0_6] : memref<1x4x5x250xf32, #tpu.memory_space<vmem>>, vector<1x1x5x250xf32>
    %3 = vector.shape_cast %2 : vector<1x1x5x250xf32> to vector<5x250xf32>
    %cst = arith.constant 0.000000e+00 : f32
    %4 = vector.broadcast %cst : f32 to vector<32x250xf32>
    %5 = vector.extract_strided_slice %0 {offsets = [0, 0], sizes = [32, 1], strides = [1, 1]} : vector<32x5xf32> to vector<32x1xf32>
    %6 = vector.extract_strided_slice %3 {offsets = [0, 0], sizes = [1, 250], strides = [1, 1]} : vector<5x250xf32> to vector<1x250xf32>
    %7 = vector.broadcast %5 : vector<32x1xf32> to vector<32x250xf32>
    %8 = vector.broadcast %6 : vector<1x250xf32> to vector<32x250xf32>
    %9 = arith.mulf %7, %8 : vector<32x250xf32>
    %10 = arith.addf %4, %9 : vector<32x250xf32>
    %11 = vector.extract_strided_slice %0 {offsets = [0, 1], sizes = [32, 1], strides = [1, 1]} : vector<32x5xf32> to vector<32x1xf32>
    %12 = vector.extract_strided_slice %3 {offsets = [1, 0], sizes = [1, 250], strides = [1, 1]} : vector<5x250xf32> to vector<1x250xf32>
    %13 = vector.broadcast %11 : vector<32x1xf32> to vector<32x250xf32>
    %14 = vector.broadcast %12 : vector<1x250xf32> to vector<32x250xf32>
    %15 = arith.mulf %13, %14 : vector<32x250xf32>
    %16 = arith.addf %10, %15 : vector<32x250xf32>
    %17 = vector.extract_strided_slice %0 {offsets = [0, 2], sizes = [32, 1], strides = [1, 1]} : vector<32x5xf32> to vector<32x1xf32>
    %18 = vector.extract_strided_slice %3 {offsets = [2, 0], sizes = [1, 250], strides = [1, 1]} : vector<5x250xf32> to vector<1x250xf32>
    %19 = vector.broadcast %17 : vector<32x1xf32> to vector<32x250xf32>
    %20 = vector.broadcast %18 : vector<1x250xf32> to vector<32x250xf32>
    %21 = arith.mulf %19, %20 : vector<32x250xf32>
    %22 = arith.addf %16, %21 : vector<32x250xf32>
    %23 = vector.extract_strided_slice %0 {offsets = [0, 3], sizes = [32, 1], strides = [1, 1]} : vector<32x5xf32> to vector<32x1xf32>
    %24 = vector.extract_strided_slice %3 {offsets = [3, 0], sizes = [1, 250], strides = [1, 1]} : vector<5x250xf32> to vector<1x250xf32>
    %25 = vector.broadcast %23 : vector<32x1xf32> to vector<32x250xf32>
    %26 = vector.broadcast %24 : vector<1x250xf32> to vector<32x250xf32>
    %27 = arith.mulf %25, %26 : vector<32x250xf32>
    %28 = arith.addf %22, %27 : vector<32x250xf32>
    %29 = vector.extract_strided_slice %0 {offsets = [0, 4], sizes = [32, 1], strides = [1, 1]} : vector<32x5xf32> to vector<32x1xf32>
    %30 = vector.extract_strided_slice %3 {offsets = [4, 0], sizes = [1, 250], strides = [1, 1]} : vector<5x250xf32> to vector<1x250xf32>
    %31 = vector.broadcast %29 : vector<32x1xf32> to vector<32x250xf32>
    %32 = vector.broadcast %30 : vector<1x250xf32> to vector<32x250xf32>
    %33 = arith.mulf %31, %32 : vector<32x250xf32>
    %34 = arith.addf %28, %33 : vector<32x250xf32>
    %35 = vector.broadcast %1 : vector<32x1xf32> to vector<32x250xf32>
    %36 = arith.addf %34, %35 : vector<32x250xf32>
    %cst_7 = arith.constant 0.000000e+00 : f32
    %37 = vector.broadcast %cst_7 : f32 to vector<32x250xf32>
    %38 = arith.maximumf %36, %37 : vector<32x250xf32>
    %c0_8 = arith.constant 0 : index
    %c1 = arith.constant 1 : index
    %c0_9 = arith.constant 0 : index
    %c0_10 = arith.constant 0 : index
    %39 = vector.load %arg1[%c0_8, %c1, %c0_9, %c0_10] : memref<1x4x5x250xf32, #tpu.memory_space<vmem>>, vector<1x1x5x250xf32>
    %40 = vector.shape_cast %39 : vector<1x1x5x250xf32> to vector<5x250xf32>
    %cst_11 = arith.constant 0.000000e+00 : f32
    %41 = vector.broadcast %cst_11 : f32 to vector<32x250xf32>
    %42 = vector.extract_strided_slice %0 {offsets = [0, 0], sizes = [32, 1], strides = [1, 1]} : vector<32x5xf32> to vector<32x1xf32>
    %43 = vector.extract_strided_slice %40 {offsets = [0, 0], sizes = [1, 250], strides = [1, 1]} : vector<5x250xf32> to vector<1x250xf32>
    %44 = vector.broadcast %42 : vector<32x1xf32> to vector<32x250xf32>
    %45 = vector.broadcast %43 : vector<1x250xf32> to vector<32x250xf32>
    %46 = arith.mulf %44, %45 : vector<32x250xf32>
    %47 = arith.addf %41, %46 : vector<32x250xf32>
    %48 = vector.extract_strided_slice %0 {offsets = [0, 1], sizes = [32, 1], strides = [1, 1]} : vector<32x5xf32> to vector<32x1xf32>
    %49 = vector.extract_strided_slice %40 {offsets = [1, 0], sizes = [1, 250], strides = [1, 1]} : vector<5x250xf32> to vector<1x250xf32>
    %50 = vector.broadcast %48 : vector<32x1xf32> to vector<32x250xf32>
    %51 = vector.broadcast %49 : vector<1x250xf32> to vector<32x250xf32>
    %52 = arith.mulf %50, %51 : vector<32x250xf32>
    %53 = arith.addf %47, %52 : vector<32x250xf32>
    %54 = vector.extract_strided_slice %0 {offsets = [0, 2], sizes = [32, 1], strides = [1, 1]} : vector<32x5xf32> to vector<32x1xf32>
    %55 = vector.extract_strided_slice %40 {offsets = [2, 0], sizes = [1, 250], strides = [1, 1]} : vector<5x250xf32> to vector<1x250xf32>
    %56 = vector.broadcast %54 : vector<32x1xf32> to vector<32x250xf32>
    %57 = vector.broadcast %55 : vector<1x250xf32> to vector<32x250xf32>
    %58 = arith.mulf %56, %57 : vector<32x250xf32>
    %59 = arith.addf %53, %58 : vector<32x250xf32>
    %60 = vector.extract_strided_slice %0 {offsets = [0, 3], sizes = [32, 1], strides = [1, 1]} : vector<32x5xf32> to vector<32x1xf32>
    %61 = vector.extract_strided_slice %40 {offsets = [3, 0], sizes = [1, 250], strides = [1, 1]} : vector<5x250xf32> to vector<1x250xf32>
    %62 = vector.broadcast %60 : vector<32x1xf32> to vector<32x250xf32>
    %63 = vector.broadcast %61 : vector<1x250xf32> to vector<32x250xf32>
    %64 = arith.mulf %62, %63 : vector<32x250xf32>
    %65 = arith.addf %59, %64 : vector<32x250xf32>
    %66 = vector.extract_strided_slice %0 {offsets = [0, 4], sizes = [32, 1], strides = [1, 1]} : vector<32x5xf32> to vector<32x1xf32>
    %67 = vector.extract_strided_slice %40 {offsets = [4, 0], sizes = [1, 250], strides = [1, 1]} : vector<5x250xf32> to vector<1x250xf32>
    %68 = vector.broadcast %66 : vector<32x1xf32> to vector<32x250xf32>
    %69 = vector.broadcast %67 : vector<1x250xf32> to vector<32x250xf32>
    %70 = arith.mulf %68, %69 : vector<32x250xf32>
    %71 = arith.addf %65, %70 : vector<32x250xf32>
    %72 = vector.broadcast %1 : vector<32x1xf32> to vector<32x250xf32>
    %73 = arith.addf %71, %72 : vector<32x250xf32>
    %cst_12 = arith.constant 0.000000e+00 : f32
    %74 = vector.broadcast %cst_12 : f32 to vector<32x250xf32>
    %75 = arith.maximumf %73, %74 : vector<32x250xf32>
    %c0_13 = arith.constant 0 : index
    %c2 = arith.constant 2 : index
    %c0_14 = arith.constant 0 : index
    %c0_15 = arith.constant 0 : index
    %76 = vector.load %arg1[%c0_13, %c2, %c0_14, %c0_15] : memref<1x4x5x250xf32, #tpu.memory_space<vmem>>, vector<1x1x5x250xf32>
    %77 = vector.shape_cast %76 : vector<1x1x5x250xf32> to vector<5x250xf32>
    %cst_16 = arith.constant 0.000000e+00 : f32
    %78 = vector.broadcast %cst_16 : f32 to vector<32x250xf32>
    %79 = vector.extract_strided_slice %0 {offsets = [0, 0], sizes = [32, 1], strides = [1, 1]} : vector<32x5xf32> to vector<32x1xf32>
    %80 = vector.extract_strided_slice %77 {offsets = [0, 0], sizes = [1, 250], strides = [1, 1]} : vector<5x250xf32> to vector<1x250xf32>
    %81 = vector.broadcast %79 : vector<32x1xf32> to vector<32x250xf32>
    %82 = vector.broadcast %80 : vector<1x250xf32> to vector<32x250xf32>
    %83 = arith.mulf %81, %82 : vector<32x250xf32>
    %84 = arith.addf %78, %83 : vector<32x250xf32>
    %85 = vector.extract_strided_slice %0 {offsets = [0, 1], sizes = [32, 1], strides = [1, 1]} : vector<32x5xf32> to vector<32x1xf32>
    %86 = vector.extract_strided_slice %77 {offsets = [1, 0], sizes = [1, 250], strides = [1, 1]} : vector<5x250xf32> to vector<1x250xf32>
    %87 = vector.broadcast %85 : vector<32x1xf32> to vector<32x250xf32>
    %88 = vector.broadcast %86 : vector<1x250xf32> to vector<32x250xf32>
    %89 = arith.mulf %87, %88 : vector<32x250xf32>
    %90 = arith.addf %84, %89 : vector<32x250xf32>
    %91 = vector.extract_strided_slice %0 {offsets = [0, 2], sizes = [32, 1], strides = [1, 1]} : vector<32x5xf32> to vector<32x1xf32>
    %92 = vector.extract_strided_slice %77 {offsets = [2, 0], sizes = [1, 250], strides = [1, 1]} : vector<5x250xf32> to vector<1x250xf32>
    %93 = vector.broadcast %91 : vector<32x1xf32> to vector<32x250xf32>
    %94 = vector.broadcast %92 : vector<1x250xf32> to vector<32x250xf32>
    %95 = arith.mulf %93, %94 : vector<32x250xf32>
    %96 = arith.addf %90, %95 : vector<32x250xf32>
    %97 = vector.extract_strided_slice %0 {offsets = [0, 3], sizes = [32, 1], strides = [1, 1]} : vector<32x5xf32> to vector<32x1xf32>
    %98 = vector.extract_strided_slice %77 {offsets = [3, 0], sizes = [1, 250], strides = [1, 1]} : vector<5x250xf32> to vector<1x250xf32>
    %99 = vector.broadcast %97 : vector<32x1xf32> to vector<32x250xf32>
    %100 = vector.broadcast %98 : vector<1x250xf32> to vector<32x250xf32>
    %101 = arith.mulf %99, %100 : vector<32x250xf32>
    %102 = arith.addf %96, %101 : vector<32x250xf32>
    %103 = vector.extract_strided_slice %0 {offsets = [0, 4], sizes = [32, 1], strides = [1, 1]} : vector<32x5xf32> to vector<32x1xf32>
    %104 = vector.extract_strided_slice %77 {offsets = [4, 0], sizes = [1, 250], strides = [1, 1]} : vector<5x250xf32> to vector<1x250xf32>
    %105 = vector.broadcast %103 : vector<32x1xf32> to vector<32x250xf32>
    %106 = vector.broadcast %104 : vector<1x250xf32> to vector<32x250xf32>
    %107 = arith.mulf %105, %106 : vector<32x250xf32>
    %108 = arith.addf %102, %107 : vector<32x250xf32>
    %109 = vector.broadcast %1 : vector<32x1xf32> to vector<32x250xf32>
    %110 = arith.addf %108, %109 : vector<32x250xf32>
    %cst_17 = arith.constant 0.000000e+00 : f32
    %111 = vector.broadcast %cst_17 : f32 to vector<32x250xf32>
    %112 = arith.maximumf %110, %111 : vector<32x250xf32>
    %c0_18 = arith.constant 0 : index
    %c3 = arith.constant 3 : index
    %c0_19 = arith.constant 0 : index
    %c0_20 = arith.constant 0 : index
    %113 = vector.load %arg1[%c0_18, %c3, %c0_19, %c0_20] : memref<1x4x5x250xf32, #tpu.memory_space<vmem>>, vector<1x1x5x250xf32>
    %114 = vector.shape_cast %113 : vector<1x1x5x250xf32> to vector<5x250xf32>
    %cst_21 = arith.constant 0.000000e+00 : f32
    %115 = vector.broadcast %cst_21 : f32 to vector<32x250xf32>
    %116 = vector.extract_strided_slice %0 {offsets = [0, 0], sizes = [32, 1], strides = [1, 1]} : vector<32x5xf32> to vector<32x1xf32>
    %117 = vector.extract_strided_slice %114 {offsets = [0, 0], sizes = [1, 250], strides = [1, 1]} : vector<5x250xf32> to vector<1x250xf32>
    %118 = vector.broadcast %116 : vector<32x1xf32> to vector<32x250xf32>
    %119 = vector.broadcast %117 : vector<1x250xf32> to vector<32x250xf32>
    %120 = arith.mulf %118, %119 : vector<32x250xf32>
    %121 = arith.addf %115, %120 : vector<32x250xf32>
    %122 = vector.extract_strided_slice %0 {offsets = [0, 1], sizes = [32, 1], strides = [1, 1]} : vector<32x5xf32> to vector<32x1xf32>
    %123 = vector.extract_strided_slice %114 {offsets = [1, 0], sizes = [1, 250], strides = [1, 1]} : vector<5x250xf32> to vector<1x250xf32>
    %124 = vector.broadcast %122 : vector<32x1xf32> to vector<32x250xf32>
    %125 = vector.broadcast %123 : vector<1x250xf32> to vector<32x250xf32>
    %126 = arith.mulf %124, %125 : vector<32x250xf32>
    %127 = arith.addf %121, %126 : vector<32x250xf32>
    %128 = vector.extract_strided_slice %0 {offsets = [0, 2], sizes = [32, 1], strides = [1, 1]} : vector<32x5xf32> to vector<32x1xf32>
    %129 = vector.extract_strided_slice %114 {offsets = [2, 0], sizes = [1, 250], strides = [1, 1]} : vector<5x250xf32> to vector<1x250xf32>
    %130 = vector.broadcast %128 : vector<32x1xf32> to vector<32x250xf32>
    %131 = vector.broadcast %129 : vector<1x250xf32> to vector<32x250xf32>
    %132 = arith.mulf %130, %131 : vector<32x250xf32>
    %133 = arith.addf %127, %132 : vector<32x250xf32>
    %134 = vector.extract_strided_slice %0 {offsets = [0, 3], sizes = [32, 1], strides = [1, 1]} : vector<32x5xf32> to vector<32x1xf32>
    %135 = vector.extract_strided_slice %114 {offsets = [3, 0], sizes = [1, 250], strides = [1, 1]} : vector<5x250xf32> to vector<1x250xf32>
    %136 = vector.broadcast %134 : vector<32x1xf32> to vector<32x250xf32>
    %137 = vector.broadcast %135 : vector<1x250xf32> to vector<32x250xf32>
    %138 = arith.mulf %136, %137 : vector<32x250xf32>
    %139 = arith.addf %133, %138 : vector<32x250xf32>
    %140 = vector.extract_strided_slice %0 {offsets = [0, 4], sizes = [32, 1], strides = [1, 1]} : vector<32x5xf32> to vector<32x1xf32>
    %141 = vector.extract_strided_slice %114 {offsets = [4, 0], sizes = [1, 250], strides = [1, 1]} : vector<5x250xf32> to vector<1x250xf32>
    %142 = vector.broadcast %140 : vector<32x1xf32> to vector<32x250xf32>
    %143 = vector.broadcast %141 : vector<1x250xf32> to vector<32x250xf32>
    %144 = arith.mulf %142, %143 : vector<32x250xf32>
    %145 = arith.addf %139, %144 : vector<32x250xf32>
    %146 = vector.broadcast %1 : vector<32x1xf32> to vector<32x250xf32>
    %147 = arith.addf %145, %146 : vector<32x250xf32>
    %cst_22 = arith.constant 0.000000e+00 : f32
    %148 = vector.broadcast %cst_22 : f32 to vector<32x250xf32>
    %149 = arith.maximumf %147, %148 : vector<32x250xf32>
    %150 = arith.maximumf %38, %75 : vector<32x250xf32>
    %151 = arith.maximumf %112, %149 : vector<32x250xf32>
    %152 = tpu.iota {dimensions = array<i32: 0>} : vector<250x250xi32>
    %153 = tpu.iota {dimensions = array<i32: 1>} : vector<250x250xi32>
    %c1_i32 = arith.constant 1 : i32
    %154 = vector.broadcast %c1_i32 : i32 to vector<250x250xi32>
    %155 = arith.subi %153, %154 : vector<250x250xi32>
    %156 = arith.cmpi eq, %152, %155 : vector<250x250xi32>
    %157 = arith.extui %156 : vector<250x250xi1> to vector<250x250xi32>
    %158 = arith.sitofp %157 : vector<250x250xi32> to vector<250x250xf32>
    %c1_i32_23 = arith.constant 1 : i32
    %159 = vector.broadcast %c1_i32_23 : i32 to vector<250x250xi32>
    %160 = arith.addi %153, %159 : vector<250x250xi32>
    %161 = arith.cmpi eq, %152, %160 : vector<250x250xi32>
    %162 = arith.extui %161 : vector<250x250xi1> to vector<250x250xi32>
    %163 = arith.sitofp %162 : vector<250x250xi32> to vector<250x250xf32>
    %cst_24 = arith.constant dense<0.000000e+00> : vector<32x250xf32>
    %164 = tpu.matmul %150, %158, %cst_24 {dimension_numbers = #tpu.dot_dimension_numbers<[1], [0], [0], [1], [0, 0, 1, 1], [], []>} : vector<32x250xf32>, vector<250x250xf32>, vector<32x250xf32> -> vector<32x250xf32>
    %cst_25 = arith.constant dense<0.000000e+00> : vector<32x250xf32>
    %165 = tpu.matmul %151, %158, %cst_25 {dimension_numbers = #tpu.dot_dimension_numbers<[1], [0], [0], [1], [0, 0, 1, 1], [], []>} : vector<32x250xf32>, vector<250x250xf32>, vector<32x250xf32> -> vector<32x250xf32>
    %cst_26 = arith.constant dense<0.000000e+00> : vector<32x250xf32>
    %166 = tpu.matmul %150, %163, %cst_26 {dimension_numbers = #tpu.dot_dimension_numbers<[1], [0], [0], [1], [0, 0, 1, 1], [], []>} : vector<32x250xf32>, vector<250x250xf32>, vector<32x250xf32> -> vector<32x250xf32>
    %cst_27 = arith.constant dense<0.000000e+00> : vector<32x250xf32>
    %167 = tpu.matmul %151, %163, %cst_27 {dimension_numbers = #tpu.dot_dimension_numbers<[1], [0], [0], [1], [0, 0, 1, 1], [], []>} : vector<32x250xf32>, vector<250x250xf32>, vector<32x250xf32> -> vector<32x250xf32>
    %168 = tpu.concatenate %164, %165, %150, %151, %166 in 0 : vector<32x250xf32>, vector<32x250xf32>, vector<32x250xf32>, vector<32x250xf32>, vector<32x250xf32> -> vector<160x250xf32>
    %169 = tpu.concatenate %165, %150, %151, %166, %167 in 0 : vector<32x250xf32>, vector<32x250xf32>, vector<32x250xf32>, vector<32x250xf32>, vector<32x250xf32> -> vector<160x250xf32>
    %c0_28 = arith.constant 0 : index
    %c0_29 = arith.constant 0 : index
    %170 = vector.load %arg4[%c0_28, %c0_29] : memref<64x160xf32, #tpu.memory_space<vmem>>, vector<64x160xf32>
    %c0_30 = arith.constant 0 : index
    %c0_31 = arith.constant 0 : index
    %171 = vector.load %arg5[%c0_30, %c0_31] : memref<64x1xf32, #tpu.memory_space<vmem>>, vector<64x1xf32>
    %cst_32 = arith.constant dense<0.000000e+00> : vector<64x250xf32>
    %172 = tpu.matmul %170, %168, %cst_32 {dimension_numbers = #tpu.dot_dimension_numbers<[1], [0], [0], [1], [0, 0, 1, 1], [], []>} : vector<64x160xf32>, vector<160x250xf32>, vector<64x250xf32> -> vector<64x250xf32>
    %173 = vector.broadcast %171 : vector<64x1xf32> to vector<64x250xf32>
    %174 = arith.addf %172, %173 : vector<64x250xf32>
    %cst_33 = arith.constant 0.000000e+00 : f32
    %175 = vector.broadcast %cst_33 : f32 to vector<64x250xf32>
    %176 = arith.maximumf %174, %175 : vector<64x250xf32>
    %cst_34 = arith.constant dense<0.000000e+00> : vector<64x250xf32>
    %177 = tpu.matmul %170, %169, %cst_34 {dimension_numbers = #tpu.dot_dimension_numbers<[1], [0], [0], [1], [0, 0, 1, 1], [], []>} : vector<64x160xf32>, vector<160x250xf32>, vector<64x250xf32> -> vector<64x250xf32>
    %178 = vector.broadcast %171 : vector<64x1xf32> to vector<64x250xf32>
    %179 = arith.addf %177, %178 : vector<64x250xf32>
    %cst_35 = arith.constant 0.000000e+00 : f32
    %180 = vector.broadcast %cst_35 : f32 to vector<64x250xf32>
    %181 = arith.maximumf %179, %180 : vector<64x250xf32>
    %182 = arith.maximumf %176, %181 : vector<64x250xf32>
    %c0_36 = arith.constant 0 : index
    %c0_37 = arith.constant 0 : index
    %c0_38 = arith.constant 0 : index
    %183 = vector.load %arg6[%c0_36, %c0_37, %c0_38] : memref<1x64x250xf32, #tpu.memory_space<vmem>>, vector<1x64x250xf32>
    %184 = vector.shape_cast %183 : vector<1x64x250xf32> to vector<64x250xf32>
    %185 = vector.shape_cast %182 : vector<64x250xf32> to vector<1x64x250xf32>
    tpu.vector_store %arg6[%c0_36, %c0_37, %c0_38], %185 {strides = array<i32>} : memref<1x64x250xf32, #tpu.memory_space<vmem>>, vector<1x64x250xf32>,
    return
  }
  func.func @transform_0(%arg0: i32) -> (i32, i32, i32, i32) {
    %c0_i32 = arith.constant 0 : i32
    %c0_i32_0 = arith.constant 0 : i32
    %c0_i32_1 = arith.constant 0 : i32
    %c0_i32_2 = arith.constant 0 : i32
    return %arg0, %c0_i32, %c0_i32_0, %c0_i32_1 : i32, i32, i32, i32
  }
  func.func @transform_1(%arg0: i32) -> (i32, i32) {
    %c0_i32 = arith.constant 0 : i32
    %c0_i32_0 = arith.constant 0 : i32
    %c0_i32_1 = arith.constant 0 : i32
    return %c0_i32, %c0_i32_0 : i32, i32
  }
  func.func @transform_2(%arg0: i32) -> (i32, i32) {
    %c0_i32 = arith.constant 0 : i32
    %c0_i32_0 = arith.constant 0 : i32
    %c0_i32_1 = arith.constant 0 : i32
    return %c0_i32, %c0_i32_0 : i32, i32
  }
  func.func @transform_3(%arg0: i32) -> (i32, i32) {
    %c0_i32 = arith.constant 0 : i32
    %c0_i32_0 = arith.constant 0 : i32
    %c0_i32_1 = arith.constant 0 : i32
    return %c0_i32, %c0_i32_0 : i32, i32
  }
  func.func @transform_4(%arg0: i32) -> (i32, i32) {
    %c0_i32 = arith.constant 0 : i32
    %c0_i32_0 = arith.constant 0 : i32
    %c0_i32_1 = arith.constant 0 : i32
    return %c0_i32, %c0_i32_0 : i32, i32
  }
  func.func @transform_5(%arg0: i32) -> (i32, i32, i32) {
    %c0_i32 = arith.constant 0 : i32
    %c0_i32_0 = arith.constant 0 : i32
    %c0_i32_1 = arith.constant 0 : i32
    return %arg0, %c0_i32, %c0_i32_0 : i32, i32, i32
  }
}

module attributes {stable_mosaic.version = 11 : i64} {
  func.func @_tail_kernel(%arg0: i32, %arg1: memref<2x3200xf32, #tpu.memory_space<vmem>>, %arg2: memref<3200x128xbf16, #tpu.memory_space<vmem>>, %arg3: memref<1x128xf32, #tpu.memory_space<vmem>>, %arg4: memref<128x64xf32, #tpu.memory_space<vmem>>, %arg5: memref<1x64xf32, #tpu.memory_space<vmem>>, %arg6: memref<64x12xf32, #tpu.memory_space<vmem>>, %arg7: memref<1x12xf32, #tpu.memory_space<vmem>>, %arg8: memref<2x12xf32, #tpu.memory_space<vmem>>, %arg9: memref<2x128xf32, #tpu.memory_space<vmem>>) attributes {dimension_semantics = [#tpu.dimension_semantics<arbitrary>], iteration_bounds = array<i64: 5>, scalar_prefetch = 0 : i64, scratch_operands = 1 : i64, tpu.core_type = #tpu.core_type<tc>, window_params = [{transform_indices = @transform_0, window_bounds = array<i64: 2, 3200>}, {transform_indices = @transform_1, window_bounds = array<i64: 3200, 128>}, {pipeline_mode = #tpu.pipeline_mode<synchronous>, transform_indices = @transform_2, window_bounds = array<i64: 1, 128>}, {pipeline_mode = #tpu.pipeline_mode<synchronous>, transform_indices = @transform_3, window_bounds = array<i64: 128, 64>}, {pipeline_mode = #tpu.pipeline_mode<synchronous>, transform_indices = @transform_4, window_bounds = array<i64: 1, 64>}, {pipeline_mode = #tpu.pipeline_mode<synchronous>, transform_indices = @transform_5, window_bounds = array<i64: 64, 12>}, {pipeline_mode = #tpu.pipeline_mode<synchronous>, transform_indices = @transform_6, window_bounds = array<i64: 1, 12>}, {pipeline_mode = #tpu.pipeline_mode<synchronous>, transform_indices = @transform_7, window_bounds = array<i64: 2, 12>}]} {
    %c0_i32 = arith.constant 0 : i32
    %0 = arith.cmpi eq, %arg0, %c0_i32 : i32
    %1 = arith.extui %0 : i1 to i32
    %c0_i32_0 = arith.constant 0 : i32
    %2 = arith.cmpi ne, %1, %c0_i32_0 : i32
    scf.if %2 {
      %cst_9 = arith.constant 0.000000e+00 : f32
      %13 = vector.broadcast %cst_9 : f32 to vector<2x128xf32>
      %c0_10 = arith.constant 0 : index
      %c0_11 = arith.constant 0 : index
      %14 = vector.load %arg9[%c0_10, %c0_11] : memref<2x128xf32, #tpu.memory_space<vmem>>, vector<2x128xf32>
      tpu.vector_store %arg9[%c0_10, %c0_11], %13 {strides = array<i32>} : memref<2x128xf32, #tpu.memory_space<vmem>>, vector<2x128xf32>,
    } else {
    }
    %c0 = arith.constant 0 : index
    %c0_1 = arith.constant 0 : index
    %3 = vector.load %arg9[%c0, %c0_1] : memref<2x128xf32, #tpu.memory_space<vmem>>, vector<2x128xf32>
    %c0_2 = arith.constant 0 : index
    %c0_3 = arith.constant 0 : index
    %4 = vector.load %arg1[%c0_2, %c0_3] : memref<2x3200xf32, #tpu.memory_space<vmem>>, vector<2x3200xf32>
    %5 = arith.truncf %4 : vector<2x3200xf32> to vector<2x3200xbf16>
    %c0_4 = arith.constant 0 : index
    %c0_5 = arith.constant 0 : index
    %6 = vector.load %arg2[%c0_4, %c0_5] : memref<3200x128xbf16, #tpu.memory_space<vmem>>, vector<3200x128xbf16>
    %cst = arith.constant dense<0.000000e+00> : vector<2x128xf32>
    %7 = tpu.matmul %5, %6, %cst {dimension_numbers = #tpu.dot_dimension_numbers<[1], [0], [0], [1], [0, 0, 1, 1], [], []>} : vector<2x3200xbf16>, vector<3200x128xbf16>, vector<2x128xf32> -> vector<2x128xf32>
    %8 = arith.addf %3, %7 : vector<2x128xf32>
    %c0_6 = arith.constant 0 : index
    %c0_7 = arith.constant 0 : index
    %9 = vector.load %arg9[%c0_6, %c0_7] : memref<2x128xf32, #tpu.memory_space<vmem>>, vector<2x128xf32>
    tpu.vector_store %arg9[%c0_6, %c0_7], %8 {strides = array<i32>} : memref<2x128xf32, #tpu.memory_space<vmem>>, vector<2x128xf32>,
    %c4_i32 = arith.constant 4 : i32
    %10 = arith.cmpi eq, %arg0, %c4_i32 : i32
    %11 = arith.extui %10 : i1 to i32
    %c0_i32_8 = arith.constant 0 : i32
    %12 = arith.cmpi ne, %11, %c0_i32_8 : i32
    scf.if %12 {
      %c0_9 = arith.constant 0 : index
      %c0_10 = arith.constant 0 : index
      %13 = vector.load %arg9[%c0_9, %c0_10] : memref<2x128xf32, #tpu.memory_space<vmem>>, vector<2x128xf32>
      %c0_11 = arith.constant 0 : index
      %c0_12 = arith.constant 0 : index
      %14 = vector.load %arg3[%c0_11, %c0_12] : memref<1x128xf32, #tpu.memory_space<vmem>>, vector<1x128xf32>
      %15 = vector.broadcast %14 : vector<1x128xf32> to vector<2x128xf32>
      %16 = arith.addf %13, %15 : vector<2x128xf32>
      %c0_13 = arith.constant 0 : index
      %c0_14 = arith.constant 0 : index
      %17 = vector.load %arg4[%c0_13, %c0_14] : memref<128x64xf32, #tpu.memory_space<vmem>>, vector<128x64xf32>
      %cst_15 = arith.constant dense<0.000000e+00> : vector<2x64xf32>
      %18 = tpu.matmul %16, %17, %cst_15 {dimension_numbers = #tpu.dot_dimension_numbers<[1], [0], [0], [1], [0, 0, 1, 1], [], []>} : vector<2x128xf32>, vector<128x64xf32>, vector<2x64xf32> -> vector<2x64xf32>
      %c0_16 = arith.constant 0 : index
      %c0_17 = arith.constant 0 : index
      %19 = vector.load %arg5[%c0_16, %c0_17] : memref<1x64xf32, #tpu.memory_space<vmem>>, vector<1x64xf32>
      %20 = vector.broadcast %19 : vector<1x64xf32> to vector<2x64xf32>
      %21 = arith.addf %18, %20 : vector<2x64xf32>
      %cst_18 = arith.constant 0.000000e+00 : f32
      %22 = vector.broadcast %cst_18 : f32 to vector<2x64xf32>
      %23 = arith.maximumf %21, %22 : vector<2x64xf32>
      %c0_19 = arith.constant 0 : index
      %c0_20 = arith.constant 0 : index
      %24 = vector.load %arg6[%c0_19, %c0_20] : memref<64x12xf32, #tpu.memory_space<vmem>>, vector<64x12xf32>
      %cst_21 = arith.constant dense<0.000000e+00> : vector<2x12xf32>
      %25 = tpu.matmul %23, %24, %cst_21 {dimension_numbers = #tpu.dot_dimension_numbers<[1], [0], [0], [1], [0, 0, 1, 1], [], []>} : vector<2x64xf32>, vector<64x12xf32>, vector<2x12xf32> -> vector<2x12xf32>
      %c0_22 = arith.constant 0 : index
      %c0_23 = arith.constant 0 : index
      %26 = vector.load %arg7[%c0_22, %c0_23] : memref<1x12xf32, #tpu.memory_space<vmem>>, vector<1x12xf32>
      %27 = vector.broadcast %26 : vector<1x12xf32> to vector<2x12xf32>
      %28 = arith.addf %25, %27 : vector<2x12xf32>
      %cst_24 = arith.constant dense<0xFF800000> : vector<2xf32>
      %29 = vector.multi_reduction <maximumf>, %28, %cst_24 [1] : vector<2x12xf32> to vector<2xf32>
      %30 = vector.shape_cast %29 : vector<2xf32> to vector<2x1xf32>
      %31 = vector.broadcast %30 : vector<2x1xf32> to vector<2x12xf32>
      %32 = arith.subf %28, %31 : vector<2x12xf32>
      %33 = math.exp %32 : vector<2x12xf32>
      %cst_25 = arith.constant dense<0.000000e+00> : vector<2xf32>
      %34 = vector.multi_reduction <add>, %33, %cst_25 [1] : vector<2x12xf32> to vector<2xf32>
      %35 = vector.shape_cast %34 : vector<2xf32> to vector<2x1xf32>
      %36 = math.log %35 : vector<2x1xf32>
      %37 = arith.addf %30, %36 : vector<2x1xf32>
      %38 = vector.broadcast %37 : vector<2x1xf32> to vector<2x12xf32>
      %39 = arith.subf %28, %38 : vector<2x12xf32>
      %c0_26 = arith.constant 0 : index
      %c0_27 = arith.constant 0 : index
      %40 = vector.load %arg8[%c0_26, %c0_27] : memref<2x12xf32, #tpu.memory_space<vmem>>, vector<2x12xf32>
      tpu.vector_store %arg8[%c0_26, %c0_27], %39 {strides = array<i32>} : memref<2x12xf32, #tpu.memory_space<vmem>>, vector<2x12xf32>,
    } else {
    }
    return
  }
  func.func @transform_0(%arg0: i32) -> (i32, i32) {
    %c0_i32 = arith.constant 0 : i32
    %c0_i32_0 = arith.constant 0 : i32
    return %c0_i32, %arg0 : i32, i32
  }
  func.func @transform_1(%arg0: i32) -> (i32, i32) {
    %c0_i32 = arith.constant 0 : i32
    %c0_i32_0 = arith.constant 0 : i32
    return %arg0, %c0_i32 : i32, i32
  }
  func.func @transform_2(%arg0: i32) -> (i32, i32) {
    %c0_i32 = arith.constant 0 : i32
    %c0_i32_0 = arith.constant 0 : i32
    %c0_i32_1 = arith.constant 0 : i32
    return %c0_i32, %c0_i32_0 : i32, i32
  }
  func.func @transform_3(%arg0: i32) -> (i32, i32) {
    %c0_i32 = arith.constant 0 : i32
    %c0_i32_0 = arith.constant 0 : i32
    %c0_i32_1 = arith.constant 0 : i32
    return %c0_i32, %c0_i32_0 : i32, i32
  }
  func.func @transform_4(%arg0: i32) -> (i32, i32) {
    %c0_i32 = arith.constant 0 : i32
    %c0_i32_0 = arith.constant 0 : i32
    %c0_i32_1 = arith.constant 0 : i32
    return %c0_i32, %c0_i32_0 : i32, i32
  }
  func.func @transform_5(%arg0: i32) -> (i32, i32) {
    %c0_i32 = arith.constant 0 : i32
    %c0_i32_0 = arith.constant 0 : i32
    %c0_i32_1 = arith.constant 0 : i32
    return %c0_i32, %c0_i32_0 : i32, i32
  }
  func.func @transform_6(%arg0: i32) -> (i32, i32) {
    %c0_i32 = arith.constant 0 : i32
    %c0_i32_0 = arith.constant 0 : i32
    %c0_i32_1 = arith.constant 0 : i32
    return %c0_i32, %c0_i32_0 : i32, i32
  }
  func.func @transform_7(%arg0: i32) -> (i32, i32) {
    %c0_i32 = arith.constant 0 : i32
    %c0_i32_0 = arith.constant 0 : i32
    %c0_i32_1 = arith.constant 0 : i32
    return %c0_i32, %c0_i32_0 : i32, i32
  }
}

</mosaic_0001>

<llo_original>
// kernel: model2_forward.4
$region0: #{model2_forward.4}
  #allocation0 [shape = 'u32[]', space=smem, size = 0x4, offset = 0x4, fixed_abs, tag = 'smem constant byte address 0x4 - core index']
  #allocation1 [shape = 'u32[144,128]{1,0:T(1,128)}', space=vmem, size = 0x12000, scoped, tag = 'internal scratch']
  %s0 = inlined_call_operand.hbm [shape: f32[2,250], index: 0, kind: input, shape index: {}]
  %s1 = inlined_call_operand.hbm [shape: f32[250,250], index: 1, kind: input, shape index: {}]
  %s2 = inlined_call_operand.hbm [shape: f32[1,250], index: 2, kind: input, shape index: {}]
  %s3 = inlined_call_operand.vmem [shape: f32[2,250], index: 3, kind: output, shape index: {}]
  %s4 = sld [smem:[#allocation0]]
  $region34: #{model2_forward.4} parent=0
    _
  %s6 = ssub.s32 1, %s4
  %s7 = scalar_select 0, %s6, %s4
  $region1: #{model2_forward.4} parent=0
    #allocation2 [shape = 'u8[2048]{0}', space=vmem, size = 0x800, scoped, tag = 'input window, operand 0, single buffered']
    #allocation3 [shape = 's32[1]{0}', space=sflag, size = 0x4, scoped, tag = 'scoped memory for model2_forward.4']
    #allocation4 [shape = 'u8[262144]{0}', space=vmem, size = 0x40000, scoped, tag = 'input window, operand 1, single buffered']
    #allocation5 [shape = 's32[1]{0}', space=sflag, size = 0x4, scoped, tag = 'scoped memory for model2_forward.4']
    #allocation6 [shape = 'u8[1024]{0}', space=vmem, size = 0x400, scoped, tag = 'input window, operand 2, single buffered']
    %8 = vsyncpa [#allocation3], 0
    %9 = vsyncpa [#allocation5], 0
    // Predicated region
    $region2: #{model2_forward.4} parent=1 // pred_check
      _
    $region3: #{model2_forward.4} parent=1 // pred_check_branch
      %11 = sbr.rel (0) target = $region5
    $region4: #{model2_forward.4} parent=1 // pred_region
      %s13 = ssub.s32 64, 64
      %14 = vsyncadd [#allocation3], %s13
      %s16 = sshll.u32 [#allocation2], 4
      %s17 = int_to_ptr.vmem [resolvable:$true] %s16
      %19 = dma.hbm_to_vmem [thread:$0]  %s0, 64, %s17, [#allocation3]
    $region5: #{model2_forward.4} parent=1 // pred_fallthru
      _
    // Predicated region
    $region6: #{model2_forward.4} parent=1 // pred_check
      _
    $region7: #{model2_forward.4} parent=1 // pred_check_branch
      %21 = sbr.rel (0) target = $region9
    $region8: #{model2_forward.4} parent=1 // pred_region
      %s23 = ssub.s32 8192, 8192
      %24 = vsyncadd [#allocation5], %s23
      %s25 = sshll.u32 [#allocation4], 4
      %s26 = int_to_ptr.vmem [resolvable:$true] %s25
      %31 = dma.hbm_to_vmem [thread:$0]  %s1, 8192, %s26, [#allocation5], 256, 256, 16
    $region9: #{model2_forward.4} parent=1 // pred_fallthru
      _
    // Predicated region
    $region10: #{model2_forward.4} parent=1 // pred_check
      _
    $region11: #{model2_forward.4} parent=1 // pred_check_branch
      %33 = sbr.rel (0) target = $region13
    $region12: #{model2_forward.4} parent=1 // pred_region
      %s35 = ssub.s32 32, 32
      %36 = vsyncadd [#allocation5], %s35
      %s38 = sshll.u32 [#allocation6], 4
      %s39 = int_to_ptr.vmem [resolvable:$true] %s38
      %41 = dma.hbm_to_vmem [thread:$0]  %s2, 32, %s39, [#allocation5]
    $region13: #{model2_forward.4} parent=1 // pred_fallthru
      _
    // Predicated region
    $region14: #{model2_forward.4} parent=1 // pred_check
      _
    $region15: #{model2_forward.4} parent=1 // pred_check_branch
      %43 = sbr.rel (0) target = $region17
    $region16: #{model2_forward.4} parent=1 // pred_region
      %44 = dma.done [#allocation3], 64
    $region17: #{model2_forward.4} parent=1 // pred_fallthru
      _
    // Predicated region
    $region18: #{model2_forward.4} parent=1 // pred_check
      _
    $region19: #{model2_forward.4} parent=1 // pred_check_branch
      %46 = sbr.rel (0) target = $region21
    $region20: #{model2_forward.4} parent=1 // pred_region
      %47 = dma.done [#allocation5], 8192
    $region21: #{model2_forward.4} parent=1 // pred_fallthru
      _
    // Predicated region
    $region22: #{model2_forward.4} parent=1 // pred_check
      _
    $region23: #{model2_forward.4} parent=1 // pred_check_branch
      %49 = sbr.rel (0) target = $region25
    $region24: #{model2_forward.4} parent=1 // pred_region
      %50 = dma.done [#allocation5], 32
    $region25: #{model2_forward.4} parent=1 // pred_fallthru
      _
    %v51 = vld [vmem:[#allocation2] sm:$0xf]
    %v52 = vld [vmem:[#allocation4] sm:$0xff]
    %v53 = vld [vmem:[#allocation4 + $0x8] sm:$0xff]
    %v54 = vld [vmem:[#allocation4 + $0x10] sm:$0xff]
    %v55 = vld [vmem:[#allocation4 + $0x18] sm:$0xff]
    %v56 = vld [vmem:[#allocation4 + $0x20] sm:$0xff]
    %v57 = vld [vmem:[#allocation4 + $0x28] sm:$0xff]
    %v58 = vld [vmem:[#allocation4 + $0x30] sm:$0xff]
    %v59 = vld [vmem:[#allocation4 + $0x38] sm:$0xff]
    %v60 = vld [vmem:[#allocation4 + $0x40] sm:$0xff]
    %v61 = vld [vmem:[#allocation4 + $0x48] sm:$0xff]
    %v62 = vld [vmem:[#allocation4 + $0x50] sm:$0xff]
    %v63 = vld [vmem:[#allocation4 + $0x58] sm:$0xff]
    %v64 = vld [vmem:[#allocation4 + $0x60] sm:$0xff]
    %v65 = vld [vmem:[#allocation4 + $0x68] sm:$0xff]
    %v66 = vld [vmem:[#allocation4 + $0x70] sm:$0xff]
    %v67 = vld [vmem:[#allocation4 + $0x78] sm:$0xff]
    %v68 = vld [vmem:[#allocation4 + $0x80] sm:$0xff]
    %v69 = vld [vmem:[#allocation4 + $0x88] sm:$0xff]
    %v70 = vld [vmem:[#allocation4 + $0x90] sm:$0xff]
    %v71 = vld [vmem:[#allocation4 + $0x98] sm:$0xff]
    %v72 = vld [vmem:[#allocation4 + $0xa0] sm:$0xff]
    %v73 = vld [vmem:[#allocation4 + $0xa8] sm:$0xff]
    %v74 = vld [vmem:[#allocation4 + $0xb0] sm:$0xff]
    %v75 = vld [vmem:[#allocation4 + $0xb8] sm:$0xff]
    %v76 = vld [vmem:[#allocation4 + $0xc0] sm:$0xff]
    %v77 = vld [vmem:[#allocation4 + $0xc8] sm:$0xff]
    %v78 = vld [vmem:[#allocation4 + $0xd0] sm:$0xff]
    %v79 = vld [vmem:[#allocation4 + $0xd8] sm:$0xff]
    %v80 = vld [vmem:[#allocation4 + $0xe0] sm:$0xff]
    %v81 = vld [vmem:[#allocation4 + $0xe8] sm:$0xff]
    %v82 = vld [vmem:[#allocation4 + $0xf0] sm:$0xff]
    %v83 = vld [vmem:[#allocation4 + $0xf8] sm:$0xff]
    %v84 = vld [vmem:[#allocation4 + $0x100] sm:$0xff]
    %v85 = vld [vmem:[#allocation4 + $0x108] sm:$0xff]
    %v86 = vld [vmem:[#allocation4 + $0x110] sm:$0xff]
    %v87 = vld [vmem:[#allocation4 + $0x118] sm:$0xff]
    %v88 = vld [vmem:[#allocation4 + $0x120] sm:$0xff]
    %v89 = vld [vmem:[#allocation4 + $0x128] sm:$0xff]
    %v90 = vld [vmem:[#allocation4 + $0x130] sm:$0xff]
    %v91 = vld [vmem:[#allocation4 + $0x138] sm:$0xff]
    %v92 = vld [vmem:[#allocation4 + $0x140] sm:$0xff]
    %v93 = vld [vmem:[#allocation4 + $0x148] sm:$0xff]
    %v94 = vld [vmem:[#allocation4 + $0x150] sm:$0xff]
    %v95 = vld [vmem:[#allocation4 + $0x158] sm:$0xff]
    %v96 = vld [vmem:[#allocation4 + $0x160] sm:$0xff]
    %v97 = vld [vmem:[#allocation4 + $0x168] sm:$0xff]
    %v98 = vld [vmem:[#allocation4 + $0x170] sm:$0xff]
    %v99 = vld [vmem:[#allocation4 + $0x178] sm:$0xff]
    %v100 = vld [vmem:[#allocation4 + $0x180] sm:$0xff]
    %v101 = vld [vmem:[#allocation4 + $0x188] sm:$0xff]
    %v102 = vld [vmem:[#allocation4 + $0x190] sm:$0xff]
    %v103 = vld [vmem:[#allocation4 + $0x198] sm:$0xff]
    %v104 = vld [vmem:[#allocation4 + $0x1a0] sm:$0xff]
    %v105 = vld [vmem:[#allocation4 + $0x1a8] sm:$0xff]
    %v106 = vld [vmem:[#allocation4 + $0x1b0] sm:$0xff]
    %v107 = vld [vmem:[#allocation4 + $0x1b8] sm:$0xff]
    %v108 = vld [vmem:[#allocation4 + $0x1c0] sm:$0xff]
    %v109 = vld [vmem:[#allocation4 + $0x1c8] sm:$0xff]
    %v110 = vld [vmem:[#allocation4 + $0x1d0] sm:$0xff]
    %v111 = vld [vmem:[#allocation4 + $0x1d8] sm:$0xff]
    %v112 = vld [vmem:[#allocation4 + $0x1e0] sm:$0xff]
    %v113 = vld [vmem:[#allocation4 + $0x1e8] sm:$0xff]
    %v114 = vld [vmem:[#allocation4 + $0x1f0] sm:$0x3]
    %v115 = vld [vmem:[#allocation4 + $0x1f8] sm:$0x3]
    %v116 = vld [vmem:[#allocation6] sm:$0x3]
    %v118 = vlaneseq
    %v119 = vshrl.u32 %v118, 7
    %v120 = vsub.s32 0, %v119
    %v121 = vrot.slane %v116, %v120
    %v122 = vlaneseq
    %v123 = vshrl.u32 %v122, 7
    %v124 = vsub.s32 1, %v123
    %v125 = vrot.slane %v116, %v124
    %v130 = vunpack.c.l.s4 1983009808
    %v131 = vunpack.c.0.s8 %v130
    %v132 = vlaneseq
    %v133 = vshrl.u32 %v132, 7
    %v134 = vsub.s32 %v131, %v133
    %v135 = vrot.slane %v51, %v134
    %v136 = vcombine.high %v135, %v135
    %vm138 = vcmask 998400
    %v139 = vsel %vm138, %v136, 0
    %vm141 = vcmask 1041408
    %v143 = vsel %vm141, %v114, 0
    %v146 = vsel %vm141, %v115, 0
    %148 = vmatprep.subr.mxu0 %v83
    %149 = vmatpush1.msra.mxu0 %v82
    %150 = vmatprep.subr.mxu0 %v81
    %151 = vmatpush1.msra.mxu0 %v80
    %152 = vmatprep.subr.mxu0 %v79
    %153 = vmatpush1.msra.mxu0 %v78
    %154 = vmatprep.subr.mxu0 %v77
    %155 = vmatpush1.msra.mxu0 %v76
    %156 = vmatprep.subr.mxu0 %v75
    %157 = vmatpush1.msra.mxu0 %v74
    %158 = vmatprep.subr.mxu0 %v73
    %159 = vmatpush1.msra.mxu0 %v72
    %160 = vmatprep.subr.mxu0 %v71
    %161 = vmatpush1.msra.mxu0 %v70
    %162 = vmatprep.subr.mxu0 %v69
    %163 = vmatpush1.msra.mxu0 %v68
    %164 = vmatprep.subr.mxu0 %v67
    %165 = vmatpush1.msra.mxu0 %v66
    %166 = vmatprep.subr.mxu0 %v65
    %167 = vmatpush1.msra.mxu0 %v64
    %168 = vmatprep.subr.mxu0 %v63
    %169 = vmatpush1.msra.mxu0 %v62
    %170 = vmatprep.subr.mxu0 %v61
    %171 = vmatpush1.msra.mxu0 %v60
    %172 = vmatprep.subr.mxu0 %v59
    %173 = vmatpush1.msra.mxu0 %v58
    %174 = vmatprep.subr.mxu0 %v57
    %175 = vmatpush1.msra.mxu0 %v56
    %176 = vmatprep.subr.mxu0 %v55
    %177 = vmatpush1.msra.mxu0 %v54
    %178 = vmatprep.subr.mxu0 %v53
    %179 = vmatpush1.msra.mxu0 %v52
    %180 = vmatprep.subr.mxu0 %v146
    %181 = vmatpush2.msra.mxu0 %v143
    %182 = vmatprep.subr.mxu0 %v113
    %183 = vmatpush2.msra.mxu0 %v112
    %184 = vmatprep.subr.mxu0 %v111
    %185 = vmatpush2.msra.mxu0 %v110
    %186 = vmatprep.subr.mxu0 %v109
    %187 = vmatpush2.msra.mxu0 %v108
    %188 = vmatprep.subr.mxu0 %v107
    %189 = vmatpush2.msra.mxu0 %v106
    %190 = vmatprep.subr.mxu0 %v105
    %191 = vmatpush2.msra.mxu0 %v104
    %192 = vmatprep.subr.mxu0 %v103
    %193 = vmatpush2.msra.mxu0 %v102
    %194 = vmatprep.subr.mxu0 %v101
    %195 = vmatpush2.msra.mxu0 %v100
    %196 = vmatprep.subr.mxu0 %v99
    %197 = vmatpush2.msra.mxu0 %v98
    %198 = vmatprep.subr.mxu0 %v97
    %199 = vmatpush2.msra.mxu0 %v96
    %200 = vmatprep.subr.mxu0 %v95
    %201 = vmatpush2.msra.mxu0 %v94
    %202 = vmatprep.subr.mxu0 %v93
    %203 = vmatpush2.msra.mxu0 %v92
    %204 = vmatprep.subr.mxu0 %v91
    %205 = vmatpush2.msra.mxu0 %v90
    %206 = vmatprep.subr.mxu0 %v89
    %207 = vmatpush2.msra.mxu0 %v88
    %208 = vmatprep.subr.mxu0 %v87
    %209 = vmatpush2.msra.mxu0 %v86
    %210 = vmatprep.subr.mxu0 %v85
    %211 = vmatpush2.msra.mxu0 %v84
    %212 = vmatprep.mubr.f32.mxu0 %v139
    %213 = vmatmul.mubr.f32.gmra.mxu0 %v135
    %v214 = vpop.f32.mrf.mxu0
    %v215 = vadd.f32 %v121, %v214
    %v216 = vpop.f32.mrf.mxu0
    %v217 = vadd.f32 %v125, %v216
    %218 = vdwg.mxu0
    %v219 = vmax.f32 %v215, 0.0
    %v220 = vmax.f32 %v217, 0.0
    %v223 = vcombine.low %v219, %v220
    %v225 = vunpack.c.l.s4 1983009808
    %v226 = vunpack.c.0.s8 %v225
    %v227 = vlaneseq
    %v228 = vshrl.u32 %v227, 7
    %v229 = vsub.s32 %v226, %v228
    %v230 = vrot.slane %v223, %v229
    %vm232 = vcmask 994306
    %vm233 = vmor %vm232, %vm141
    %234 = vst.msk [vmem:[%s3] sm:$0xf] %vm233, %v230
    // Predicated region
    $region26: #{model2_forward.4} parent=1 // pred_check
      _
    $region27: #{model2_forward.4} parent=1 // pred_check_branch
      %236 = sbr.rel (0) target = $region29
    $region28: #{model2_forward.4} parent=1 // pred_region
      _
    $region29: #{model2_forward.4} parent=1 // pred_fallthru
      _
    // Predicated region
    $region30: #{model2_forward.4} parent=1 // pred_check
      _
    $region31: #{model2_forward.4} parent=1 // pred_check_branch
      %238 = sbr.rel (0) target = $region33
    $region32: #{model2_forward.4} parent=1 // pred_region
      _
    $region33: #{model2_forward.4} parent=1 // pred_fallthru
      _
    %239 = vsyncpa [#allocation3], 1
    %240 = vsyncpa [#allocation5], 1

// kernel: model2_forward.5
$region0: #{model2_forward.5}
  #allocation0 [shape = 'u32[]', space=smem, size = 0x4, offset = 0x4, fixed_abs, tag = 'smem constant byte address 0x4 - core index']
  #allocation1 [shape = 'u32[144,128]{1,0:T(1,128)}', space=vmem, size = 0x12000, scoped, tag = 'internal scratch']
  %s0 = inlined_call_operand.vmem [shape: f32[2,750,8], index: 0, kind: input, shape index: {}]
  %s1 = inlined_call_operand.hbm [shape: f32[2,8,750], index: 1, kind: input, shape index: {}]
  %s2 = inlined_call_operand.hbm [shape: f32[8,8], index: 2, kind: input, shape index: {}]
  %s3 = inlined_call_operand.vmem [shape: f32[8,1], index: 3, kind: input, shape index: {}]
  %s4 = inlined_call_operand.vmem [shape: f32[2,1,750], index: 4, kind: output, shape index: {}]
  %s5 = sld [smem:[#allocation0]]
  $region57: #{model2_forward.5} parent=0
    _
  %s7 = ssub.s32 1, %s5
  %s8 = scalar_select 0, %s7, %s5
  $region1: #{model2_forward.5} parent=0
    #allocation2 [shape = 'u8[49152]{0}', space=vmem, size = 0xc000, scoped, tag = 'input window, operand 1']
    #allocation3 [shape = 's32[2]{0}', space=sflag, size = 0x8, scoped, tag = 'scoped memory for model2_forward.5']
    #allocation4 [shape = 'u8[4096]{0}', space=vmem, size = 0x1000, scoped, tag = 'input window, operand 2, single buffered']
    #allocation5 [shape = 's32[1]{0}', space=sflag, size = 0x4, scoped, tag = 'scoped memory for model2_forward.5']
    %9 = vsyncpa [#allocation3], 0
    %s10 = scalar_lea.sflag [#allocation3], 1
    %11 = vsyncpa %s10, 0
    %12 = vsyncpa [#allocation5], 0
    loop: start=0, step=1, limit=4
    $region2: #{model2_forward.5} parent=1 // loop_pre_header
      _
    $region3: #{model2_forward.5} parent=1 // loop_header
      %s14 = sphi 0, %s18
      %p15 = scmp.ge.s32.totalorder %s14, 4
      %s24 = sphi 0, %s26
      %s27 = sphi 0, %s24
      %s28 = sphi 0, %s27
      %s44 = sphi 0, %s28
      %s50 = sphi 0, %s52
      %s53 = sphi 0, %s50
      %s54 = sphi 0, %s53
      %s70 = sphi 0, %s54
      %s74 = sphi 0, %s74
      %s76 = sphi 0, %s74
      %s77 = sphi 0, %s76
      %s91 = sphi 0, %s77
      %s95 = sphi 0, %s95
      %s97 = sphi 0, %s95
      %s98 = sphi 0, %s97
      %s112 = sphi 0, %s98
      %s118 = sphi 0, %s120
      %s121 = sphi 0, %s118
      %s122 = sphi 0, %s121
      %s138 = sphi 0, %s122
    $region4: #{model2_forward.5} parent=1 // loop_header_branch
      %17 = sbr.rel (%p15) target = $region8
    $region5: #{model2_forward.5} parent=1 // loop_body
      %s19 = ssub.s32 %s14, 1
      %s20 = ssub.s32 %s14, 2
      %s21 = sadd.s32 %s14, 1
      %s22 = ssub.s32 %s14, %s21
      %p23 = scmp.eq.s32.totalorder %s22, 0
      %s25 = sadd.s32 %s24, 1
      %s26 = scalar_select %p23, %s24, %s25
      %p29 = pneg %p23
      %p30 = scmp.eq.s32.totalorder %s14, 1
      %p31 = por %p29, %p30
      %p32 = scmp.ne.s32.totalorder %s24, %s27
      %p33 = scmp.eq.s32.totalorder %s14, 0
      %p34 = por %p32, %p33
      %p35 = scmp.ne.s32.totalorder %s24, %s27
      %p36 = scmp.eq.s32.totalorder %s19, 1
      %p37 = por %p35, %p36
      %p38 = scmp.ne.s32.totalorder %s27, %s28
      %p39 = scmp.eq.s32.totalorder %s19, 0
      %p40 = por %p38, %p39
      %p41 = scmp.ne.s32.totalorder %s27, %s28
      %p42 = scmp.eq.s32.totalorder %s20, 1
      %p43 = por %p41, %p42
      %p45 = scmp.ne.s32.totalorder %s28, %s44
      %p46 = scmp.eq.s32.totalorder %s20, 0
      %p47 = por %p45, %p46
      %s48 = ssub.s32 %s14, %s21
      %p49 = scmp.eq.s32.totalorder %s48, 0
      %s51 = sadd.s32 %s50, 1
      %s52 = scalar_select %p49, %s50, %s51
      %p55 = pneg %p49
      %p56 = scmp.eq.s32.totalorder %s14, 1
      %p57 = por %p55, %p56
      %p58 = scmp.ne.s32.totalorder %s50, %s53
      %p59 = scmp.eq.s32.totalorder %s14, 0
      %p60 = por %p58, %p59
      %p61 = scmp.ne.s32.totalorder %s50, %s53
      %p62 = scmp.eq.s32.totalorder %s19, 1
      %p63 = por %p61, %p62
      %p64 = scmp.ne.s32.totalorder %s53, %s54
      %p65 = scmp.eq.s32.totalorder %s19, 0
      %p66 = por %p64, %p65
      %p67 = scmp.ne.s32.totalorder %s53, %s54
      %p68 = scmp.eq.s32.totalorder %s20, 1
      %p69 = por %p67, %p68
      %p71 = scmp.ne.s32.totalorder %s54, %s70
      %p72 = scmp.eq.s32.totalorder %s20, 0
      %p73 = por %p71, %p72
      %s75 = sadd.s32 %s74, 1
      %p78 = scmp.eq.s32.totalorder %s14, 1
      %p79 = scmp.ne.s32.totalorder %s74, %s76
      %p80 = scmp.eq.s32.totalorder %s14, 0
      %p81 = por %p79, %p80
      %p82 = scmp.ne.s32.totalorder %s74, %s76
      %p83 = scmp.eq.s32.totalorder %s19, 1
      %p84 = por %p82, %p83
      %p85 = scmp.ne.s32.totalorder %s76, %s77
      %p86 = scmp.eq.s32.totalorder %s19, 0
      %p87 = por %p85, %p86
      %p88 = scmp.ne.s32.totalorder %s76, %s77
      %p89 = scmp.eq.s32.totalorder %s20, 1
      %p90 = por %p88, %p89
      %p92 = scmp.ne.s32.totalorder %s77, %s91
      %p93 = scmp.eq.s32.totalorder %s20, 0
      %p94 = por %p92, %p93
      %s96 = sadd.s32 %s95, 1
      %p99 = scmp.eq.s32.totalorder %s14, 1
      %p100 = scmp.ne.s32.totalorder %s95, %s97
      %p101 = scmp.eq.s32.totalorder %s14, 0
      %p102 = por %p100, %p101
      %p103 = scmp.ne.s32.totalorder %s95, %s97
      %p104 = scmp.eq.s32.totalorder %s19, 1
      %p105 = por %p103, %p104
      %p106 = scmp.ne.s32.totalorder %s97, %s98
      %p107 = scmp.eq.s32.totalorder %s19, 0
      %p108 = por %p106, %p107
      %p109 = scmp.ne.s32.totalorder %s97, %s98
      %p110 = scmp.eq.s32.totalorder %s20, 1
      %p111 = por %p109, %p110
      %p113 = scmp.ne.s32.totalorder %s98, %s112
      %p114 = scmp.eq.s32.totalorder %s20, 0
      %p115 = por %p113, %p114
      %s116 = ssub.s32 %s14, %s21
      %p117 = scmp.eq.s32.totalorder %s116, 0
      %s119 = sadd.s32 %s118, 1
      %s120 = scalar_select %p117, %s118, %s119
      %p123 = pneg %p117
      %p124 = scmp.eq.s32.totalorder %s14, 1
      %p125 = por %p123, %p124
      %p126 = scmp.ne.s32.totalorder %s118, %s121
      %p127 = scmp.eq.s32.totalorder %s14, 0
      %p128 = por %p126, %p127
      %p129 = scmp.ne.s32.totalorder %s118, %s121
      %p130 = scmp.eq.s32.totalorder %s19, 1
      %p131 = por %p129, %p130
      %p132 = scmp.ne.s32.totalorder %s121, %s122
      %p133 = scmp.eq.s32.totalorder %s19, 0
      %p134 = por %p132, %p133
      %p135 = scmp.ne.s32.totalorder %s121, %s122
      %p136 = scmp.eq.s32.totalorder %s20, 1
      %p137 = por %p135, %p136
      %p139 = scmp.ne.s32.totalorder %s122, %s138
      %p140 = scmp.eq.s32.totalorder %s20, 0
      %p141 = por %p139, %p140
      %p142 = scmp.le.s32.totalorder 1, %s14
      %p143 = scmp.lt.s32.totalorder %s14, 3
      %p144 = pnand %p142, %p143
      %p145 = pneg %p144
      // Predicated region
      $region9: #{model2_forward.5} parent=5 // pred_check
        _
      $region10: #{model2_forward.5} parent=5 // pred_check_branch
        %147 = sbr.rel (%p144) target = $region12
      $region11: #{model2_forward.5} parent=5 // pred_region
        %s148 = ssub.s32 %s14, 1
        // Predicated region
        $region13: #{model2_forward.5} parent=11 // pred_check
          %p149 = pneg %p87
        $region14: #{model2_forward.5} parent=11 // pred_check_branch
          %151 = sbr.rel (%p149) target = $region16
        $region15: #{model2_forward.5} parent=11 // pred_region
          %s153 = ssub.s32 128, 128
          %154 = vsyncadd [#allocation5], %s153
          %s156 = sshll.u32 [#allocation4], 4
          %s157 = int_to_ptr.vmem [resolvable:$true] %s156
          %159 = dma.hbm_to_vmem [thread:$0]  %s2, 128, %s157, [#allocation5]
        $region16: #{model2_forward.5} parent=11 // pred_fallthru
          _
        // Predicated region
        $region17: #{model2_forward.5} parent=11 // pred_check
          %p160 = pneg %p108
        $region18: #{model2_forward.5} parent=11 // pred_check_branch
          %162 = sbr.rel (%p160) target = $region20
        $region19: #{model2_forward.5} parent=11 // pred_region
          _
        $region20: #{model2_forward.5} parent=11 // pred_fallthru
          _
      $region12: #{model2_forward.5} parent=5 // pred_fallthru
        _
      %p163 = scmp.lt.s32.totalorder %s14, 2
      // Predicated region
      $region21: #{model2_forward.5} parent=5 // pred_check
        %p164 = pneg %p163
      $region22: #{model2_forward.5} parent=5 // pred_check_branch
        %166 = sbr.rel (%p164) target = $region24
      $region23: #{model2_forward.5} parent=5 // pred_region
        // Predicated region
        $region25: #{model2_forward.5} parent=23 // pred_check
          %p167 = pneg %p34
        $region26: #{model2_forward.5} parent=23 // pred_check_branch
          %169 = sbr.rel (%p167) target = $region28
        $region27: #{model2_forward.5} parent=23 // pred_region
          %p170 = scmp.lt.s32.totalorder %s14, 1
          %s171 = scalar_select %p170, %s14, 1
          %s172 = smul.addr %s171, 94
          %s173 = smul.addr %s172, 8
          %s174 = scalar_lea.vmem %s0, %s173
        $region28: #{model2_forward.5} parent=23 // pred_fallthru
          _
        // Predicated region
        $region29: #{model2_forward.5} parent=23 // pred_check
          %p175 = pneg %p60
        $region30: #{model2_forward.5} parent=23 // pred_check_branch
          %177 = sbr.rel (%p175) target = $region32
        $region31: #{model2_forward.5} parent=23 // pred_region
          %s178 = sand.u32 %s50, 1
          %s179 = scalar_lea.sflag [#allocation3], %s178
          %s180 = sand.u32 %s50, 1
          %s181 = smul.addr %s180, 48
          %s182 = scalar_lea.vmem [#allocation2], %s181
          %s184 = ssub.s32 768, 768
          %185 = vsyncadd %s179, %s184
          %s186 = smul.addr %s14, 6
          %s187 = smul.addr %s186, 128
          %s188 = scalar_lea.hbm %s1, %s187
          %s190 = sshll.u32 %s182, 4
          %s191 = int_to_ptr.vmem [resolvable:$true] %s190
          %193 = dma.hbm_to_vmem [thread:$0]  %s188, 768, %s191, %s179
        $region32: #{model2_forward.5} parent=23 // pred_fallthru
          _
      $region24: #{model2_forward.5} parent=5 // pred_fallthru
        _
      %p194 = scmp.le.s32.totalorder 1, %s14
      %p195 = scmp.lt.s32.totalorder %s14, 3
      %p196 = pnand %p194, %p195
      %p197 = pneg %p196
      // Predicated region
      $region33: #{model2_forward.5} parent=5 // pred_check
        _
      $region34: #{model2_forward.5} parent=5 // pred_check_branch
        %199 = sbr.rel (%p196) target = $region36
      $region35: #{model2_forward.5} parent=5 // pred_region
        %s200 = ssub.s32 %s14, 1
        %s201 = sand.u32 %s53, 1
        %s202 = scalar_lea.sflag [#allocation3], %s201
        %s203 = sand.u32 %s53, 1
        %s204 = smul.addr %s203, 48
        %s205 = scalar_lea.vmem [#allocation2], %s204
        // Predicated region
        $region37: #{model2_forward.5} parent=35 // pred_check
          %p206 = pneg %p66
        $region38: #{model2_forward.5} parent=35 // pred_check_branch
          %208 = sbr.rel (%p206) target = $region40
        $region39: #{model2_forward.5} parent=35 // pred_region
          %209 = dma.done %s202, 768
        $region40: #{model2_forward.5} parent=35 // pred_fallthru
          _
        // Predicated region
        $region41: #{model2_forward.5} parent=35 // pred_check
          %p210 = pneg %p87
        $region42: #{model2_forward.5} parent=35 // pred_check_branch
          %212 = sbr.rel (%p210) target = $region44
        $region43: #{model2_forward.5} parent=35 // pred_region
          %213 = dma.done [#allocation5], 128
        $region44: #{model2_forward.5} parent=35 // pred_fallthru
          _
        %p214 = scmp.lt.s32.totalorder %s19, 1
        %s215 = scalar_select %p214, %s19, 1
        %s216 = smul.addr %s215, 94
        %s217 = smul.addr %s216, 8
        %s218 = scalar_lea.vmem %s0, %s217
        %p219 = pneg %p40
        %p220 = pneg %p37
        %s221 = sand.u32 %s53, 1
        %s222 = scalar_lea.sflag [#allocation3], %s221
        %s223 = sand.u32 %s53, 1
        %s224 = smul.addr %s223, 48
        %s225 = scalar_lea.vmem [#allocation2], %s224
        %p226 = pneg %p66
        %p227 = pneg %p63
        %p228 = pneg %p87
        %p229 = pneg %p84
        %p230 = pneg %p108
        %p231 = pneg %p105
        %p232 = pneg %p134
        %p233 = pneg %p131
        %p234 = scmp.lt.s32.totalorder %s19, 1
        %s235 = scalar_select %p234, %s19, 1
        %s236 = smul.addr %s235, 6
        %s237 = scalar_lea.vmem %s4, %s236
        %p238 = scmp.lt.s32.totalorder %s19, 1
        %s239 = scalar_select %p238, %s19, 1
        %s240 = smul.addr %s239, 94
        %s241 = smul.addr %s240, 8
        %s242 = scalar_lea.vmem %s0, %s241
        %p243 = scmp.lt.s32.totalorder %s19, 1
        %s244 = scalar_select %p243, %s19, 1
        %s245 = smul.addr %s244, 6
        %s246 = scalar_lea.vmem %s4, %s245
        %v249 = vld [vmem:[%s242] sm:$0xff]
        %v250 = vld [vmem:[%s242 + $0x8] sm:$0xff]
        %v251 = vld [vmem:[%s242 + $0x10] sm:$0xff]
        %v252 = vld [vmem:[%s242 + $0x18] sm:$0xff]
        %v253 = vld [vmem:[%s242 + $0x20] sm:$0xff]
        %v254 = vld [vmem:[%s242 + $0x28] sm:$0xff]
        %v255 = vld [vmem:[%s242 + $0x30] sm:$0xff]
        %v256 = vld [vmem:[%s242 + $0x38] sm:$0xff]
        %v257 = vld [vmem:[%s242 + $0x40] sm:$0xff]
        %v258 = vld [vmem:[%s242 + $0x48] sm:$0xff]
        %v259 = vld [vmem:[%s242 + $0x50] sm:$0xff]
        %v260 = vld [vmem:[%s242 + $0x58] sm:$0xff]
        %v261 = vld [vmem:[%s242 + $0x60] sm:$0xff]
        %v262 = vld [vmem:[%s242 + $0x68] sm:$0xff]
        %v263 = vld [vmem:[%s242 + $0x70] sm:$0xff]
        %v264 = vld [vmem:[%s242 + $0x78] sm:$0xff]
        %v265 = vld [vmem:[%s242 + $0x80] sm:$0xff]
        %v266 = vld [vmem:[%s242 + $0x88] sm:$0xff]
        %v267 = vld [vmem:[%s242 + $0x90] sm:$0xff]
        %v268 = vld [vmem:[%s242 + $0x98] sm:$0xff]
        %v269 = vld [vmem:[%s242 + $0xa0] sm:$0xff]
        %v270 = vld [vmem:[%s242 + $0xa8] sm:$0xff]
        %v271 = vld [vmem:[%s242 + $0xb0] sm:$0xff]
        %v272 = vld [vmem:[%s242 + $0xb8] sm:$0xff]
        %v273 = vld [vmem:[%s242 + $0xc0] sm:$0xff]
        %v274 = vld [vmem:[%s242 + $0xc8] sm:$0xff]
        %v275 = vld [vmem:[%s242 + $0xd0] sm:$0xff]
        %v276 = vld [vmem:[%s242 + $0xd8] sm:$0xff]
        %v277 = vld [vmem:[%s242 + $0xe0] sm:$0xff]
        %v278 = vld [vmem:[%s242 + $0xe8] sm:$0xff]
        %v279 = vld [vmem:[%s242 + $0xf0] sm:$0xff]
        %v280 = vld [vmem:[%s242 + $0xf8] sm:$0xff]
        %v281 = vld [vmem:[%s242 + $0x100] sm:$0xff]
        %v282 = vld [vmem:[%s242 + $0x108] sm:$0xff]
        %v283 = vld [vmem:[%s242 + $0x110] sm:$0xff]
        %v284 = vld [vmem:[%s242 + $0x118] sm:$0xff]
        %v285 = vld [vmem:[%s242 + $0x120] sm:$0xff]
        %v286 = vld [vmem:[%s242 + $0x128] sm:$0xff]
        %v287 = vld [vmem:[%s242 + $0x130] sm:$0xff]
        %v288 = vld [vmem:[%s242 + $0x138] sm:$0xff]
        %v289 = vld [vmem:[%s242 + $0x140] sm:$0xff]
        %v290 = vld [vmem:[%s242 + $0x148] sm:$0xff]
        %v291 = vld [vmem:[%s242 + $0x150] sm:$0xff]
        %v292 = vld [vmem:[%s242 + $0x158] sm:$0xff]
        %v293 = vld [vmem:[%s242 + $0x160] sm:$0xff]
        %v294 = vld [vmem:[%s242 + $0x168] sm:$0xff]
        %v295 = vld [vmem:[%s242 + $0x170] sm:$0xff]
        %v296 = vld [vmem:[%s242 + $0x178] sm:$0xff]
        %v297 = vld [vmem:[%s242 + $0x180] sm:$0xff]
        %v298 = vld [vmem:[%s242 + $0x188] sm:$0xff]
        %v299 = vld [vmem:[%s242 + $0x190] sm:$0xff]
        %v300 = vld [vmem:[%s242 + $0x198] sm:$0xff]
        %v301 = vld [vmem:[%s242 + $0x1a0] sm:$0xff]
        %v302 = vld [vmem:[%s242 + $0x1a8] sm:$0xff]
        %v303 = vld [vmem:[%s242 + $0x1b0] sm:$0xff]
        %v304 = vld [vmem:[%s242 + $0x1b8] sm:$0xff]
        %v305 = vld [vmem:[%s242 + $0x1c0] sm:$0xff]
        %v306 = vld [vmem:[%s242 + $0x1c8] sm:$0xff]
        %v307 = vld [vmem:[%s242 + $0x1d0] sm:$0xff]
        %v308 = vld [vmem:[%s242 + $0x1d8] sm:$0xff]
        %v309 = vld [vmem:[%s242 + $0x1e0] sm:$0xff]
        %v310 = vld [vmem:[%s242 + $0x1e8] sm:$0xff]
        %v311 = vld [vmem:[%s242 + $0x1f0] sm:$0xff]
        %v312 = vld [vmem:[%s242 + $0x1f8] sm:$0xff]
        %v313 = vld [vmem:[%s242 + $0x200] sm:$0xff]
        %v314 = vld [vmem:[%s242 + $0x208] sm:$0xff]
        %v315 = vld [vmem:[%s242 + $0x210] sm:$0xff]
        %v316 = vld [vmem:[%s242 + $0x218] sm:$0xff]
        %v317 = vld [vmem:[%s242 + $0x220] sm:$0xff]
        %v318 = vld [vmem:[%s242 + $0x228] sm:$0xff]
        %v319 = vld [vmem:[%s242 + $0x230] sm:$0xff]
        %v320 = vld [vmem:[%s242 + $0x238] sm:$0xff]
        %v321 = vld [vmem:[%s242 + $0x240] sm:$0xff]
        %v322 = vld [vmem:[%s242 + $0x248] sm:$0xff]
        %v323 = vld [vmem:[%s242 + $0x250] sm:$0xff]
        %v324 = vld [vmem:[%s242 + $0x258] sm:$0xff]
        %v325 = vld [vmem:[%s242 + $0x260] sm:$0xff]
        %v326 = vld [vmem:[%s242 + $0x268] sm:$0xff]
        %v327 = vld [vmem:[%s242 + $0x270] sm:$0xff]
        %v328 = vld [vmem:[%s242 + $0x278] sm:$0xff]
        %v329 = vld [vmem:[%s242 + $0x280] sm:$0xff]
        %v330 = vld [vmem:[%s242 + $0x288] sm:$0xff]
        %v331 = vld [vmem:[%s242 + $0x290] sm:$0xff]
        %v332 = vld [vmem:[%s242 + $0x298] sm:$0xff]
        %v333 = vld [vmem:[%s242 + $0x2a0] sm:$0xff]
        %v334 = vld [vmem:[%s242 + $0x2a8] sm:$0xff]
        %v335 = vld [vmem:[%s242 + $0x2b0] sm:$0xff]
        %v336 = vld [vmem:[%s242 + $0x2b8] sm:$0xff]
        %v337 = vld [vmem:[%s242 + $0x2c0] sm:$0xff]
        %v338 = vld [vmem:[%s242 + $0x2c8] sm:$0xff]
        %v339 = vld [vmem:[%s242 + $0x2d0] sm:$0xff]
        %v340 = vld [vmem:[%s242 + $0x2d8] sm:$0xff]
        %v341 = vld [vmem:[%s242 + $0x2e0] sm:$0xff]
        %v342 = vld [vmem:[%s242 + $0x2e8] sm:$0x3f]
        %v343 = vld [vmem:[%s205] sm:$0xff]
        %v344 = vld [vmem:[%s205 + $0x8] sm:$0xff]
        %v345 = vld [vmem:[%s205 + $0x10] sm:$0xff]
        %v346 = vld [vmem:[%s205 + $0x18] sm:$0xff]
        %v347 = vld [vmem:[%s205 + $0x20] sm:$0xff]
        %v348 = vld [vmem:[%s205 + $0x28] sm:$0xff]
        %350 = vset.pattern.permute.xlu0 0
        %351 = vperm.xlu0 %350, %v249
        %v352 = vpop.permute.xlu0 %351
        %355 = vset.pattern.permute.xlu0 0
        %356 = vperm.xlu0 %355, %v250
        %v357 = vpop.permute.xlu0 %356
        %360 = vset.pattern.permute.xlu0 0
        %361 = vperm.xlu0 %360, %v251
        %v362 = vpop.permute.xlu0 %361
        %365 = vset.pattern.permute.xlu0 0
        %366 = vperm.xlu0 %365, %v252
        %v367 = vpop.permute.xlu0 %366
        %370 = vset.pattern.permute.xlu0 0
        %371 = vperm.xlu0 %370, %v253
        %v372 = vpop.permute.xlu0 %371
        %375 = vset.pattern.permute.xlu0 0
        %376 = vperm.xlu0 %375, %v254
        %v377 = vpop.permute.xlu0 %376
        %380 = vset.pattern.permute.xlu0 0
        %381 = vperm.xlu0 %380, %v255
        %v382 = vpop.permute.xlu0 %381
        %385 = vset.pattern.permute.xlu0 0
        %386 = vperm.xlu0 %385, %v256
        %v387 = vpop.permute.xlu0 %386
        %390 = vset.pattern.permute.xlu0 0
        %391 = vperm.xlu0 %390, %v257
        %v392 = vpop.permute.xlu0 %391
        %395 = vset.pattern.permute.xlu0 0
        %396 = vperm.xlu0 %395, %v258
        %v397 = vpop.permute.xlu0 %396
        %400 = vset.pattern.permute.xlu0 0
        %401 = vperm.xlu0 %400, %v259
        %v402 = vpop.permute.xlu0 %401
        %405 = vset.pattern.permute.xlu0 0
        %406 = vperm.xlu0 %405, %v260
        %v407 = vpop.permute.xlu0 %406
        %410 = vset.pattern.permute.xlu0 0
        %411 = vperm.xlu0 %410, %v261
        %v412 = vpop.permute.xlu0 %411
        %415 = vset.pattern.permute.xlu0 0
        %416 = vperm.xlu0 %415, %v262
        %v417 = vpop.permute.xlu0 %416
        %420 = vset.pattern.permute.xlu0 0
        %421 = vperm.xlu0 %420, %v263
        %v422 = vpop.permute.xlu0 %421
        %425 = vset.pattern.permute.xlu0 0
        %426 = vperm.xlu0 %425, %v264
        %v427 = vpop.permute.xlu0 %426
        %430 = vset.pattern.permute.xlu0 0
        %431 = vperm.xlu0 %430, %v265
        %v432 = vpop.permute.xlu0 %431
        %435 = vset.pattern.permute.xlu0 0
        %436 = vperm.xlu0 %435, %v266
        %v437 = vpop.permute.xlu0 %436
        %440 = vset.pattern.permute.xlu0 0
        %441 = vperm.xlu0 %440, %v267
        %v442 = vpop.permute.xlu0 %441
        %445 = vset.pattern.permute.xlu0 0
        %446 = vperm.xlu0 %445, %v268
        %v447 = vpop.permute.xlu0 %446
        %450 = vset.pattern.permute.xlu0 0
        %451 = vperm.xlu0 %450, %v269
        %v452 = vpop.permute.xlu0 %451
        %455 = vset.pattern.permute.xlu0 0
        %456 = vperm.xlu0 %455, %v270
        %v457 = vpop.permute.xlu0 %456
        %460 = vset.pattern.permute.xlu0 0
        %461 = vperm.xlu0 %460, %v271
        %v462 = vpop.permute.xlu0 %461
        %465 = vset.pattern.permute.xlu0 0
        %466 = vperm.xlu0 %465, %v272
        %v467 = vpop.permute.xlu0 %466
        %470 = vset.pattern.permute.xlu0 0
        %471 = vperm.xlu0 %470, %v273
        %v472 = vpop.permute.xlu0 %471
        %475 = vset.pattern.permute.xlu0 0
        %476 = vperm.xlu0 %475, %v274
        %v477 = vpop.permute.xlu0 %476
        %480 = vset.pattern.permute.xlu0 0
        %481 = vperm.xlu0 %480, %v275
        %v482 = vpop.permute.xlu0 %481
        %485 = vset.pattern.permute.xlu0 0
        %486 = vperm.xlu0 %485, %v276
        %v487 = vpop.permute.xlu0 %486
        %490 = vset.pattern.permute.xlu0 0
        %491 = vperm.xlu0 %490, %v277
        %v492 = vpop.permute.xlu0 %491
        %495 = vset.pattern.permute.xlu0 0
        %496 = vperm.xlu0 %495, %v278
        %v497 = vpop.permute.xlu0 %496
        %500 = vset.pattern.permute.xlu0 0
        %501 = vperm.xlu0 %500, %v279
        %v502 = vpop.permute.xlu0 %501
        %505 = vset.pattern.permute.xlu0 0
        %506 = vperm.xlu0 %505, %v280
        %v507 = vpop.permute.xlu0 %506
        %510 = vset.pattern.permute.xlu0 0
        %511 = vperm.xlu0 %510, %v281
        %v512 = vpop.permute.xlu0 %511
        %515 = vset.pattern.permute.xlu0 0
        %516 = vperm.xlu0 %515, %v282
        %v517 = vpop.permute.xlu0 %516
        %520 = vset.pattern.permute.xlu0 0
        %521 = vperm.xlu0 %520, %v283
        %v522 = vpop.permute.xlu0 %521
        %525 = vset.pattern.permute.xlu0 0
        %526 = vperm.xlu0 %525, %v284
        %v527 = vpop.permute.xlu0 %526
        %530 = vset.pattern.permute.xlu0 0
        %531 = vperm.xlu0 %530, %v285
        %v532 = vpop.permute.xlu0 %531
        %535 = vset.pattern.permute.xlu0 0
        %536 = vperm.xlu0 %535, %v286
        %v537 = vpop.permute.xlu0 %536
        %540 = vset.pattern.permute.xlu0 0
        %541 = vperm.xlu0 %540, %v287
        %v542 = vpop.permute.xlu0 %541
        %545 = vset.pattern.permute.xlu0 0
        %546 = vperm.xlu0 %545, %v288
        %v547 = vpop.permute.xlu0 %546
        %550 = vset.pattern.permute.xlu0 0
        %551 = vperm.xlu0 %550, %v289
        %v552 = vpop.permute.xlu0 %551
        %555 = vset.pattern.permute.xlu0 0
        %556 = vperm.xlu0 %555, %v290
        %v557 = vpop.permute.xlu0 %556
        %560 = vset.pattern.permute.xlu0 0
        %561 = vperm.xlu0 %560, %v291
        %v562 = vpop.permute.xlu0 %561
        %565 = vset.pattern.permute.xlu0 0
        %566 = vperm.xlu0 %565, %v292
        %v567 = vpop.permute.xlu0 %566
        %570 = vset.pattern.permute.xlu0 0
        %571 = vperm.xlu0 %570, %v293
        %v572 = vpop.permute.xlu0 %571
        %575 = vset.pattern.permute.xlu0 0
        %576 = vperm.xlu0 %575, %v294
        %v577 = vpop.permute.xlu0 %576
        %580 = vset.pattern.permute.xlu0 0
        %581 = vperm.xlu0 %580, %v295
        %v582 = vpop.permute.xlu0 %581
        %585 = vset.pattern.permute.xlu0 0
        %586 = vperm.xlu0 %585, %v296
        %v587 = vpop.permute.xlu0 %586
        %590 = vset.pattern.permute.xlu0 0
        %591 = vperm.xlu0 %590, %v297
        %v592 = vpop.permute.xlu0 %591
        %595 = vset.pattern.permute.xlu0 0
        %596 = vperm.xlu0 %595, %v298
        %v597 = vpop.permute.xlu0 %596
        %600 = vset.pattern.permute.xlu0 0
        %601 = vperm.xlu0 %600, %v299
        %v602 = vpop.permute.xlu0 %601
        %605 = vset.pattern.permute.xlu0 0
        %606 = vperm.xlu0 %605, %v300
        %v607 = vpop.permute.xlu0 %606
        %610 = vset.pattern.permute.xlu0 0
        %611 = vperm.xlu0 %610, %v301
        %v612 = vpop.permute.xlu0 %611
        %615 = vset.pattern.permute.xlu0 0
        %616 = vperm.xlu0 %615, %v302
        %v617 = vpop.permute.xlu0 %616
        %620 = vset.pattern.permute.xlu0 0
        %621 = vperm.xlu0 %620, %v303
        %v622 = vpop.permute.xlu0 %621
        %625 = vset.pattern.permute.xlu0 0
        %626 = vperm.xlu0 %625, %v304
        %v627 = vpop.permute.xlu0 %626
        %630 = vset.pattern.permute.xlu0 0
        %631 = vperm.xlu0 %630, %v305
        %v632 = vpop.permute.xlu0 %631
        %635 = vset.pattern.permute.xlu0 0
        %636 = vperm.xlu0 %635, %v306
        %v637 = vpop.permute.xlu0 %636
        %640 = vset.pattern.permute.xlu0 0
        %641 = vperm.xlu0 %640, %v307
        %v642 = vpop.permute.xlu0 %641
        %645 = vset.pattern.permute.xlu0 0
        %646 = vperm.xlu0 %645, %v308
        %v647 = vpop.permute.xlu0 %646
        %650 = vset.pattern.permute.xlu0 0
        %651 = vperm.xlu0 %650, %v309
        %v652 = vpop.permute.xlu0 %651
        %655 = vset.pattern.permute.xlu0 0
        %656 = vperm.xlu0 %655, %v310
        %v657 = vpop.permute.xlu0 %656
        %660 = vset.pattern.permute.xlu0 0
        %661 = vperm.xlu0 %660, %v311
        %v662 = vpop.permute.xlu0 %661
        %665 = vset.pattern.permute.xlu0 0
        %666 = vperm.xlu0 %665, %v312
        %v667 = vpop.permute.xlu0 %666
        %670 = vset.pattern.permute.xlu0 0
        %671 = vperm.xlu0 %670, %v313
        %v672 = vpop.permute.xlu0 %671
        %675 = vset.pattern.permute.xlu0 0
        %676 = vperm.xlu0 %675, %v314
        %v677 = vpop.permute.xlu0 %676
        %680 = vset.pattern.permute.xlu0 0
        %681 = vperm.xlu0 %680, %v315
        %v682 = vpop.permute.xlu0 %681
        %685 = vset.pattern.permute.xlu0 0
        %686 = vperm.xlu0 %685, %v316
        %v687 = vpop.permute.xlu0 %686
        %690 = vset.pattern.permute.xlu0 0
        %691 = vperm.xlu0 %690, %v317
        %v692 = vpop.permute.xlu0 %691
        %695 = vset.pattern.permute.xlu0 0
        %696 = vperm.xlu0 %695, %v318
        %v697 = vpop.permute.xlu0 %696
        %700 = vset.pattern.permute.xlu0 0
        %701 = vperm.xlu0 %700, %v319
        %v702 = vpop.permute.xlu0 %701
        %705 = vset.pattern.permute.xlu0 0
        %706 = vperm.xlu0 %705, %v320
        %v707 = vpop.permute.xlu0 %706
        %710 = vset.pattern.permute.xlu0 0
        %711 = vperm.xlu0 %710, %v321
        %v712 = vpop.permute.xlu0 %711
        %715 = vset.pattern.permute.xlu0 0
        %716 = vperm.xlu0 %715, %v322
        %v717 = vpop.permute.xlu0 %716
        %720 = vset.pattern.permute.xlu0 0
        %721 = vperm.xlu0 %720, %v323
        %v722 = vpop.permute.xlu0 %721
        %725 = vset.pattern.permute.xlu0 0
        %726 = vperm.xlu0 %725, %v324
        %v727 = vpop.permute.xlu0 %726
        %730 = vset.pattern.permute.xlu0 0
        %731 = vperm.xlu0 %730, %v325
        %v732 = vpop.permute.xlu0 %731
        %735 = vset.pattern.permute.xlu0 0
        %736 = vperm.xlu0 %735, %v326
        %v737 = vpop.permute.xlu0 %736
        %740 = vset.pattern.permute.xlu0 0
        %741 = vperm.xlu0 %740, %v327
        %v742 = vpop.permute.xlu0 %741
        %745 = vset.pattern.permute.xlu0 0
        %746 = vperm.xlu0 %745, %v328
        %v747 = vpop.permute.xlu0 %746
        %750 = vset.pattern.permute.xlu0 0
        %751 = vperm.xlu0 %750, %v329
        %v752 = vpop.permute.xlu0 %751
        %755 = vset.pattern.permute.xlu0 0
        %756 = vperm.xlu0 %755, %v330
        %v757 = vpop.permute.xlu0 %756
        %760 = vset.pattern.permute.xlu0 0
        %761 = vperm.xlu0 %760, %v331
        %v762 = vpop.permute.xlu0 %761
        %765 = vset.pattern.permute.xlu0 0
        %766 = vperm.xlu0 %765, %v332
        %v767 = vpop.permute.xlu0 %766
        %770 = vset.pattern.permute.xlu0 0
        %771 = vperm.xlu0 %770, %v333
        %v772 = vpop.permute.xlu0 %771
        %775 = vset.pattern.permute.xlu0 0
        %776 = vperm.xlu0 %775, %v334
        %v777 = vpop.permute.xlu0 %776
        %780 = vset.pattern.permute.xlu0 0
        %781 = vperm.xlu0 %780, %v335
        %v782 = vpop.permute.xlu0 %781
        %785 = vset.pattern.permute.xlu0 0
        %786 = vperm.xlu0 %785, %v336
        %v787 = vpop.permute.xlu0 %786
        %790 = vset.pattern.permute.xlu0 0
        %791 = vperm.xlu0 %790, %v337
        %v792 = vpop.permute.xlu0 %791
        %795 = vset.pattern.permute.xlu0 0
        %796 = vperm.xlu0 %795, %v338
        %v797 = vpop.permute.xlu0 %796
        %800 = vset.pattern.permute.xlu0 0
        %801 = vperm.xlu0 %800, %v339
        %v802 = vpop.permute.xlu0 %801
        %805 = vset.pattern.permute.xlu0 0
        %806 = vperm.xlu0 %805, %v340
        %v807 = vpop.permute.xlu0 %806
        %810 = vset.pattern.permute.xlu0 0
        %811 = vperm.xlu0 %810, %v341
        %v812 = vpop.permute.xlu0 %811
        %815 = vset.pattern.permute.xlu0 0
        %816 = vperm.xlu0 %815, %v342
        %v817 = vpop.permute.xlu0 %816
        %v819 = vlaneseq
        %v820 = vshrl.u32 %v819, 7
        %v821 = vsub.s32 0, %v820
        %v822 = vrot.slane %v343, %v821
        %v823 = vlaneseq
        %v824 = vshrl.u32 %v823, 7
        %v825 = vsub.s32 0, %v824
        %v826 = vrot.slane %v344, %v825
        %v827 = vlaneseq
        %v828 = vshrl.u32 %v827, 7
        %v829 = vsub.s32 0, %v828
        %v830 = vrot.slane %v345, %v829
        %v831 = vlaneseq
        %v832 = vshrl.u32 %v831, 7
        %v833 = vsub.s32 0, %v832
        %v834 = vrot.slane %v346, %v833
        %v835 = vlaneseq
        %v836 = vshrl.u32 %v835, 7
        %v837 = vsub.s32 0, %v836
        %v838 = vrot.slane %v347, %v837
        %v839 = vlaneseq
        %v840 = vshrl.u32 %v839, 7
        %v841 = vsub.s32 0, %v840
        %v842 = vrot.slane %v348, %v841
        %v843 = vsub.f32 %v352, %v822
        %v844 = vsub.f32 %v352, %v826
        %v845 = vsub.f32 %v352, %v830
        %v846 = vsub.f32 %v352, %v834
        %v847 = vsub.f32 %v352, %v838
        %v848 = vsub.f32 %v352, %v842
        %v849 = vsub.f32 %v357, %v822
        %v850 = vsub.f32 %v357, %v826
        %v851 = vsub.f32 %v357, %v830
        %v852 = vsub.f32 %v357, %v834
        %v853 = vsub.f32 %v357, %v838
        %v854 = vsub.f32 %v357, %v842
        %v855 = vsub.f32 %v362, %v822
        %v856 = vsub.f32 %v362, %v826
        %v857 = vsub.f32 %v362, %v830
        %v858 = vsub.f32 %v362, %v834
        %v859 = vsub.f32 %v362, %v838
        %v860 = vsub.f32 %v362, %v842
        %v861 = vsub.f32 %v367, %v822
        %v862 = vsub.f32 %v367, %v826
        %v863 = vsub.f32 %v367, %v830
        %v864 = vsub.f32 %v367, %v834
        %v865 = vsub.f32 %v367, %v838
        %v866 = vsub.f32 %v367, %v842
        %v867 = vsub.f32 %v372, %v822
        %v868 = vsub.f32 %v372, %v826
        %v869 = vsub.f32 %v372, %v830
        %v870 = vsub.f32 %v372, %v834
        %v871 = vsub.f32 %v372, %v838
        %v872 = vsub.f32 %v372, %v842
        %v873 = vsub.f32 %v377, %v822
        %v874 = vsub.f32 %v377, %v826
        %v875 = vsub.f32 %v377, %v830
        %v876 = vsub.f32 %v377, %v834
        %v877 = vsub.f32 %v377, %v838
        %v878 = vsub.f32 %v377, %v842
        %v879 = vsub.f32 %v382, %v822
        %v880 = vsub.f32 %v382, %v826
        %v881 = vsub.f32 %v382, %v830
        %v882 = vsub.f32 %v382, %v834
        %v883 = vsub.f32 %v382, %v838
        %v884 = vsub.f32 %v382, %v842
        %v885 = vsub.f32 %v387, %v822
        %v886 = vsub.f32 %v387, %v826
        %v887 = vsub.f32 %v387, %v830
        %v888 = vsub.f32 %v387, %v834
        %v889 = vsub.f32 %v387, %v838
        %v890 = vsub.f32 %v387, %v842
        %v891 = vsub.f32 %v392, %v822
        %v892 = vsub.f32 %v392, %v826
        %v893 = vsub.f32 %v392, %v830
        %v894 = vsub.f32 %v392, %v834
        %v895 = vsub.f32 %v392, %v838
        %v896 = vsub.f32 %v392, %v842
        %v897 = vsub.f32 %v397, %v822
        %v898 = vsub.f32 %v397, %v826
        %v899 = vsub.f32 %v397, %v830
        %v900 = vsub.f32 %v397, %v834
        %v901 = vsub.f32 %v397, %v838
        %v902 = vsub.f32 %v397, %v842
        %v903 = vsub.f32 %v402, %v822
        %v904 = vsub.f32 %v402, %v826
        %v905 = vsub.f32 %v402, %v830
        %v906 = vsub.f32 %v402, %v834
        %v907 = vsub.f32 %v402, %v838
        %v908 = vsub.f32 %v402, %v842
        %v909 = vsub.f32 %v407, %v822
        %v910 = vsub.f32 %v407, %v826
        %v911 = vsub.f32 %v407, %v830
        %v912 = vsub.f32 %v407, %v834
        %v913 = vsub.f32 %v407, %v838
        %v914 = vsub.f32 %v407, %v842
        %v915 = vsub.f32 %v412, %v822
        %v916 = vsub.f32 %v412, %v826
        %v917 = vsub.f32 %v412, %v830
        %v918 = vsub.f32 %v412, %v834
        %v919 = vsub.f32 %v412, %v838
        %v920 = vsub.f32 %v412, %v842
        %v921 = vsub.f32 %v417, %v822
        %v922 = vsub.f32 %v417, %v826
        %v923 = vsub.f32 %v417, %v830
        %v924 = vsub.f32 %v417, %v834
        %v925 = vsub.f32 %v417, %v838
        %v926 = vsub.f32 %v417, %v842
        %v927 = vsub.f32 %v422, %v822
        %v928 = vsub.f32 %v422, %v826
        %v929 = vsub.f32 %v422, %v830
        %v930 = vsub.f32 %v422, %v834
        %v931 = vsub.f32 %v422, %v838
        %v932 = vsub.f32 %v422, %v842
        %v933 = vsub.f32 %v427, %v822
        %v934 = vsub.f32 %v427, %v826
        %v935 = vsub.f32 %v427, %v830
        %v936 = vsub.f32 %v427, %v834
        %v937 = vsub.f32 %v427, %v838
        %v938 = vsub.f32 %v427, %v842
        %v939 = vsub.f32 %v432, %v822
        %v940 = vsub.f32 %v432, %v826
        %v941 = vsub.f32 %v432, %v830
        %v942 = vsub.f32 %v432, %v834
        %v943 = vsub.f32 %v432, %v838
        %v944 = vsub.f32 %v432, %v842
        %v945 = vsub.f32 %v437, %v822
        %v946 = vsub.f32 %v437, %v826
        %v947 = vsub.f32 %v437, %v830
        %v948 = vsub.f32 %v437, %v834
        %v949 = vsub.f32 %v437, %v838
        %v950 = vsub.f32 %v437, %v842
        %v951 = vsub.f32 %v442, %v822
        %v952 = vsub.f32 %v442, %v826
        %v953 = vsub.f32 %v442, %v830
        %v954 = vsub.f32 %v442, %v834
        %v955 = vsub.f32 %v442, %v838
        %v956 = vsub.f32 %v442, %v842
        %v957 = vsub.f32 %v447, %v822
        %v958 = vsub.f32 %v447, %v826
        %v959 = vsub.f32 %v447, %v830
        %v960 = vsub.f32 %v447, %v834
        %v961 = vsub.f32 %v447, %v838
        %v962 = vsub.f32 %v447, %v842
        %v963 = vsub.f32 %v452, %v822
        %v964 = vsub.f32 %v452, %v826
        %v965 = vsub.f32 %v452, %v830
        %v966 = vsub.f32 %v452, %v834
        %v967 = vsub.f32 %v452, %v838
        %v968 = vsub.f32 %v452, %v842
        %v969 = vsub.f32 %v457, %v822
        %v970 = vsub.f32 %v457, %v826
        %v971 = vsub.f32 %v457, %v830
        %v972 = vsub.f32 %v457, %v834
        %v973 = vsub.f32 %v457, %v838
        %v974 = vsub.f32 %v457, %v842
        %v975 = vsub.f32 %v462, %v822
        %v976 = vsub.f32 %v462, %v826
        %v977 = vsub.f32 %v462, %v830
        %v978 = vsub.f32 %v462, %v834
        %v979 = vsub.f32 %v462, %v838
        %v980 = vsub.f32 %v462, %v842
        %v981 = vsub.f32 %v467, %v822
        %v982 = vsub.f32 %v467, %v826
        %v983 = vsub.f32 %v467, %v830
        %v984 = vsub.f32 %v467, %v834
        %v985 = vsub.f32 %v467, %v838
        %v986 = vsub.f32 %v467, %v842
        %v987 = vsub.f32 %v472, %v822
        %v988 = vsub.f32 %v472, %v826
        %v989 = vsub.f32 %v472, %v830
        %v990 = vsub.f32 %v472, %v834
        %v991 = vsub.f32 %v472, %v838
        %v992 = vsub.f32 %v472, %v842
        %v993 = vsub.f32 %v477, %v822
        %v994 = vsub.f32 %v477, %v826
        %v995 = vsub.f32 %v477, %v830
        %v996 = vsub.f32 %v477, %v834
        %v997 = vsub.f32 %v477, %v838
        %v998 = vsub.f32 %v477, %v842
        %v999 = vsub.f32 %v482, %v822
        %v1000 = vsub.f32 %v482, %v826
        %v1001 = vsub.f32 %v482, %v830
        %v1002 = vsub.f32 %v482, %v834
        %v1003 = vsub.f32 %v482, %v838
        %v1004 = vsub.f32 %v482, %v842
        %v1005 = vsub.f32 %v487, %v822
        %v1006 = vsub.f32 %v487, %v826
        %v1007 = vsub.f32 %v487, %v830
        %v1008 = vsub.f32 %v487, %v834
        %v1009 = vsub.f32 %v487, %v838
        %v1010 = vsub.f32 %v487, %v842
        %v1011 = vsub.f32 %v492, %v822
        %v1012 = vsub.f32 %v492, %v826
        %v1013 = vsub.f32 %v492, %v830
        %v1014 = vsub.f32 %v492, %v834
        %v1015 = vsub.f32 %v492, %v838
        %v1016 = vsub.f32 %v492, %v842
        %v1017 = vsub.f32 %v497, %v822
        %v1018 = vsub.f32 %v497, %v826
        %v1019 = vsub.f32 %v497, %v830
        %v1020 = vsub.f32 %v497, %v834
        %v1021 = vsub.f32 %v497, %v838
        %v1022 = vsub.f32 %v497, %v842
        %v1023 = vsub.f32 %v502, %v822
        %v1024 = vsub.f32 %v502, %v826
        %v1025 = vsub.f32 %v502, %v830
        %v1026 = vsub.f32 %v502, %v834
        %v1027 = vsub.f32 %v502, %v838
        %v1028 = vsub.f32 %v502, %v842
        %v1029 = vsub.f32 %v507, %v822
        %v1030 = vsub.f32 %v507, %v826
        %v1031 = vsub.f32 %v507, %v830
        %v1032 = vsub.f32 %v507, %v834
        %v1033 = vsub.f32 %v507, %v838
        %v1034 = vsub.f32 %v507, %v842
        %v1035 = vsub.f32 %v512, %v822
        %v1036 = vsub.f32 %v512, %v826
        %v1037 = vsub.f32 %v512, %v830
        %v1038 = vsub.f32 %v512, %v834
        %v1039 = vsub.f32 %v512, %v838
        %v1040 = vsub.f32 %v512, %v842
        %v1041 = vsub.f32 %v517, %v822
        %v1042 = vsub.f32 %v517, %v826
        %v1043 = vsub.f32 %v517, %v830
        %v1044 = vsub.f32 %v517, %v834
        %v1045 = vsub.f32 %v517, %v838
        %v1046 = vsub.f32 %v517, %v842
        %v1047 = vsub.f32 %v522, %v822
        %v1048 = vsub.f32 %v522, %v826
        %v1049 = vsub.f32 %v522, %v830
        %v1050 = vsub.f32 %v522, %v834
        %v1051 = vsub.f32 %v522, %v838
        %v1052 = vsub.f32 %v522, %v842
        %v1053 = vsub.f32 %v527, %v822
        %v1054 = vsub.f32 %v527, %v826
        %v1055 = vsub.f32 %v527, %v830
        %v1056 = vsub.f32 %v527, %v834
        %v1057 = vsub.f32 %v527, %v838
        %v1058 = vsub.f32 %v527, %v842
        %v1059 = vsub.f32 %v532, %v822
        %v1060 = vsub.f32 %v532, %v826
        %v1061 = vsub.f32 %v532, %v830
        %v1062 = vsub.f32 %v532, %v834
        %v1063 = vsub.f32 %v532, %v838
        %v1064 = vsub.f32 %v532, %v842
        %v1065 = vsub.f32 %v537, %v822
        %v1066 = vsub.f32 %v537, %v826
        %v1067 = vsub.f32 %v537, %v830
        %v1068 = vsub.f32 %v537, %v834
        %v1069 = vsub.f32 %v537, %v838
        %v1070 = vsub.f32 %v537, %v842
        %v1071 = vsub.f32 %v542, %v822
        %v1072 = vsub.f32 %v542, %v826
        %v1073 = vsub.f32 %v542, %v830
        %v1074 = vsub.f32 %v542, %v834
        %v1075 = vsub.f32 %v542, %v838
        %v1076 = vsub.f32 %v542, %v842
        %v1077 = vsub.f32 %v547, %v822
        %v1078 = vsub.f32 %v547, %v826
        %v1079 = vsub.f32 %v547, %v830
        %v1080 = vsub.f32 %v547, %v834
        %v1081 = vsub.f32 %v547, %v838
        %v1082 = vsub.f32 %v547, %v842
        %v1083 = vsub.f32 %v552, %v822
        %v1084 = vsub.f32 %v552, %v826
        %v1085 = vsub.f32 %v552, %v830
        %v1086 = vsub.f32 %v552, %v834
        %v1087 = vsub.f32 %v552, %v838
        %v1088 = vsub.f32 %v552, %v842
        %v1089 = vsub.f32 %v557, %v822
        %v1090 = vsub.f32 %v557, %v826
        %v1091 = vsub.f32 %v557, %v830
        %v1092 = vsub.f32 %v557, %v834
        %v1093 = vsub.f32 %v557, %v838
        %v1094 = vsub.f32 %v557, %v842
        %v1095 = vsub.f32 %v562, %v822
        %v1096 = vsub.f32 %v562, %v826
        %v1097 = vsub.f32 %v562, %v830
        %v1098 = vsub.f32 %v562, %v834
        %v1099 = vsub.f32 %v562, %v838
        %v1100 = vsub.f32 %v562, %v842
        %v1101 = vsub.f32 %v567, %v822
        %v1102 = vsub.f32 %v567, %v826
        %v1103 = vsub.f32 %v567, %v830
        %v1104 = vsub.f32 %v567, %v834
        %v1105 = vsub.f32 %v567, %v838
        %v1106 = vsub.f32 %v567, %v842
        %v1107 = vsub.f32 %v572, %v822
        %v1108 = vsub.f32 %v572, %v826
        %v1109 = vsub.f32 %v572, %v830
        %v1110 = vsub.f32 %v572, %v834
        %v1111 = vsub.f32 %v572, %v838
        %v1112 = vsub.f32 %v572, %v842
        %v1113 = vsub.f32 %v577, %v822
        %v1114 = vsub.f32 %v577, %v826
        %v1115 = vsub.f32 %v577, %v830
        %v1116 = vsub.f32 %v577, %v834
        %v1117 = vsub.f32 %v577, %v838
        %v1118 = vsub.f32 %v577, %v842
        %v1119 = vsub.f32 %v582, %v822
        %v1120 = vsub.f32 %v582, %v826
        %v1121 = vsub.f32 %v582, %v830
        %v1122 = vsub.f32 %v582, %v834
        %v1123 = vsub.f32 %v582, %v838
        %v1124 = vsub.f32 %v582, %v842
        %v1125 = vsub.f32 %v587, %v822
        %v1126 = vsub.f32 %v587, %v826
        %v1127 = vsub.f32 %v587, %v830
        %v1128 = vsub.f32 %v587, %v834
        %v1129 = vsub.f32 %v587, %v838
        %v1130 = vsub.f32 %v587, %v842
        %v1131 = vsub.f32 %v592, %v822
        %v1132 = vsub.f32 %v592, %v826
        %v1133 = vsub.f32 %v592, %v830
        %v1134 = vsub.f32 %v592, %v834
        %v1135 = vsub.f32 %v592, %v838
        %v1136 = vsub.f32 %v592, %v842
        %v1137 = vsub.f32 %v597, %v822
        %v1138 = vsub.f32 %v597, %v826
        %v1139 = vsub.f32 %v597, %v830
        %v1140 = vsub.f32 %v597, %v834
        %v1141 = vsub.f32 %v597, %v838
        %v1142 = vsub.f32 %v597, %v842
        %v1143 = vsub.f32 %v602, %v822
        %v1144 = vsub.f32 %v602, %v826
        %v1145 = vsub.f32 %v602, %v830
        %v1146 = vsub.f32 %v602, %v834
        %v1147 = vsub.f32 %v602, %v838
        %v1148 = vsub.f32 %v602, %v842
        %v1149 = vsub.f32 %v607, %v822
        %v1150 = vsub.f32 %v607, %v826
        %v1151 = vsub.f32 %v607, %v830
        %v1152 = vsub.f32 %v607, %v834
        %v1153 = vsub.f32 %v607, %v838
        %v1154 = vsub.f32 %v607, %v842
        %v1155 = vsub.f32 %v612, %v822
        %v1156 = vsub.f32 %v612, %v826
        %v1157 = vsub.f32 %v612, %v830
        %v1158 = vsub.f32 %v612, %v834
        %v1159 = vsub.f32 %v612, %v838
        %v1160 = vsub.f32 %v612, %v842
        %v1161 = vsub.f32 %v617, %v822
        %v1162 = vsub.f32 %v617, %v826
        %v1163 = vsub.f32 %v617, %v830
        %v1164 = vsub.f32 %v617, %v834
        %v1165 = vsub.f32 %v617, %v838
        %v1166 = vsub.f32 %v617, %v842
        %v1167 = vsub.f32 %v622, %v822
        %v1168 = vsub.f32 %v622, %v826
        %v1169 = vsub.f32 %v622, %v830
        %v1170 = vsub.f32 %v622, %v834
        %v1171 = vsub.f32 %v622, %v838
        %v1172 = vsub.f32 %v622, %v842
        %v1173 = vsub.f32 %v627, %v822
        %v1174 = vsub.f32 %v627, %v826
        %v1175 = vsub.f32 %v627, %v830
        %v1176 = vsub.f32 %v627, %v834
        %v1177 = vsub.f32 %v627, %v838
        %v1178 = vsub.f32 %v627, %v842
        %v1179 = vsub.f32 %v632, %v822
        %v1180 = vsub.f32 %v632, %v826
        %v1181 = vsub.f32 %v632, %v830
        %v1182 = vsub.f32 %v632, %v834
        %v1183 = vsub.f32 %v632, %v838
        %v1184 = vsub.f32 %v632, %v842
        %v1185 = vsub.f32 %v637, %v822
        %v1186 = vsub.f32 %v637, %v826
        %v1187 = vsub.f32 %v637, %v830
        %v1188 = vsub.f32 %v637, %v834
        %v1189 = vsub.f32 %v637, %v838
        %v1190 = vsub.f32 %v637, %v842
        %v1191 = vsub.f32 %v642, %v822
        %v1192 = vsub.f32 %v642, %v826
        %v1193 = vsub.f32 %v642, %v830
        %v1194 = vsub.f32 %v642, %v834
        %v1195 = vsub.f32 %v642, %v838
        %v1196 = vsub.f32 %v642, %v842
        %v1197 = vsub.f32 %v647, %v822
        %v1198 = vsub.f32 %v647, %v826
        %v1199 = vsub.f32 %v647, %v830
        %v1200 = vsub.f32 %v647, %v834
        %v1201 = vsub.f32 %v647, %v838
        %v1202 = vsub.f32 %v647, %v842
        %v1203 = vsub.f32 %v652, %v822
        %v1204 = vsub.f32 %v652, %v826
        %v1205 = vsub.f32 %v652, %v830
        %v1206 = vsub.f32 %v652, %v834
        %v1207 = vsub.f32 %v652, %v838
        %v1208 = vsub.f32 %v652, %v842
        %v1209 = vsub.f32 %v657, %v822
        %v1210 = vsub.f32 %v657, %v826
        %v1211 = vsub.f32 %v657, %v830
        %v1212 = vsub.f32 %v657, %v834
        %v1213 = vsub.f32 %v657, %v838
        %v1214 = vsub.f32 %v657, %v842
        %v1215 = vsub.f32 %v662, %v822
        %v1216 = vsub.f32 %v662, %v826
        %v1217 = vsub.f32 %v662, %v830
        %v1218 = vsub.f32 %v662, %v834
        %v1219 = vsub.f32 %v662, %v838
        %v1220 = vsub.f32 %v662, %v842
        %v1221 = vsub.f32 %v667, %v822
        %v1222 = vsub.f32 %v667, %v826
        %v1223 = vsub.f32 %v667, %v830
        %v1224 = vsub.f32 %v667, %v834
        %v1225 = vsub.f32 %v667, %v838
        %v1226 = vsub.f32 %v667, %v842
        %v1227 = vsub.f32 %v672, %v822
        %v1228 = vsub.f32 %v672, %v826
        %v1229 = vsub.f32 %v672, %v830
        %v1230 = vsub.f32 %v672, %v834
        %v1231 = vsub.f32 %v672, %v838
        %v1232 = vsub.f32 %v672, %v842
        %v1233 = vsub.f32 %v677, %v822
        %v1234 = vsub.f32 %v677, %v826
        %v1235 = vsub.f32 %v677, %v830
        %v1236 = vsub.f32 %v677, %v834
        %v1237 = vsub.f32 %v677, %v838
        %v1238 = vsub.f32 %v677, %v842
        %v1239 = vsub.f32 %v682, %v822
        %v1240 = vsub.f32 %v682, %v826
        %v1241 = vsub.f32 %v682, %v830
        %v1242 = vsub.f32 %v682, %v834
        %v1243 = vsub.f32 %v682, %v838
        %v1244 = vsub.f32 %v682, %v842
        %v1245 = vsub.f32 %v687, %v822
        %v1246 = vsub.f32 %v687, %v826
        %v1247 = vsub.f32 %v687, %v830
        %v1248 = vsub.f32 %v687, %v834
        %v1249 = vsub.f32 %v687, %v838
        %v1250 = vsub.f32 %v687, %v842
        %v1251 = vsub.f32 %v692, %v822
        %v1252 = vsub.f32 %v692, %v826
        %v1253 = vsub.f32 %v692, %v830
        %v1254 = vsub.f32 %v692, %v834
        %v1255 = vsub.f32 %v692, %v838
        %v1256 = vsub.f32 %v692, %v842
        %v1257 = vsub.f32 %v697, %v822
        %v1258 = vsub.f32 %v697, %v826
        %v1259 = vsub.f32 %v697, %v830
        %v1260 = vsub.f32 %v697, %v834
        %v1261 = vsub.f32 %v697, %v838
        %v1262 = vsub.f32 %v697, %v842
        %v1263 = vsub.f32 %v702, %v822
        %v1264 = vsub.f32 %v702, %v826
        %v1265 = vsub.f32 %v702, %v830
        %v1266 = vsub.f32 %v702, %v834
        %v1267 = vsub.f32 %v702, %v838
        %v1268 = vsub.f32 %v702, %v842
        %v1269 = vsub.f32 %v707, %v822
        %v1270 = vsub.f32 %v707, %v826
        %v1271 = vsub.f32 %v707, %v830
        %v1272 = vsub.f32 %v707, %v834
        %v1273 = vsub.f32 %v707, %v838
        %v1274 = vsub.f32 %v707, %v842
        %v1275 = vsub.f32 %v712, %v822
        %v1276 = vsub.f32 %v712, %v826
        %v1277 = vsub.f32 %v712, %v830
        %v1278 = vsub.f32 %v712, %v834
        %v1279 = vsub.f32 %v712, %v838
        %v1280 = vsub.f32 %v712, %v842
        %v1281 = vsub.f32 %v717, %v822
        %v1282 = vsub.f32 %v717, %v826
        %v1283 = vsub.f32 %v717, %v830
        %v1284 = vsub.f32 %v717, %v834
        %v1285 = vsub.f32 %v717, %v838
        %v1286 = vsub.f32 %v717, %v842
        %v1287 = vsub.f32 %v722, %v822
        %v1288 = vsub.f32 %v722, %v826
        %v1289 = vsub.f32 %v722, %v830
        %v1290 = vsub.f32 %v722, %v834
        %v1291 = vsub.f32 %v722, %v838
        %v1292 = vsub.f32 %v722, %v842
        %v1293 = vsub.f32 %v727, %v822
        %v1294 = vsub.f32 %v727, %v826
        %v1295 = vsub.f32 %v727, %v830
        %v1296 = vsub.f32 %v727, %v834
        %v1297 = vsub.f32 %v727, %v838
        %v1298 = vsub.f32 %v727, %v842
        %v1299 = vsub.f32 %v732, %v822
        %v1300 = vsub.f32 %v732, %v826
        %v1301 = vsub.f32 %v732, %v830
        %v1302 = vsub.f32 %v732, %v834
        %v1303 = vsub.f32 %v732, %v838
        %v1304 = vsub.f32 %v732, %v842
        %v1305 = vsub.f32 %v737, %v822
        %v1306 = vsub.f32 %v737, %v826
        %v1307 = vsub.f32 %v737, %v830
        %v1308 = vsub.f32 %v737, %v834
        %v1309 = vsub.f32 %v737, %v838
        %v1310 = vsub.f32 %v737, %v842
        %v1311 = vsub.f32 %v742, %v822
        %v1312 = vsub.f32 %v742, %v826
        %v1313 = vsub.f32 %v742, %v830
        %v1314 = vsub.f32 %v742, %v834
        %v1315 = vsub.f32 %v742, %v838
        %v1316 = vsub.f32 %v742, %v842
        %v1317 = vsub.f32 %v747, %v822
        %v1318 = vsub.f32 %v747, %v826
        %v1319 = vsub.f32 %v747, %v830
        %v1320 = vsub.f32 %v747, %v834
        %v1321 = vsub.f32 %v747, %v838
        %v1322 = vsub.f32 %v747, %v842
        %v1323 = vsub.f32 %v752, %v822
        %v1324 = vsub.f32 %v752, %v826
        %v1325 = vsub.f32 %v752, %v830
        %v1326 = vsub.f32 %v752, %v834
        %v1327 = vsub.f32 %v752, %v838
        %v1328 = vsub.f32 %v752, %v842
        %v1329 = vsub.f32 %v757, %v822
        %v1330 = vsub.f32 %v757, %v826
        %v1331 = vsub.f32 %v757, %v830
        %v1332 = vsub.f32 %v757, %v834
        %v1333 = vsub.f32 %v757, %v838
        %v1334 = vsub.f32 %v757, %v842
        %v1335 = vsub.f32 %v762, %v822
        %v1336 = vsub.f32 %v762, %v826
        %v1337 = vsub.f32 %v762, %v830
        %v1338 = vsub.f32 %v762, %v834
        %v1339 = vsub.f32 %v762, %v838
        %v1340 = vsub.f32 %v762, %v842
        %v1341 = vsub.f32 %v767, %v822
        %v1342 = vsub.f32 %v767, %v826
        %v1343 = vsub.f32 %v767, %v830
        %v1344 = vsub.f32 %v767, %v834
        %v1345 = vsub.f32 %v767, %v838
        %v1346 = vsub.f32 %v767, %v842
        %v1347 = vsub.f32 %v772, %v822
        %v1348 = vsub.f32 %v772, %v826
        %v1349 = vsub.f32 %v772, %v830
        %v1350 = vsub.f32 %v772, %v834
        %v1351 = vsub.f32 %v772, %v838
        %v1352 = vsub.f32 %v772, %v842
        %v1353 = vsub.f32 %v777, %v822
        %v1354 = vsub.f32 %v777, %v826
        %v1355 = vsub.f32 %v777, %v830
        %v1356 = vsub.f32 %v777, %v834
        %v1357 = vsub.f32 %v777, %v838
        %v1358 = vsub.f32 %v777, %v842
        %v1359 = vsub.f32 %v782, %v822
        %v1360 = vsub.f32 %v782, %v826
        %v1361 = vsub.f32 %v782, %v830
        %v1362 = vsub.f32 %v782, %v834
        %v1363 = vsub.f32 %v782, %v838
        %v1364 = vsub.f32 %v782, %v842
        %v1365 = vsub.f32 %v787, %v822
        %v1366 = vsub.f32 %v787, %v826
        %v1367 = vsub.f32 %v787, %v830
        %v1368 = vsub.f32 %v787, %v834
        %v1369 = vsub.f32 %v787, %v838
        %v1370 = vsub.f32 %v787, %v842
        %v1371 = vsub.f32 %v792, %v822
        %v1372 = vsub.f32 %v792, %v826
        %v1373 = vsub.f32 %v792, %v830
        %v1374 = vsub.f32 %v792, %v834
        %v1375 = vsub.f32 %v792, %v838
        %v1376 = vsub.f32 %v792, %v842
        %v1377 = vsub.f32 %v797, %v822
        %v1378 = vsub.f32 %v797, %v826
        %v1379 = vsub.f32 %v797, %v830
        %v1380 = vsub.f32 %v797, %v834
        %v1381 = vsub.f32 %v797, %v838
        %v1382 = vsub.f32 %v797, %v842
        %v1383 = vsub.f32 %v802, %v822
        %v1384 = vsub.f32 %v802, %v826
        %v1385 = vsub.f32 %v802, %v830
        %v1386 = vsub.f32 %v802, %v834
        %v1387 = vsub.f32 %v802, %v838
        %v1388 = vsub.f32 %v802, %v842
        %v1389 = vsub.f32 %v807, %v822
        %v1390 = vsub.f32 %v807, %v826
        %v1391 = vsub.f32 %v807, %v830
        %v1392 = vsub.f32 %v807, %v834
        %v1393 = vsub.f32 %v807, %v838
        %v1394 = vsub.f32 %v807, %v842
        %v1395 = vsub.f32 %v812, %v822
        %v1396 = vsub.f32 %v812, %v826
        %v1397 = vsub.f32 %v812, %v830
        %v1398 = vsub.f32 %v812, %v834
        %v1399 = vsub.f32 %v812, %v838
        %v1400 = vsub.f32 %v812, %v842
        %v1401 = vsub.f32 %v817, %v822
        %v1402 = vsub.f32 %v817, %v826
        %v1403 = vsub.f32 %v817, %v830
        %v1404 = vsub.f32 %v817, %v834
        %v1405 = vsub.f32 %v817, %v838
        %v1406 = vsub.f32 %v817, %v842
        %v1407 = vmul.f32 %v843, %v843
        %v1408 = vmul.f32 %v844, %v844
        %v1409 = vmul.f32 %v845, %v845
        %v1410 = vmul.f32 %v846, %v846
        %v1411 = vmul.f32 %v847, %v847
        %v1412 = vmul.f32 %v848, %v848
        %v1413 = vmul.f32 %v849, %v849
        %v1414 = vmul.f32 %v850, %v850
        %v1415 = vmul.f32 %v851, %v851
        %v1416 = vmul.f32 %v852, %v852
        %v1417 = vmul.f32 %v853, %v853
        %v1418 = vmul.f32 %v854, %v854
        %v1419 = vmul.f32 %v855, %v855
        %v1420 = vmul.f32 %v856, %v856
        %v1421 = vmul.f32 %v857, %v857
        %v1422 = vmul.f32 %v858, %v858
        %v1423 = vmul.f32 %v859, %v859
        %v1424 = vmul.f32 %v860, %v860
        %v1425 = vmul.f32 %v861, %v861
        %v1426 = vmul.f32 %v862, %v862
        %v1427 = vmul.f32 %v863, %v863
        %v1428 = vmul.f32 %v864, %v864
        %v1429 = vmul.f32 %v865, %v865
        %v1430 = vmul.f32 %v866, %v866
        %v1431 = vmul.f32 %v867, %v867
        %v1432 = vmul.f32 %v868, %v868
        %v1433 = vmul.f32 %v869, %v869
        %v1434 = vmul.f32 %v870, %v870
        %v1435 = vmul.f32 %v871, %v871
        %v1436 = vmul.f32 %v872, %v872
        %v1437 = vmul.f32 %v873, %v873
        %v1438 = vmul.f32 %v874, %v874
        %v1439 = vmul.f32 %v875, %v875
        %v1440 = vmul.f32 %v876, %v876
        %v1441 = vmul.f32 %v877, %v877
        %v1442 = vmul.f32 %v878, %v878
        %v1443 = vmul.f32 %v879, %v879
        %v1444 = vmul.f32 %v880, %v880
        %v1445 = vmul.f32 %v881, %v881
        %v1446 = vmul.f32 %v882, %v882
        %v1447 = vmul.f32 %v883, %v883
        %v1448 = vmul.f32 %v884, %v884
        %v1449 = vmul.f32 %v885, %v885
        %v1450 = vmul.f32 %v886, %v886
        %v1451 = vmul.f32 %v887, %v887
        %v1452 = vmul.f32 %v888, %v888
        %v1453 = vmul.f32 %v889, %v889
        %v1454 = vmul.f32 %v890, %v890
        %v1455 = vmul.f32 %v891, %v891
        %v1456 = vmul.f32 %v892, %v892
        %v1457 = vmul.f32 %v893, %v893
        %v1458 = vmul.f32 %v894, %v894
        %v1459 = vmul.f32 %v895, %v895
        %v1460 = vmul.f32 %v896, %v896
        %v1461 = vmul.f32 %v897, %v897
        %v1462 = vmul.f32 %v898, %v898
        %v1463 = vmul.f32 %v899, %v899
        %v1464 = vmul.f32 %v900, %v900
        %v1465 = vmul.f32 %v901, %v901
        %v1466 = vmul.f32 %v902, %v902
        %v1467 = vmul.f32 %v903, %v903
        %v1468 = vmul.f32 %v904, %v904
        %v1469 = vmul.f32 %v905, %v905
        %v1470 = vmul.f32 %v906, %v906
        %v1471 = vmul.f32 %v907, %v907
        %v1472 = vmul.f32 %v908, %v908
        %v1473 = vmul.f32 %v909, %v909
        %v1474 = vmul.f32 %v910, %v910
        %v1475 = vmul.f32 %v911, %v911
        %v1476 = vmul.f32 %v912, %v912
        %v1477 = vmul.f32 %v913, %v913
        %v1478 = vmul.f32 %v914, %v914
        %v1479 = vmul.f32 %v915, %v915
        %v1480 = vmul.f32 %v916, %v916
        %v1481 = vmul.f32 %v917, %v917
        %v1482 = vmul.f32 %v918, %v918
        %v1483 = vmul.f32 %v919, %v919
        %v1484 = vmul.f32 %v920, %v920
        %v1485 = vmul.f32 %v921, %v921
        %v1486 = vmul.f32 %v922, %v922
        %v1487 = vmul.f32 %v923, %v923
        %v1488 = vmul.f32 %v924, %v924
        %v1489 = vmul.f32 %v925, %v925
        %v1490 = vmul.f32 %v926, %v926
        %v1491 = vmul.f32 %v927, %v927
        %v1492 = vmul.f32 %v928, %v928
        %v1493 = vmul.f32 %v929, %v929
        %v1494 = vmul.f32 %v930, %v930
        %v1495 = vmul.f32 %v931, %v931
        %v1496 = vmul.f32 %v932, %v932
        %v1497 = vmul.f32 %v933, %v933
        %v1498 = vmul.f32 %v934, %v934
        %v1499 = vmul.f32 %v935, %v935
        %v1500 = vmul.f32 %v936, %v936
        %v1501 = vmul.f32 %v937, %v937
        %v1502 = vmul.f32 %v938, %v938
        %v1503 = vmul.f32 %v939, %v939
        %v1504 = vmul.f32 %v940, %v940
        %v1505 = vmul.f32 %v941, %v941
        %v1506 = vmul.f32 %v942, %v942
        %v1507 = vmul.f32 %v943, %v943
        %v1508 = vmul.f32 %v944, %v944
        %v1509 = vmul.f32 %v945, %v945
        %v1510 = vmul.f32 %v946, %v946
        %v1511 = vmul.f32 %v947, %v947
        %v1512 = vmul.f32 %v948, %v948
        %v1513 = vmul.f32 %v949, %v949
        %v1514 = vmul.f32 %v950, %v950
        %v1515 = vmul.f32 %v951, %v951
        %v1516 = vmul.f32 %v952, %v952
        %v1517 = vmul.f32 %v953, %v953
        %v1518 = vmul.f32 %v954, %v954
        %v1519 = vmul.f32 %v955, %v955
        %v1520 = vmul.f32 %v956, %v956
        %v1521 = vmul.f32 %v957, %v957
        %v1522 = vmul.f32 %v958, %v958
        %v1523 = vmul.f32 %v959, %v959
        %v1524 = vmul.f32 %v960, %v960
        %v1525 = vmul.f32 %v961, %v961
        %v1526 = vmul.f32 %v962, %v962
        %v1527 = vmul.f32 %v963, %v963
        %v1528 = vmul.f32 %v964, %v964
        %v1529 = vmul.f32 %v965, %v965
        %v1530 = vmul.f32 %v966, %v966
        %v1531 = vmul.f32 %v967, %v967
        %v1532 = vmul.f32 %v968, %v968
        %v1533 = vmul.f32 %v969, %v969
        %v1534 = vmul.f32 %v970, %v970
        %v1535 = vmul.f32 %v971, %v971
        %v1536 = vmul.f32 %v972, %v972
        %v1537 = vmul.f32 %v973, %v973
        %v1538 = vmul.f32 %v974, %v974
        %v1539 = vmul.f32 %v975, %v975
        %v1540 = vmul.f32 %v976, %v976
        %v1541 = vmul.f32 %v977, %v977
        %v1542 = vmul.f32 %v978, %v978
        %v1543 = vmul.f32 %v979, %v979
        %v1544 = vmul.f32 %v980, %v980
        %v1545 = vmul.f32 %v981, %v981
        %v1546 = vmul.f32 %v982, %v982
        %v1547 = vmul.f32 %v983, %v983
        %v1548 = vmul.f32 %v984, %v984
        %v1549 = vmul.f32 %v985, %v985
        %v1550 = vmul.f32 %v986, %v986
        %v1551 = vmul.f32 %v987, %v987
        %v1552 = vmul.f32 %v988, %v988
        %v1553 = vmul.f32 %v989, %v989
        %v1554 = vmul.f32 %v990, %v990
        %v1555 = vmul.f32 %v991, %v991
        %v1556 = vmul.f32 %v992, %v992
        %v1557 = vmul.f32 %v993, %v993
        %v1558 = vmul.f32 %v994, %v994
        %v1559 = vmul.f32 %v995, %v995
        %v1560 = vmul.f32 %v996, %v996
        %v1561 = vmul.f32 %v997, %v997
        %v1562 = vmul.f32 %v998, %v998
        %v1563 = vmul.f32 %v999, %v999
        %v1564 = vmul.f32 %v1000, %v1000
        %v1565 = vmul.f32 %v1001, %v1001
        %v1566 = vmul.f32 %v1002, %v1002
        %v1567 = vmul.f32 %v1003, %v1003
        %v1568 = vmul.f32 %v1004, %v1004
        %v1569 = vmul.f32 %v1005, %v1005
        %v1570 = vmul.f32 %v1006, %v1006
        %v1571 = vmul.f32 %v1007, %v1007
        %v1572 = vmul.f32 %v1008, %v1008
        %v1573 = vmul.f32 %v1009, %v1009
        %v1574 = vmul.f32 %v1010, %v1010
        %v1575 = vmul.f32 %v1011, %v1011
        %v1576 = vmul.f32 %v1012, %v1012
        %v1577 = vmul.f32 %v1013, %v1013
        %v1578 = vmul.f32 %v1014, %v1014
        %v1579 = vmul.f32 %v1015, %v1015
        %v1580 = vmul.f32 %v1016, %v1016
        %v1581 = vmul.f32 %v1017, %v1017
        %v1582 = vmul.f32 %v1018, %v1018
        %v1583 = vmul.f32 %v1019, %v1019
        %v1584 = vmul.f32 %v1020, %v1020
        %v1585 = vmul.f32 %v1021, %v1021
        %v1586 = vmul.f32 %v1022, %v1022
        %v1587 = vmul.f32 %v1023, %v1023
        %v1588 = vmul.f32 %v1024, %v1024
        %v1589 = vmul.f32 %v1025, %v1025
        %v1590 = vmul.f32 %v1026, %v1026
        %v1591 = vmul.f32 %v1027, %v1027
        %v1592 = vmul.f32 %v1028, %v1028
        %v1593 = vmul.f32 %v1029, %v1029
        %v1594 = vmul.f32 %v1030, %v1030
        %v1595 = vmul.f32 %v1031, %v1031
        %v1596 = vmul.f32 %v1032, %v1032
        %v1597 = vmul.f32 %v1033, %v1033
        %v1598 = vmul.f32 %v1034, %v1034
        %v1599 = vmul.f32 %v1035, %v1035
        %v1600 = vmul.f32 %v1036, %v1036
        %v1601 = vmul.f32 %v1037, %v1037
        %v1602 = vmul.f32 %v1038, %v1038
        %v1603 = vmul.f32 %v1039, %v1039
        %v1604 = vmul.f32 %v1040, %v1040
        %v1605 = vmul.f32 %v1041, %v1041
        %v1606 = vmul.f32 %v1042, %v1042
        %v1607 = vmul.f32 %v1043, %v1043
        %v1608 = vmul.f32 %v1044, %v1044
        %v1609 = vmul.f32 %v1045, %v1045
        %v1610 = vmul.f32 %v1046, %v1046
        %v1611 = vmul.f32 %v1047, %v1047
        %v1612 = vmul.f32 %v1048, %v1048
        %v1613 = vmul.f32 %v1049, %v1049
        %v1614 = vmul.f32 %v1050, %v1050
        %v1615 = vmul.f32 %v1051, %v1051
        %v1616 = vmul.f32 %v1052, %v1052
        %v1617 = vmul.f32 %v1053, %v1053
        %v1618 = vmul.f32 %v1054, %v1054
        %v1619 = vmul.f32 %v1055, %v1055
        %v1620 = vmul.f32 %v1056, %v1056
        %v1621 = vmul.f32 %v1057, %v1057
        %v1622 = vmul.f32 %v1058, %v1058
        %v1623 = vmul.f32 %v1059, %v1059
        %v1624 = vmul.f32 %v1060, %v1060
        %v1625 = vmul.f32 %v1061, %v1061
        %v1626 = vmul.f32 %v1062, %v1062
        %v1627 = vmul.f32 %v1063, %v1063
        %v1628 = vmul.f32 %v1064, %v1064
        %v1629 = vmul.f32 %v1065, %v1065
        %v1630 = vmul.f32 %v1066, %v1066
        %v1631 = vmul.f32 %v1067, %v1067
        %v1632 = vmul.f32 %v1068, %v1068
        %v1633 = vmul.f32 %v1069, %v1069
        %v1634 = vmul.f32 %v1070, %v1070
        %v1635 = vmul.f32 %v1071, %v1071
        %v1636 = vmul.f32 %v1072, %v1072
        %v1637 = vmul.f32 %v1073, %v1073
        %v1638 = vmul.f32 %v1074, %v1074
        %v1639 = vmul.f32 %v1075, %v1075
        %v1640 = vmul.f32 %v1076, %v1076
        %v1641 = vmul.f32 %v1077, %v1077
        %v1642 = vmul.f32 %v1078, %v1078
        %v1643 = vmul.f32 %v1079, %v1079
        %v1644 = vmul.f32 %v1080, %v1080
        %v1645 = vmul.f32 %v1081, %v1081
        %v1646 = vmul.f32 %v1082, %v1082
        %v1647 = vmul.f32 %v1083, %v1083
        %v1648 = vmul.f32 %v1084, %v1084
        %v1649 = vmul.f32 %v1085, %v1085
        %v1650 = vmul.f32 %v1086, %v1086
        %v1651 = vmul.f32 %v1087, %v1087
        %v1652 = vmul.f32 %v1088, %v1088
        %v1653 = vmul.f32 %v1089, %v1089
        %v1654 = vmul.f32 %v1090, %v1090
        %v1655 = vmul.f32 %v1091, %v1091
        %v1656 = vmul.f32 %v1092, %v1092
        %v1657 = vmul.f32 %v1093, %v1093
        %v1658 = vmul.f32 %v1094, %v1094
        %v1659 = vmul.f32 %v1095, %v1095
        %v1660 = vmul.f32 %v1096, %v1096
        %v1661 = vmul.f32 %v1097, %v1097
        %v1662 = vmul.f32 %v1098, %v1098
        %v1663 = vmul.f32 %v1099, %v1099
        %v1664 = vmul.f32 %v1100, %v1100
        %v1665 = vmul.f32 %v1101, %v1101
        %v1666 = vmul.f32 %v1102, %v1102
        %v1667 = vmul.f32 %v1103, %v1103
        %v1668 = vmul.f32 %v1104, %v1104
        %v1669 = vmul.f32 %v1105, %v1105
        %v1670 = vmul.f32 %v1106, %v1106
        %v1671 = vmul.f32 %v1107, %v1107
        %v1672 = vmul.f32 %v1108, %v1108
        %v1673 = vmul.f32 %v1109, %v1109
        %v1674 = vmul.f32 %v1110, %v1110
        %v1675 = vmul.f32 %v1111, %v1111
        %v1676 = vmul.f32 %v1112, %v1112
        %v1677 = vmul.f32 %v1113, %v1113
        %v1678 = vmul.f32 %v1114, %v1114
        %v1679 = vmul.f32 %v1115, %v1115
        %v1680 = vmul.f32 %v1116, %v1116
        %v1681 = vmul.f32 %v1117, %v1117
        %v1682 = vmul.f32 %v1118, %v1118
        %v1683 = vmul.f32 %v1119, %v1119
        %v1684 = vmul.f32 %v1120, %v1120
        %v1685 = vmul.f32 %v1121, %v1121
        %v1686 = vmul.f32 %v1122, %v1122
        %v1687 = vmul.f32 %v1123, %v1123
        %v1688 = vmul.f32 %v1124, %v1124
        %v1689 = vmul.f32 %v1125, %v1125
        %v1690 = vmul.f32 %v1126, %v1126
        %v1691 = vmul.f32 %v1127, %v1127
        %v1692 = vmul.f32 %v1128, %v1128
        %v1693 = vmul.f32 %v1129, %v1129
        %v1694 = vmul.f32 %v1130, %v1130
        %v1695 = vmul.f32 %v1131, %v1131
        %v1696 = vmul.f32 %v1132, %v1132
        %v1697 = vmul.f32 %v1133, %v1133
        %v1698 = vmul.f32 %v1134, %v1134
        %v1699 = vmul.f32 %v1135, %v1135
        %v1700 = vmul.f32 %v1136, %v1136
        %v1701 = vmul.f32 %v1137, %v1137
        %v1702 = vmul.f32 %v1138, %v1138
        %v1703 = vmul.f32 %v1139, %v1139
        %v1704 = vmul.f32 %v1140, %v1140
        %v1705 = vmul.f32 %v1141, %v1141
        %v1706 = vmul.f32 %v1142, %v1142
        %v1707 = vmul.f32 %v1143, %v1143
        %v1708 = vmul.f32 %v1144, %v1144
        %v1709 = vmul.f32 %v1145, %v1145
        %v1710 = vmul.f32 %v1146, %v1146
        %v1711 = vmul.f32 %v1147, %v1147
        %v1712 = vmul.f32 %v1148, %v1148
        %v1713 = vmul.f32 %v1149, %v1149
        %v1714 = vmul.f32 %v1150, %v1150
        %v1715 = vmul.f32 %v1151, %v1151
        %v1716 = vmul.f32 %v1152, %v1152
        %v1717 = vmul.f32 %v1153, %v1153
        %v1718 = vmul.f32 %v1154, %v1154
        %v1719 = vmul.f32 %v1155, %v1155
        %v1720 = vmul.f32 %v1156, %v1156
        %v1721 = vmul.f32 %v1157, %v1157
        %v1722 = vmul.f32 %v1158, %v1158
        %v1723 = vmul.f32 %v1159, %v1159
        %v1724 = vmul.f32 %v1160, %v1160
        %v1725 = vmul.f32 %v1161, %v1161
        %v1726 = vmul.f32 %v1162, %v1162
        %v1727 = vmul.f32 %v1163, %v1163
        %v1728 = vmul.f32 %v1164, %v1164
        %v1729 = vmul.f32 %v1165, %v1165
        %v1730 = vmul.f32 %v1166, %v1166
        %v1731 = vmul.f32 %v1167, %v1167
        %v1732 = vmul.f32 %v1168, %v1168
        %v1733 = vmul.f32 %v1169, %v1169
        %v1734 = vmul.f32 %v1170, %v1170
        %v1735 = vmul.f32 %v1171, %v1171
        %v1736 = vmul.f32 %v1172, %v1172
        %v1737 = vmul.f32 %v1173, %v1173
        %v1738 = vmul.f32 %v1174, %v1174
        %v1739 = vmul.f32 %v1175, %v1175
        %v1740 = vmul.f32 %v1176, %v1176
        %v1741 = vmul.f32 %v1177, %v1177
        %v1742 = vmul.f32 %v1178, %v1178
        %v1743 = vmul.f32 %v1179, %v1179
        %v1744 = vmul.f32 %v1180, %v1180
        %v1745 = vmul.f32 %v1181, %v1181
        %v1746 = vmul.f32 %v1182, %v1182
        %v1747 = vmul.f32 %v1183, %v1183
        %v1748 = vmul.f32 %v1184, %v1184
        %v1749 = vmul.f32 %v1185, %v1185
        %v1750 = vmul.f32 %v1186, %v1186
        %v1751 = vmul.f32 %v1187, %v1187
        %v1752 = vmul.f32 %v1188, %v1188
        %v1753 = vmul.f32 %v1189, %v1189
        %v1754 = vmul.f32 %v1190, %v1190
        %v1755 = vmul.f32 %v1191, %v1191
        %v1756 = vmul.f32 %v1192, %v1192
        %v1757 = vmul.f32 %v1193, %v1193
        %v1758 = vmul.f32 %v1194, %v1194
        %v1759 = vmul.f32 %v1195, %v1195
        %v1760 = vmul.f32 %v1196, %v1196
        %v1761 = vmul.f32 %v1197, %v1197
        %v1762 = vmul.f32 %v1198, %v1198
        %v1763 = vmul.f32 %v1199, %v1199
        %v1764 = vmul.f32 %v1200, %v1200
        %v1765 = vmul.f32 %v1201, %v1201
        %v1766 = vmul.f32 %v1202, %v1202
        %v1767 = vmul.f32 %v1203, %v1203
        %v1768 = vmul.f32 %v1204, %v1204
        %v1769 = vmul.f32 %v1205, %v1205
        %v1770 = vmul.f32 %v1206, %v1206
        %v1771 = vmul.f32 %v1207, %v1207
        %v1772 = vmul.f32 %v1208, %v1208
        %v1773 = vmul.f32 %v1209, %v1209
        %v1774 = vmul.f32 %v1210, %v1210
        %v1775 = vmul.f32 %v1211, %v1211
        %v1776 = vmul.f32 %v1212, %v1212
        %v1777 = vmul.f32 %v1213, %v1213
        %v1778 = vmul.f32 %v1214, %v1214
        %v1779 = vmul.f32 %v1215, %v1215
        %v1780 = vmul.f32 %v1216, %v1216
        %v1781 = vmul.f32 %v1217, %v1217
        %v1782 = vmul.f32 %v1218, %v1218
        %v1783 = vmul.f32 %v1219, %v1219
        %v1784 = vmul.f32 %v1220, %v1220
        %v1785 = vmul.f32 %v1221, %v1221
        %v1786 = vmul.f32 %v1222, %v1222
        %v1787 = vmul.f32 %v1223, %v1223
        %v1788 = vmul.f32 %v1224, %v1224
        %v1789 = vmul.f32 %v1225, %v1225
        %v1790 = vmul.f32 %v1226, %v1226
        %v1791 = vmul.f32 %v1227, %v1227
        %v1792 = vmul.f32 %v1228, %v1228
        %v1793 = vmul.f32 %v1229, %v1229
        %v1794 = vmul.f32 %v1230, %v1230
        %v1795 = vmul.f32 %v1231, %v1231
        %v1796 = vmul.f32 %v1232, %v1232
        %v1797 = vmul.f32 %v1233, %v1233
        %v1798 = vmul.f32 %v1234, %v1234
        %v1799 = vmul.f32 %v1235, %v1235
        %v1800 = vmul.f32 %v1236, %v1236
        %v1801 = vmul.f32 %v1237, %v1237
        %v1802 = vmul.f32 %v1238, %v1238
        %v1803 = vmul.f32 %v1239, %v1239
        %v1804 = vmul.f32 %v1240, %v1240
        %v1805 = vmul.f32 %v1241, %v1241
        %v1806 = vmul.f32 %v1242, %v1242
        %v1807 = vmul.f32 %v1243, %v1243
        %v1808 = vmul.f32 %v1244, %v1244
        %v1809 = vmul.f32 %v1245, %v1245
        %v1810 = vmul.f32 %v1246, %v1246
        %v1811 = vmul.f32 %v1247, %v1247
        %v1812 = vmul.f32 %v1248, %v1248
        %v1813 = vmul.f32 %v1249, %v1249
        %v1814 = vmul.f32 %v1250, %v1250
        %v1815 = vmul.f32 %v1251, %v1251
        %v1816 = vmul.f32 %v1252, %v1252
        %v1817 = vmul.f32 %v1253, %v1253
        %v1818 = vmul.f32 %v1254, %v1254
        %v1819 = vmul.f32 %v1255, %v1255
        %v1820 = vmul.f32 %v1256, %v1256
        %v1821 = vmul.f32 %v1257, %v1257
        %v1822 = vmul.f32 %v1258, %v1258
        %v1823 = vmul.f32 %v1259, %v1259
        %v1824 = vmul.f32 %v1260, %v1260
        %v1825 = vmul.f32 %v1261, %v1261
        %v1826 = vmul.f32 %v1262, %v1262
        %v1827 = vmul.f32 %v1263, %v1263
        %v1828 = vmul.f32 %v1264, %v1264
        %v1829 = vmul.f32 %v1265, %v1265
        %v1830 = vmul.f32 %v1266, %v1266
        %v1831 = vmul.f32 %v1267, %v1267
        %v1832 = vmul.f32 %v1268, %v1268
        %v1833 = vmul.f32 %v1269, %v1269
        %v1834 = vmul.f32 %v1270, %v1270
        %v1835 = vmul.f32 %v1271, %v1271
        %v1836 = vmul.f32 %v1272, %v1272
        %v1837 = vmul.f32 %v1273, %v1273
        %v1838 = vmul.f32 %v1274, %v1274
        %v1839 = vmul.f32 %v1275, %v1275
        %v1840 = vmul.f32 %v1276, %v1276
        %v1841 = vmul.f32 %v1277, %v1277
        %v1842 = vmul.f32 %v1278, %v1278
        %v1843 = vmul.f32 %v1279, %v1279
        %v1844 = vmul.f32 %v1280, %v1280
        %v1845 = vmul.f32 %v1281, %v1281
        %v1846 = vmul.f32 %v1282, %v1282
        %v1847 = vmul.f32 %v1283, %v1283
        %v1848 = vmul.f32 %v1284, %v1284
        %v1849 = vmul.f32 %v1285, %v1285
        %v1850 = vmul.f32 %v1286, %v1286
        %v1851 = vmul.f32 %v1287, %v1287
        %v1852 = vmul.f32 %v1288, %v1288
        %v1853 = vmul.f32 %v1289, %v1289
        %v1854 = vmul.f32 %v1290, %v1290
        %v1855 = vmul.f32 %v1291, %v1291
        %v1856 = vmul.f32 %v1292, %v1292
        %v1857 = vmul.f32 %v1293, %v1293
        %v1858 = vmul.f32 %v1294, %v1294
        %v1859 = vmul.f32 %v1295, %v1295
        %v1860 = vmul.f32 %v1296, %v1296
        %v1861 = vmul.f32 %v1297, %v1297
        %v1862 = vmul.f32 %v1298, %v1298
        %v1863 = vmul.f32 %v1299, %v1299
        %v1864 = vmul.f32 %v1300, %v1300
        %v1865 = vmul.f32 %v1301, %v1301
        %v1866 = vmul.f32 %v1302, %v1302
        %v1867 = vmul.f32 %v1303, %v1303
        %v1868 = vmul.f32 %v1304, %v1304
        %v1869 = vmul.f32 %v1305, %v1305
        %v1870 = vmul.f32 %v1306, %v1306
        %v1871 = vmul.f32 %v1307, %v1307
        %v1872 = vmul.f32 %v1308, %v1308
        %v1873 = vmul.f32 %v1309, %v1309
        %v1874 = vmul.f32 %v1310, %v1310
        %v1875 = vmul.f32 %v1311, %v1311
        %v1876 = vmul.f32 %v1312, %v1312
        %v1877 = vmul.f32 %v1313, %v1313
        %v1878 = vmul.f32 %v1314, %v1314
        %v1879 = vmul.f32 %v1315, %v1315
        %v1880 = vmul.f32 %v1316, %v1316
        %v1881 = vmul.f32 %v1317, %v1317
        %v1882 = vmul.f32 %v1318, %v1318
        %v1883 = vmul.f32 %v1319, %v1319
        %v1884 = vmul.f32 %v1320, %v1320
        %v1885 = vmul.f32 %v1321, %v1321
        %v1886 = vmul.f32 %v1322, %v1322
        %v1887 = vmul.f32 %v1323, %v1323
        %v1888 = vmul.f32 %v1324, %v1324
        %v1889 = vmul.f32 %v1325, %v1325
        %v1890 = vmul.f32 %v1326, %v1326
        %v1891 = vmul.f32 %v1327, %v1327
        %v1892 = vmul.f32 %v1328, %v1328
        %v1893 = vmul.f32 %v1329, %v1329
        %v1894 = vmul.f32 %v1330, %v1330
        %v1895 = vmul.f32 %v1331, %v1331
        %v1896 = vmul.f32 %v1332, %v1332
        %v1897 = vmul.f32 %v1333, %v1333
        %v1898 = vmul.f32 %v1334, %v1334
        %v1899 = vmul.f32 %v1335, %v1335
        %v1900 = vmul.f32 %v1336, %v1336
        %v1901 = vmul.f32 %v1337, %v1337
        %v1902 = vmul.f32 %v1338, %v1338
        %v1903 = vmul.f32 %v1339, %v1339
        %v1904 = vmul.f32 %v1340, %v1340
        %v1905 = vmul.f32 %v1341, %v1341
        %v1906 = vmul.f32 %v1342, %v1342
        %v1907 = vmul.f32 %v1343, %v1343
        %v1908 = vmul.f32 %v1344, %v1344
        %v1909 = vmul.f32 %v1345, %v1345
        %v1910 = vmul.f32 %v1346, %v1346
        %v1911 = vmul.f32 %v1347, %v1347
        %v1912 = vmul.f32 %v1348, %v1348
        %v1913 = vmul.f32 %v1349, %v1349
        %v1914 = vmul.f32 %v1350, %v1350
        %v1915 = vmul.f32 %v1351, %v1351
        %v1916 = vmul.f32 %v1352, %v1352
        %v1917 = vmul.f32 %v1353, %v1353
        %v1918 = vmul.f32 %v1354, %v1354
        %v1919 = vmul.f32 %v1355, %v1355
        %v1920 = vmul.f32 %v1356, %v1356
        %v1921 = vmul.f32 %v1357, %v1357
        %v1922 = vmul.f32 %v1358, %v1358
        %v1923 = vmul.f32 %v1359, %v1359
        %v1924 = vmul.f32 %v1360, %v1360
        %v1925 = vmul.f32 %v1361, %v1361
        %v1926 = vmul.f32 %v1362, %v1362
        %v1927 = vmul.f32 %v1363, %v1363
        %v1928 = vmul.f32 %v1364, %v1364
        %v1929 = vmul.f32 %v1365, %v1365
        %v1930 = vmul.f32 %v1366, %v1366
        %v1931 = vmul.f32 %v1367, %v1367
        %v1932 = vmul.f32 %v1368, %v1368
        %v1933 = vmul.f32 %v1369, %v1369
        %v1934 = vmul.f32 %v1370, %v1370
        %v1935 = vmul.f32 %v1371, %v1371
        %v1936 = vmul.f32 %v1372, %v1372
        %v1937 = vmul.f32 %v1373, %v1373
        %v1938 = vmul.f32 %v1374, %v1374
        %v1939 = vmul.f32 %v1375, %v1375
        %v1940 = vmul.f32 %v1376, %v1376
        %v1941 = vmul.f32 %v1377, %v1377
        %v1942 = vmul.f32 %v1378, %v1378
        %v1943 = vmul.f32 %v1379, %v1379
        %v1944 = vmul.f32 %v1380, %v1380
        %v1945 = vmul.f32 %v1381, %v1381
        %v1946 = vmul.f32 %v1382, %v1382
        %v1947 = vmul.f32 %v1383, %v1383
        %v1948 = vmul.f32 %v1384, %v1384
        %v1949 = vmul.f32 %v1385, %v1385
        %v1950 = vmul.f32 %v1386, %v1386
        %v1951 = vmul.f32 %v1387, %v1387
        %v1952 = vmul.f32 %v1388, %v1388
        %v1953 = vmul.f32 %v1389, %v1389
        %v1954 = vmul.f32 %v1390, %v1390
        %v1955 = vmul.f32 %v1391, %v1391
        %v1956 = vmul.f32 %v1392, %v1392
        %v1957 = vmul.f32 %v1393, %v1393
        %v1958 = vmul.f32 %v1394, %v1394
        %v1959 = vmul.f32 %v1395, %v1395
        %v1960 = vmul.f32 %v1396, %v1396
        %v1961 = vmul.f32 %v1397, %v1397
        %v1962 = vmul.f32 %v1398, %v1398
        %v1963 = vmul.f32 %v1399, %v1399
        %v1964 = vmul.f32 %v1400, %v1400
        %v1965 = vmul.f32 %v1401, %v1401
        %v1966 = vmul.f32 %v1402, %v1402
        %v1967 = vmul.f32 %v1403, %v1403
        %v1968 = vmul.f32 %v1404, %v1404
        %v1969 = vmul.f32 %v1405, %v1405
        %v1970 = vmul.f32 %v1406, %v1406
        %vm1971 = vcmp.lt.f32.partialorder %v1407, 0.01
        %vm1972 = vcmp.lt.f32.partialorder %v1408, 0.01
        %vm1973 = vcmp.lt.f32.partialorder %v1409, 0.01
        %vm1974 = vcmp.lt.f32.partialorder %v1410, 0.01
        %vm1975 = vcmp.lt.f32.partialorder %v1411, 0.01
        %vm1976 = vcmp.lt.f32.partialorder %v1412, 0.01
        %vm1977 = vcmp.lt.f32.partialorder %v1413, 0.01
        %vm1978 = vcmp.lt.f32.partialorder %v1414, 0.01
        %vm1979 = vcmp.lt.f32.partialorder %v1415, 0.01
        %vm1980 = vcmp.lt.f32.partialorder %v1416, 0.01
        %vm1981 = vcmp.lt.f32.partialorder %v1417, 0.01
        %vm1982 = vcmp.lt.f32.partialorder %v1418, 0.01
        %vm1983 = vcmp.lt.f32.partialorder %v1419, 0.01
        %vm1984 = vcmp.lt.f32.partialorder %v1420, 0.01
        %vm1985 = vcmp.lt.f32.partialorder %v1421, 0.01
        %vm1986 = vcmp.lt.f32.partialorder %v1422, 0.01
        %vm1987 = vcmp.lt.f32.partialorder %v1423, 0.01
        %vm1988 = vcmp.lt.f32.partialorder %v1424, 0.01
        %vm1989 = vcmp.lt.f32.partialorder %v1425, 0.01
        %vm1990 = vcmp.lt.f32.partialorder %v1426, 0.01
        %vm1991 = vcmp.lt.f32.partialorder %v1427, 0.01
        %vm1992 = vcmp.lt.f32.partialorder %v1428, 0.01
        %vm1993 = vcmp.lt.f32.partialorder %v1429, 0.01
        %vm1994 = vcmp.lt.f32.partialorder %v1430, 0.01
        %vm1995 = vcmp.lt.f32.partialorder %v1431, 0.01
        %vm1996 = vcmp.lt.f32.partialorder %v1432, 0.01
        %vm1997 = vcmp.lt.f32.partialorder %v1433, 0.01
        %vm1998 = vcmp.lt.f32.partialorder %v1434, 0.01
        %vm1999 = vcmp.lt.f32.partialorder %v1435, 0.01
        %vm2000 = vcmp.lt.f32.partialorder %v1436, 0.01
        %vm2001 = vcmp.lt.f32.partialorder %v1437, 0.01
        %vm2002 = vcmp.lt.f32.partialorder %v1438, 0.01
        %vm2003 = vcmp.lt.f32.partialorder %v1439, 0.01
        %vm2004 = vcmp.lt.f32.partialorder %v1440, 0.01
        %vm2005 = vcmp.lt.f32.partialorder %v1441, 0.01
        %vm2006 = vcmp.lt.f32.partialorder %v1442, 0.01
        %vm2007 = vcmp.lt.f32.partialorder %v1443, 0.01
        %vm2008 = vcmp.lt.f32.partialorder %v1444, 0.01
        %vm2009 = vcmp.lt.f32.partialorder %v1445, 0.01
        %vm2010 = vcmp.lt.f32.partialorder %v1446, 0.01
        %vm2011 = vcmp.lt.f32.partialorder %v1447, 0.01
        %vm2012 = vcmp.lt.f32.partialorder %v1448, 0.01
        %vm2013 = vcmp.lt.f32.partialorder %v1449, 0.01
        %vm2014 = vcmp.lt.f32.partialorder %v1450, 0.01
        %vm2015 = vcmp.lt.f32.partialorder %v1451, 0.01
        %vm2016 = vcmp.lt.f32.partialorder %v1452, 0.01
        %vm2017 = vcmp.lt.f32.partialorder %v1453, 0.01
        %vm2018 = vcmp.lt.f32.partialorder %v1454, 0.01
        %vm2019 = vcmp.lt.f32.partialorder %v1455, 0.01
        %vm2020 = vcmp.lt.f32.partialorder %v1456, 0.01
        %vm2021 = vcmp.lt.f32.partialorder %v1457, 0.01
        %vm2022 = vcmp.lt.f32.partialorder %v1458, 0.01
        %vm2023 = vcmp.lt.f32.partialorder %v1459, 0.01
        %vm2024 = vcmp.lt.f32.partialorder %v1460, 0.01
        %vm2025 = vcmp.lt.f32.partialorder %v1461, 0.01
        %vm2026 = vcmp.lt.f32.partialorder %v1462, 0.01
        %vm2027 = vcmp.lt.f32.partialorder %v1463, 0.01
        %vm2028 = vcmp.lt.f32.partialorder %v1464, 0.01
        %vm2029 = vcmp.lt.f32.partialorder %v1465, 0.01
        %vm2030 = vcmp.lt.f32.partialorder %v1466, 0.01
        %vm2031 = vcmp.lt.f32.partialorder %v1467, 0.01
        %vm2032 = vcmp.lt.f32.partialorder %v1468, 0.01
        %vm2033 = vcmp.lt.f32.partialorder %v1469, 0.01
        %vm2034 = vcmp.lt.f32.partialorder %v1470, 0.01
        %vm2035 = vcmp.lt.f32.partialorder %v1471, 0.01
        %vm2036 = vcmp.lt.f32.partialorder %v1472, 0.01
        %vm2037 = vcmp.lt.f32.partialorder %v1473, 0.01
        %vm2038 = vcmp.lt.f32.partialorder %v1474, 0.01
        %vm2039 = vcmp.lt.f32.partialorder %v1475, 0.01
        %vm2040 = vcmp.lt.f32.partialorder %v1476, 0.01
        %vm2041 = vcmp.lt.f32.partialorder %v1477, 0.01
        %vm2042 = vcmp.lt.f32.partialorder %v1478, 0.01
        %vm2043 = vcmp.lt.f32.partialorder %v1479, 0.01
        %vm2044 = vcmp.lt.f32.partialorder %v1480, 0.01
        %vm2045 = vcmp.lt.f32.partialorder %v1481, 0.01
        %vm2046 = vcmp.lt.f32.partialorder %v1482, 0.01
        %vm2047 = vcmp.lt.f32.partialorder %v1483, 0.01
        %vm2048 = vcmp.lt.f32.partialorder %v1484, 0.01
        %vm2049 = vcmp.lt.f32.partialorder %v1485, 0.01
        %vm2050 = vcmp.lt.f32.partialorder %v1486, 0.01
        %vm2051 = vcmp.lt.f32.partialorder %v1487, 0.01
        %vm2052 = vcmp.lt.f32.partialorder %v1488, 0.01
        %vm2053 = vcmp.lt.f32.partialorder %v1489, 0.01
        %vm2054 = vcmp.lt.f32.partialorder %v1490, 0.01
        %vm2055 = vcmp.lt.f32.partialorder %v1491, 0.01
        %vm2056 = vcmp.lt.f32.partialorder %v1492, 0.01
        %vm2057 = vcmp.lt.f32.partialorder %v1493, 0.01
        %vm2058 = vcmp.lt.f32.partialorder %v1494, 0.01
        %vm2059 = vcmp.lt.f32.partialorder %v1495, 0.01
        %vm2060 = vcmp.lt.f32.partialorder %v1496, 0.01
        %vm2061 = vcmp.lt.f32.partialorder %v1497, 0.01
        %vm2062 = vcmp.lt.f32.partialorder %v1498, 0.01
        %vm2063 = vcmp.lt.f32.partialorder %v1499, 0.01
        %vm2064 = vcmp.lt.f32.partialorder %v1500, 0.01
        %vm2065 = vcmp.lt.f32.partialorder %v1501, 0.01
        %vm2066 = vcmp.lt.f32.partialorder %v1502, 0.01
        %vm2067 = vcmp.lt.f32.partialorder %v1503, 0.01
        %vm2068 = vcmp.lt.f32.partialorder %v1504, 0.01
        %vm2069 = vcmp.lt.f32.partialorder %v1505, 0.01
        %vm2070 = vcmp.lt.f32.partialorder %v1506, 0.01
        %vm2071 = vcmp.lt.f32.partialorder %v1507, 0.01
        %vm2072 = vcmp.lt.f32.partialorder %v1508, 0.01
        %vm2073 = vcmp.lt.f32.partialorder %v1509, 0.01
        %vm2074 = vcmp.lt.f32.partialorder %v1510, 0.01
        %vm2075 = vcmp.lt.f32.partialorder %v1511, 0.01
        %vm2076 = vcmp.lt.f32.partialorder %v1512, 0.01
        %vm2077 = vcmp.lt.f32.partialorder %v1513, 0.01
        %vm2078 = vcmp.lt.f32.partialorder %v1514, 0.01
        %vm2079 = vcmp.lt.f32.partialorder %v1515, 0.01
        %vm2080 = vcmp.lt.f32.partialorder %v1516, 0.01
        %vm2081 = vcmp.lt.f32.partialorder %v1517, 0.01
        %vm2082 = vcmp.lt.f32.partialorder %v1518, 0.01
        %vm2083 = vcmp.lt.f32.partialorder %v1519, 0.01
        %vm2084 = vcmp.lt.f32.partialorder %v1520, 0.01
        %vm2085 = vcmp.lt.f32.partialorder %v1521, 0.01
        %vm2086 = vcmp.lt.f32.partialorder %v1522, 0.01
        %vm2087 = vcmp.lt.f32.partialorder %v1523, 0.01
        %vm2088 = vcmp.lt.f32.partialorder %v1524, 0.01
        %vm2089 = vcmp.lt.f32.partialorder %v1525, 0.01
        %vm2090 = vcmp.lt.f32.partialorder %v1526, 0.01
        %vm2091 = vcmp.lt.f32.partialorder %v1527, 0.01
        %vm2092 = vcmp.lt.f32.partialorder %v1528, 0.01
        %vm2093 = vcmp.lt.f32.partialorder %v1529, 0.01
        %vm2094 = vcmp.lt.f32.partialorder %v1530, 0.01
        %vm2095 = vcmp.lt.f32.partialorder %v1531, 0.01
        %vm2096 = vcmp.lt.f32.partialorder %v1532, 0.01
        %vm2097 = vcmp.lt.f32.partialorder %v1533, 0.01
        %vm2098 = vcmp.lt.f32.partialorder %v1534, 0.01
        %vm2099 = vcmp.lt.f32.partialorder %v1535, 0.01
        %vm2100 = vcmp.lt.f32.partialorder %v1536, 0.01
        %vm2101 = vcmp.lt.f32.partialorder %v1537, 0.01
        %vm2102 = vcmp.lt.f32.partialorder %v1538, 0.01
        %vm2103 = vcmp.lt.f32.partialorder %v1539, 0.01
        %vm2104 = vcmp.lt.f32.partialorder %v1540, 0.01
        %vm2105 = vcmp.lt.f32.partialorder %v1541, 0.01
        %vm2106 = vcmp.lt.f32.partialorder %v1542, 0.01
        %vm2107 = vcmp.lt.f32.partialorder %v1543, 0.01
        %vm2108 = vcmp.lt.f32.partialorder %v1544, 0.01
        %vm2109 = vcmp.lt.f32.partialorder %v1545, 0.01
        %vm2110 = vcmp.lt.f32.partialorder %v1546, 0.01
        %vm2111 = vcmp.lt.f32.partialorder %v1547, 0.01
        %vm2112 = vcmp.lt.f32.partialorder %v1548, 0.01
        %vm2113 = vcmp.lt.f32.partialorder %v1549, 0.01
        %vm2114 = vcmp.lt.f32.partialorder %v1550, 0.01
        %vm2115 = vcmp.lt.f32.partialorder %v1551, 0.01
        %vm2116 = vcmp.lt.f32.partialorder %v1552, 0.01
        %vm2117 = vcmp.lt.f32.partialorder %v1553, 0.01
        %vm2118 = vcmp.lt.f32.partialorder %v1554, 0.01
        %vm2119 = vcmp.lt.f32.partialorder %v1555, 0.01
        %vm2120 = vcmp.lt.f32.partialorder %v1556, 0.01
        %vm2121 = vcmp.lt.f32.partialorder %v1557, 0.01
        %vm2122 = vcmp.lt.f32.partialorder %v1558, 0.01
        %vm2123 = vcmp.lt.f32.partialorder %v1559, 0.01
        %vm2124 = vcmp.lt.f32.partialorder %v1560, 0.01
        %vm2125 = vcmp.lt.f32.partialorder %v1561, 0.01
        %vm2126 = vcmp.lt.f32.partialorder %v1562, 0.01
        %vm2127 = vcmp.lt.f32.partialorder %v1563, 0.01
        %vm2128 = vcmp.lt.f32.partialorder %v1564, 0.01
        %vm2129 = vcmp.lt.f32.partialorder %v1565, 0.01
        %vm2130 = vcmp.lt.f32.partialorder %v1566, 0.01
        %vm2131 = vcmp.lt.f32.partialorder %v1567, 0.01
        %vm2132 = vcmp.lt.f32.partialorder %v1568, 0.01
        %vm2133 = vcmp.lt.f32.partialorder %v1569, 0.01
        %vm2134 = vcmp.lt.f32.partialorder %v1570, 0.01
        %vm2135 = vcmp.lt.f32.partialorder %v1571, 0.01
        %vm2136 = vcmp.lt.f32.partialorder %v1572, 0.01
        %vm2137 = vcmp.lt.f32.partialorder %v1573, 0.01
        %vm2138 = vcmp.lt.f32.partialorder %v1574, 0.01
        %vm2139 = vcmp.lt.f32.partialorder %v1575, 0.01
        %vm2140 = vcmp.lt.f32.partialorder %v1576, 0.01
        %vm2141 = vcmp.lt.f32.partialorder %v1577, 0.01
        %vm2142 = vcmp.lt.f32.partialorder %v1578, 0.01
        %vm2143 = vcmp.lt.f32.partialorder %v1579, 0.01
        %vm2144 = vcmp.lt.f32.partialorder %v1580, 0.01
        %vm2145 = vcmp.lt.f32.partialorder %v1581, 0.01
        %vm2146 = vcmp.lt.f32.partialorder %v1582, 0.01
        %vm2147 = vcmp.lt.f32.partialorder %v1583, 0.01
        %vm2148 = vcmp.lt.f32.partialorder %v1584, 0.01
        %vm2149 = vcmp.lt.f32.partialorder %v1585, 0.01
        %vm2150 = vcmp.lt.f32.partialorder %v1586, 0.01
        %vm2151 = vcmp.lt.f32.partialorder %v1587, 0.01
        %vm2152 = vcmp.lt.f32.partialorder %v1588, 0.01
        %vm2153 = vcmp.lt.f32.partialorder %v1589, 0.01
        %vm2154 = vcmp.lt.f32.partialorder %v1590, 0.01
        %vm2155 = vcmp.lt.f32.partialorder %v1591, 0.01
        %vm2156 = vcmp.lt.f32.partialorder %v1592, 0.01
        %vm2157 = vcmp.lt.f32.partialorder %v1593, 0.01
        %vm2158 = vcmp.lt.f32.partialorder %v1594, 0.01
        %vm2159 = vcmp.lt.f32.partialorder %v1595, 0.01
        %vm2160 = vcmp.lt.f32.partialorder %v1596, 0.01
        %vm2161 = vcmp.lt.f32.partialorder %v1597, 0.01
        %vm2162 = vcmp.lt.f32.partialorder %v1598, 0.01
        %vm2163 = vcmp.lt.f32.partialorder %v1599, 0.01
        %vm2164 = vcmp.lt.f32.partialorder %v1600, 0.01
        %vm2165 = vcmp.lt.f32.partialorder %v1601, 0.01
        %vm2166 = vcmp.lt.f32.partialorder %v1602, 0.01
        %vm2167 = vcmp.lt.f32.partialorder %v1603, 0.01
        %vm2168 = vcmp.lt.f32.partialorder %v1604, 0.01
        %vm2169 = vcmp.lt.f32.partialorder %v1605, 0.01
        %vm2170 = vcmp.lt.f32.partialorder %v1606, 0.01
        %vm2171 = vcmp.lt.f32.partialorder %v1607, 0.01
        %vm2172 = vcmp.lt.f32.partialorder %v1608, 0.01
        %vm2173 = vcmp.lt.f32.partialorder %v1609, 0.01
        %vm2174 = vcmp.lt.f32.partialorder %v1610, 0.01
        %vm2175 = vcmp.lt.f32.partialorder %v1611, 0.01
        %vm2176 = vcmp.lt.f32.partialorder %v1612, 0.01
        %vm2177 = vcmp.lt.f32.partialorder %v1613, 0.01
        %vm2178 = vcmp.lt.f32.partialorder %v1614, 0.01
        %vm2179 = vcmp.lt.f32.partialorder %v1615, 0.01
        %vm2180 = vcmp.lt.f32.partialorder %v1616, 0.01
        %vm2181 = vcmp.lt.f32.partialorder %v1617, 0.01
        %vm2182 = vcmp.lt.f32.partialorder %v1618, 0.01
        %vm2183 = vcmp.lt.f32.partialorder %v1619, 0.01
        %vm2184 = vcmp.lt.f32.partialorder %v1620, 0.01
        %vm2185 = vcmp.lt.f32.partialorder %v1621, 0.01
        %vm2186 = vcmp.lt.f32.partialorder %v1622, 0.01
        %vm2187 = vcmp.lt.f32.partialorder %v1623, 0.01
        %vm2188 = vcmp.lt.f32.partialorder %v1624, 0.01
        %vm2189 = vcmp.lt.f32.partialorder %v1625, 0.01
        %vm2190 = vcmp.lt.f32.partialorder %v1626, 0.01
        %vm2191 = vcmp.lt.f32.partialorder %v1627, 0.01
        %vm2192 = vcmp.lt.f32.partialorder %v1628, 0.01
        %vm2193 = vcmp.lt.f32.partialorder %v1629, 0.01
        %vm2194 = vcmp.lt.f32.partialorder %v1630, 0.01
        %vm2195 = vcmp.lt.f32.partialorder %v1631, 0.01
        %vm2196 = vcmp.lt.f32.partialorder %v1632, 0.01
        %vm2197 = vcmp.lt.f32.partialorder %v1633, 0.01
        %vm2198 = vcmp.lt.f32.partialorder %v1634, 0.01
        %vm2199 = vcmp.lt.f32.partialorder %v1635, 0.01
        %vm2200 = vcmp.lt.f32.partialorder %v1636, 0.01
        %vm2201 = vcmp.lt.f32.partialorder %v1637, 0.01
        %vm2202 = vcmp.lt.f32.partialorder %v1638, 0.01
        %vm2203 = vcmp.lt.f32.partialorder %v1639, 0.01
        %vm2204 = vcmp.lt.f32.partialorder %v1640, 0.01
        %vm2205 = vcmp.lt.f32.partialorder %v1641, 0.01
        %vm2206 = vcmp.lt.f32.partialorder %v1642, 0.01
        %vm2207 = vcmp.lt.f32.partialorder %v1643, 0.01
        %vm2208 = vcmp.lt.f32.partialorder %v1644, 0.01
        %vm2209 = vcmp.lt.f32.partialorder %v1645, 0.01
        %vm2210 = vcmp.lt.f32.partialorder %v1646, 0.01
        %vm2211 = vcmp.lt.f32.partialorder %v1647, 0.01
        %vm2212 = vcmp.lt.f32.partialorder %v1648, 0.01
        %vm2213 = vcmp.lt.f32.partialorder %v1649, 0.01
        %vm2214 = vcmp.lt.f32.partialorder %v1650, 0.01
        %vm2215 = vcmp.lt.f32.partialorder %v1651, 0.01
        %vm2216 = vcmp.lt.f32.partialorder %v1652, 0.01
        %vm2217 = vcmp.lt.f32.partialorder %v1653, 0.01
        %vm2218 = vcmp.lt.f32.partialorder %v1654, 0.01
        %vm2219 = vcmp.lt.f32.partialorder %v1655, 0.01
        %vm2220 = vcmp.lt.f32.partialorder %v1656, 0.01
        %vm2221 = vcmp.lt.f32.partialorder %v1657, 0.01
        %vm2222 = vcmp.lt.f32.partialorder %v1658, 0.01
        %vm2223 = vcmp.lt.f32.partialorder %v1659, 0.01
        %vm2224 = vcmp.lt.f32.partialorder %v1660, 0.01
        %vm2225 = vcmp.lt.f32.partialorder %v1661, 0.01
        %vm2226 = vcmp.lt.f32.partialorder %v1662, 0.01
        %vm2227 = vcmp.lt.f32.partialorder %v1663, 0.01
        %vm2228 = vcmp.lt.f32.partialorder %v1664, 0.01
        %vm2229 = vcmp.lt.f32.partialorder %v1665, 0.01
        %vm2230 = vcmp.lt.f32.partialorder %v1666, 0.01
        %vm2231 = vcmp.lt.f32.partialorder %v1667, 0.01
        %vm2232 = vcmp.lt.f32.partialorder %v1668, 0.01
        %vm2233 = vcmp.lt.f32.partialorder %v1669, 0.01
        %vm2234 = vcmp.lt.f32.partialorder %v1670, 0.01
        %vm2235 = vcmp.lt.f32.partialorder %v1671, 0.01
        %vm2236 = vcmp.lt.f32.partialorder %v1672, 0.01
        %vm2237 = vcmp.lt.f32.partialorder %v1673, 0.01
        %vm2238 = vcmp.lt.f32.partialorder %v1674, 0.01
        %vm2239 = vcmp.lt.f32.partialorder %v1675, 0.01
        %vm2240 = vcmp.lt.f32.partialorder %v1676, 0.01
        %vm2241 = vcmp.lt.f32.partialorder %v1677, 0.01
        %vm2242 = vcmp.lt.f32.partialorder %v1678, 0.01
        %vm2243 = vcmp.lt.f32.partialorder %v1679, 0.01
        %vm2244 = vcmp.lt.f32.partialorder %v1680, 0.01
        %vm2245 = vcmp.lt.f32.partialorder %v1681, 0.01
        %vm2246 = vcmp.lt.f32.partialorder %v1682, 0.01
        %vm2247 = vcmp.lt.f32.partialorder %v1683, 0.01
        %vm2248 = vcmp.lt.f32.partialorder %v1684, 0.01
        %vm2249 = vcmp.lt.f32.partialorder %v1685, 0.01
        %vm2250 = vcmp.lt.f32.partialorder %v1686, 0.01
        %vm2251 = vcmp.lt.f32.partialorder %v1687, 0.01
        %vm2252 = vcmp.lt.f32.partialorder %v1688, 0.01
        %vm2253 = vcmp.lt.f32.partialorder %v1689, 0.01
        %vm2254 = vcmp.lt.f32.partialorder %v1690, 0.01
        %vm2255 = vcmp.lt.f32.partialorder %v1691, 0.01
        %vm2256 = vcmp.lt.f32.partialorder %v1692, 0.01
        %vm2257 = vcmp.lt.f32.partialorder %v1693, 0.01
        %vm2258 = vcmp.lt.f32.partialorder %v1694, 0.01
        %vm2259 = vcmp.lt.f32.partialorder %v1695, 0.01
        %vm2260 = vcmp.lt.f32.partialorder %v1696, 0.01
        %vm2261 = vcmp.lt.f32.partialorder %v1697, 0.01
        %vm2262 = vcmp.lt.f32.partialorder %v1698, 0.01
        %vm2263 = vcmp.lt.f32.partialorder %v1699, 0.01
        %vm2264 = vcmp.lt.f32.partialorder %v1700, 0.01
        %vm2265 = vcmp.lt.f32.partialorder %v1701, 0.01
        %vm2266 = vcmp.lt.f32.partialorder %v1702, 0.01
        %vm2267 = vcmp.lt.f32.partialorder %v1703, 0.01
        %vm2268 = vcmp.lt.f32.partialorder %v1704, 0.01
        %vm2269 = vcmp.lt.f32.partialorder %v1705, 0.01
        %vm2270 = vcmp.lt.f32.partialorder %v1706, 0.01
        %vm2271 = vcmp.lt.f32.partialorder %v1707, 0.01
        %vm2272 = vcmp.lt.f32.partialorder %v1708, 0.01
        %vm2273 = vcmp.lt.f32.partialorder %v1709, 0.01
        %vm2274 = vcmp.lt.f32.partialorder %v1710, 0.01
        %vm2275 = vcmp.lt.f32.partialorder %v1711, 0.01
        %vm2276 = vcmp.lt.f32.partialorder %v1712, 0.01
        %vm2277 = vcmp.lt.f32.partialorder %v1713, 0.01
        %vm2278 = vcmp.lt.f32.partialorder %v1714, 0.01
        %vm2279 = vcmp.lt.f32.partialorder %v1715, 0.01
        %vm2280 = vcmp.lt.f32.partialorder %v1716, 0.01
        %vm2281 = vcmp.lt.f32.partialorder %v1717, 0.01
        %vm2282 = vcmp.lt.f32.partialorder %v1718, 0.01
        %vm2283 = vcmp.lt.f32.partialorder %v1719, 0.01
        %vm2284 = vcmp.lt.f32.partialorder %v1720, 0.01
        %vm2285 = vcmp.lt.f32.partialorder %v1721, 0.01
        %vm2286 = vcmp.lt.f32.partialorder %v1722, 0.01
        %vm2287 = vcmp.lt.f32.partialorder %v1723, 0.01
        %vm2288 = vcmp.lt.f32.partialorder %v1724, 0.01
        %vm2289 = vcmp.lt.f32.partialorder %v1725, 0.01
        %vm2290 = vcmp.lt.f32.partialorder %v1726, 0.01
        %vm2291 = vcmp.lt.f32.partialorder %v1727, 0.01
        %vm2292 = vcmp.lt.f32.partialorder %v1728, 0.01
        %vm2293 = vcmp.lt.f32.partialorder %v1729, 0.01
        %vm2294 = vcmp.lt.f32.partialorder %v1730, 0.01
        %vm2295 = vcmp.lt.f32.partialorder %v1731, 0.01
        %vm2296 = vcmp.lt.f32.partialorder %v1732, 0.01
        %vm2297 = vcmp.lt.f32.partialorder %v1733, 0.01
        %vm2298 = vcmp.lt.f32.partialorder %v1734, 0.01
        %vm2299 = vcmp.lt.f32.partialorder %v1735, 0.01
        %vm2300 = vcmp.lt.f32.partialorder %v1736, 0.01
        %vm2301 = vcmp.lt.f32.partialorder %v1737, 0.01
        %vm2302 = vcmp.lt.f32.partialorder %v1738, 0.01
        %vm2303 = vcmp.lt.f32.partialorder %v1739, 0.01
        %vm2304 = vcmp.lt.f32.partialorder %v1740, 0.01
        %vm2305 = vcmp.lt.f32.partialorder %v1741, 0.01
        %vm2306 = vcmp.lt.f32.partialorder %v1742, 0.01
        %vm2307 = vcmp.lt.f32.partialorder %v1743, 0.01
        %vm2308 = vcmp.lt.f32.partialorder %v1744, 0.01
        %vm2309 = vcmp.lt.f32.partialorder %v1745, 0.01
        %vm2310 = vcmp.lt.f32.partialorder %v1746, 0.01
        %vm2311 = vcmp.lt.f32.partialorder %v1747, 0.01
        %vm2312 = vcmp.lt.f32.partialorder %v1748, 0.01
        %vm2313 = vcmp.lt.f32.partialorder %v1749, 0.01
        %vm2314 = vcmp.lt.f32.partialorder %v1750, 0.01
        %vm2315 = vcmp.lt.f32.partialorder %v1751, 0.01
        %vm2316 = vcmp.lt.f32.partialorder %v1752, 0.01
        %vm2317 = vcmp.lt.f32.partialorder %v1753, 0.01
        %vm2318 = vcmp.lt.f32.partialorder %v1754, 0.01
        %vm2319 = vcmp.lt.f32.partialorder %v1755, 0.01
        %vm2320 = vcmp.lt.f32.partialorder %v1756, 0.01
        %vm2321 = vcmp.lt.f32.partialorder %v1757, 0.01
        %vm2322 = vcmp.lt.f32.partialorder %v1758, 0.01
        %vm2323 = vcmp.lt.f32.partialorder %v1759, 0.01
        %vm2324 = vcmp.lt.f32.partialorder %v1760, 0.01
        %vm2325 = vcmp.lt.f32.partialorder %v1761, 0.01
        %vm2326 = vcmp.lt.f32.partialorder %v1762, 0.01
        %vm2327 = vcmp.lt.f32.partialorder %v1763, 0.01
        %vm2328 = vcmp.lt.f32.partialorder %v1764, 0.01
        %vm2329 = vcmp.lt.f32.partialorder %v1765, 0.01
        %vm2330 = vcmp.lt.f32.partialorder %v1766, 0.01
        %vm2331 = vcmp.lt.f32.partialorder %v1767, 0.01
        %vm2332 = vcmp.lt.f32.partialorder %v1768, 0.01
        %vm2333 = vcmp.lt.f32.partialorder %v1769, 0.01
        %vm2334 = vcmp.lt.f32.partialorder %v1770, 0.01
        %vm2335 = vcmp.lt.f32.partialorder %v1771, 0.01
        %vm2336 = vcmp.lt.f32.partialorder %v1772, 0.01
        %vm2337 = vcmp.lt.f32.partialorder %v1773, 0.01
        %vm2338 = vcmp.lt.f32.partialorder %v1774, 0.01
        %vm2339 = vcmp.lt.f32.partialorder %v1775, 0.01
        %vm2340 = vcmp.lt.f32.partialorder %v1776, 0.01
        %vm2341 = vcmp.lt.f32.partialorder %v1777, 0.01
        %vm2342 = vcmp.lt.f32.partialorder %v1778, 0.01
        %vm2343 = vcmp.lt.f32.partialorder %v1779, 0.01
        %vm2344 = vcmp.lt.f32.partialorder %v1780, 0.01
        %vm2345 = vcmp.lt.f32.partialorder %v1781, 0.01
        %vm2346 = vcmp.lt.f32.partialorder %v1782, 0.01
        %vm2347 = vcmp.lt.f32.partialorder %v1783, 0.01
        %vm2348 = vcmp.lt.f32.partialorder %v1784, 0.01
        %vm2349 = vcmp.lt.f32.partialorder %v1785, 0.01
        %vm2350 = vcmp.lt.f32.partialorder %v1786, 0.01
        %vm2351 = vcmp.lt.f32.partialorder %v1787, 0.01
        %vm2352 = vcmp.lt.f32.partialorder %v1788, 0.01
        %vm2353 = vcmp.lt.f32.partialorder %v1789, 0.01
        %vm2354 = vcmp.lt.f32.partialorder %v1790, 0.01
        %vm2355 = vcmp.lt.f32.partialorder %v1791, 0.01
        %vm2356 = vcmp.lt.f32.partialorder %v1792, 0.01
        %vm2357 = vcmp.lt.f32.partialorder %v1793, 0.01
        %vm2358 = vcmp.lt.f32.partialorder %v1794, 0.01
        %vm2359 = vcmp.lt.f32.partialorder %v1795, 0.01
        %vm2360 = vcmp.lt.f32.partialorder %v1796, 0.01
        %vm2361 = vcmp.lt.f32.partialorder %v1797, 0.01
        %vm2362 = vcmp.lt.f32.partialorder %v1798, 0.01
        %vm2363 = vcmp.lt.f32.partialorder %v1799, 0.01
        %vm2364 = vcmp.lt.f32.partialorder %v1800, 0.01
        %vm2365 = vcmp.lt.f32.partialorder %v1801, 0.01
        %vm2366 = vcmp.lt.f32.partialorder %v1802, 0.01
        %vm2367 = vcmp.lt.f32.partialorder %v1803, 0.01
        %vm2368 = vcmp.lt.f32.partialorder %v1804, 0.01
        %vm2369 = vcmp.lt.f32.partialorder %v1805, 0.01
        %vm2370 = vcmp.lt.f32.partialorder %v1806, 0.01
        %vm2371 = vcmp.lt.f32.partialorder %v1807, 0.01
        %vm2372 = vcmp.lt.f32.partialorder %v1808, 0.01
        %vm2373 = vcmp.lt.f32.partialorder %v1809, 0.01
        %vm2374 = vcmp.lt.f32.partialorder %v1810, 0.01
        %vm2375 = vcmp.lt.f32.partialorder %v1811, 0.01
        %vm2376 = vcmp.lt.f32.partialorder %v1812, 0.01
        %vm2377 = vcmp.lt.f32.partialorder %v1813, 0.01
        %vm2378 = vcmp.lt.f32.partialorder %v1814, 0.01
        %vm2379 = vcmp.lt.f32.partialorder %v1815, 0.01
        %vm2380 = vcmp.lt.f32.partialorder %v1816, 0.01
        %vm2381 = vcmp.lt.f32.partialorder %v1817, 0.01
        %vm2382 = vcmp.lt.f32.partialorder %v1818, 0.01
        %vm2383 = vcmp.lt.f32.partialorder %v1819, 0.01
        %vm2384 = vcmp.lt.f32.partialorder %v1820, 0.01
        %vm2385 = vcmp.lt.f32.partialorder %v1821, 0.01
        %vm2386 = vcmp.lt.f32.partialorder %v1822, 0.01
        %vm2387 = vcmp.lt.f32.partialorder %v1823, 0.01
        %vm2388 = vcmp.lt.f32.partialorder %v1824, 0.01
        %vm2389 = vcmp.lt.f32.partialorder %v1825, 0.01
        %vm2390 = vcmp.lt.f32.partialorder %v1826, 0.01
        %vm2391 = vcmp.lt.f32.partialorder %v1827, 0.01
        %vm2392 = vcmp.lt.f32.partialorder %v1828, 0.01
        %vm2393 = vcmp.lt.f32.partialorder %v1829, 0.01
        %vm2394 = vcmp.lt.f32.partialorder %v1830, 0.01
        %vm2395 = vcmp.lt.f32.partialorder %v1831, 0.01
        %vm2396 = vcmp.lt.f32.partialorder %v1832, 0.01
        %vm2397 = vcmp.lt.f32.partialorder %v1833, 0.01
        %vm2398 = vcmp.lt.f32.partialorder %v1834, 0.01
        %vm2399 = vcmp.lt.f32.partialorder %v1835, 0.01
        %vm2400 = vcmp.lt.f32.partialorder %v1836, 0.01
        %vm2401 = vcmp.lt.f32.partialorder %v1837, 0.01
        %vm2402 = vcmp.lt.f32.partialorder %v1838, 0.01
        %vm2403 = vcmp.lt.f32.partialorder %v1839, 0.01
        %vm2404 = vcmp.lt.f32.partialorder %v1840, 0.01
        %vm2405 = vcmp.lt.f32.partialorder %v1841, 0.01
        %vm2406 = vcmp.lt.f32.partialorder %v1842, 0.01
        %vm2407 = vcmp.lt.f32.partialorder %v1843, 0.01
        %vm2408 = vcmp.lt.f32.partialorder %v1844, 0.01
        %vm2409 = vcmp.lt.f32.partialorder %v1845, 0.01
        %vm2410 = vcmp.lt.f32.partialorder %v1846, 0.01
        %vm2411 = vcmp.lt.f32.partialorder %v1847, 0.01
        %vm2412 = vcmp.lt.f32.partialorder %v1848, 0.01
        %vm2413 = vcmp.lt.f32.partialorder %v1849, 0.01
        %vm2414 = vcmp.lt.f32.partialorder %v1850, 0.01
        %vm2415 = vcmp.lt.f32.partialorder %v1851, 0.01
        %vm2416 = vcmp.lt.f32.partialorder %v1852, 0.01
        %vm2417 = vcmp.lt.f32.partialorder %v1853, 0.01
        %vm2418 = vcmp.lt.f32.partialorder %v1854, 0.01
        %vm2419 = vcmp.lt.f32.partialorder %v1855, 0.01
        %vm2420 = vcmp.lt.f32.partialorder %v1856, 0.01
        %vm2421 = vcmp.lt.f32.partialorder %v1857, 0.01
        %vm2422 = vcmp.lt.f32.partialorder %v1858, 0.01
        %vm2423 = vcmp.lt.f32.partialorder %v1859, 0.01
        %vm2424 = vcmp.lt.f32.partialorder %v1860, 0.01
        %vm2425 = vcmp.lt.f32.partialorder %v1861, 0.01
        %vm2426 = vcmp.lt.f32.partialorder %v1862, 0.01
        %vm2427 = vcmp.lt.f32.partialorder %v1863, 0.01
        %vm2428 = vcmp.lt.f32.partialorder %v1864, 0.01
        %vm2429 = vcmp.lt.f32.partialorder %v1865, 0.01
        %vm2430 = vcmp.lt.f32.partialorder %v1866, 0.01
        %vm2431 = vcmp.lt.f32.partialorder %v1867, 0.01
        %vm2432 = vcmp.lt.f32.partialorder %v1868, 0.01
        %vm2433 = vcmp.lt.f32.partialorder %v1869, 0.01
        %vm2434 = vcmp.lt.f32.partialorder %v1870, 0.01
        %vm2435 = vcmp.lt.f32.partialorder %v1871, 0.01
        %vm2436 = vcmp.lt.f32.partialorder %v1872, 0.01
        %vm2437 = vcmp.lt.f32.partialorder %v1873, 0.01
        %vm2438 = vcmp.lt.f32.partialorder %v1874, 0.01
        %vm2439 = vcmp.lt.f32.partialorder %v1875, 0.01
        %vm2440 = vcmp.lt.f32.partialorder %v1876, 0.01
        %vm2441 = vcmp.lt.f32.partialorder %v1877, 0.01
        %vm2442 = vcmp.lt.f32.partialorder %v1878, 0.01
        %vm2443 = vcmp.lt.f32.partialorder %v1879, 0.01
        %vm2444 = vcmp.lt.f32.partialorder %v1880, 0.01
        %vm2445 = vcmp.lt.f32.partialorder %v1881, 0.01
        %vm2446 = vcmp.lt.f32.partialorder %v1882, 0.01
        %vm2447 = vcmp.lt.f32.partialorder %v1883, 0.01
        %vm2448 = vcmp.lt.f32.partialorder %v1884, 0.01
        %vm2449 = vcmp.lt.f32.partialorder %v1885, 0.01
        %vm2450 = vcmp.lt.f32.partialorder %v1886, 0.01
        %vm2451 = vcmp.lt.f32.partialorder %v1887, 0.01
        %vm2452 = vcmp.lt.f32.partialorder %v1888, 0.01
        %vm2453 = vcmp.lt.f32.partialorder %v1889, 0.01
        %vm2454 = vcmp.lt.f32.partialorder %v1890, 0.01
        %vm2455 = vcmp.lt.f32.partialorder %v1891, 0.01
        %vm2456 = vcmp.lt.f32.partialorder %v1892, 0.01
        %vm2457 = vcmp.lt.f32.partialorder %v1893, 0.01
        %vm2458 = vcmp.lt.f32.partialorder %v1894, 0.01
        %vm2459 = vcmp.lt.f32.partialorder %v1895, 0.01
        %vm2460 = vcmp.lt.f32.partialorder %v1896, 0.01
        %vm2461 = vcmp.lt.f32.partialorder %v1897, 0.01
        %vm2462 = vcmp.lt.f32.partialorder %v1898, 0.01
        %vm2463 = vcmp.lt.f32.partialorder %v1899, 0.01
        %vm2464 = vcmp.lt.f32.partialorder %v1900, 0.01
        %vm2465 = vcmp.lt.f32.partialorder %v1901, 0.01
        %vm2466 = vcmp.lt.f32.partialorder %v1902, 0.01
        %vm2467 = vcmp.lt.f32.partialorder %v1903, 0.01
        %vm2468 = vcmp.lt.f32.partialorder %v1904, 0.01
        %vm2469 = vcmp.lt.f32.partialorder %v1905, 0.01
        %vm2470 = vcmp.lt.f32.partialorder %v1906, 0.01
        %vm2471 = vcmp.lt.f32.partialorder %v1907, 0.01
        %vm2472 = vcmp.lt.f32.partialorder %v1908, 0.01
        %vm2473 = vcmp.lt.f32.partialorder %v1909, 0.01
        %vm2474 = vcmp.lt.f32.partialorder %v1910, 0.01
        %vm2475 = vcmp.lt.f32.partialorder %v1911, 0.01
        %vm2476 = vcmp.lt.f32.partialorder %v1912, 0.01
        %vm2477 = vcmp.lt.f32.partialorder %v1913, 0.01
        %vm2478 = vcmp.lt.f32.partialorder %v1914, 0.01
        %vm2479 = vcmp.lt.f32.partialorder %v1915, 0.01
        %vm2480 = vcmp.lt.f32.partialorder %v1916, 0.01
        %vm2481 = vcmp.lt.f32.partialorder %v1917, 0.01
        %vm2482 = vcmp.lt.f32.partialorder %v1918, 0.01
        %vm2483 = vcmp.lt.f32.partialorder %v1919, 0.01
        %vm2484 = vcmp.lt.f32.partialorder %v1920, 0.01
        %vm2485 = vcmp.lt.f32.partialorder %v1921, 0.01
        %vm2486 = vcmp.lt.f32.partialorder %v1922, 0.01
        %vm2487 = vcmp.lt.f32.partialorder %v1923, 0.01
        %vm2488 = vcmp.lt.f32.partialorder %v1924, 0.01
        %vm2489 = vcmp.lt.f32.partialorder %v1925, 0.01
        %vm2490 = vcmp.lt.f32.partialorder %v1926, 0.01
        %vm2491 = vcmp.lt.f32.partialorder %v1927, 0.01
        %vm2492 = vcmp.lt.f32.partialorder %v1928, 0.01
        %vm2493 = vcmp.lt.f32.partialorder %v1929, 0.01
        %vm2494 = vcmp.lt.f32.partialorder %v1930, 0.01
        %vm2495 = vcmp.lt.f32.partialorder %v1931, 0.01
        %vm2496 = vcmp.lt.f32.partialorder %v1932, 0.01
        %vm2497 = vcmp.lt.f32.partialorder %v1933, 0.01
        %vm2498 = vcmp.lt.f32.partialorder %v1934, 0.01
        %vm2499 = vcmp.lt.f32.partialorder %v1935, 0.01
        %vm2500 = vcmp.lt.f32.partialorder %v1936, 0.01
        %vm2501 = vcmp.lt.f32.partialorder %v1937, 0.01
        %vm2502 = vcmp.lt.f32.partialorder %v1938, 0.01
        %vm2503 = vcmp.lt.f32.partialorder %v1939, 0.01
        %vm2504 = vcmp.lt.f32.partialorder %v1940, 0.01
        %vm2505 = vcmp.lt.f32.partialorder %v1941, 0.01
        %vm2506 = vcmp.lt.f32.partialorder %v1942, 0.01
        %vm2507 = vcmp.lt.f32.partialorder %v1943, 0.01
        %vm2508 = vcmp.lt.f32.partialorder %v1944, 0.01
        %vm2509 = vcmp.lt.f32.partialorder %v1945, 0.01
        %vm2510 = vcmp.lt.f32.partialorder %v1946, 0.01
        %vm2511 = vcmp.lt.f32.partialorder %v1947, 0.01
        %vm2512 = vcmp.lt.f32.partialorder %v1948, 0.01
        %vm2513 = vcmp.lt.f32.partialorder %v1949, 0.01
        %vm2514 = vcmp.lt.f32.partialorder %v1950, 0.01
        %vm2515 = vcmp.lt.f32.partialorder %v1951, 0.01
        %vm2516 = vcmp.lt.f32.partialorder %v1952, 0.01
        %vm2517 = vcmp.lt.f32.partialorder %v1953, 0.01
        %vm2518 = vcmp.lt.f32.partialorder %v1954, 0.01
        %vm2519 = vcmp.lt.f32.partialorder %v1955, 0.01
        %vm2520 = vcmp.lt.f32.partialorder %v1956, 0.01
        %vm2521 = vcmp.lt.f32.partialorder %v1957, 0.01
        %vm2522 = vcmp.lt.f32.partialorder %v1958, 0.01
        %vm2523 = vcmp.lt.f32.partialorder %v1959, 0.01
        %vm2524 = vcmp.lt.f32.partialorder %v1960, 0.01
        %vm2525 = vcmp.lt.f32.partialorder %v1961, 0.01
        %vm2526 = vcmp.lt.f32.partialorder %v1962, 0.01
        %vm2527 = vcmp.lt.f32.partialorder %v1963, 0.01
        %vm2528 = vcmp.lt.f32.partialorder %v1964, 0.01
        %vm2529 = vcmp.lt.f32.partialorder %v1965, 0.01
        %vm2530 = vcmp.lt.f32.partialorder %v1966, 0.01
        %vm2531 = vcmp.lt.f32.partialorder %v1967, 0.01
        %vm2532 = vcmp.lt.f32.partialorder %v1968, 0.01
        %vm2533 = vcmp.lt.f32.partialorder %v1969, 0.01
        %vm2534 = vcmp.lt.f32.partialorder %v1970, 0.01
        %v2535 = vsel %vm1971, 1, 0
        %v2536 = vsel %vm1972, 1, 0
        %v2537 = vsel %vm1973, 1, 0
        %v2538 = vsel %vm1974, 1, 0
        %v2539 = vsel %vm1975, 1, 0
        %v2540 = vsel %vm1976, 1, 0
        %v2541 = vsel %vm1977, 1, 0
        %v2542 = vsel %vm1978, 1, 0
        %v2543 = vsel %vm1979, 1, 0
        %v2544 = vsel %vm1980, 1, 0
        %v2545 = vsel %vm1981, 1, 0
        %v2546 = vsel %vm1982, 1, 0
        %v2547 = vsel %vm1983, 1, 0
        %v2548 = vsel %vm1984, 1, 0
        %v2549 = vsel %vm1985, 1, 0
        %v2550 = vsel %vm1986, 1, 0
        %v2551 = vsel %vm1987, 1, 0
        %v2552 = vsel %vm1988, 1, 0
        %v2553 = vsel %vm1989, 1, 0
        %v2554 = vsel %vm1990, 1, 0
        %v2555 = vsel %vm1991, 1, 0
        %v2556 = vsel %vm1992, 1, 0
        %v2557 = vsel %vm1993, 1, 0
        %v2558 = vsel %vm1994, 1, 0
        %v2559 = vsel %vm1995, 1, 0
        %v2560 = vsel %vm1996, 1, 0
        %v2561 = vsel %vm1997, 1, 0
        %v2562 = vsel %vm1998, 1, 0
        %v2563 = vsel %vm1999, 1, 0
        %v2564 = vsel %vm2000, 1, 0
        %v2565 = vsel %vm2001, 1, 0
        %v2566 = vsel %vm2002, 1, 0
        %v2567 = vsel %vm2003, 1, 0
        %v2568 = vsel %vm2004, 1, 0
        %v2569 = vsel %vm2005, 1, 0
        %v2570 = vsel %vm2006, 1, 0
        %v2571 = vsel %vm2007, 1, 0
        %v2572 = vsel %vm2008, 1, 0
        %v2573 = vsel %vm2009, 1, 0
        %v2574 = vsel %vm2010, 1, 0
        %v2575 = vsel %vm2011, 1, 0
        %v2576 = vsel %vm2012, 1, 0
        %v2577 = vsel %vm2013, 1, 0
        %v2578 = vsel %vm2014, 1, 0
        %v2579 = vsel %vm2015, 1, 0
        %v2580 = vsel %vm2016, 1, 0
        %v2581 = vsel %vm2017, 1, 0
        %v2582 = vsel %vm2018, 1, 0
        %v2583 = vsel %vm2019, 1, 0
        %v2584 = vsel %vm2020, 1, 0
        %v2585 = vsel %vm2021, 1, 0
        %v2586 = vsel %vm2022, 1, 0
        %v2587 = vsel %vm2023, 1, 0
        %v2588 = vsel %vm2024, 1, 0
        %v2589 = vsel %vm2025, 1, 0
        %v2590 = vsel %vm2026, 1, 0
        %v2591 = vsel %vm2027, 1, 0
        %v2592 = vsel %vm2028, 1, 0
        %v2593 = vsel %vm2029, 1, 0
        %v2594 = vsel %vm2030, 1, 0
        %v2595 = vsel %vm2031, 1, 0
        %v2596 = vsel %vm2032, 1, 0
        %v2597 = vsel %vm2033, 1, 0
        %v2598 = vsel %vm2034, 1, 0
        %v2599 = vsel %vm2035, 1, 0
        %v2600 = vsel %vm2036, 1, 0
        %v2601 = vsel %vm2037, 1, 0
        %v2602 = vsel %vm2038, 1, 0
        %v2603 = vsel %vm2039, 1, 0
        %v2604 = vsel %vm2040, 1, 0
        %v2605 = vsel %vm2041, 1, 0
        %v2606 = vsel %vm2042, 1, 0
        %v2607 = vsel %vm2043, 1, 0
        %v2608 = vsel %vm2044, 1, 0
        %v2609 = vsel %vm2045, 1, 0
        %v2610 = vsel %vm2046, 1, 0
        %v2611 = vsel %vm2047, 1, 0
        %v2612 = vsel %vm2048, 1, 0
        %v2613 = vsel %vm2049, 1, 0
        %v2614 = vsel %vm2050, 1, 0
        %v2615 = vsel %vm2051, 1, 0
        %v2616 = vsel %vm2052, 1, 0
        %v2617 = vsel %vm2053, 1, 0
        %v2618 = vsel %vm2054, 1, 0
        %v2619 = vsel %vm2055, 1, 0
        %v2620 = vsel %vm2056, 1, 0
        %v2621 = vsel %vm2057, 1, 0
        %v2622 = vsel %vm2058, 1, 0
        %v2623 = vsel %vm2059, 1, 0
        %v2624 = vsel %vm2060, 1, 0
        %v2625 = vsel %vm2061, 1, 0
        %v2626 = vsel %vm2062, 1, 0
        %v2627 = vsel %vm2063, 1, 0
        %v2628 = vsel %vm2064, 1, 0
        %v2629 = vsel %vm2065, 1, 0
        %v2630 = vsel %vm2066, 1, 0
        %v2631 = vsel %vm2067, 1, 0
        %v2632 = vsel %vm2068, 1, 0
        %v2633 = vsel %vm2069, 1, 0
        %v2634 = vsel %vm2070, 1, 0
        %v2635 = vsel %vm2071, 1, 0
        %v2636 = vsel %vm2072, 1, 0
        %v2637 = vsel %vm2073, 1, 0
        %v2638 = vsel %vm2074, 1, 0
        %v2639 = vsel %vm2075, 1, 0
        %v2640 = vsel %vm2076, 1, 0
        %v2641 = vsel %vm2077, 1, 0
        %v2642 = vsel %vm2078, 1, 0
        %v2643 = vsel %vm2079, 1, 0
        %v2644 = vsel %vm2080, 1, 0
        %v2645 = vsel %vm2081, 1, 0
        %v2646 = vsel %vm2082, 1, 0
        %v2647 = vsel %vm2083, 1, 0
        %v2648 = vsel %vm2084, 1, 0
        %v2649 = vsel %vm2085, 1, 0
        %v2650 = vsel %vm2086, 1, 0
        %v2651 = vsel %vm2087, 1, 0
        %v2652 = vsel %vm2088, 1, 0
        %v2653 = vsel %vm2089, 1, 0
        %v2654 = vsel %vm2090, 1, 0
        %v2655 = vsel %vm2091, 1, 0
        %v2656 = vsel %vm2092, 1, 0
        %v2657 = vsel %vm2093, 1, 0
        %v2658 = vsel %vm2094, 1, 0
        %v2659 = vsel %vm2095, 1, 0
        %v2660 = vsel %vm2096, 1, 0
        %v2661 = vsel %vm2097, 1, 0
        %v2662 = vsel %vm2098, 1, 0
        %v2663 = vsel %vm2099, 1, 0
        %v2664 = vsel %vm2100, 1, 0
        %v2665 = vsel %vm2101, 1, 0
        %v2666 = vsel %vm2102, 1, 0
        %v2667 = vsel %vm2103, 1, 0
        %v2668 = vsel %vm2104, 1, 0
        %v2669 = vsel %vm2105, 1, 0
        %v2670 = vsel %vm2106, 1, 0
        %v2671 = vsel %vm2107, 1, 0
        %v2672 = vsel %vm2108, 1, 0
        %v2673 = vsel %vm2109, 1, 0
        %v2674 = vsel %vm2110, 1, 0
        %v2675 = vsel %vm2111, 1, 0
        %v2676 = vsel %vm2112, 1, 0
        %v2677 = vsel %vm2113, 1, 0
        %v2678 = vsel %vm2114, 1, 0
        %v2679 = vsel %vm2115, 1, 0
        %v2680 = vsel %vm2116, 1, 0
        %v2681 = vsel %vm2117, 1, 0
        %v2682 = vsel %vm2118, 1, 0
        %v2683 = vsel %vm2119, 1, 0
        %v2684 = vsel %vm2120, 1, 0
        %v2685 = vsel %vm2121, 1, 0
        %v2686 = vsel %vm2122, 1, 0
        %v2687 = vsel %vm2123, 1, 0
        %v2688 = vsel %vm2124, 1, 0
        %v2689 = vsel %vm2125, 1, 0
        %v2690 = vsel %vm2126, 1, 0
        %v2691 = vsel %vm2127, 1, 0
        %v2692 = vsel %vm2128, 1, 0
        %v2693 = vsel %vm2129, 1, 0
        %v2694 = vsel %vm2130, 1, 0
        %v2695 = vsel %vm2131, 1, 0
        %v2696 = vsel %vm2132, 1, 0
        %v2697 = vsel %vm2133, 1, 0
        %v2698 = vsel %vm2134, 1, 0
        %v2699 = vsel %vm2135, 1, 0
        %v2700 = vsel %vm2136, 1, 0
        %v2701 = vsel %vm2137, 1, 0
        %v2702 = vsel %vm2138, 1, 0
        %v2703 = vsel %vm2139, 1, 0
        %v2704 = vsel %vm2140, 1, 0
        %v2705 = vsel %vm2141, 1, 0
        %v2706 = vsel %vm2142, 1, 0
        %v2707 = vsel %vm2143, 1, 0
        %v2708 = vsel %vm2144, 1, 0
        %v2709 = vsel %vm2145, 1, 0
        %v2710 = vsel %vm2146, 1, 0
        %v2711 = vsel %vm2147, 1, 0
        %v2712 = vsel %vm2148, 1, 0
        %v2713 = vsel %vm2149, 1, 0
        %v2714 = vsel %vm2150, 1, 0
        %v2715 = vsel %vm2151, 1, 0
        %v2716 = vsel %vm2152, 1, 0
        %v2717 = vsel %vm2153, 1, 0
        %v2718 = vsel %vm2154, 1, 0
        %v2719 = vsel %vm2155, 1, 0
        %v2720 = vsel %vm2156, 1, 0
        %v2721 = vsel %vm2157, 1, 0
        %v2722 = vsel %vm2158, 1, 0
        %v2723 = vsel %vm2159, 1, 0
        %v2724 = vsel %vm2160, 1, 0
        %v2725 = vsel %vm2161, 1, 0
        %v2726 = vsel %vm2162, 1, 0
        %v2727 = vsel %vm2163, 1, 0
        %v2728 = vsel %vm2164, 1, 0
        %v2729 = vsel %vm2165, 1, 0
        %v2730 = vsel %vm2166, 1, 0
        %v2731 = vsel %vm2167, 1, 0
        %v2732 = vsel %vm2168, 1, 0
        %v2733 = vsel %vm2169, 1, 0
        %v2734 = vsel %vm2170, 1, 0
        %v2735 = vsel %vm2171, 1, 0
        %v2736 = vsel %vm2172, 1, 0
        %v2737 = vsel %vm2173, 1, 0
        %v2738 = vsel %vm2174, 1, 0
        %v2739 = vsel %vm2175, 1, 0
        %v2740 = vsel %vm2176, 1, 0
        %v2741 = vsel %vm2177, 1, 0
        %v2742 = vsel %vm2178, 1, 0
        %v2743 = vsel %vm2179, 1, 0
        %v2744 = vsel %vm2180, 1, 0
        %v2745 = vsel %vm2181, 1, 0
        %v2746 = vsel %vm2182, 1, 0
        %v2747 = vsel %vm2183, 1, 0
        %v2748 = vsel %vm2184, 1, 0
        %v2749 = vsel %vm2185, 1, 0
        %v2750 = vsel %vm2186, 1, 0
        %v2751 = vsel %vm2187, 1, 0
        %v2752 = vsel %vm2188, 1, 0
        %v2753 = vsel %vm2189, 1, 0
        %v2754 = vsel %vm2190, 1, 0
        %v2755 = vsel %vm2191, 1, 0
        %v2756 = vsel %vm2192, 1, 0
        %v2757 = vsel %vm2193, 1, 0
        %v2758 = vsel %vm2194, 1, 0
        %v2759 = vsel %vm2195, 1, 0
        %v2760 = vsel %vm2196, 1, 0
        %v2761 = vsel %vm2197, 1, 0
        %v2762 = vsel %vm2198, 1, 0
        %v2763 = vsel %vm2199, 1, 0
        %v2764 = vsel %vm2200, 1, 0
        %v2765 = vsel %vm2201, 1, 0
        %v2766 = vsel %vm2202, 1, 0
        %v2767 = vsel %vm2203, 1, 0
        %v2768 = vsel %vm2204, 1, 0
        %v2769 = vsel %vm2205, 1, 0
        %v2770 = vsel %vm2206, 1, 0
        %v2771 = vsel %vm2207, 1, 0
        %v2772 = vsel %vm2208, 1, 0
        %v2773 = vsel %vm2209, 1, 0
        %v2774 = vsel %vm2210, 1, 0
        %v2775 = vsel %vm2211, 1, 0
        %v2776 = vsel %vm2212, 1, 0
        %v2777 = vsel %vm2213, 1, 0
        %v2778 = vsel %vm2214, 1, 0
        %v2779 = vsel %vm2215, 1, 0
        %v2780 = vsel %vm2216, 1, 0
        %v2781 = vsel %vm2217, 1, 0
        %v2782 = vsel %vm2218, 1, 0
        %v2783 = vsel %vm2219, 1, 0
        %v2784 = vsel %vm2220, 1, 0
        %v2785 = vsel %vm2221, 1, 0
        %v2786 = vsel %vm2222, 1, 0
        %v2787 = vsel %vm2223, 1, 0
        %v2788 = vsel %vm2224, 1, 0
        %v2789 = vsel %vm2225, 1, 0
        %v2790 = vsel %vm2226, 1, 0
        %v2791 = vsel %vm2227, 1, 0
        %v2792 = vsel %vm2228, 1, 0
        %v2793 = vsel %vm2229, 1, 0
        %v2794 = vsel %vm2230, 1, 0
        %v2795 = vsel %vm2231, 1, 0
        %v2796 = vsel %vm2232, 1, 0
        %v2797 = vsel %vm2233, 1, 0
        %v2798 = vsel %vm2234, 1, 0
        %v2799 = vsel %vm2235, 1, 0
        %v2800 = vsel %vm2236, 1, 0
        %v2801 = vsel %vm2237, 1, 0
        %v2802 = vsel %vm2238, 1, 0
        %v2803 = vsel %vm2239, 1, 0
        %v2804 = vsel %vm2240, 1, 0
        %v2805 = vsel %vm2241, 1, 0
        %v2806 = vsel %vm2242, 1, 0
        %v2807 = vsel %vm2243, 1, 0
        %v2808 = vsel %vm2244, 1, 0
        %v2809 = vsel %vm2245, 1, 0
        %v2810 = vsel %vm2246, 1, 0
        %v2811 = vsel %vm2247, 1, 0
        %v2812 = vsel %vm2248, 1, 0
        %v2813 = vsel %vm2249, 1, 0
        %v2814 = vsel %vm2250, 1, 0
        %v2815 = vsel %vm2251, 1, 0
        %v2816 = vsel %vm2252, 1, 0
        %v2817 = vsel %vm2253, 1, 0
        %v2818 = vsel %vm2254, 1, 0
        %v2819 = vsel %vm2255, 1, 0
        %v2820 = vsel %vm2256, 1, 0
        %v2821 = vsel %vm2257, 1, 0
        %v2822 = vsel %vm2258, 1, 0
        %v2823 = vsel %vm2259, 1, 0
        %v2824 = vsel %vm2260, 1, 0
        %v2825 = vsel %vm2261, 1, 0
        %v2826 = vsel %vm2262, 1, 0
        %v2827 = vsel %vm2263, 1, 0
        %v2828 = vsel %vm2264, 1, 0
        %v2829 = vsel %vm2265, 1, 0
        %v2830 = vsel %vm2266, 1, 0
        %v2831 = vsel %vm2267, 1, 0
        %v2832 = vsel %vm2268, 1, 0
        %v2833 = vsel %vm2269, 1, 0
        %v2834 = vsel %vm2270, 1, 0
        %v2835 = vsel %vm2271, 1, 0
        %v2836 = vsel %vm2272, 1, 0
        %v2837 = vsel %vm2273, 1, 0
        %v2838 = vsel %vm2274, 1, 0
        %v2839 = vsel %vm2275, 1, 0
        %v2840 = vsel %vm2276, 1, 0
        %v2841 = vsel %vm2277, 1, 0
        %v2842 = vsel %vm2278, 1, 0
        %v2843 = vsel %vm2279, 1, 0
        %v2844 = vsel %vm2280, 1, 0
        %v2845 = vsel %vm2281, 1, 0
        %v2846 = vsel %vm2282, 1, 0
        %v2847 = vsel %vm2283, 1, 0
        %v2848 = vsel %vm2284, 1, 0
        %v2849 = vsel %vm2285, 1, 0
        %v2850 = vsel %vm2286, 1, 0
        %v2851 = vsel %vm2287, 1, 0
        %v2852 = vsel %vm2288, 1, 0
        %v2853 = vsel %vm2289, 1, 0
        %v2854 = vsel %vm2290, 1, 0
        %v2855 = vsel %vm2291, 1, 0
        %v2856 = vsel %vm2292, 1, 0
        %v2857 = vsel %vm2293, 1, 0
        %v2858 = vsel %vm2294, 1, 0
        %v2859 = vsel %vm2295, 1, 0
        %v2860 = vsel %vm2296, 1, 0
        %v2861 = vsel %vm2297, 1, 0
        %v2862 = vsel %vm2298, 1, 0
        %v2863 = vsel %vm2299, 1, 0
        %v2864 = vsel %vm2300, 1, 0
        %v2865 = vsel %vm2301, 1, 0
        %v2866 = vsel %vm2302, 1, 0
        %v2867 = vsel %vm2303, 1, 0
        %v2868 = vsel %vm2304, 1, 0
        %v2869 = vsel %vm2305, 1, 0
        %v2870 = vsel %vm2306, 1, 0
        %v2871 = vsel %vm2307, 1, 0
        %v2872 = vsel %vm2308, 1, 0
        %v2873 = vsel %vm2309, 1, 0
        %v2874 = vsel %vm2310, 1, 0
        %v2875 = vsel %vm2311, 1, 0
        %v2876 = vsel %vm2312, 1, 0
        %v2877 = vsel %vm2313, 1, 0
        %v2878 = vsel %vm2314, 1, 0
        %v2879 = vsel %vm2315, 1, 0
        %v2880 = vsel %vm2316, 1, 0
        %v2881 = vsel %vm2317, 1, 0
        %v2882 = vsel %vm2318, 1, 0
        %v2883 = vsel %vm2319, 1, 0
        %v2884 = vsel %vm2320, 1, 0
        %v2885 = vsel %vm2321, 1, 0
        %v2886 = vsel %vm2322, 1, 0
        %v2887 = vsel %vm2323, 1, 0
        %v2888 = vsel %vm2324, 1, 0
        %v2889 = vsel %vm2325, 1, 0
        %v2890 = vsel %vm2326, 1, 0
        %v2891 = vsel %vm2327, 1, 0
        %v2892 = vsel %vm2328, 1, 0
        %v2893 = vsel %vm2329, 1, 0
        %v2894 = vsel %vm2330, 1, 0
        %v2895 = vsel %vm2331, 1, 0
        %v2896 = vsel %vm2332, 1, 0
        %v2897 = vsel %vm2333, 1, 0
        %v2898 = vsel %vm2334, 1, 0
        %v2899 = vsel %vm2335, 1, 0
        %v2900 = vsel %vm2336, 1, 0
        %v2901 = vsel %vm2337, 1, 0
        %v2902 = vsel %vm2338, 1, 0
        %v2903 = vsel %vm2339, 1, 0
        %v2904 = vsel %vm2340, 1, 0
        %v2905 = vsel %vm2341, 1, 0
        %v2906 = vsel %vm2342, 1, 0
        %v2907 = vsel %vm2343, 1, 0
        %v2908 = vsel %vm2344, 1, 0
        %v2909 = vsel %vm2345, 1, 0
        %v2910 = vsel %vm2346, 1, 0
        %v2911 = vsel %vm2347, 1, 0
        %v2912 = vsel %vm2348, 1, 0
        %v2913 = vsel %vm2349, 1, 0
        %v2914 = vsel %vm2350, 1, 0
        %v2915 = vsel %vm2351, 1, 0
        %v2916 = vsel %vm2352, 1, 0
        %v2917 = vsel %vm2353, 1, 0
        %v2918 = vsel %vm2354, 1, 0
        %v2919 = vsel %vm2355, 1, 0
        %v2920 = vsel %vm2356, 1, 0
        %v2921 = vsel %vm2357, 1, 0
        %v2922 = vsel %vm2358, 1, 0
        %v2923 = vsel %vm2359, 1, 0
        %v2924 = vsel %vm2360, 1, 0
        %v2925 = vsel %vm2361, 1, 0
        %v2926 = vsel %vm2362, 1, 0
        %v2927 = vsel %vm2363, 1, 0
        %v2928 = vsel %vm2364, 1, 0
        %v2929 = vsel %vm2365, 1, 0
        %v2930 = vsel %vm2366, 1, 0
        %v2931 = vsel %vm2367, 1, 0
        %v2932 = vsel %vm2368, 1, 0
        %v2933 = vsel %vm2369, 1, 0
        %v2934 = vsel %vm2370, 1, 0
        %v2935 = vsel %vm2371, 1, 0
        %v2936 = vsel %vm2372, 1, 0
        %v2937 = vsel %vm2373, 1, 0
        %v2938 = vsel %vm2374, 1, 0
        %v2939 = vsel %vm2375, 1, 0
        %v2940 = vsel %vm2376, 1, 0
        %v2941 = vsel %vm2377, 1, 0
        %v2942 = vsel %vm2378, 1, 0
        %v2943 = vsel %vm2379, 1, 0
        %v2944 = vsel %vm2380, 1, 0
        %v2945 = vsel %vm2381, 1, 0
        %v2946 = vsel %vm2382, 1, 0
        %v2947 = vsel %vm2383, 1, 0
        %v2948 = vsel %vm2384, 1, 0
        %v2949 = vsel %vm2385, 1, 0
        %v2950 = vsel %vm2386, 1, 0
        %v2951 = vsel %vm2387, 1, 0
        %v2952 = vsel %vm2388, 1, 0
        %v2953 = vsel %vm2389, 1, 0
        %v2954 = vsel %vm2390, 1, 0
        %v2955 = vsel %vm2391, 1, 0
        %v2956 = vsel %vm2392, 1, 0
        %v2957 = vsel %vm2393, 1, 0
        %v2958 = vsel %vm2394, 1, 0
        %v2959 = vsel %vm2395, 1, 0
        %v2960 = vsel %vm2396, 1, 0
        %v2961 = vsel %vm2397, 1, 0
        %v2962 = vsel %vm2398, 1, 0
        %v2963 = vsel %vm2399, 1, 0
        %v2964 = vsel %vm2400, 1, 0
        %v2965 = vsel %vm2401, 1, 0
        %v2966 = vsel %vm2402, 1, 0
        %v2967 = vsel %vm2403, 1, 0
        %v2968 = vsel %vm2404, 1, 0
        %v2969 = vsel %vm2405, 1, 0
        %v2970 = vsel %vm2406, 1, 0
        %v2971 = vsel %vm2407, 1, 0
        %v2972 = vsel %vm2408, 1, 0
        %v2973 = vsel %vm2409, 1, 0
        %v2974 = vsel %vm2410, 1, 0
        %v2975 = vsel %vm2411, 1, 0
        %v2976 = vsel %vm2412, 1, 0
        %v2977 = vsel %vm2413, 1, 0
        %v2978 = vsel %vm2414, 1, 0
        %v2979 = vsel %vm2415, 1, 0
        %v2980 = vsel %vm2416, 1, 0
        %v2981 = vsel %vm2417, 1, 0
        %v2982 = vsel %vm2418, 1, 0
        %v2983 = vsel %vm2419, 1, 0
        %v2984 = vsel %vm2420, 1, 0
        %v2985 = vsel %vm2421, 1, 0
        %v2986 = vsel %vm2422, 1, 0
        %v2987 = vsel %vm2423, 1, 0
        %v2988 = vsel %vm2424, 1, 0
        %v2989 = vsel %vm2425, 1, 0
        %v2990 = vsel %vm2426, 1, 0
        %v2991 = vsel %vm2427, 1, 0
        %v2992 = vsel %vm2428, 1, 0
        %v2993 = vsel %vm2429, 1, 0
        %v2994 = vsel %vm2430, 1, 0
        %v2995 = vsel %vm2431, 1, 0
        %v2996 = vsel %vm2432, 1, 0
        %v2997 = vsel %vm2433, 1, 0
        %v2998 = vsel %vm2434, 1, 0
        %v2999 = vsel %vm2435, 1, 0
        %v3000 = vsel %vm2436, 1, 0
        %v3001 = vsel %vm2437, 1, 0
        %v3002 = vsel %vm2438, 1, 0
        %v3003 = vsel %vm2439, 1, 0
        %v3004 = vsel %vm2440, 1, 0
        %v3005 = vsel %vm2441, 1, 0
        %v3006 = vsel %vm2442, 1, 0
        %v3007 = vsel %vm2443, 1, 0
        %v3008 = vsel %vm2444, 1, 0
        %v3009 = vsel %vm2445, 1, 0
        %v3010 = vsel %vm2446, 1, 0
        %v3011 = vsel %vm2447, 1, 0
        %v3012 = vsel %vm2448, 1, 0
        %v3013 = vsel %vm2449, 1, 0
        %v3014 = vsel %vm2450, 1, 0
        %v3015 = vsel %vm2451, 1, 0
        %v3016 = vsel %vm2452, 1, 0
        %v3017 = vsel %vm2453, 1, 0
        %v3018 = vsel %vm2454, 1, 0
        %v3019 = vsel %vm2455, 1, 0
        %v3020 = vsel %vm2456, 1, 0
        %v3021 = vsel %vm2457, 1, 0
        %v3022 = vsel %vm2458, 1, 0
        %v3023 = vsel %vm2459, 1, 0
        %v3024 = vsel %vm2460, 1, 0
        %v3025 = vsel %vm2461, 1, 0
        %v3026 = vsel %vm2462, 1, 0
        %v3027 = vsel %vm2463, 1, 0
        %v3028 = vsel %vm2464, 1, 0
        %v3029 = vsel %vm2465, 1, 0
        %v3030 = vsel %vm2466, 1, 0
        %v3031 = vsel %vm2467, 1, 0
        %v3032 = vsel %vm2468, 1, 0
        %v3033 = vsel %vm2469, 1, 0
        %v3034 = vsel %vm2470, 1, 0
        %v3035 = vsel %vm2471, 1, 0
        %v3036 = vsel %vm2472, 1, 0
        %v3037 = vsel %vm2473, 1, 0
        %v3038 = vsel %vm2474, 1, 0
        %v3039 = vsel %vm2475, 1, 0
        %v3040 = vsel %vm2476, 1, 0
        %v3041 = vsel %vm2477, 1, 0
        %v3042 = vsel %vm2478, 1, 0
        %v3043 = vsel %vm2479, 1, 0
        %v3044 = vsel %vm2480, 1, 0
        %v3045 = vsel %vm2481, 1, 0
        %v3046 = vsel %vm2482, 1, 0
        %v3047 = vsel %vm2483, 1, 0
        %v3048 = vsel %vm2484, 1, 0
        %v3049 = vsel %vm2485, 1, 0
        %v3050 = vsel %vm2486, 1, 0
        %v3051 = vsel %vm2487, 1, 0
        %v3052 = vsel %vm2488, 1, 0
        %v3053 = vsel %vm2489, 1, 0
        %v3054 = vsel %vm2490, 1, 0
        %v3055 = vsel %vm2491, 1, 0
        %v3056 = vsel %vm2492, 1, 0
        %v3057 = vsel %vm2493, 1, 0
        %v3058 = vsel %vm2494, 1, 0
        %v3059 = vsel %vm2495, 1, 0
        %v3060 = vsel %vm2496, 1, 0
        %v3061 = vsel %vm2497, 1, 0
        %v3062 = vsel %vm2498, 1, 0
        %v3063 = vsel %vm2499, 1, 0
        %v3064 = vsel %vm2500, 1, 0
        %v3065 = vsel %vm2501, 1, 0
        %v3066 = vsel %vm2502, 1, 0
        %v3067 = vsel %vm2503, 1, 0
        %v3068 = vsel %vm2504, 1, 0
        %v3069 = vsel %vm2505, 1, 0
        %v3070 = vsel %vm2506, 1, 0
        %v3071 = vsel %vm2507, 1, 0
        %v3072 = vsel %vm2508, 1, 0
        %v3073 = vsel %vm2509, 1, 0
        %v3074 = vsel %vm2510, 1, 0
        %v3075 = vsel %vm2511, 1, 0
        %v3076 = vsel %vm2512, 1, 0
        %v3077 = vsel %vm2513, 1, 0
        %v3078 = vsel %vm2514, 1, 0
        %v3079 = vsel %vm2515, 1, 0
        %v3080 = vsel %vm2516, 1, 0
        %v3081 = vsel %vm2517, 1, 0
        %v3082 = vsel %vm2518, 1, 0
        %v3083 = vsel %vm2519, 1, 0
        %v3084 = vsel %vm2520, 1, 0
        %v3085 = vsel %vm2521, 1, 0
        %v3086 = vsel %vm2522, 1, 0
        %v3087 = vsel %vm2523, 1, 0
        %v3088 = vsel %vm2524, 1, 0
        %v3089 = vsel %vm2525, 1, 0
        %v3090 = vsel %vm2526, 1, 0
        %v3091 = vsel %vm2527, 1, 0
        %v3092 = vsel %vm2528, 1, 0
        %v3093 = vsel %vm2529, 1, 0
        %v3094 = vsel %vm2530, 1, 0
        %v3095 = vsel %vm2531, 1, 0
        %v3096 = vsel %vm2532, 1, 0
        %v3097 = vsel %vm2533, 1, 0
        %v3098 = vsel %vm2534, 1, 0
        %v3099 = vcvt.s32.f32 %v2535
        %v3100 = vcvt.s32.f32 %v2536
        %v3101 = vcvt.s32.f32 %v2537
        %v3102 = vcvt.s32.f32 %v2538
        %v3103 = vcvt.s32.f32 %v2539
        %v3104 = vcvt.s32.f32 %v2540
        %v3105 = vcvt.s32.f32 %v2541
        %v3106 = vcvt.s32.f32 %v2542
        %v3107 = vcvt.s32.f32 %v2543
        %v3108 = vcvt.s32.f32 %v2544
        %v3109 = vcvt.s32.f32 %v2545
        %v3110 = vcvt.s32.f32 %v2546
        %v3111 = vcvt.s32.f32 %v2547
        %v3112 = vcvt.s32.f32 %v2548
        %v3113 = vcvt.s32.f32 %v2549
        %v3114 = vcvt.s32.f32 %v2550
        %v3115 = vcvt.s32.f32 %v2551
        %v3116 = vcvt.s32.f32 %v2552
        %v3117 = vcvt.s32.f32 %v2553
        %v3118 = vcvt.s32.f32 %v2554
        %v3119 = vcvt.s32.f32 %v2555
        %v3120 = vcvt.s32.f32 %v2556
        %v3121 = vcvt.s32.f32 %v2557
        %v3122 = vcvt.s32.f32 %v2558
        %v3123 = vcvt.s32.f32 %v2559
        %v3124 = vcvt.s32.f32 %v2560
        %v3125 = vcvt.s32.f32 %v2561
        %v3126 = vcvt.s32.f32 %v2562
        %v3127 = vcvt.s32.f32 %v2563
        %v3128 = vcvt.s32.f32 %v2564
        %v3129 = vcvt.s32.f32 %v2565
        %v3130 = vcvt.s32.f32 %v2566
        %v3131 = vcvt.s32.f32 %v2567
        %v3132 = vcvt.s32.f32 %v2568
        %v3133 = vcvt.s32.f32 %v2569
        %v3134 = vcvt.s32.f32 %v2570
        %v3135 = vcvt.s32.f32 %v2571
        %v3136 = vcvt.s32.f32 %v2572
        %v3137 = vcvt.s32.f32 %v2573
        %v3138 = vcvt.s32.f32 %v2574
        %v3139 = vcvt.s32.f32 %v2575
        %v3140 = vcvt.s32.f32 %v2576
        %v3141 = vcvt.s32.f32 %v2577
        %v3142 = vcvt.s32.f32 %v2578
        %v3143 = vcvt.s32.f32 %v2579
        %v3144 = vcvt.s32.f32 %v2580
        %v3145 = vcvt.s32.f32 %v2581
        %v3146 = vcvt.s32.f32 %v2582
        %v3147 = vcvt.s32.f32 %v2583
        %v3148 = vcvt.s32.f32 %v2584
        %v3149 = vcvt.s32.f32 %v2585
        %v3150 = vcvt.s32.f32 %v2586
        %v3151 = vcvt.s32.f32 %v2587
        %v3152 = vcvt.s32.f32 %v2588
        %v3153 = vcvt.s32.f32 %v2589
        %v3154 = vcvt.s32.f32 %v2590
        %v3155 = vcvt.s32.f32 %v2591
        %v3156 = vcvt.s32.f32 %v2592
        %v3157 = vcvt.s32.f32 %v2593
        %v3158 = vcvt.s32.f32 %v2594
        %v3159 = vcvt.s32.f32 %v2595
        %v3160 = vcvt.s32.f32 %v2596
        %v3161 = vcvt.s32.f32 %v2597
        %v3162 = vcvt.s32.f32 %v2598
        %v3163 = vcvt.s32.f32 %v2599
        %v3164 = vcvt.s32.f32 %v2600
        %v3165 = vcvt.s32.f32 %v2601
        %v3166 = vcvt.s32.f32 %v2602
        %v3167 = vcvt.s32.f32 %v2603
        %v3168 = vcvt.s32.f32 %v2604
        %v3169 = vcvt.s32.f32 %v2605
        %v3170 = vcvt.s32.f32 %v2606
        %v3171 = vcvt.s32.f32 %v2607
        %v3172 = vcvt.s32.f32 %v2608
        %v3173 = vcvt.s32.f32 %v2609
        %v3174 = vcvt.s32.f32 %v2610
        %v3175 = vcvt.s32.f32 %v2611
        %v3176 = vcvt.s32.f32 %v2612
        %v3177 = vcvt.s32.f32 %v2613
        %v3178 = vcvt.s32.f32 %v2614
        %v3179 = vcvt.s32.f32 %v2615
        %v3180 = vcvt.s32.f32 %v2616
        %v3181 = vcvt.s32.f32 %v2617
        %v3182 = vcvt.s32.f32 %v2618
        %v3183 = vcvt.s32.f32 %v2619
        %v3184 = vcvt.s32.f32 %v2620
        %v3185 = vcvt.s32.f32 %v2621
        %v3186 = vcvt.s32.f32 %v2622
        %v3187 = vcvt.s32.f32 %v2623
        %v3188 = vcvt.s32.f32 %v2624
        %v3189 = vcvt.s32.f32 %v2625
        %v3190 = vcvt.s32.f32 %v2626
        %v3191 = vcvt.s32.f32 %v2627
        %v3192 = vcvt.s32.f32 %v2628
        %v3193 = vcvt.s32.f32 %v2629
        %v3194 = vcvt.s32.f32 %v2630
        %v3195 = vcvt.s32.f32 %v2631
        %v3196 = vcvt.s32.f32 %v2632
        %v3197 = vcvt.s32.f32 %v2633
        %v3198 = vcvt.s32.f32 %v2634
        %v3199 = vcvt.s32.f32 %v2635
        %v3200 = vcvt.s32.f32 %v2636
        %v3201 = vcvt.s32.f32 %v2637
        %v3202 = vcvt.s32.f32 %v2638
        %v3203 = vcvt.s32.f32 %v2639
        %v3204 = vcvt.s32.f32 %v2640
        %v3205 = vcvt.s32.f32 %v2641
        %v3206 = vcvt.s32.f32 %v2642
        %v3207 = vcvt.s32.f32 %v2643
        %v3208 = vcvt.s32.f32 %v2644
        %v3209 = vcvt.s32.f32 %v2645
        %v3210 = vcvt.s32.f32 %v2646
        %v3211 = vcvt.s32.f32 %v2647
        %v3212 = vcvt.s32.f32 %v2648
        %v3213 = vcvt.s32.f32 %v2649
        %v3214 = vcvt.s32.f32 %v2650
        %v3215 = vcvt.s32.f32 %v2651
        %v3216 = vcvt.s32.f32 %v2652
        %v3217 = vcvt.s32.f32 %v2653
        %v3218 = vcvt.s32.f32 %v2654
        %v3219 = vcvt.s32.f32 %v2655
        %v3220 = vcvt.s32.f32 %v2656
        %v3221 = vcvt.s32.f32 %v2657
        %v3222 = vcvt.s32.f32 %v2658
        %v3223 = vcvt.s32.f32 %v2659
        %v3224 = vcvt.s32.f32 %v2660
        %v3225 = vcvt.s32.f32 %v2661
        %v3226 = vcvt.s32.f32 %v2662
        %v3227 = vcvt.s32.f32 %v2663
        %v3228 = vcvt.s32.f32 %v2664
        %v3229 = vcvt.s32.f32 %v2665
        %v3230 = vcvt.s32.f32 %v2666
        %v3231 = vcvt.s32.f32 %v2667
        %v3232 = vcvt.s32.f32 %v2668
        %v3233 = vcvt.s32.f32 %v2669
        %v3234 = vcvt.s32.f32 %v2670
        %v3235 = vcvt.s32.f32 %v2671
        %v3236 = vcvt.s32.f32 %v2672
        %v3237 = vcvt.s32.f32 %v2673
        %v3238 = vcvt.s32.f32 %v2674
        %v3239 = vcvt.s32.f32 %v2675
        %v3240 = vcvt.s32.f32 %v2676
        %v3241 = vcvt.s32.f32 %v2677
        %v3242 = vcvt.s32.f32 %v2678
        %v3243 = vcvt.s32.f32 %v2679
        %v3244 = vcvt.s32.f32 %v2680
        %v3245 = vcvt.s32.f32 %v2681
        %v3246 = vcvt.s32.f32 %v2682
        %v3247 = vcvt.s32.f32 %v2683
        %v3248 = vcvt.s32.f32 %v2684
        %v3249 = vcvt.s32.f32 %v2685
        %v3250 = vcvt.s32.f32 %v2686
        %v3251 = vcvt.s32.f32 %v2687
        %v3252 = vcvt.s32.f32 %v2688
        %v3253 = vcvt.s32.f32 %v2689
        %v3254 = vcvt.s32.f32 %v2690
        %v3255 = vcvt.s32.f32 %v2691
        %v3256 = vcvt.s32.f32 %v2692
        %v3257 = vcvt.s32.f32 %v2693
        %v3258 = vcvt.s32.f32 %v2694
        %v3259 = vcvt.s32.f32 %v2695
        %v3260 = vcvt.s32.f32 %v2696
        %v3261 = vcvt.s32.f32 %v2697
        %v3262 = vcvt.s32.f32 %v2698
        %v3263 = vcvt.s32.f32 %v2699
        %v3264 = vcvt.s32.f32 %v2700
        %v3265 = vcvt.s32.f32 %v2701
        %v3266 = vcvt.s32.f32 %v2702
        %v3267 = vcvt.s32.f32 %v2703
        %v3268 = vcvt.s32.f32 %v2704
        %v3269 = vcvt.s32.f32 %v2705
        %v3270 = vcvt.s32.f32 %v2706
        %v3271 = vcvt.s32.f32 %v2707
        %v3272 = vcvt.s32.f32 %v2708
        %v3273 = vcvt.s32.f32 %v2709
        %v3274 = vcvt.s32.f32 %v2710
        %v3275 = vcvt.s32.f32 %v2711
        %v3276 = vcvt.s32.f32 %v2712
        %v3277 = vcvt.s32.f32 %v2713
        %v3278 = vcvt.s32.f32 %v2714
        %v3279 = vcvt.s32.f32 %v2715
        %v3280 = vcvt.s32.f32 %v2716
        %v3281 = vcvt.s32.f32 %v2717
        %v3282 = vcvt.s32.f32 %v2718
        %v3283 = vcvt.s32.f32 %v2719
        %v3284 = vcvt.s32.f32 %v2720
        %v3285 = vcvt.s32.f32 %v2721
        %v3286 = vcvt.s32.f32 %v2722
        %v3287 = vcvt.s32.f32 %v2723
        %v3288 = vcvt.s32.f32 %v2724
        %v3289 = vcvt.s32.f32 %v2725
        %v3290 = vcvt.s32.f32 %v2726
        %v3291 = vcvt.s32.f32 %v2727
        %v3292 = vcvt.s32.f32 %v2728
        %v3293 = vcvt.s32.f32 %v2729
        %v3294 = vcvt.s32.f32 %v2730
        %v3295 = vcvt.s32.f32 %v2731
        %v3296 = vcvt.s32.f32 %v2732
        %v3297 = vcvt.s32.f32 %v2733
        %v3298 = vcvt.s32.f32 %v2734
        %v3299 = vcvt.s32.f32 %v2735
        %v3300 = vcvt.s32.f32 %v2736
        %v3301 = vcvt.s32.f32 %v2737
        %v3302 = vcvt.s32.f32 %v2738
        %v3303 = vcvt.s32.f32 %v2739
        %v3304 = vcvt.s32.f32 %v2740
        %v3305 = vcvt.s32.f32 %v2741
        %v3306 = vcvt.s32.f32 %v2742
        %v3307 = vcvt.s32.f32 %v2743
        %v3308 = vcvt.s32.f32 %v2744
        %v3309 = vcvt.s32.f32 %v2745
        %v3310 = vcvt.s32.f32 %v2746
        %v3311 = vcvt.s32.f32 %v2747
        %v3312 = vcvt.s32.f32 %v2748
        %v3313 = vcvt.s32.f32 %v2749
        %v3314 = vcvt.s32.f32 %v2750
        %v3315 = vcvt.s32.f32 %v2751
        %v3316 = vcvt.s32.f32 %v2752
        %v3317 = vcvt.s32.f32 %v2753
        %v3318 = vcvt.s32.f32 %v2754
        %v3319 = vcvt.s32.f32 %v2755
        %v3320 = vcvt.s32.f32 %v2756
        %v3321 = vcvt.s32.f32 %v2757
        %v3322 = vcvt.s32.f32 %v2758
        %v3323 = vcvt.s32.f32 %v2759
        %v3324 = vcvt.s32.f32 %v2760
        %v3325 = vcvt.s32.f32 %v2761
        %v3326 = vcvt.s32.f32 %v2762
        %v3327 = vcvt.s32.f32 %v2763
        %v3328 = vcvt.s32.f32 %v2764
        %v3329 = vcvt.s32.f32 %v2765
        %v3330 = vcvt.s32.f32 %v2766
        %v3331 = vcvt.s32.f32 %v2767
        %v3332 = vcvt.s32.f32 %v2768
        %v3333 = vcvt.s32.f32 %v2769
        %v3334 = vcvt.s32.f32 %v2770
        %v3335 = vcvt.s32.f32 %v2771
        %v3336 = vcvt.s32.f32 %v2772
        %v3337 = vcvt.s32.f32 %v2773
        %v3338 = vcvt.s32.f32 %v2774
        %v3339 = vcvt.s32.f32 %v2775
        %v3340 = vcvt.s32.f32 %v2776
        %v3341 = vcvt.s32.f32 %v2777
        %v3342 = vcvt.s32.f32 %v2778
        %v3343 = vcvt.s32.f32 %v2779
        %v3344 = vcvt.s32.f32 %v2780
        %v3345 = vcvt.s32.f32 %v2781
        %v3346 = vcvt.s32.f32 %v2782
        %v3347 = vcvt.s32.f32 %v2783
        %v3348 = vcvt.s32.f32 %v2784
        %v3349 = vcvt.s32.f32 %v2785
        %v3350 = vcvt.s32.f32 %v2786
        %v3351 = vcvt.s32.f32 %v2787
        %v3352 = vcvt.s32.f32 %v2788
        %v3353 = vcvt.s32.f32 %v2789
        %v3354 = vcvt.s32.f32 %v2790
        %v3355 = vcvt.s32.f32 %v2791
        %v3356 = vcvt.s32.f32 %v2792
        %v3357 = vcvt.s32.f32 %v2793
        %v3358 = vcvt.s32.f32 %v2794
        %v3359 = vcvt.s32.f32 %v2795
        %v3360 = vcvt.s32.f32 %v2796
        %v3361 = vcvt.s32.f32 %v2797
        %v3362 = vcvt.s32.f32 %v2798
        %v3363 = vcvt.s32.f32 %v2799
        %v3364 = vcvt.s32.f32 %v2800
        %v3365 = vcvt.s32.f32 %v2801
        %v3366 = vcvt.s32.f32 %v2802
        %v3367 = vcvt.s32.f32 %v2803
        %v3368 = vcvt.s32.f32 %v2804
        %v3369 = vcvt.s32.f32 %v2805
        %v3370 = vcvt.s32.f32 %v2806
        %v3371 = vcvt.s32.f32 %v2807
        %v3372 = vcvt.s32.f32 %v2808
        %v3373 = vcvt.s32.f32 %v2809
        %v3374 = vcvt.s32.f32 %v2810
        %v3375 = vcvt.s32.f32 %v2811
        %v3376 = vcvt.s32.f32 %v2812
        %v3377 = vcvt.s32.f32 %v2813
        %v3378 = vcvt.s32.f32 %v2814
        %v3379 = vcvt.s32.f32 %v2815
        %v3380 = vcvt.s32.f32 %v2816
        %v3381 = vcvt.s32.f32 %v2817
        %v3382 = vcvt.s32.f32 %v2818
        %v3383 = vcvt.s32.f32 %v2819
        %v3384 = vcvt.s32.f32 %v2820
        %v3385 = vcvt.s32.f32 %v2821
        %v3386 = vcvt.s32.f32 %v2822
        %v3387 = vcvt.s32.f32 %v2823
        %v3388 = vcvt.s32.f32 %v2824
        %v3389 = vcvt.s32.f32 %v2825
        %v3390 = vcvt.s32.f32 %v2826
        %v3391 = vcvt.s32.f32 %v2827
        %v3392 = vcvt.s32.f32 %v2828
        %v3393 = vcvt.s32.f32 %v2829
        %v3394 = vcvt.s32.f32 %v2830
        %v3395 = vcvt.s32.f32 %v2831
        %v3396 = vcvt.s32.f32 %v2832
        %v3397 = vcvt.s32.f32 %v2833
        %v3398 = vcvt.s32.f32 %v2834
        %v3399 = vcvt.s32.f32 %v2835
        %v3400 = vcvt.s32.f32 %v2836
        %v3401 = vcvt.s32.f32 %v2837
        %v3402 = vcvt.s32.f32 %v2838
        %v3403 = vcvt.s32.f32 %v2839
        %v3404 = vcvt.s32.f32 %v2840
        %v3405 = vcvt.s32.f32 %v2841
        %v3406 = vcvt.s32.f32 %v2842
        %v3407 = vcvt.s32.f32 %v2843
        %v3408 = vcvt.s32.f32 %v2844
        %v3409 = vcvt.s32.f32 %v2845
        %v3410 = vcvt.s32.f32 %v2846
        %v3411 = vcvt.s32.f32 %v2847
        %v3412 = vcvt.s32.f32 %v2848
        %v3413 = vcvt.s32.f32 %v2849
        %v3414 = vcvt.s32.f32 %v2850
        %v3415 = vcvt.s32.f32 %v2851
        %v3416 = vcvt.s32.f32 %v2852
        %v3417 = vcvt.s32.f32 %v2853
        %v3418 = vcvt.s32.f32 %v2854
        %v3419 = vcvt.s32.f32 %v2855
        %v3420 = vcvt.s32.f32 %v2856
        %v3421 = vcvt.s32.f32 %v2857
        %v3422 = vcvt.s32.f32 %v2858
        %v3423 = vcvt.s32.f32 %v2859
        %v3424 = vcvt.s32.f32 %v2860
        %v3425 = vcvt.s32.f32 %v2861
        %v3426 = vcvt.s32.f32 %v2862
        %v3427 = vcvt.s32.f32 %v2863
        %v3428 = vcvt.s32.f32 %v2864
        %v3429 = vcvt.s32.f32 %v2865
        %v3430 = vcvt.s32.f32 %v2866
        %v3431 = vcvt.s32.f32 %v2867
        %v3432 = vcvt.s32.f32 %v2868
        %v3433 = vcvt.s32.f32 %v2869
        %v3434 = vcvt.s32.f32 %v2870
        %v3435 = vcvt.s32.f32 %v2871
        %v3436 = vcvt.s32.f32 %v2872
        %v3437 = vcvt.s32.f32 %v2873
        %v3438 = vcvt.s32.f32 %v2874
        %v3439 = vcvt.s32.f32 %v2875
        %v3440 = vcvt.s32.f32 %v2876
        %v3441 = vcvt.s32.f32 %v2877
        %v3442 = vcvt.s32.f32 %v2878
        %v3443 = vcvt.s32.f32 %v2879
        %v3444 = vcvt.s32.f32 %v2880
        %v3445 = vcvt.s32.f32 %v2881
        %v3446 = vcvt.s32.f32 %v2882
        %v3447 = vcvt.s32.f32 %v2883
        %v3448 = vcvt.s32.f32 %v2884
        %v3449 = vcvt.s32.f32 %v2885
        %v3450 = vcvt.s32.f32 %v2886
        %v3451 = vcvt.s32.f32 %v2887
        %v3452 = vcvt.s32.f32 %v2888
        %v3453 = vcvt.s32.f32 %v2889
        %v3454 = vcvt.s32.f32 %v2890
        %v3455 = vcvt.s32.f32 %v2891
        %v3456 = vcvt.s32.f32 %v2892
        %v3457 = vcvt.s32.f32 %v2893
        %v3458 = vcvt.s32.f32 %v2894
        %v3459 = vcvt.s32.f32 %v2895
        %v3460 = vcvt.s32.f32 %v2896
        %v3461 = vcvt.s32.f32 %v2897
        %v3462 = vcvt.s32.f32 %v2898
        %v3463 = vcvt.s32.f32 %v2899
        %v3464 = vcvt.s32.f32 %v2900
        %v3465 = vcvt.s32.f32 %v2901
        %v3466 = vcvt.s32.f32 %v2902
        %v3467 = vcvt.s32.f32 %v2903
        %v3468 = vcvt.s32.f32 %v2904
        %v3469 = vcvt.s32.f32 %v2905
        %v3470 = vcvt.s32.f32 %v2906
        %v3471 = vcvt.s32.f32 %v2907
        %v3472 = vcvt.s32.f32 %v2908
        %v3473 = vcvt.s32.f32 %v2909
        %v3474 = vcvt.s32.f32 %v2910
        %v3475 = vcvt.s32.f32 %v2911
        %v3476 = vcvt.s32.f32 %v2912
        %v3477 = vcvt.s32.f32 %v2913
        %v3478 = vcvt.s32.f32 %v2914
        %v3479 = vcvt.s32.f32 %v2915
        %v3480 = vcvt.s32.f32 %v2916
        %v3481 = vcvt.s32.f32 %v2917
        %v3482 = vcvt.s32.f32 %v2918
        %v3483 = vcvt.s32.f32 %v2919
        %v3484 = vcvt.s32.f32 %v2920
        %v3485 = vcvt.s32.f32 %v2921
        %v3486 = vcvt.s32.f32 %v2922
        %v3487 = vcvt.s32.f32 %v2923
        %v3488 = vcvt.s32.f32 %v2924
        %v3489 = vcvt.s32.f32 %v2925
        %v3490 = vcvt.s32.f32 %v2926
        %v3491 = vcvt.s32.f32 %v2927
        %v3492 = vcvt.s32.f32 %v2928
        %v3493 = vcvt.s32.f32 %v2929
        %v3494 = vcvt.s32.f32 %v2930
        %v3495 = vcvt.s32.f32 %v2931
        %v3496 = vcvt.s32.f32 %v2932
        %v3497 = vcvt.s32.f32 %v2933
        %v3498 = vcvt.s32.f32 %v2934
        %v3499 = vcvt.s32.f32 %v2935
        %v3500 = vcvt.s32.f32 %v2936
        %v3501 = vcvt.s32.f32 %v2937
        %v3502 = vcvt.s32.f32 %v2938
        %v3503 = vcvt.s32.f32 %v2939
        %v3504 = vcvt.s32.f32 %v2940
        %v3505 = vcvt.s32.f32 %v2941
        %v3506 = vcvt.s32.f32 %v2942
        %v3507 = vcvt.s32.f32 %v2943
        %v3508 = vcvt.s32.f32 %v2944
        %v3509 = vcvt.s32.f32 %v2945
        %v3510 = vcvt.s32.f32 %v2946
        %v3511 = vcvt.s32.f32 %v2947
        %v3512 = vcvt.s32.f32 %v2948
        %v3513 = vcvt.s32.f32 %v2949
        %v3514 = vcvt.s32.f32 %v2950
        %v3515 = vcvt.s32.f32 %v2951
        %v3516 = vcvt.s32.f32 %v2952
        %v3517 = vcvt.s32.f32 %v2953
        %v3518 = vcvt.s32.f32 %v2954
        %v3519 = vcvt.s32.f32 %v2955
        %v3520 = vcvt.s32.f32 %v2956
        %v3521 = vcvt.s32.f32 %v2957
        %v3522 = vcvt.s32.f32 %v2958
        %v3523 = vcvt.s32.f32 %v2959
        %v3524 = vcvt.s32.f32 %v2960
        %v3525 = vcvt.s32.f32 %v2961
        %v3526 = vcvt.s32.f32 %v2962
        %v3527 = vcvt.s32.f32 %v2963
        %v3528 = vcvt.s32.f32 %v2964
        %v3529 = vcvt.s32.f32 %v2965
        %v3530 = vcvt.s32.f32 %v2966
        %v3531 = vcvt.s32.f32 %v2967
        %v3532 = vcvt.s32.f32 %v2968
        %v3533 = vcvt.s32.f32 %v2969
        %v3534 = vcvt.s32.f32 %v2970
        %v3535 = vcvt.s32.f32 %v2971
        %v3536 = vcvt.s32.f32 %v2972
        %v3537 = vcvt.s32.f32 %v2973
        %v3538 = vcvt.s32.f32 %v2974
        %v3539 = vcvt.s32.f32 %v2975
        %v3540 = vcvt.s32.f32 %v2976
        %v3541 = vcvt.s32.f32 %v2977
        %v3542 = vcvt.s32.f32 %v2978
        %v3543 = vcvt.s32.f32 %v2979
        %v3544 = vcvt.s32.f32 %v2980
        %v3545 = vcvt.s32.f32 %v2981
        %v3546 = vcvt.s32.f32 %v2982
        %v3547 = vcvt.s32.f32 %v2983
        %v3548 = vcvt.s32.f32 %v2984
        %v3549 = vcvt.s32.f32 %v2985
        %v3550 = vcvt.s32.f32 %v2986
        %v3551 = vcvt.s32.f32 %v2987
        %v3552 = vcvt.s32.f32 %v2988
        %v3553 = vcvt.s32.f32 %v2989
        %v3554 = vcvt.s32.f32 %v2990
        %v3555 = vcvt.s32.f32 %v2991
        %v3556 = vcvt.s32.f32 %v2992
        %v3557 = vcvt.s32.f32 %v2993
        %v3558 = vcvt.s32.f32 %v2994
        %v3559 = vcvt.s32.f32 %v2995
        %v3560 = vcvt.s32.f32 %v2996
        %v3561 = vcvt.s32.f32 %v2997
        %v3562 = vcvt.s32.f32 %v2998
        %v3563 = vcvt.s32.f32 %v2999
        %v3564 = vcvt.s32.f32 %v3000
        %v3565 = vcvt.s32.f32 %v3001
        %v3566 = vcvt.s32.f32 %v3002
        %v3567 = vcvt.s32.f32 %v3003
        %v3568 = vcvt.s32.f32 %v3004
        %v3569 = vcvt.s32.f32 %v3005
        %v3570 = vcvt.s32.f32 %v3006
        %v3571 = vcvt.s32.f32 %v3007
        %v3572 = vcvt.s32.f32 %v3008
        %v3573 = vcvt.s32.f32 %v3009
        %v3574 = vcvt.s32.f32 %v3010
        %v3575 = vcvt.s32.f32 %v3011
        %v3576 = vcvt.s32.f32 %v3012
        %v3577 = vcvt.s32.f32 %v3013
        %v3578 = vcvt.s32.f32 %v3014
        %v3579 = vcvt.s32.f32 %v3015
        %v3580 = vcvt.s32.f32 %v3016
        %v3581 = vcvt.s32.f32 %v3017
        %v3582 = vcvt.s32.f32 %v3018
        %v3583 = vcvt.s32.f32 %v3019
        %v3584 = vcvt.s32.f32 %v3020
        %v3585 = vcvt.s32.f32 %v3021
        %v3586 = vcvt.s32.f32 %v3022
        %v3587 = vcvt.s32.f32 %v3023
        %v3588 = vcvt.s32.f32 %v3024
        %v3589 = vcvt.s32.f32 %v3025
        %v3590 = vcvt.s32.f32 %v3026
        %v3591 = vcvt.s32.f32 %v3027
        %v3592 = vcvt.s32.f32 %v3028
        %v3593 = vcvt.s32.f32 %v3029
        %v3594 = vcvt.s32.f32 %v3030
        %v3595 = vcvt.s32.f32 %v3031
        %v3596 = vcvt.s32.f32 %v3032
        %v3597 = vcvt.s32.f32 %v3033
        %v3598 = vcvt.s32.f32 %v3034
        %v3599 = vcvt.s32.f32 %v3035
        %v3600 = vcvt.s32.f32 %v3036
        %v3601 = vcvt.s32.f32 %v3037
        %v3602 = vcvt.s32.f32 %v3038
        %v3603 = vcvt.s32.f32 %v3039
        %v3604 = vcvt.s32.f32 %v3040
        %v3605 = vcvt.s32.f32 %v3041
        %v3606 = vcvt.s32.f32 %v3042
        %v3607 = vcvt.s32.f32 %v3043
        %v3608 = vcvt.s32.f32 %v3044
        %v3609 = vcvt.s32.f32 %v3045
        %v3610 = vcvt.s32.f32 %v3046
        %v3611 = vcvt.s32.f32 %v3047
        %v3612 = vcvt.s32.f32 %v3048
        %v3613 = vcvt.s32.f32 %v3049
        %v3614 = vcvt.s32.f32 %v3050
        %v3615 = vcvt.s32.f32 %v3051
        %v3616 = vcvt.s32.f32 %v3052
        %v3617 = vcvt.s32.f32 %v3053
        %v3618 = vcvt.s32.f32 %v3054
        %v3619 = vcvt.s32.f32 %v3055
        %v3620 = vcvt.s32.f32 %v3056
        %v3621 = vcvt.s32.f32 %v3057
        %v3622 = vcvt.s32.f32 %v3058
        %v3623 = vcvt.s32.f32 %v3059
        %v3624 = vcvt.s32.f32 %v3060
        %v3625 = vcvt.s32.f32 %v3061
        %v3626 = vcvt.s32.f32 %v3062
        %v3627 = vcvt.s32.f32 %v3063
        %v3628 = vcvt.s32.f32 %v3064
        %v3629 = vcvt.s32.f32 %v3065
        %v3630 = vcvt.s32.f32 %v3066
        %v3631 = vcvt.s32.f32 %v3067
        %v3632 = vcvt.s32.f32 %v3068
        %v3633 = vcvt.s32.f32 %v3069
        %v3634 = vcvt.s32.f32 %v3070
        %v3635 = vcvt.s32.f32 %v3071
        %v3636 = vcvt.s32.f32 %v3072
        %v3637 = vcvt.s32.f32 %v3073
        %v3638 = vcvt.s32.f32 %v3074
        %v3639 = vcvt.s32.f32 %v3075
        %v3640 = vcvt.s32.f32 %v3076
        %v3641 = vcvt.s32.f32 %v3077
        %v3642 = vcvt.s32.f32 %v3078
        %v3643 = vcvt.s32.f32 %v3079
        %v3644 = vcvt.s32.f32 %v3080
        %v3645 = vcvt.s32.f32 %v3081
        %v3646 = vcvt.s32.f32 %v3082
        %v3647 = vcvt.s32.f32 %v3083
        %v3648 = vcvt.s32.f32 %v3084
        %v3649 = vcvt.s32.f32 %v3085
        %v3650 = vcvt.s32.f32 %v3086
        %v3651 = vcvt.s32.f32 %v3087
        %v3652 = vcvt.s32.f32 %v3088
        %v3653 = vcvt.s32.f32 %v3089
        %v3654 = vcvt.s32.f32 %v3090
        %v3655 = vcvt.s32.f32 %v3091
        %v3656 = vcvt.s32.f32 %v3092
        %v3657 = vcvt.s32.f32 %v3093
        %v3658 = vcvt.s32.f32 %v3094
        %v3659 = vcvt.s32.f32 %v3095
        %v3660 = vcvt.s32.f32 %v3096
        %v3661 = vcvt.s32.f32 %v3097
        %v3662 = vcvt.s32.f32 %v3098
        %v3663 = vpack.c.bf16 %v3105, %v3099
        %v3664 = vpack.c.bf16 %v3106, %v3100
        %v3665 = vpack.c.bf16 %v3107, %v3101
        %v3666 = vpack.c.bf16 %v3108, %v3102
        %v3667 = vpack.c.bf16 %v3109, %v3103
        %v3668 = vpack.c.bf16 %v3110, %v3104
        %v3669 = vpack.c.bf16 %v3117, %v3111
        %v3670 = vpack.c.bf16 %v3118, %v3112
        %v3671 = vpack.c.bf16 %v3119, %v3113
        %v3672 = vpack.c.bf16 %v3120, %v3114
        %v3673 = vpack.c.bf16 %v3121, %v3115
        %v3674 = vpack.c.bf16 %v3122, %v3116
        %v3675 = vpack.c.bf16 %v3129, %v3123
        %v3676 = vpack.c.bf16 %v3130, %v3124
        %v3677 = vpack.c.bf16 %v3131, %v3125
        %v3678 = vpack.c.bf16 %v3132, %v3126
        %v3679 = vpack.c.bf16 %v3133, %v3127
        %v3680 = vpack.c.bf16 %v3134, %v3128
        %v3681 = vpack.c.bf16 %v3141, %v3135
        %v3682 = vpack.c.bf16 %v3142, %v3136
        %v3683 = vpack.c.bf16 %v3143, %v3137
        %v3684 = vpack.c.bf16 %v3144, %v3138
        %v3685 = vpack.c.bf16 %v3145, %v3139
        %v3686 = vpack.c.bf16 %v3146, %v3140
        %v3687 = vpack.c.bf16 %v3153, %v3147
        %v3688 = vpack.c.bf16 %v3154, %v3148
        %v3689 = vpack.c.bf16 %v3155, %v3149
        %v3690 = vpack.c.bf16 %v3156, %v3150
        %v3691 = vpack.c.bf16 %v3157, %v3151
        %v3692 = vpack.c.bf16 %v3158, %v3152
        %v3693 = vpack.c.bf16 %v3165, %v3159
        %v3694 = vpack.c.bf16 %v3166, %v3160
        %v3695 = vpack.c.bf16 %v3167, %v3161
        %v3696 = vpack.c.bf16 %v3168, %v3162
        %v3697 = vpack.c.bf16 %v3169, %v3163
        %v3698 = vpack.c.bf16 %v3170, %v3164
        %v3699 = vpack.c.bf16 %v3177, %v3171
        %v3700 = vpack.c.bf16 %v3178, %v3172
        %v3701 = vpack.c.bf16 %v3179, %v3173
        %v3702 = vpack.c.bf16 %v3180, %v3174
        %v3703 = vpack.c.bf16 %v3181, %v3175
        %v3704 = vpack.c.bf16 %v3182, %v3176
        %v3705 = vpack.c.bf16 %v3189, %v3183
        %v3706 = vpack.c.bf16 %v3190, %v3184
        %v3707 = vpack.c.bf16 %v3191, %v3185
        %v3708 = vpack.c.bf16 %v3192, %v3186
        %v3709 = vpack.c.bf16 %v3193, %v3187
        %v3710 = vpack.c.bf16 %v3194, %v3188
        %v3711 = vpack.c.bf16 %v3201, %v3195
        %v3712 = vpack.c.bf16 %v3202, %v3196
        %v3713 = vpack.c.bf16 %v3203, %v3197
        %v3714 = vpack.c.bf16 %v3204, %v3198
        %v3715 = vpack.c.bf16 %v3205, %v3199
        %v3716 = vpack.c.bf16 %v3206, %v3200
        %v3717 = vpack.c.bf16 %v3213, %v3207
        %v3718 = vpack.c.bf16 %v3214, %v3208
        %v3719 = vpack.c.bf16 %v3215, %v3209
        %v3720 = vpack.c.bf16 %v3216, %v3210
        %v3721 = vpack.c.bf16 %v3217, %v3211
        %v3722 = vpack.c.bf16 %v3218, %v3212
        %v3723 = vpack.c.bf16 %v3225, %v3219
        %v3724 = vpack.c.bf16 %v3226, %v3220
        %v3725 = vpack.c.bf16 %v3227, %v3221
        %v3726 = vpack.c.bf16 %v3228, %v3222
        %v3727 = vpack.c.bf16 %v3229, %v3223
        %v3728 = vpack.c.bf16 %v3230, %v3224
        %v3729 = vpack.c.bf16 %v3237, %v3231
        %v3730 = vpack.c.bf16 %v3238, %v3232
        %v3731 = vpack.c.bf16 %v3239, %v3233
        %v3732 = vpack.c.bf16 %v3240, %v3234
        %v3733 = vpack.c.bf16 %v3241, %v3235
        %v3734 = vpack.c.bf16 %v3242, %v3236
        %v3735 = vpack.c.bf16 %v3249, %v3243
        %v3736 = vpack.c.bf16 %v3250, %v3244
        %v3737 = vpack.c.bf16 %v3251, %v3245
        %v3738 = vpack.c.bf16 %v3252, %v3246
        %v3739 = vpack.c.bf16 %v3253, %v3247
        %v3740 = vpack.c.bf16 %v3254, %v3248
        %v3741 = vpack.c.bf16 %v3261, %v3255
        %v3742 = vpack.c.bf16 %v3262, %v3256
        %v3743 = vpack.c.bf16 %v3263, %v3257
        %v3744 = vpack.c.bf16 %v3264, %v3258
        %v3745 = vpack.c.bf16 %v3265, %v3259
        %v3746 = vpack.c.bf16 %v3266, %v3260
        %v3747 = vpack.c.bf16 %v3273, %v3267
        %v3748 = vpack.c.bf16 %v3274, %v3268
        %v3749 = vpack.c.bf16 %v3275, %v3269
        %v3750 = vpack.c.bf16 %v3276, %v3270
        %v3751 = vpack.c.bf16 %v3277, %v3271
        %v3752 = vpack.c.bf16 %v3278, %v3272
        %v3753 = vpack.c.bf16 %v3285, %v3279
        %v3754 = vpack.c.bf16 %v3286, %v3280
        %v3755 = vpack.c.bf16 %v3287, %v3281
        %v3756 = vpack.c.bf16 %v3288, %v3282
        %v3757 = vpack.c.bf16 %v3289, %v3283
        %v3758 = vpack.c.bf16 %v3290, %v3284
        %v3759 = vpack.c.bf16 %v3297, %v3291
        %v3760 = vpack.c.bf16 %v3298, %v3292
        %v3761 = vpack.c.bf16 %v3299, %v3293
        %v3762 = vpack.c.bf16 %v3300, %v3294
        %v3763 = vpack.c.bf16 %v3301, %v3295
        %v3764 = vpack.c.bf16 %v3302, %v3296
        %v3765 = vpack.c.bf16 %v3309, %v3303
        %v3766 = vpack.c.bf16 %v3310, %v3304
        %v3767 = vpack.c.bf16 %v3311, %v3305
        %v3768 = vpack.c.bf16 %v3312, %v3306
        %v3769 = vpack.c.bf16 %v3313, %v3307
        %v3770 = vpack.c.bf16 %v3314, %v3308
        %v3771 = vpack.c.bf16 %v3321, %v3315
        %v3772 = vpack.c.bf16 %v3322, %v3316
        %v3773 = vpack.c.bf16 %v3323, %v3317
        %v3774 = vpack.c.bf16 %v3324, %v3318
        %v3775 = vpack.c.bf16 %v3325, %v3319
        %v3776 = vpack.c.bf16 %v3326, %v3320
        %v3777 = vpack.c.bf16 %v3333, %v3327
        %v3778 = vpack.c.bf16 %v3334, %v3328
        %v3779 = vpack.c.bf16 %v3335, %v3329
        %v3780 = vpack.c.bf16 %v3336, %v3330
        %v3781 = vpack.c.bf16 %v3337, %v3331
        %v3782 = vpack.c.bf16 %v3338, %v3332
        %v3783 = vpack.c.bf16 %v3345, %v3339
        %v3784 = vpack.c.bf16 %v3346, %v3340
        %v3785 = vpack.c.bf16 %v3347, %v3341
        %v3786 = vpack.c.bf16 %v3348, %v3342
        %v3787 = vpack.c.bf16 %v3349, %v3343
        %v3788 = vpack.c.bf16 %v3350, %v3344
        %v3789 = vpack.c.bf16 %v3357, %v3351
        %v3790 = vpack.c.bf16 %v3358, %v3352
        %v3791 = vpack.c.bf16 %v3359, %v3353
        %v3792 = vpack.c.bf16 %v3360, %v3354
        %v3793 = vpack.c.bf16 %v3361, %v3355
        %v3794 = vpack.c.bf16 %v3362, %v3356
        %v3795 = vpack.c.bf16 %v3369, %v3363
        %v3796 = vpack.c.bf16 %v3370, %v3364
        %v3797 = vpack.c.bf16 %v3371, %v3365
        %v3798 = vpack.c.bf16 %v3372, %v3366
        %v3799 = vpack.c.bf16 %v3373, %v3367
        %v3800 = vpack.c.bf16 %v3374, %v3368
        %v3801 = vpack.c.bf16 %v3381, %v3375
        %v3802 = vpack.c.bf16 %v3382, %v3376
        %v3803 = vpack.c.bf16 %v3383, %v3377
        %v3804 = vpack.c.bf16 %v3384, %v3378
        %v3805 = vpack.c.bf16 %v3385, %v3379
        %v3806 = vpack.c.bf16 %v3386, %v3380
        %v3807 = vpack.c.bf16 %v3393, %v3387
        %v3808 = vpack.c.bf16 %v3394, %v3388
        %v3809 = vpack.c.bf16 %v3395, %v3389
        %v3810 = vpack.c.bf16 %v3396, %v3390
        %v3811 = vpack.c.bf16 %v3397, %v3391
        %v3812 = vpack.c.bf16 %v3398, %v3392
        %v3813 = vpack.c.bf16 %v3405, %v3399
        %v3814 = vpack.c.bf16 %v3406, %v3400
        %v3815 = vpack.c.bf16 %v3407, %v3401
        %v3816 = vpack.c.bf16 %v3408, %v3402
        %v3817 = vpack.c.bf16 %v3409, %v3403
        %v3818 = vpack.c.bf16 %v3410, %v3404
        %v3819 = vpack.c.bf16 %v3417, %v3411
        %v3820 = vpack.c.bf16 %v3418, %v3412
        %v3821 = vpack.c.bf16 %v3419, %v3413
        %v3822 = vpack.c.bf16 %v3420, %v3414
        %v3823 = vpack.c.bf16 %v3421, %v3415
        %v3824 = vpack.c.bf16 %v3422, %v3416
        %v3825 = vpack.c.bf16 %v3429, %v3423
        %v3826 = vpack.c.bf16 %v3430, %v3424
        %v3827 = vpack.c.bf16 %v3431, %v3425
        %v3828 = vpack.c.bf16 %v3432, %v3426
        %v3829 = vpack.c.bf16 %v3433, %v3427
        %v3830 = vpack.c.bf16 %v3434, %v3428
        %v3831 = vpack.c.bf16 %v3441, %v3435
        %v3832 = vpack.c.bf16 %v3442, %v3436
        %v3833 = vpack.c.bf16 %v3443, %v3437
        %v3834 = vpack.c.bf16 %v3444, %v3438
        %v3835 = vpack.c.bf16 %v3445, %v3439
        %v3836 = vpack.c.bf16 %v3446, %v3440
        %v3837 = vpack.c.bf16 %v3453, %v3447
        %v3838 = vpack.c.bf16 %v3454, %v3448
        %v3839 = vpack.c.bf16 %v3455, %v3449
        %v3840 = vpack.c.bf16 %v3456, %v3450
        %v3841 = vpack.c.bf16 %v3457, %v3451
        %v3842 = vpack.c.bf16 %v3458, %v3452
        %v3843 = vpack.c.bf16 %v3465, %v3459
        %v3844 = vpack.c.bf16 %v3466, %v3460
        %v3845 = vpack.c.bf16 %v3467, %v3461
        %v3846 = vpack.c.bf16 %v3468, %v3462
        %v3847 = vpack.c.bf16 %v3469, %v3463
        %v3848 = vpack.c.bf16 %v3470, %v3464
        %v3849 = vpack.c.bf16 %v3477, %v3471
        %v3850 = vpack.c.bf16 %v3478, %v3472
        %v3851 = vpack.c.bf16 %v3479, %v3473
        %v3852 = vpack.c.bf16 %v3480, %v3474
        %v3853 = vpack.c.bf16 %v3481, %v3475
        %v3854 = vpack.c.bf16 %v3482, %v3476
        %v3855 = vpack.c.bf16 %v3489, %v3483
        %v3856 = vpack.c.bf16 %v3490, %v3484
        %v3857 = vpack.c.bf16 %v3491, %v3485
        %v3858 = vpack.c.bf16 %v3492, %v3486
        %v3859 = vpack.c.bf16 %v3493, %v3487
        %v3860 = vpack.c.bf16 %v3494, %v3488
        %v3861 = vpack.c.bf16 %v3501, %v3495
        %v3862 = vpack.c.bf16 %v3502, %v3496
        %v3863 = vpack.c.bf16 %v3503, %v3497
        %v3864 = vpack.c.bf16 %v3504, %v3498
        %v3865 = vpack.c.bf16 %v3505, %v3499
        %v3866 = vpack.c.bf16 %v3506, %v3500
        %v3867 = vpack.c.bf16 %v3513, %v3507
        %v3868 = vpack.c.bf16 %v3514, %v3508
        %v3869 = vpack.c.bf16 %v3515, %v3509
        %v3870 = vpack.c.bf16 %v3516, %v3510
        %v3871 = vpack.c.bf16 %v3517, %v3511
        %v3872 = vpack.c.bf16 %v3518, %v3512
        %v3873 = vpack.c.bf16 %v3525, %v3519
        %v3874 = vpack.c.bf16 %v3526, %v3520
        %v3875 = vpack.c.bf16 %v3527, %v3521
        %v3876 = vpack.c.bf16 %v3528, %v3522
        %v3877 = vpack.c.bf16 %v3529, %v3523
        %v3878 = vpack.c.bf16 %v3530, %v3524
        %v3879 = vpack.c.bf16 %v3537, %v3531
        %v3880 = vpack.c.bf16 %v3538, %v3532
        %v3881 = vpack.c.bf16 %v3539, %v3533
        %v3882 = vpack.c.bf16 %v3540, %v3534
        %v3883 = vpack.c.bf16 %v3541, %v3535
        %v3884 = vpack.c.bf16 %v3542, %v3536
        %v3885 = vpack.c.bf16 %v3549, %v3543
        %v3886 = vpack.c.bf16 %v3550, %v3544
        %v3887 = vpack.c.bf16 %v3551, %v3545
        %v3888 = vpack.c.bf16 %v3552, %v3546
        %v3889 = vpack.c.bf16 %v3553, %v3547
        %v3890 = vpack.c.bf16 %v3554, %v3548
        %v3891 = vpack.c.bf16 %v3561, %v3555
        %v3892 = vpack.c.bf16 %v3562, %v3556
        %v3893 = vpack.c.bf16 %v3563, %v3557
        %v3894 = vpack.c.bf16 %v3564, %v3558
        %v3895 = vpack.c.bf16 %v3565, %v3559
        %v3896 = vpack.c.bf16 %v3566, %v3560
        %v3897 = vpack.c.bf16 %v3573, %v3567
        %v3898 = vpack.c.bf16 %v3574, %v3568
        %v3899 = vpack.c.bf16 %v3575, %v3569
        %v3900 = vpack.c.bf16 %v3576, %v3570
        %v3901 = vpack.c.bf16 %v3577, %v3571
        %v3902 = vpack.c.bf16 %v3578, %v3572
        %v3903 = vpack.c.bf16 %v3585, %v3579
        %v3904 = vpack.c.bf16 %v3586, %v3580
        %v3905 = vpack.c.bf16 %v3587, %v3581
        %v3906 = vpack.c.bf16 %v3588, %v3582
        %v3907 = vpack.c.bf16 %v3589, %v3583
        %v3908 = vpack.c.bf16 %v3590, %v3584
        %v3909 = vpack.c.bf16 %v3597, %v3591
        %v3910 = vpack.c.bf16 %v3598, %v3592
        %v3911 = vpack.c.bf16 %v3599, %v3593
        %v3912 = vpack.c.bf16 %v3600, %v3594
        %v3913 = vpack.c.bf16 %v3601, %v3595
        %v3914 = vpack.c.bf16 %v3602, %v3596
        %v3915 = vpack.c.bf16 %v3609, %v3603
        %v3916 = vpack.c.bf16 %v3610, %v3604
        %v3917 = vpack.c.bf16 %v3611, %v3605
        %v3918 = vpack.c.bf16 %v3612, %v3606
        %v3919 = vpack.c.bf16 %v3613, %v3607
        %v3920 = vpack.c.bf16 %v3614, %v3608
        %v3921 = vpack.c.bf16 %v3621, %v3615
        %v3922 = vpack.c.bf16 %v3622, %v3616
        %v3923 = vpack.c.bf16 %v3623, %v3617
        %v3924 = vpack.c.bf16 %v3624, %v3618
        %v3925 = vpack.c.bf16 %v3625, %v3619
        %v3926 = vpack.c.bf16 %v3626, %v3620
        %v3927 = vpack.c.bf16 %v3633, %v3627
        %v3928 = vpack.c.bf16 %v3634, %v3628
        %v3929 = vpack.c.bf16 %v3635, %v3629
        %v3930 = vpack.c.bf16 %v3636, %v3630
        %v3931 = vpack.c.bf16 %v3637, %v3631
        %v3932 = vpack.c.bf16 %v3638, %v3632
        %v3933 = vpack.c.bf16 %v3645, %v3639
        %v3934 = vpack.c.bf16 %v3646, %v3640
        %v3935 = vpack.c.bf16 %v3647, %v3641
        %v3936 = vpack.c.bf16 %v3648, %v3642
        %v3937 = vpack.c.bf16 %v3649, %v3643
        %v3938 = vpack.c.bf16 %v3650, %v3644
        %v3939 = vpack.c.bf16 %v3657, %v3651
        %v3940 = vpack.c.bf16 %v3658, %v3652
        %v3941 = vpack.c.bf16 %v3659, %v3653
        %v3942 = vpack.c.bf16 %v3660, %v3654
        %v3943 = vpack.c.bf16 %v3661, %v3655
        %v3944 = vpack.c.bf16 %v3662, %v3656
        %vm3945 = vcmask 900096
        %v3947 = vsel %vm3945, 1065369472, 0
        %vm3949 = vcmask 1046528
        %v3951 = vsel %vm3949, %v3939, 0
        %v3954 = vsel %vm3949, %v3940, 0
        %v3957 = vsel %vm3949, %v3941, 0
        %v3960 = vsel %vm3949, %v3942, 0
        %v3963 = vsel %vm3949, %v3943, 0
        %v3966 = vsel %vm3949, %v3944, 0
        %3968 = vmatprep.subr.bf16.mxu0 %v3706
        %3969 = vmatpush1.bf16.msra.mxu0 %v3705
        %3970 = vmatprep.subr.bf16.mxu0 %v3700
        %3971 = vmatpush1.bf16.msra.mxu0 %v3699
        %3972 = vmatprep.subr.bf16.mxu0 %v3694
        %3973 = vmatpush1.bf16.msra.mxu0 %v3693
        %3974 = vmatprep.subr.bf16.mxu0 %v3688
        %3975 = vmatpush1.bf16.msra.mxu0 %v3687
        %3976 = vmatprep.subr.bf16.mxu0 %v3682
        %3977 = vmatpush1.bf16.msra.mxu0 %v3681
        %3978 = vmatprep.subr.bf16.mxu0 %v3676
        %3979 = vmatpush1.bf16.msra.mxu0 %v3675
        %3980 = vmatprep.subr.bf16.mxu0 %v3670
        %3981 = vmatpush1.bf16.msra.mxu0 %v3669
        %3982 = vmatprep.subr.bf16.mxu0 %v3664
        %3983 = vmatpush1.bf16.msra.mxu0 %v3663
        %3984 = vmatprep.subr.bf16.mxu0 %v3754
        %3985 = vmatpush2.bf16.msra.mxu0 %v3753
        %3986 = vmatprep.subr.bf16.mxu0 %v3748
        %3987 = vmatpush2.bf16.msra.mxu0 %v3747
        %3988 = vmatprep.subr.bf16.mxu0 %v3742
        %3989 = vmatpush2.bf16.msra.mxu0 %v3741
        %3990 = vmatprep.subr.bf16.mxu0 %v3736
        %3991 = vmatpush2.bf16.msra.mxu0 %v3735
        %3992 = vmatprep.subr.bf16.mxu0 %v3730
        %3993 = vmatpush2.bf16.msra.mxu0 %v3729
        %3994 = vmatprep.subr.bf16.mxu0 %v3724
        %3995 = vmatpush2.bf16.msra.mxu0 %v3723
        %3996 = vmatprep.subr.bf16.mxu0 %v3718
        %3997 = vmatpush2.bf16.msra.mxu0 %v3717
        %3998 = vmatprep.subr.bf16.mxu0 %v3712
        %3999 = vmatpush2.bf16.msra.mxu0 %v3711
        %4000 = vmatprep.mubr.bf16.mxu0 1065369472
        %4001 = vmatmul.mubr.bf16.gmra.mxu0 1065369472
        %v4002 = vpop.f32.mrf.mxu0
        %v4003 = vadd.f32 0.0, %v4002
        %v4004 = vpop.f32.mrf.mxu0
        %v4005 = vadd.f32 0.0, %v4004
        %v4006 = vpop.f32.mrf.mxu0
        %v4007 = vpop.f32.mrf.mxu0
        %4008 = vdwg.mxu0
        %4009 = vmatprep.subr.bf16.mxu0 %v3802
        %4010 = vmatpush1.bf16.msra.mxu0 %v3801
        %4011 = vmatprep.subr.bf16.mxu0 %v3796
        %4012 = vmatpush1.bf16.msra.mxu0 %v3795
        %4013 = vmatprep.subr.bf16.mxu0 %v3790
        %4014 = vmatpush1.bf16.msra.mxu0 %v3789
        %4015 = vmatprep.subr.bf16.mxu0 %v3784
        %4016 = vmatpush1.bf16.msra.mxu0 %v3783
        %4017 = vmatprep.subr.bf16.mxu0 %v3778
        %4018 = vmatpush1.bf16.msra.mxu0 %v3777
        %4019 = vmatprep.subr.bf16.mxu0 %v3772
        %4020 = vmatpush1.bf16.msra.mxu0 %v3771
        %4021 = vmatprep.subr.bf16.mxu0 %v3766
        %4022 = vmatpush1.bf16.msra.mxu0 %v3765
        %4023 = vmatprep.subr.bf16.mxu0 %v3760
        %4024 = vmatpush1.bf16.msra.mxu0 %v3759
        %4025 = vmatprep.subr.bf16.mxu0 %v3850
        %4026 = vmatpush2.bf16.msra.mxu0 %v3849
        %4027 = vmatprep.subr.bf16.mxu0 %v3844
        %4028 = vmatpush2.bf16.msra.mxu0 %v3843
        %4029 = vmatprep.subr.bf16.mxu0 %v3838
        %4030 = vmatpush2.bf16.msra.mxu0 %v3837
        %4031 = vmatprep.subr.bf16.mxu0 %v3832
        %4032 = vmatpush2.bf16.msra.mxu0 %v3831
        %4033 = vmatprep.subr.bf16.mxu0 %v3826
        %4034 = vmatpush2.bf16.msra.mxu0 %v3825
        %4035 = vmatprep.subr.bf16.mxu0 %v3820
        %4036 = vmatpush2.bf16.msra.mxu0 %v3819
        %4037 = vmatprep.subr.bf16.mxu0 %v3814
        %4038 = vmatpush2.bf16.msra.mxu0 %v3813
        %4039 = vmatprep.subr.bf16.mxu0 %v3808
        %4040 = vmatpush2.bf16.msra.mxu0 %v3807
        %4041 = vmatprep.mubr.bf16.mxu0 1065369472
        %4042 = vmatmul.mubr.bf16.gmra.mxu0 1065369472
        %v4043 = vpop.f32.mrf.mxu0
        %v4044 = vadd.f32 %v4003, %v4043
        %v4045 = vpop.f32.mrf.mxu0
        %v4046 = vadd.f32 %v4005, %v4045
        %v4047 = vpop.f32.mrf.mxu0
        %v4048 = vpop.f32.mrf.mxu0
        %4049 = vdwg.mxu0
        %4050 = vmatprep.subr.bf16.mxu0 %v3898
        %4051 = vmatpush1.bf16.msra.mxu0 %v3897
        %4052 = vmatprep.subr.bf16.mxu0 %v3892
        %4053 = vmatpush1.bf16.msra.mxu0 %v3891
        %4054 = vmatprep.subr.bf16.mxu0 %v3886
        %4055 = vmatpush1.bf16.msra.mxu0 %v3885
        %4056 = vmatprep.subr.bf16.mxu0 %v3880
        %4057 = vmatpush1.bf16.msra.mxu0 %v3879
        %4058 = vmatprep.subr.bf16.mxu0 %v3874
        %4059 = vmatpush1.bf16.msra.mxu0 %v3873
        %4060 = vmatprep.subr.bf16.mxu0 %v3868
        %4061 = vmatpush1.bf16.msra.mxu0 %v3867
        %4062 = vmatprep.subr.bf16.mxu0 %v3862
        %4063 = vmatpush1.bf16.msra.mxu0 %v3861
        %4064 = vmatprep.subr.bf16.mxu0 %v3856
        %4065 = vmatpush1.bf16.msra.mxu0 %v3855
        %4066 = vmatprep.subr.bf16.mxu0 0
        %4067 = vmatpush2.bf16.msra.mxu0 0
        %4068 = vmatprep.subr.bf16.mxu0 %v3954
        %4069 = vmatpush2.bf16.msra.mxu0 %v3951
        %4070 = vmatprep.subr.bf16.mxu0 %v3934
        %4071 = vmatpush2.bf16.msra.mxu0 %v3933
        %4072 = vmatprep.subr.bf16.mxu0 %v3928
        %4073 = vmatpush2.bf16.msra.mxu0 %v3927
        %4074 = vmatprep.subr.bf16.mxu0 %v3922
        %4075 = vmatpush2.bf16.msra.mxu0 %v3921
        %4076 = vmatprep.subr.bf16.mxu0 %v3916
        %4077 = vmatpush2.bf16.msra.mxu0 %v3915
        %4078 = vmatprep.subr.bf16.mxu0 %v3910
        %4079 = vmatpush2.bf16.msra.mxu0 %v3909
        %4080 = vmatprep.subr.bf16.mxu0 %v3904
        %4081 = vmatpush2.bf16.msra.mxu0 %v3903
        %4082 = vmatprep.mubr.bf16.mxu0 %v3947
        %4083 = vmatmul.mubr.bf16.gmra.mxu0 1065369472
        %v4084 = vpop.f32.mrf.mxu0
        %v4085 = vadd.f32 %v4044, %v4084
        %v4086 = vpop.f32.mrf.mxu0
        %v4087 = vadd.f32 %v4046, %v4086
        %v4088 = vpop.f32.mrf.mxu0
        %v4089 = vpop.f32.mrf.mxu0
        %4090 = vdwg.mxu0
        %4091 = vmatprep.subr.bf16.mxu0 %v3708
        %4092 = vmatpush1.bf16.msra.mxu0 %v3707
        %4093 = vmatprep.subr.bf16.mxu0 %v3702
        %4094 = vmatpush1.bf16.msra.mxu0 %v3701
        %4095 = vmatprep.subr.bf16.mxu0 %v3696
        %4096 = vmatpush1.bf16.msra.mxu0 %v3695
        %4097 = vmatprep.subr.bf16.mxu0 %v3690
        %4098 = vmatpush1.bf16.msra.mxu0 %v3689
        %4099 = vmatprep.subr.bf16.mxu0 %v3684
        %4100 = vmatpush1.bf16.msra.mxu0 %v3683
        %4101 = vmatprep.subr.bf16.mxu0 %v3678
        %4102 = vmatpush1.bf16.msra.mxu0 %v3677
        %4103 = vmatprep.subr.bf16.mxu0 %v3672
        %4104 = vmatpush1.bf16.msra.mxu0 %v3671
        %4105 = vmatprep.subr.bf16.mxu0 %v3666
        %4106 = vmatpush1.bf16.msra.mxu0 %v3665
        %4107 = vmatprep.subr.bf16.mxu0 %v3756
        %4108 = vmatpush2.bf16.msra.mxu0 %v3755
        %4109 = vmatprep.subr.bf16.mxu0 %v3750
        %4110 = vmatpush2.bf16.msra.mxu0 %v3749
        %4111 = vmatprep.subr.bf16.mxu0 %v3744
        %4112 = vmatpush2.bf16.msra.mxu0 %v3743
        %4113 = vmatprep.subr.bf16.mxu0 %v3738
        %4114 = vmatpush2.bf16.msra.mxu0 %v3737
        %4115 = vmatprep.subr.bf16.mxu0 %v3732
        %4116 = vmatpush2.bf16.msra.mxu0 %v3731
        %4117 = vmatprep.subr.bf16.mxu0 %v3726
        %4118 = vmatpush2.bf16.msra.mxu0 %v3725
        %4119 = vmatprep.subr.bf16.mxu0 %v3720
        %4120 = vmatpush2.bf16.msra.mxu0 %v3719
        %4121 = vmatprep.subr.bf16.mxu0 %v3714
        %4122 = vmatpush2.bf16.msra.mxu0 %v3713
        %4123 = vmatprep.mubr.bf16.mxu0 1065369472
        %4124 = vmatmul.mubr.bf16.gmra.mxu0 1065369472
        %v4125 = vpop.f32.mrf.mxu0
        %v4126 = vadd.f32 0.0, %v4125
        %v4127 = vpop.f32.mrf.mxu0
        %v4128 = vadd.f32 0.0, %v4127
        %v4129 = vpop.f32.mrf.mxu0
        %v4130 = vpop.f32.mrf.mxu0
        %4131 = vdwg.mxu0
        %4132 = vmatprep.subr.bf16.mxu0 %v3804
        %4133 = vmatpush1.bf16.msra.mxu0 %v3803
        %4134 = vmatprep.subr.bf16.mxu0 %v3798
        %4135 = vmatpush1.bf16.msra.mxu0 %v3797
        %4136 = vmatprep.subr.bf16.mxu0 %v3792
        %4137 = vmatpush1.bf16.msra.mxu0 %v3791
        %4138 = vmatprep.subr.bf16.mxu0 %v3786
        %4139 = vmatpush1.bf16.msra.mxu0 %v3785
        %4140 = vmatprep.subr.bf16.mxu0 %v3780
        %4141 = vmatpush1.bf16.msra.mxu0 %v3779
        %4142 = vmatprep.subr.bf16.mxu0 %v3774
        %4143 = vmatpush1.bf16.msra.mxu0 %v3773
        %4144 = vmatprep.subr.bf16.mxu0 %v3768
        %4145 = vmatpush1.bf16.msra.mxu0 %v3767
        %4146 = vmatprep.subr.bf16.mxu0 %v3762
        %4147 = vmatpush1.bf16.msra.mxu0 %v3761
        %4148 = vmatprep.subr.bf16.mxu0 %v3852
        %4149 = vmatpush2.bf16.msra.mxu0 %v3851
        %4150 = vmatprep.subr.bf16.mxu0 %v3846
        %4151 = vmatpush2.bf16.msra.mxu0 %v3845
        %4152 = vmatprep.subr.bf16.mxu0 %v3840
        %4153 = vmatpush2.bf16.msra.mxu0 %v3839
        %4154 = vmatprep.subr.bf16.mxu0 %v3834
        %4155 = vmatpush2.bf16.msra.mxu0 %v3833
        %4156 = vmatprep.subr.bf16.mxu0 %v3828
        %4157 = vmatpush2.bf16.msra.mxu0 %v3827
        %4158 = vmatprep.subr.bf16.mxu0 %v3822
        %4159 = vmatpush2.bf16.msra.mxu0 %v3821
        %4160 = vmatprep.subr.bf16.mxu0 %v3816
        %4161 = vmatpush2.bf16.msra.mxu0 %v3815
        %4162 = vmatprep.subr.bf16.mxu0 %v3810
        %4163 = vmatpush2.bf16.msra.mxu0 %v3809
        %4164 = vmatprep.mubr.bf16.mxu0 1065369472
        %4165 = vmatmul.mubr.bf16.gmra.mxu0 1065369472
        %v4166 = vpop.f32.mrf.mxu0
        %v4167 = vadd.f32 %v4126, %v4166
        %v4168 = vpop.f32.mrf.mxu0
        %v4169 = vadd.f32 %v4128, %v4168
        %v4170 = vpop.f32.mrf.mxu0
        %v4171 = vpop.f32.mrf.mxu0
        %4172 = vdwg.mxu0
        %4173 = vmatprep.subr.bf16.mxu0 %v3900
        %4174 = vmatpush1.bf16.msra.mxu0 %v3899
        %4175 = vmatprep.subr.bf16.mxu0 %v3894
        %4176 = vmatpush1.bf16.msra.mxu0 %v3893
        %4177 = vmatprep.subr.bf16.mxu0 %v3888
        %4178 = vmatpush1.bf16.msra.mxu0 %v3887
        %4179 = vmatprep.subr.bf16.mxu0 %v3882
        %4180 = vmatpush1.bf16.msra.mxu0 %v3881
        %4181 = vmatprep.subr.bf16.mxu0 %v3876
        %4182 = vmatpush1.bf16.msra.mxu0 %v3875
        %4183 = vmatprep.subr.bf16.mxu0 %v3870
        %4184 = vmatpush1.bf16.msra.mxu0 %v3869
        %4185 = vmatprep.subr.bf16.mxu0 %v3864
        %4186 = vmatpush1.bf16.msra.mxu0 %v3863
        %4187 = vmatprep.subr.bf16.mxu0 %v3858
        %4188 = vmatpush1.bf16.msra.mxu0 %v3857
        %4189 = vmatprep.subr.bf16.mxu0 0
        %4190 = vmatpush2.bf16.msra.mxu0 0
        %4191 = vmatprep.subr.bf16.mxu0 %v3960
        %4192 = vmatpush2.bf16.msra.mxu0 %v3957
        %4193 = vmatprep.subr.bf16.mxu0 %v3936
        %4194 = vmatpush2.bf16.msra.mxu0 %v3935
        %4195 = vmatprep.subr.bf16.mxu0 %v3930
        %4196 = vmatpush2.bf16.msra.mxu0 %v3929
        %4197 = vmatprep.subr.bf16.mxu0 %v3924
        %4198 = vmatpush2.bf16.msra.mxu0 %v3923
        %4199 = vmatprep.subr.bf16.mxu0 %v3918
        %4200 = vmatpush2.bf16.msra.mxu0 %v3917
        %4201 = vmatprep.subr.bf16.mxu0 %v3912
        %4202 = vmatpush2.bf16.msra.mxu0 %v3911
        %4203 = vmatprep.subr.bf16.mxu0 %v3906
        %4204 = vmatpush2.bf16.msra.mxu0 %v3905
        %4205 = vmatprep.mubr.bf16.mxu0 %v3947
        %4206 = vmatmul.mubr.bf16.gmra.mxu0 1065369472
        %v4207 = vpop.f32.mrf.mxu0
        %v4208 = vadd.f32 %v4167, %v4207
        %v4209 = vpop.f32.mrf.mxu0
        %v4210 = vadd.f32 %v4169, %v4209
        %v4211 = vpop.f32.mrf.mxu0
        %v4212 = vpop.f32.mrf.mxu0
        %4213 = vdwg.mxu0
        %4214 = vmatprep.subr.bf16.mxu0 %v3710
        %4215 = vmatpush1.bf16.msra.mxu0 %v3709
        %4216 = vmatprep.subr.bf16.mxu0 %v3704
        %4217 = vmatpush1.bf16.msra.mxu0 %v3703
        %4218 = vmatprep.subr.bf16.mxu0 %v3698
        %4219 = vmatpush1.bf16.msra.mxu0 %v3697
        %4220 = vmatprep.subr.bf16.mxu0 %v3692
        %4221 = vmatpush1.bf16.msra.mxu0 %v3691
        %4222 = vmatprep.subr.bf16.mxu0 %v3686
        %4223 = vmatpush1.bf16.msra.mxu0 %v3685
        %4224 = vmatprep.subr.bf16.mxu0 %v3680
        %4225 = vmatpush1.bf16.msra.mxu0 %v3679
        %4226 = vmatprep.subr.bf16.mxu0 %v3674
        %4227 = vmatpush1.bf16.msra.mxu0 %v3673
        %4228 = vmatprep.subr.bf16.mxu0 %v3668
        %4229 = vmatpush1.bf16.msra.mxu0 %v3667
        %4230 = vmatprep.subr.bf16.mxu0 %v3758
        %4231 = vmatpush2.bf16.msra.mxu0 %v3757
        %4232 = vmatprep.subr.bf16.mxu0 %v3752
        %4233 = vmatpush2.bf16.msra.mxu0 %v3751
        %4234 = vmatprep.subr.bf16.mxu0 %v3746
        %4235 = vmatpush2.bf16.msra.mxu0 %v3745
        %4236 = vmatprep.subr.bf16.mxu0 %v3740
        %4237 = vmatpush2.bf16.msra.mxu0 %v3739
        %4238 = vmatprep.subr.bf16.mxu0 %v3734
        %4239 = vmatpush2.bf16.msra.mxu0 %v3733
        %4240 = vmatprep.subr.bf16.mxu0 %v3728
        %4241 = vmatpush2.bf16.msra.mxu0 %v3727
        %4242 = vmatprep.subr.bf16.mxu0 %v3722
        %4243 = vmatpush2.bf16.msra.mxu0 %v3721
        %4244 = vmatprep.subr.bf16.mxu0 %v3716
        %4245 = vmatpush2.bf16.msra.mxu0 %v3715
        %4246 = vmatprep.mubr.bf16.mxu0 1065369472
        %4247 = vmatmul.mubr.bf16.gmra.mxu0 1065369472
        %v4248 = vpop.f32.mrf.mxu0
        %v4249 = vadd.f32 0.0, %v4248
        %v4250 = vpop.f32.mrf.mxu0
        %v4251 = vadd.f32 0.0, %v4250
        %v4252 = vpop.f32.mrf.mxu0
        %v4253 = vpop.f32.mrf.mxu0
        %4254 = vdwg.mxu0
        %4255 = vmatprep.subr.bf16.mxu0 %v3806
        %4256 = vmatpush1.bf16.msra.mxu0 %v3805
        %4257 = vmatprep.subr.bf16.mxu0 %v3800
        %4258 = vmatpush1.bf16.msra.mxu0 %v3799
        %4259 = vmatprep.subr.bf16.mxu0 %v3794
        %4260 = vmatpush1.bf16.msra.mxu0 %v3793
        %4261 = vmatprep.subr.bf16.mxu0 %v3788
        %4262 = vmatpush1.bf16.msra.mxu0 %v3787
        %4263 = vmatprep.subr.bf16.mxu0 %v3782
        %4264 = vmatpush1.bf16.msra.mxu0 %v3781
        %4265 = vmatprep.subr.bf16.mxu0 %v3776
        %4266 = vmatpush1.bf16.msra.mxu0 %v3775
        %4267 = vmatprep.subr.bf16.mxu0 %v3770
        %4268 = vmatpush1.bf16.msra.mxu0 %v3769
        %4269 = vmatprep.subr.bf16.mxu0 %v3764
        %4270 = vmatpush1.bf16.msra.mxu0 %v3763
        %4271 = vmatprep.subr.bf16.mxu0 %v3854
        %4272 = vmatpush2.bf16.msra.mxu0 %v3853
        %4273 = vmatprep.subr.bf16.mxu0 %v3848
        %4274 = vmatpush2.bf16.msra.mxu0 %v3847
        %4275 = vmatprep.subr.bf16.mxu0 %v3842
        %4276 = vmatpush2.bf16.msra.mxu0 %v3841
        %4277 = vmatprep.subr.bf16.mxu0 %v3836
        %4278 = vmatpush2.bf16.msra.mxu0 %v3835
        %4279 = vmatprep.subr.bf16.mxu0 %v3830
        %4280 = vmatpush2.bf16.msra.mxu0 %v3829
        %4281 = vmatprep.subr.bf16.mxu0 %v3824
        %4282 = vmatpush2.bf16.msra.mxu0 %v3823
        %4283 = vmatprep.subr.bf16.mxu0 %v3818
        %4284 = vmatpush2.bf16.msra.mxu0 %v3817
        %4285 = vmatprep.subr.bf16.mxu0 %v3812
        %4286 = vmatpush2.bf16.msra.mxu0 %v3811
        %4287 = vmatprep.mubr.bf16.mxu0 1065369472
        %4288 = vmatmul.mubr.bf16.gmra.mxu0 1065369472
        %v4289 = vpop.f32.mrf.mxu0
        %v4290 = vadd.f32 %v4249, %v4289
        %v4291 = vpop.f32.mrf.mxu0
        %v4292 = vadd.f32 %v4251, %v4291
        %v4293 = vpop.f32.mrf.mxu0
        %v4294 = vpop.f32.mrf.mxu0
        %4295 = vdwg.mxu0
        %4296 = vmatprep.subr.bf16.mxu0 %v3902
        %4297 = vmatpush1.bf16.msra.mxu0 %v3901
        %4298 = vmatprep.subr.bf16.mxu0 %v3896
        %4299 = vmatpush1.bf16.msra.mxu0 %v3895
        %4300 = vmatprep.subr.bf16.mxu0 %v3890
        %4301 = vmatpush1.bf16.msra.mxu0 %v3889
        %4302 = vmatprep.subr.bf16.mxu0 %v3884
        %4303 = vmatpush1.bf16.msra.mxu0 %v3883
        %4304 = vmatprep.subr.bf16.mxu0 %v3878
        %4305 = vmatpush1.bf16.msra.mxu0 %v3877
        %4306 = vmatprep.subr.bf16.mxu0 %v3872
        %4307 = vmatpush1.bf16.msra.mxu0 %v3871
        %4308 = vmatprep.subr.bf16.mxu0 %v3866
        %4309 = vmatpush1.bf16.msra.mxu0 %v3865
        %4310 = vmatprep.subr.bf16.mxu0 %v3860
        %4311 = vmatpush1.bf16.msra.mxu0 %v3859
        %4312 = vmatprep.subr.bf16.mxu0 0
        %4313 = vmatpush2.bf16.msra.mxu0 0
        %4314 = vmatprep.subr.bf16.mxu0 %v3966
        %4315 = vmatpush2.bf16.msra.mxu0 %v3963
        %4316 = vmatprep.subr.bf16.mxu0 %v3938
        %4317 = vmatpush2.bf16.msra.mxu0 %v3937
        %4318 = vmatprep.subr.bf16.mxu0 %v3932
        %4319 = vmatpush2.bf16.msra.mxu0 %v3931
        %4320 = vmatprep.subr.bf16.mxu0 %v3926
        %4321 = vmatpush2.bf16.msra.mxu0 %v3925
        %4322 = vmatprep.subr.bf16.mxu0 %v3920
        %4323 = vmatpush2.bf16.msra.mxu0 %v3919
        %4324 = vmatprep.subr.bf16.mxu0 %v3914
        %4325 = vmatpush2.bf16.msra.mxu0 %v3913
        %4326 = vmatprep.subr.bf16.mxu0 %v3908
        %4327 = vmatpush2.bf16.msra.mxu0 %v3907
        %4328 = vmatprep.mubr.bf16.mxu0 %v3947
        %4329 = vmatmul.mubr.bf16.gmra.mxu0 1065369472
        %v4330 = vpop.f32.mrf.mxu0
        %v4331 = vadd.f32 %v4290, %v4330
        %v4332 = vpop.f32.mrf.mxu0
        %v4333 = vadd.f32 %v4292, %v4332
        %v4334 = vpop.f32.mrf.mxu0
        %v4335 = vpop.f32.mrf.mxu0
        %4336 = vdwg.mxu0
        %v4337 = vrsqrt.pop %v4085
        %v4338 = vrsqrt.pop %v4087
        %v4339 = vrsqrt.pop %v4208
        %v4340 = vrsqrt.pop %v4210
        %v4341 = vrsqrt.pop %v4331
        %v4342 = vrsqrt.pop %v4333
        %v4343 = vld [vmem:[#allocation4] sm:$0xff]
        %vm4344 = vcmask 64512
        %v4346 = vsel %vm4344, %v4343, 0
        %4348 = vmatprep.subr.mxu0 0.0
        %4349 = vmatpush1.msra.mxu0 0.0
        %4350 = vmatprep.subr.mxu0 0.0
        %4351 = vmatpush1.msra.mxu0 0.0
        %4352 = vmatprep.subr.mxu0 0.0
        %4353 = vmatpush1.msra.mxu0 0.0
        %4354 = vmatprep.subr.mxu0 0.0
        %4355 = vmatpush1.msra.mxu0 0.0
        %4356 = vmatprep.subr.mxu0 0.0
        %4357 = vmatpush1.msra.mxu0 0.0
        %4358 = vmatprep.subr.mxu0 0.0
        %4359 = vmatpush1.msra.mxu0 0.0
        %4360 = vmatprep.subr.mxu0 0.0
        %4361 = vmatpush1.msra.mxu0 0.0
        %4362 = vmatprep.subr.mxu0 0.0
        %4363 = vmatpush1.msra.mxu0 0.0
        %4364 = vmatprep.subr.mxu0 0.0
        %4365 = vmatpush1.msra.mxu0 0.0
        %4366 = vmatprep.subr.mxu0 0.0
        %4367 = vmatpush1.msra.mxu0 0.0
        %4368 = vmatprep.subr.mxu0 0.0
        %4369 = vmatpush1.msra.mxu0 0.0
        %4370 = vmatprep.subr.mxu0 0.0
        %4371 = vmatpush1.msra.mxu0 0.0
        %4372 = vmatprep.subr.mxu0 0.0
        %4373 = vmatpush1.msra.mxu0 0.0
        %4374 = vmatprep.subr.mxu0 0.0
        %4375 = vmatpush1.msra.mxu0 0.0
        %4376 = vmatprep.subr.mxu0 0.0
        %4377 = vmatpush1.msra.mxu0 0.0
        %4378 = vmatprep.subr.mxu0 %v344
        %4379 = vmatpush1.msra.mxu0 %v343
        %4380 = vmatprep.subr.mxu0 0.0
        %4381 = vmatpush2.msra.mxu0 0.0
        %4382 = vmatprep.subr.mxu0 0.0
        %4383 = vmatpush2.msra.mxu0 0.0
        %4384 = vmatprep.subr.mxu0 0.0
        %4385 = vmatpush2.msra.mxu0 0.0
        %4386 = vmatprep.subr.mxu0 0.0
        %4387 = vmatpush2.msra.mxu0 0.0
        %4388 = vmatprep.subr.mxu0 0.0
        %4389 = vmatpush2.msra.mxu0 0.0
        %4390 = vmatprep.subr.mxu0 0.0
        %4391 = vmatpush2.msra.mxu0 0.0
        %4392 = vmatprep.subr.mxu0 0.0
        %4393 = vmatpush2.msra.mxu0 0.0
        %4394 = vmatprep.subr.mxu0 0.0
        %4395 = vmatpush2.msra.mxu0 0.0
        %4396 = vmatprep.subr.mxu0 0.0
        %4397 = vmatpush2.msra.mxu0 0.0
        %4398 = vmatprep.subr.mxu0 0.0
        %4399 = vmatpush2.msra.mxu0 0.0
        %4400 = vmatprep.subr.mxu0 0.0
        %4401 = vmatpush2.msra.mxu0 0.0
        %4402 = vmatprep.subr.mxu0 0.0
        %4403 = vmatpush2.msra.mxu0 0.0
        %4404 = vmatprep.subr.mxu0 0.0
        %4405 = vmatpush2.msra.mxu0 0.0
        %4406 = vmatprep.subr.mxu0 0.0
        %4407 = vmatpush2.msra.mxu0 0.0
        %4408 = vmatprep.subr.mxu0 0.0
        %4409 = vmatpush2.msra.mxu0 0.0
        %4410 = vmatprep.subr.mxu0 0.0
        %4411 = vmatpush2.msra.mxu0 0.0
        %4412 = vmatprep.mubr.f32.mxu0 0.0
        %4413 = vmatmul.mubr.f32.gmra.mxu0 %v4346
        %v4414 = vpop.f32.mrf.mxu0
        %v4415 = vadd.f32 0.0, %v4414
        %v4416 = vpop.f32.mrf.mxu0
        %v4417 = vadd.f32 0.0, %v4416
        %4418 = vdwg.mxu0
        %4419 = vmatprep.subr.mxu0 0.0
        %4420 = vmatpush1.msra.mxu0 0.0
        %4421 = vmatprep.subr.mxu0 0.0
        %4422 = vmatpush1.msra.mxu0 0.0
        %4423 = vmatprep.subr.mxu0 0.0
        %4424 = vmatpush1.msra.mxu0 0.0
        %4425 = vmatprep.subr.mxu0 0.0
        %4426 = vmatpush1.msra.mxu0 0.0
        %4427 = vmatprep.subr.mxu0 0.0
        %4428 = vmatpush1.msra.mxu0 0.0
        %4429 = vmatprep.subr.mxu0 0.0
        %4430 = vmatpush1.msra.mxu0 0.0
        %4431 = vmatprep.subr.mxu0 0.0
        %4432 = vmatpush1.msra.mxu0 0.0
        %4433 = vmatprep.subr.mxu0 0.0
        %4434 = vmatpush1.msra.mxu0 0.0
        %4435 = vmatprep.subr.mxu0 0.0
        %4436 = vmatpush1.msra.mxu0 0.0
        %4437 = vmatprep.subr.mxu0 0.0
        %4438 = vmatpush1.msra.mxu0 0.0
        %4439 = vmatprep.subr.mxu0 0.0
        %4440 = vmatpush1.msra.mxu0 0.0
        %4441 = vmatprep.subr.mxu0 0.0
        %4442 = vmatpush1.msra.mxu0 0.0
        %4443 = vmatprep.subr.mxu0 0.0
        %4444 = vmatpush1.msra.mxu0 0.0
        %4445 = vmatprep.subr.mxu0 0.0
        %4446 = vmatpush1.msra.mxu0 0.0
        %4447 = vmatprep.subr.mxu0 0.0
        %4448 = vmatpush1.msra.mxu0 0.0
        %4449 = vmatprep.subr.mxu0 %v346
        %4450 = vmatpush1.msra.mxu0 %v345
        %4451 = vmatprep.subr.mxu0 0.0
        %4452 = vmatpush2.msra.mxu0 0.0
        %4453 = vmatprep.subr.mxu0 0.0
        %4454 = vmatpush2.msra.mxu0 0.0
        %4455 = vmatprep.subr.mxu0 0.0
        %4456 = vmatpush2.msra.mxu0 0.0
        %4457 = vmatprep.subr.mxu0 0.0
        %4458 = vmatpush2.msra.mxu0 0.0
        %4459 = vmatprep.subr.mxu0 0.0
        %4460 = vmatpush2.msra.mxu0 0.0
        %4461 = vmatprep.subr.mxu0 0.0
        %4462 = vmatpush2.msra.mxu0 0.0
        %4463 = vmatprep.subr.mxu0 0.0
        %4464 = vmatpush2.msra.mxu0 0.0
        %4465 = vmatprep.subr.mxu0 0.0
        %4466 = vmatpush2.msra.mxu0 0.0
        %4467 = vmatprep.subr.mxu0 0.0
        %4468 = vmatpush2.msra.mxu0 0.0
        %4469 = vmatprep.subr.mxu0 0.0
        %4470 = vmatpush2.msra.mxu0 0.0
        %4471 = vmatprep.subr.mxu0 0.0
        %4472 = vmatpush2.msra.mxu0 0.0
        %4473 = vmatprep.subr.mxu0 0.0
        %4474 = vmatpush2.msra.mxu0 0.0
        %4475 = vmatprep.subr.mxu0 0.0
        %4476 = vmatpush2.msra.mxu0 0.0
        %4477 = vmatprep.subr.mxu0 0.0
        %4478 = vmatpush2.msra.mxu0 0.0
        %4479 = vmatprep.subr.mxu0 0.0
        %4480 = vmatpush2.msra.mxu0 0.0
        %4481 = vmatprep.subr.mxu0 0.0
        %4482 = vmatpush2.msra.mxu0 0.0
        %4483 = vmatprep.mubr.f32.mxu0 0.0
        %4484 = vmatmul.mubr.f32.gmra.mxu0 %v4346
        %v4485 = vpop.f32.mrf.mxu0
        %v4486 = vadd.f32 0.0, %v4485
        %v4487 = vpop.f32.mrf.mxu0
        %v4488 = vadd.f32 0.0, %v4487
        %4489 = vdwg.mxu0
        %4490 = vmatprep.subr.mxu0 0.0
        %4491 = vmatpush1.msra.mxu0 0.0
        %4492 = vmatprep.subr.mxu0 0.0
        %4493 = vmatpush1.msra.mxu0 0.0
        %4494 = vmatprep.subr.mxu0 0.0
        %4495 = vmatpush1.msra.mxu0 0.0
        %4496 = vmatprep.subr.mxu0 0.0
        %4497 = vmatpush1.msra.mxu0 0.0
        %4498 = vmatprep.subr.mxu0 0.0
        %4499 = vmatpush1.msra.mxu0 0.0
        %4500 = vmatprep.subr.mxu0 0.0
        %4501 = vmatpush1.msra.mxu0 0.0
        %4502 = vmatprep.subr.mxu0 0.0
        %4503 = vmatpush1.msra.mxu0 0.0
        %4504 = vmatprep.subr.mxu0 0.0
        %4505 = vmatpush1.msra.mxu0 0.0
        %4506 = vmatprep.subr.mxu0 0.0
        %4507 = vmatpush1.msra.mxu0 0.0
        %4508 = vmatprep.subr.mxu0 0.0
        %4509 = vmatpush1.msra.mxu0 0.0
        %4510 = vmatprep.subr.mxu0 0.0
        %4511 = vmatpush1.msra.mxu0 0.0
        %4512 = vmatprep.subr.mxu0 0.0
        %4513 = vmatpush1.msra.mxu0 0.0
        %4514 = vmatprep.subr.mxu0 0.0
        %4515 = vmatpush1.msra.mxu0 0.0
        %4516 = vmatprep.subr.mxu0 0.0
        %4517 = vmatpush1.msra.mxu0 0.0
        %4518 = vmatprep.subr.mxu0 0.0
        %4519 = vmatpush1.msra.mxu0 0.0
        %4520 = vmatprep.subr.mxu0 %v348
        %4521 = vmatpush1.msra.mxu0 %v347
        %4522 = vmatprep.subr.mxu0 0.0
        %4523 = vmatpush2.msra.mxu0 0.0
        %4524 = vmatprep.subr.mxu0 0.0
        %4525 = vmatpush2.msra.mxu0 0.0
        %4526 = vmatprep.subr.mxu0 0.0
        %4527 = vmatpush2.msra.mxu0 0.0
        %4528 = vmatprep.subr.mxu0 0.0
        %4529 = vmatpush2.msra.mxu0 0.0
        %4530 = vmatprep.subr.mxu0 0.0
        %4531 = vmatpush2.msra.mxu0 0.0
        %4532 = vmatprep.subr.mxu0 0.0
        %4533 = vmatpush2.msra.mxu0 0.0
        %4534 = vmatprep.subr.mxu0 0.0
        %4535 = vmatpush2.msra.mxu0 0.0
        %4536 = vmatprep.subr.mxu0 0.0
        %4537 = vmatpush2.msra.mxu0 0.0
        %4538 = vmatprep.subr.mxu0 0.0
        %4539 = vmatpush2.msra.mxu0 0.0
        %4540 = vmatprep.subr.mxu0 0.0
        %4541 = vmatpush2.msra.mxu0 0.0
        %4542 = vmatprep.subr.mxu0 0.0
        %4543 = vmatpush2.msra.mxu0 0.0
        %4544 = vmatprep.subr.mxu0 0.0
        %4545 = vmatpush2.msra.mxu0 0.0
        %4546 = vmatprep.subr.mxu0 0.0
        %4547 = vmatpush2.msra.mxu0 0.0
        %4548 = vmatprep.subr.mxu0 0.0
        %4549 = vmatpush2.msra.mxu0 0.0
        %4550 = vmatprep.subr.mxu0 0.0
        %4551 = vmatpush2.msra.mxu0 0.0
        %4552 = vmatprep.subr.mxu0 0.0
        %4553 = vmatpush2.msra.mxu0 0.0
        %4554 = vmatprep.mubr.f32.mxu0 0.0
        %4555 = vmatmul.mubr.f32.gmra.mxu0 %v4346
        %v4556 = vpop.f32.mrf.mxu0
        %v4557 = vadd.f32 0.0, %v4556
        %v4558 = vpop.f32.mrf.mxu0
        %v4559 = vadd.f32 0.0, %v4558
        %4560 = vdwg.mxu0
        %v4561 = vlaneseq
        %v4562 = vshrl.u32 %v4561, 7
        %v4563 = vsub.s32 0, %v4562
        %v4564 = vrot.slane %v4337, %v4563
        %v4565 = vlaneseq
        %v4566 = vshrl.u32 %v4565, 7
        %v4567 = vsub.s32 0, %v4566
        %v4568 = vrot.slane %v4338, %v4567
        %v4569 = vlaneseq
        %v4570 = vshrl.u32 %v4569, 7
        %v4571 = vsub.s32 0, %v4570
        %v4572 = vrot.slane %v4339, %v4571
        %v4573 = vlaneseq
        %v4574 = vshrl.u32 %v4573, 7
        %v4575 = vsub.s32 0, %v4574
        %v4576 = vrot.slane %v4340, %v4575
        %v4577 = vlaneseq
        %v4578 = vshrl.u32 %v4577, 7
        %v4579 = vsub.s32 0, %v4578
        %v4580 = vrot.slane %v4341, %v4579
        %v4581 = vlaneseq
        %v4582 = vshrl.u32 %v4581, 7
        %v4583 = vsub.s32 0, %v4582
        %v4584 = vrot.slane %v4342, %v4583
        %v4585 = vmul.f32 %v4415, %v4564
        %v4586 = vmul.f32 %v4417, %v4568
        %v4587 = vmul.f32 %v4486, %v4572
        %v4588 = vmul.f32 %v4488, %v4576
        %v4589 = vmul.f32 %v4557, %v4580
        %v4590 = vmul.f32 %v4559, %v4584
        %v4591 = vpack.c.bf16 %v4585, %v4585
        %v4592 = vpack.c.bf16 %v4586, %v4586
        %v4593 = vpack.c.bf16 %v4587, %v4587
        %v4594 = vpack.c.bf16 %v4588, %v4588
        %v4595 = vpack.c.bf16 %v4589, %v4589
        %v4596 = vpack.c.bf16 %v4590, %v4590
        %v4598 = vsel %vm3945, %v4596, 0
        %4600 = vmatprep.subr.bf16.mxu0 %v3706
        %4601 = vmatpush1.bf16.msra.mxu0 %v3705
        %4602 = vmatprep.subr.bf16.mxu0 %v3700
        %4603 = vmatpush1.bf16.msra.mxu0 %v3699
        %4604 = vmatprep.subr.bf16.mxu0 %v3694
        %4605 = vmatpush1.bf16.msra.mxu0 %v3693
        %4606 = vmatprep.subr.bf16.mxu0 %v3688
        %4607 = vmatpush1.bf16.msra.mxu0 %v3687
        %4608 = vmatprep.subr.bf16.mxu0 %v3682
        %4609 = vmatpush1.bf16.msra.mxu0 %v3681
        %4610 = vmatprep.subr.bf16.mxu0 %v3676
        %4611 = vmatpush1.bf16.msra.mxu0 %v3675
        %4612 = vmatprep.subr.bf16.mxu0 %v3670
        %4613 = vmatpush1.bf16.msra.mxu0 %v3669
        %4614 = vmatprep.subr.bf16.mxu0 %v3664
        %4615 = vmatpush1.bf16.msra.mxu0 %v3663
        %4616 = vmatprep.subr.bf16.mxu0 %v3754
        %4617 = vmatpush2.bf16.msra.mxu0 %v3753
        %4618 = vmatprep.subr.bf16.mxu0 %v3748
        %4619 = vmatpush2.bf16.msra.mxu0 %v3747
        %4620 = vmatprep.subr.bf16.mxu0 %v3742
        %4621 = vmatpush2.bf16.msra.mxu0 %v3741
        %4622 = vmatprep.subr.bf16.mxu0 %v3736
        %4623 = vmatpush2.bf16.msra.mxu0 %v3735
        %4624 = vmatprep.subr.bf16.mxu0 %v3730
        %4625 = vmatpush2.bf16.msra.mxu0 %v3729
        %4626 = vmatprep.subr.bf16.mxu0 %v3724
        %4627 = vmatpush2.bf16.msra.mxu0 %v3723
        %4628 = vmatprep.subr.bf16.mxu0 %v3718
        %4629 = vmatpush2.bf16.msra.mxu0 %v3717
        %4630 = vmatprep.subr.bf16.mxu0 %v3712
        %4631 = vmatpush2.bf16.msra.mxu0 %v3711
        %4632 = vmatprep.mubr.bf16.mxu0 %v4592
        %4633 = vmatmul.mubr.bf16.gmra.mxu0 %v4591
        %v4634 = vpop.f32.mrf.mxu0
        %v4635 = vadd.f32 0.0, %v4634
        %v4636 = vpop.f32.mrf.mxu0
        %v4637 = vadd.f32 0.0, %v4636
        %v4638 = vpop.f32.mrf.mxu0
        %v4639 = vpop.f32.mrf.mxu0
        %4640 = vdwg.mxu0
        %4641 = vmatprep.subr.bf16.mxu0 %v3802
        %4642 = vmatpush1.bf16.msra.mxu0 %v3801
        %4643 = vmatprep.subr.bf16.mxu0 %v3796
        %4644 = vmatpush1.bf16.msra.mxu0 %v3795
        %4645 = vmatprep.subr.bf16.mxu0 %v3790
        %4646 = vmatpush1.bf16.msra.mxu0 %v3789
        %4647 = vmatprep.subr.bf16.mxu0 %v3784
        %4648 = vmatpush1.bf16.msra.mxu0 %v3783
        %4649 = vmatprep.subr.bf16.mxu0 %v3778
        %4650 = vmatpush1.bf16.msra.mxu0 %v3777
        %4651 = vmatprep.subr.bf16.mxu0 %v3772
        %4652 = vmatpush1.bf16.msra.mxu0 %v3771
        %4653 = vmatprep.subr.bf16.mxu0 %v3766
        %4654 = vmatpush1.bf16.msra.mxu0 %v3765
        %4655 = vmatprep.subr.bf16.mxu0 %v3760
        %4656 = vmatpush1.bf16.msra.mxu0 %v3759
        %4657 = vmatprep.subr.bf16.mxu0 %v3850
        %4658 = vmatpush2.bf16.msra.mxu0 %v3849
        %4659 = vmatprep.subr.bf16.mxu0 %v3844
        %4660 = vmatpush2.bf16.msra.mxu0 %v3843
        %4661 = vmatprep.subr.bf16.mxu0 %v3838
        %4662 = vmatpush2.bf16.msra.mxu0 %v3837
        %4663 = vmatprep.subr.bf16.mxu0 %v3832
        %4664 = vmatpush2.bf16.msra.mxu0 %v3831
        %4665 = vmatprep.subr.bf16.mxu0 %v3826
        %4666 = vmatpush2.bf16.msra.mxu0 %v3825
        %4667 = vmatprep.subr.bf16.mxu0 %v3820
        %4668 = vmatpush2.bf16.msra.mxu0 %v3819
        %4669 = vmatprep.subr.bf16.mxu0 %v3814
        %4670 = vmatpush2.bf16.msra.mxu0 %v3813
        %4671 = vmatprep.subr.bf16.mxu0 %v3808
        %4672 = vmatpush2.bf16.msra.mxu0 %v3807
        %4673 = vmatprep.mubr.bf16.mxu0 %v4594
        %4674 = vmatmul.mubr.bf16.gmra.mxu0 %v4593
        %v4675 = vpop.f32.mrf.mxu0
        %v4676 = vadd.f32 %v4635, %v4675
        %v4677 = vpop.f32.mrf.mxu0
        %v4678 = vadd.f32 %v4637, %v4677
        %v4679 = vpop.f32.mrf.mxu0
        %v4680 = vpop.f32.mrf.mxu0
        %4681 = vdwg.mxu0
        %4682 = vmatprep.subr.bf16.mxu0 %v3898
        %4683 = vmatpush1.bf16.msra.mxu0 %v3897
        %4684 = vmatprep.subr.bf16.mxu0 %v3892
        %4685 = vmatpush1.bf16.msra.mxu0 %v3891
        %4686 = vmatprep.subr.bf16.mxu0 %v3886
        %4687 = vmatpush1.bf16.msra.mxu0 %v3885
        %4688 = vmatprep.subr.bf16.mxu0 %v3880
        %4689 = vmatpush1.bf16.msra.mxu0 %v3879
        %4690 = vmatprep.subr.bf16.mxu0 %v3874
        %4691 = vmatpush1.bf16.msra.mxu0 %v3873
        %4692 = vmatprep.subr.bf16.mxu0 %v3868
        %4693 = vmatpush1.bf16.msra.mxu0 %v3867
        %4694 = vmatprep.subr.bf16.mxu0 %v3862
        %4695 = vmatpush1.bf16.msra.mxu0 %v3861
        %4696 = vmatprep.subr.bf16.mxu0 %v3856
        %4697 = vmatpush1.bf16.msra.mxu0 %v3855
        %4698 = vmatprep.subr.bf16.mxu0 0
        %4699 = vmatpush2.bf16.msra.mxu0 0
        %4700 = vmatprep.subr.bf16.mxu0 %v3954
        %4701 = vmatpush2.bf16.msra.mxu0 %v3951
        %4702 = vmatprep.subr.bf16.mxu0 %v3934
        %4703 = vmatpush2.bf16.msra.mxu0 %v3933
        %4704 = vmatprep.subr.bf16.mxu0 %v3928
        %4705 = vmatpush2.bf16.msra.mxu0 %v3927
        %4706 = vmatprep.subr.bf16.mxu0 %v3922
        %4707 = vmatpush2.bf16.msra.mxu0 %v3921
        %4708 = vmatprep.subr.bf16.mxu0 %v3916
        %4709 = vmatpush2.bf16.msra.mxu0 %v3915
        %4710 = vmatprep.subr.bf16.mxu0 %v3910
        %4711 = vmatpush2.bf16.msra.mxu0 %v3909
        %4712 = vmatprep.subr.bf16.mxu0 %v3904
        %4713 = vmatpush2.bf16.msra.mxu0 %v3903
        %4714 = vmatprep.mubr.bf16.mxu0 %v4598
        %4715 = vmatmul.mubr.bf16.gmra.mxu0 %v4595
        %v4716 = vpop.f32.mrf.mxu0
        %v4717 = vadd.f32 %v4676, %v4716
        %v4718 = vpop.f32.mrf.mxu0
        %v4719 = vadd.f32 %v4678, %v4718
        %v4720 = vpop.f32.mrf.mxu0
        %v4721 = vpop.f32.mrf.mxu0
        %4722 = vdwg.mxu0
        %4723 = vmatprep.subr.bf16.mxu0 %v3708
        %4724 = vmatpush1.bf16.msra.mxu0 %v3707
        %4725 = vmatprep.subr.bf16.mxu0 %v3702
        %4726 = vmatpush1.bf16.msra.mxu0 %v3701
        %4727 = vmatprep.subr.bf16.mxu0 %v3696
        %4728 = vmatpush1.bf16.msra.mxu0 %v3695
        %4729 = vmatprep.subr.bf16.mxu0 %v3690
        %4730 = vmatpush1.bf16.msra.mxu0 %v3689
        %4731 = vmatprep.subr.bf16.mxu0 %v3684
        %4732 = vmatpush1.bf16.msra.mxu0 %v3683
        %4733 = vmatprep.subr.bf16.mxu0 %v3678
        %4734 = vmatpush1.bf16.msra.mxu0 %v3677
        %4735 = vmatprep.subr.bf16.mxu0 %v3672
        %4736 = vmatpush1.bf16.msra.mxu0 %v3671
        %4737 = vmatprep.subr.bf16.mxu0 %v3666
        %4738 = vmatpush1.bf16.msra.mxu0 %v3665
        %4739 = vmatprep.subr.bf16.mxu0 %v3756
        %4740 = vmatpush2.bf16.msra.mxu0 %v3755
        %4741 = vmatprep.subr.bf16.mxu0 %v3750
        %4742 = vmatpush2.bf16.msra.mxu0 %v3749
        %4743 = vmatprep.subr.bf16.mxu0 %v3744
        %4744 = vmatpush2.bf16.msra.mxu0 %v3743
        %4745 = vmatprep.subr.bf16.mxu0 %v3738
        %4746 = vmatpush2.bf16.msra.mxu0 %v3737
        %4747 = vmatprep.subr.bf16.mxu0 %v3732
        %4748 = vmatpush2.bf16.msra.mxu0 %v3731
        %4749 = vmatprep.subr.bf16.mxu0 %v3726
        %4750 = vmatpush2.bf16.msra.mxu0 %v3725
        %4751 = vmatprep.subr.bf16.mxu0 %v3720
        %4752 = vmatpush2.bf16.msra.mxu0 %v3719
        %4753 = vmatprep.subr.bf16.mxu0 %v3714
        %4754 = vmatpush2.bf16.msra.mxu0 %v3713
        %4755 = vmatprep.mubr.bf16.mxu0 %v4592
        %4756 = vmatmul.mubr.bf16.gmra.mxu0 %v4591
        %v4757 = vpop.f32.mrf.mxu0
        %v4758 = vadd.f32 0.0, %v4757
        %v4759 = vpop.f32.mrf.mxu0
        %v4760 = vadd.f32 0.0, %v4759
        %v4761 = vpop.f32.mrf.mxu0
        %v4762 = vpop.f32.mrf.mxu0
        %4763 = vdwg.mxu0
        %4764 = vmatprep.subr.bf16.mxu0 %v3804
        %4765 = vmatpush1.bf16.msra.mxu0 %v3803
        %4766 = vmatprep.subr.bf16.mxu0 %v3798
        %4767 = vmatpush1.bf16.msra.mxu0 %v3797
        %4768 = vmatprep.subr.bf16.mxu0 %v3792
        %4769 = vmatpush1.bf16.msra.mxu0 %v3791
        %4770 = vmatprep.subr.bf16.mxu0 %v3786
        %4771 = vmatpush1.bf16.msra.mxu0 %v3785
        %4772 = vmatprep.subr.bf16.mxu0 %v3780
        %4773 = vmatpush1.bf16.msra.mxu0 %v3779
        %4774 = vmatprep.subr.bf16.mxu0 %v3774
        %4775 = vmatpush1.bf16.msra.mxu0 %v3773
        %4776 = vmatprep.subr.bf16.mxu0 %v3768
        %4777 = vmatpush1.bf16.msra.mxu0 %v3767
        %4778 = vmatprep.subr.bf16.mxu0 %v3762
        %4779 = vmatpush1.bf16.msra.mxu0 %v3761
        %4780 = vmatprep.subr.bf16.mxu0 %v3852
        %4781 = vmatpush2.bf16.msra.mxu0 %v3851
        %4782 = vmatprep.subr.bf16.mxu0 %v3846
        %4783 = vmatpush2.bf16.msra.mxu0 %v3845
        %4784 = vmatprep.subr.bf16.mxu0 %v3840
        %4785 = vmatpush2.bf16.msra.mxu0 %v3839
        %4786 = vmatprep.subr.bf16.mxu0 %v3834
        %4787 = vmatpush2.bf16.msra.mxu0 %v3833
        %4788 = vmatprep.subr.bf16.mxu0 %v3828
        %4789 = vmatpush2.bf16.msra.mxu0 %v3827
        %4790 = vmatprep.subr.bf16.mxu0 %v3822
        %4791 = vmatpush2.bf16.msra.mxu0 %v3821
        %4792 = vmatprep.subr.bf16.mxu0 %v3816
        %4793 = vmatpush2.bf16.msra.mxu0 %v3815
        %4794 = vmatprep.subr.bf16.mxu0 %v3810
        %4795 = vmatpush2.bf16.msra.mxu0 %v3809
        %4796 = vmatprep.mubr.bf16.mxu0 %v4594
        %4797 = vmatmul.mubr.bf16.gmra.mxu0 %v4593
        %v4798 = vpop.f32.mrf.mxu0
        %v4799 = vadd.f32 %v4758, %v4798
        %v4800 = vpop.f32.mrf.mxu0
        %v4801 = vadd.f32 %v4760, %v4800
        %v4802 = vpop.f32.mrf.mxu0
        %v4803 = vpop.f32.mrf.mxu0
        %4804 = vdwg.mxu0
        %4805 = vmatprep.subr.bf16.mxu0 %v3900
        %4806 = vmatpush1.bf16.msra.mxu0 %v3899
        %4807 = vmatprep.subr.bf16.mxu0 %v3894
        %4808 = vmatpush1.bf16.msra.mxu0 %v3893
        %4809 = vmatprep.subr.bf16.mxu0 %v3888
        %4810 = vmatpush1.bf16.msra.mxu0 %v3887
        %4811 = vmatprep.subr.bf16.mxu0 %v3882
        %4812 = vmatpush1.bf16.msra.mxu0 %v3881
        %4813 = vmatprep.subr.bf16.mxu0 %v3876
        %4814 = vmatpush1.bf16.msra.mxu0 %v3875
        %4815 = vmatprep.subr.bf16.mxu0 %v3870
        %4816 = vmatpush1.bf16.msra.mxu0 %v3869
        %4817 = vmatprep.subr.bf16.mxu0 %v3864
        %4818 = vmatpush1.bf16.msra.mxu0 %v3863
        %4819 = vmatprep.subr.bf16.mxu0 %v3858
        %4820 = vmatpush1.bf16.msra.mxu0 %v3857
        %4821 = vmatprep.subr.bf16.mxu0 0
        %4822 = vmatpush2.bf16.msra.mxu0 0
        %4823 = vmatprep.subr.bf16.mxu0 %v3960
        %4824 = vmatpush2.bf16.msra.mxu0 %v3957
        %4825 = vmatprep.subr.bf16.mxu0 %v3936
        %4826 = vmatpush2.bf16.msra.mxu0 %v3935
        %4827 = vmatprep.subr.bf16.mxu0 %v3930
        %4828 = vmatpush2.bf16.msra.mxu0 %v3929
        %4829 = vmatprep.subr.bf16.mxu0 %v3924
        %4830 = vmatpush2.bf16.msra.mxu0 %v3923
        %4831 = vmatprep.subr.bf16.mxu0 %v3918
        %4832 = vmatpush2.bf16.msra.mxu0 %v3917
        %4833 = vmatprep.subr.bf16.mxu0 %v3912
        %4834 = vmatpush2.bf16.msra.mxu0 %v3911
        %4835 = vmatprep.subr.bf16.mxu0 %v3906
        %4836 = vmatpush2.bf16.msra.mxu0 %v3905
        %4837 = vmatprep.mubr.bf16.mxu0 %v4598
        %4838 = vmatmul.mubr.bf16.gmra.mxu0 %v4595
        %v4839 = vpop.f32.mrf.mxu0
        %v4840 = vadd.f32 %v4799, %v4839
        %v4841 = vpop.f32.mrf.mxu0
        %v4842 = vadd.f32 %v4801, %v4841
        %v4843 = vpop.f32.mrf.mxu0
        %v4844 = vpop.f32.mrf.mxu0
        %4845 = vdwg.mxu0
        %4846 = vmatprep.subr.bf16.mxu0 %v3710
        %4847 = vmatpush1.bf16.msra.mxu0 %v3709
        %4848 = vmatprep.subr.bf16.mxu0 %v3704
        %4849 = vmatpush1.bf16.msra.mxu0 %v3703
        %4850 = vmatprep.subr.bf16.mxu0 %v3698
        %4851 = vmatpush1.bf16.msra.mxu0 %v3697
        %4852 = vmatprep.subr.bf16.mxu0 %v3692
        %4853 = vmatpush1.bf16.msra.mxu0 %v3691
        %4854 = vmatprep.subr.bf16.mxu0 %v3686
        %4855 = vmatpush1.bf16.msra.mxu0 %v3685
        %4856 = vmatprep.subr.bf16.mxu0 %v3680
        %4857 = vmatpush1.bf16.msra.mxu0 %v3679
        %4858 = vmatprep.subr.bf16.mxu0 %v3674
        %4859 = vmatpush1.bf16.msra.mxu0 %v3673
        %4860 = vmatprep.subr.bf16.mxu0 %v3668
        %4861 = vmatpush1.bf16.msra.mxu0 %v3667
        %4862 = vmatprep.subr.bf16.mxu0 %v3758
        %4863 = vmatpush2.bf16.msra.mxu0 %v3757
        %4864 = vmatprep.subr.bf16.mxu0 %v3752
        %4865 = vmatpush2.bf16.msra.mxu0 %v3751
        %4866 = vmatprep.subr.bf16.mxu0 %v3746
        %4867 = vmatpush2.bf16.msra.mxu0 %v3745
        %4868 = vmatprep.subr.bf16.mxu0 %v3740
        %4869 = vmatpush2.bf16.msra.mxu0 %v3739
        %4870 = vmatprep.subr.bf16.mxu0 %v3734
        %4871 = vmatpush2.bf16.msra.mxu0 %v3733
        %4872 = vmatprep.subr.bf16.mxu0 %v3728
        %4873 = vmatpush2.bf16.msra.mxu0 %v3727
        %4874 = vmatprep.subr.bf16.mxu0 %v3722
        %4875 = vmatpush2.bf16.msra.mxu0 %v3721
        %4876 = vmatprep.subr.bf16.mxu0 %v3716
        %4877 = vmatpush2.bf16.msra.mxu0 %v3715
        %4878 = vmatprep.mubr.bf16.mxu0 %v4592
        %4879 = vmatmul.mubr.bf16.gmra.mxu0 %v4591
        %v4880 = vpop.f32.mrf.mxu0
        %v4881 = vadd.f32 0.0, %v4880
        %v4882 = vpop.f32.mrf.mxu0
        %v4883 = vadd.f32 0.0, %v4882
        %v4884 = vpop.f32.mrf.mxu0
        %v4885 = vpop.f32.mrf.mxu0
        %4886 = vdwg.mxu0
        %4887 = vmatprep.subr.bf16.mxu0 %v3806
        %4888 = vmatpush1.bf16.msra.mxu0 %v3805
        %4889 = vmatprep.subr.bf16.mxu0 %v3800
        %4890 = vmatpush1.bf16.msra.mxu0 %v3799
        %4891 = vmatprep.subr.bf16.mxu0 %v3794
        %4892 = vmatpush1.bf16.msra.mxu0 %v3793
        %4893 = vmatprep.subr.bf16.mxu0 %v3788
        %4894 = vmatpush1.bf16.msra.mxu0 %v3787
        %4895 = vmatprep.subr.bf16.mxu0 %v3782
        %4896 = vmatpush1.bf16.msra.mxu0 %v3781
        %4897 = vmatprep.subr.bf16.mxu0 %v3776
        %4898 = vmatpush1.bf16.msra.mxu0 %v3775
        %4899 = vmatprep.subr.bf16.mxu0 %v3770
        %4900 = vmatpush1.bf16.msra.mxu0 %v3769
        %4901 = vmatprep.subr.bf16.mxu0 %v3764
        %4902 = vmatpush1.bf16.msra.mxu0 %v3763
        %4903 = vmatprep.subr.bf16.mxu0 %v3854
        %4904 = vmatpush2.bf16.msra.mxu0 %v3853
        %4905 = vmatprep.subr.bf16.mxu0 %v3848
        %4906 = vmatpush2.bf16.msra.mxu0 %v3847
        %4907 = vmatprep.subr.bf16.mxu0 %v3842
        %4908 = vmatpush2.bf16.msra.mxu0 %v3841
        %4909 = vmatprep.subr.bf16.mxu0 %v3836
        %4910 = vmatpush2.bf16.msra.mxu0 %v3835
        %4911 = vmatprep.subr.bf16.mxu0 %v3830
        %4912 = vmatpush2.bf16.msra.mxu0 %v3829
        %4913 = vmatprep.subr.bf16.mxu0 %v3824
        %4914 = vmatpush2.bf16.msra.mxu0 %v3823
        %4915 = vmatprep.subr.bf16.mxu0 %v3818
        %4916 = vmatpush2.bf16.msra.mxu0 %v3817
        %4917 = vmatprep.subr.bf16.mxu0 %v3812
        %4918 = vmatpush2.bf16.msra.mxu0 %v3811
        %4919 = vmatprep.mubr.bf16.mxu0 %v4594
        %4920 = vmatmul.mubr.bf16.gmra.mxu0 %v4593
        %v4921 = vpop.f32.mrf.mxu0
        %v4922 = vadd.f32 %v4881, %v4921
        %v4923 = vpop.f32.mrf.mxu0
        %v4924 = vadd.f32 %v4883, %v4923
        %v4925 = vpop.f32.mrf.mxu0
        %v4926 = vpop.f32.mrf.mxu0
        %4927 = vdwg.mxu0
        %4928 = vmatprep.subr.bf16.mxu0 %v3902
        %4929 = vmatpush1.bf16.msra.mxu0 %v3901
        %4930 = vmatprep.subr.bf16.mxu0 %v3896
        %4931 = vmatpush1.bf16.msra.mxu0 %v3895
        %4932 = vmatprep.subr.bf16.mxu0 %v3890
        %4933 = vmatpush1.bf16.msra.mxu0 %v3889
        %4934 = vmatprep.subr.bf16.mxu0 %v3884
        %4935 = vmatpush1.bf16.msra.mxu0 %v3883
        %4936 = vmatprep.subr.bf16.mxu0 %v3878
        %4937 = vmatpush1.bf16.msra.mxu0 %v3877
        %4938 = vmatprep.subr.bf16.mxu0 %v3872
        %4939 = vmatpush1.bf16.msra.mxu0 %v3871
        %4940 = vmatprep.subr.bf16.mxu0 %v3866
        %4941 = vmatpush1.bf16.msra.mxu0 %v3865
        %4942 = vmatprep.subr.bf16.mxu0 %v3860
        %4943 = vmatpush1.bf16.msra.mxu0 %v3859
        %4944 = vmatprep.subr.bf16.mxu0 0
        %4945 = vmatpush2.bf16.msra.mxu0 0
        %4946 = vmatprep.subr.bf16.mxu0 %v3966
        %4947 = vmatpush2.bf16.msra.mxu0 %v3963
        %4948 = vmatprep.subr.bf16.mxu0 %v3938
        %4949 = vmatpush2.bf16.msra.mxu0 %v3937
        %4950 = vmatprep.subr.bf16.mxu0 %v3932
        %4951 = vmatpush2.bf16.msra.mxu0 %v3931
        %4952 = vmatprep.subr.bf16.mxu0 %v3926
        %4953 = vmatpush2.bf16.msra.mxu0 %v3925
        %4954 = vmatprep.subr.bf16.mxu0 %v3920
        %4955 = vmatpush2.bf16.msra.mxu0 %v3919
        %4956 = vmatprep.subr.bf16.mxu0 %v3914
        %4957 = vmatpush2.bf16.msra.mxu0 %v3913
        %4958 = vmatprep.subr.bf16.mxu0 %v3908
        %4959 = vmatpush2.bf16.msra.mxu0 %v3907
        %4960 = vmatprep.mubr.bf16.mxu0 %v4598
        %4961 = vmatmul.mubr.bf16.gmra.mxu0 %v4595
        %v4962 = vpop.f32.mrf.mxu0
        %v4963 = vadd.f32 %v4922, %v4962
        %v4964 = vpop.f32.mrf.mxu0
        %v4965 = vadd.f32 %v4924, %v4964
        %v4966 = vpop.f32.mrf.mxu0
        %v4967 = vpop.f32.mrf.mxu0
        %4968 = vdwg.mxu0
        %v4969 = vmul.f32 %v4717, %v4564
        %v4970 = vmul.f32 %v4719, %v4568
        %v4971 = vmul.f32 %v4840, %v4572
        %v4972 = vmul.f32 %v4842, %v4576
        %v4973 = vmul.f32 %v4963, %v4580
        %v4974 = vmul.f32 %v4965, %v4584
        %v4975 = vld [vmem:[%s3] sm:$0xff]
        %4977 = vset.pattern.permute.xlu0 0
        %4978 = vperm.xlu0 %4977, %v4975
        %v4979 = vpop.permute.xlu0 %4978
        %v4981 = vadd.f32 %v4969, %v4979
        %v4982 = vadd.f32 %v4970, %v4979
        %v4983 = vadd.f32 %v4971, %v4979
        %v4984 = vadd.f32 %v4972, %v4979
        %v4985 = vadd.f32 %v4973, %v4979
        %v4986 = vadd.f32 %v4974, %v4979
        %v4987 = vmax.f32 %v4981, 0.0
        %v4988 = vmax.f32 %v4982, 0.0
        %v4989 = vmax.f32 %v4983, 0.0
        %v4990 = vmax.f32 %v4984, 0.0
        %v4991 = vmax.f32 %v4985, 0.0
        %v4992 = vmax.f32 %v4986, 0.0
        %v4993 = vrot.slane %v4987, 4
        %v4994 = vadd.f32 %v4987, %v4993
        %v4995 = vrot.slane %v4994, 2
        %v4996 = vadd.f32 %v4994, %v4995
        %v4997 = vrot.slane %v4996, 1
        %v4998 = vadd.f32 %v4996, %v4997
        %v4999 = vrot.slane %v4988, 4
        %v5000 = vadd.f32 %v4988, %v4999
        %v5001 = vrot.slane %v5000, 2
        %v5002 = vadd.f32 %v5000, %v5001
        %v5003 = vrot.slane %v5002, 1
        %v5004 = vadd.f32 %v5002, %v5003
        %v5005 = vrot.slane %v4989, 4
        %v5006 = vadd.f32 %v4989, %v5005
        %v5007 = vrot.slane %v5006, 2
        %v5008 = vadd.f32 %v5006, %v5007
        %v5009 = vrot.slane %v5008, 1
        %v5010 = vadd.f32 %v5008, %v5009
        %v5011 = vrot.slane %v4990, 4
        %v5012 = vadd.f32 %v4990, %v5011
        %v5013 = vrot.slane %v5012, 2
        %v5014 = vadd.f32 %v5012, %v5013
        %v5015 = vrot.slane %v5014, 1
        %v5016 = vadd.f32 %v5014, %v5015
        %v5017 = vrot.slane %v4991, 4
        %v5018 = vadd.f32 %v4991, %v5017
        %v5019 = vrot.slane %v5018, 2
        %v5020 = vadd.f32 %v5018, %v5019
        %v5021 = vrot.slane %v5020, 1
        %v5022 = vadd.f32 %v5020, %v5021
        %v5023 = vsel %vm3945, %v4992, 0.0
        %v5024 = vrot.slane %v5023, 4
        %v5025 = vadd.f32 %v5023, %v5024
        %v5026 = vrot.slane %v5025, 2
        %v5027 = vadd.f32 %v5025, %v5026
        %v5028 = vrot.slane %v5027, 1
        %v5029 = vadd.f32 %v5027, %v5028
        %v5030 = vrcp.pop 8.0
        %v5031 = vmul.f32 %v4998, %v5030
        %v5032 = vmul.f32 %v5004, %v5030
        %v5033 = vmul.f32 %v5010, %v5030
        %v5034 = vmul.f32 %v5016, %v5030
        %v5035 = vmul.f32 %v5022, %v5030
        %v5036 = vmul.f32 %v5029, %v5030
        %v5043 = vcombine.low %v5031, %v5032
        %v5044 = vcombine.low %v5033, %v5034
        %v5045 = vcombine.low %v5035, %v5036
        %v5047 = vunpack.c.l.s4 1966171168
        %v5048 = vunpack.c.0.s8 %v5047
        %v5049 = vlaneseq
        %v5050 = vshrl.u32 %v5049, 7
        %v5051 = vsub.s32 %v5048, %v5050
        %v5052 = vrot.slane %v5043, %v5051
        %v5054 = vunpack.c.l.s4 1966171168
        %v5055 = vunpack.c.0.s8 %v5054
        %v5056 = vlaneseq
        %v5057 = vshrl.u32 %v5056, 7
        %v5058 = vsub.s32 %v5055, %v5057
        %v5059 = vrot.slane %v5044, %v5058
        %v5061 = vunpack.c.l.s4 1966171168
        %v5062 = vunpack.c.0.s8 %v5061
        %v5063 = vlaneseq
        %v5064 = vshrl.u32 %v5063, 7
        %v5065 = vsub.s32 %v5062, %v5064
        %v5066 = vrot.slane %v5045, %v5065
        %v5067 = vcombine.low %v5052, %v5059
        %v5069 = vunpack.c.l.s4 1966171168
        %v5070 = vunpack.c.0.s8 %v5069
        %v5071 = vlaneseq
        %v5072 = vshrl.u32 %v5071, 7
        %v5073 = vsub.s32 %v5070, %v5072
        %v5074 = vrot.slane %v5067, %v5073
        %v5076 = vunpack.c.l.s4 1966171168
        %v5077 = vunpack.c.0.s8 %v5076
        %v5078 = vlaneseq
        %v5079 = vshrl.u32 %v5078, 7
        %v5080 = vsub.s32 %v5077, %v5079
        %v5081 = vrot.slane %v5066, %v5080
        %v5082 = vcombine.low %v5074, %v5081
        %v5084 = vlaneseq
        %vm5085 = vcmp.ge.s32.totalorder %v5084, 0
        %vm5086 = vcmp.lt.s32.totalorder %v5084, 750
        %vm5087 = vmand %vm5085, %vm5086
        %5088 = vst.msk [vmem:[%s246] sm:$0x3f] %vm5087, %v5082
        %p5089 = scmp.lt.s32.totalorder %s19, 1
        %s5090 = scalar_select %p5089, %s19, 1
        %s5091 = smul.addr %s5090, 6
        %s5092 = scalar_lea.vmem %s4, %s5091
        // Predicated region
        $region45: #{model2_forward.5} parent=35 // pred_check
          %p5093 = pneg %p131
        $region46: #{model2_forward.5} parent=35 // pred_check_branch
          %5095 = sbr.rel (%p5093) target = $region48
        $region47: #{model2_forward.5} parent=35 // pred_region
          _
        $region48: #{model2_forward.5} parent=35 // pred_fallthru
          _
      $region36: #{model2_forward.5} parent=5 // pred_fallthru
        _
      %p5096 = scmp.le.s32.totalorder 2, %s14
      // Predicated region
      $region49: #{model2_forward.5} parent=5 // pred_check
        %p5097 = pneg %p5096
      $region50: #{model2_forward.5} parent=5 // pred_check_branch
        %5099 = sbr.rel (%p5097) target = $region52
      $region51: #{model2_forward.5} parent=5 // pred_region
        %s5100 = ssub.s32 %s14, 2
        // Predicated region
        $region53: #{model2_forward.5} parent=51 // pred_check
          %p5101 = pneg %p137
        $region54: #{model2_forward.5} parent=51 // pred_check_branch
          %5103 = sbr.rel (%p5101) target = $region56
        $region55: #{model2_forward.5} parent=51 // pred_region
          %p5104 = scmp.lt.s32.totalorder %s20, 1
          %s5105 = scalar_select %p5104, %s20, 1
          %s5106 = smul.addr %s5105, 6
          %s5107 = scalar_lea.vmem %s4, %s5106
        $region56: #{model2_forward.5} parent=51 // pred_fallthru
          _
      $region52: #{model2_forward.5} parent=5 // pred_fallthru
        _
    $region6: #{model2_forward.5} parent=1 // loop_footer
      %s18 = sadd.s32 1, %s14
    $region7: #{model2_forward.5} parent=1 // loop_footer_branch
      %13 = sbr.rel target = $region3
    $region8: #{model2_forward.5} parent=1 // loop_exit
      _
    %5108 = vsyncpa [#allocation3], 1
    %s5109 = scalar_lea.sflag [#allocation3], 1
    %5110 = vsyncpa %s5109, 1
    %5111 = vsyncpa [#allocation5], 1

// kernel: model2_forward.6
$region0: #{model2_forward.6}
  #allocation0 [shape = 'u32[]', space=smem, size = 0x4, offset = 0x4, fixed_abs, tag = 'smem constant byte address 0x4 - core index']
  #allocation1 [shape = 'u32[144,128]{1,0:T(1,128)}', space=vmem, size = 0x12000, scoped, tag = 'internal scratch']
  %s0 = inlined_call_operand.vmem [shape: f32[2,4,5,250], index: 0, kind: input, shape index: {}]
  %s1 = inlined_call_operand.vmem [shape: f32[32,5], index: 1, kind: input, shape index: {}]
  %s2 = inlined_call_operand.vmem [shape: f32[32,1], index: 2, kind: input, shape index: {}]
  %s3 = inlined_call_operand.hbm [shape: f32[64,160], index: 3, kind: input, shape index: {}]
  %s4 = inlined_call_operand.vmem [shape: f32[64,1], index: 4, kind: input, shape index: {}]
  %s5 = inlined_call_operand.vmem [shape: f32[2,64,250], index: 5, kind: output, shape index: {}]
  %s6 = sld [smem:[#allocation0]]
  $region57: #{model2_forward.6} parent=0
    _
  %s8 = ssub.s32 1, %s6
  %s9 = scalar_select 0, %s8, %s6
  $region1: #{model2_forward.6} parent=0
    #allocation2 [shape = 'u8[65536]{0}', space=vmem, size = 0x10000, scoped, tag = 'input window, operand 3, single buffered']
    #allocation3 [shape = 's32[2]{0}', space=sflag, size = 0x8, scoped, tag = 'scoped memory for model2_forward.6']
    %10 = vsyncpa [#allocation3], 0
    loop: start=0, step=1, limit=4
    $region2: #{model2_forward.6} parent=1 // loop_pre_header
      _
    $region3: #{model2_forward.6} parent=1 // loop_header
      %s12 = sphi 0, %s16
      %p13 = scmp.ge.s32.totalorder %s12, 4
      %s22 = sphi 0, %s24
      %s25 = sphi 0, %s22
      %s26 = sphi 0, %s25
      %s42 = sphi 0, %s26
      %s46 = sphi 0, %s46
      %s48 = sphi 0, %s46
      %s49 = sphi 0, %s48
      %s63 = sphi 0, %s49
      %s67 = sphi 0, %s67
      %s69 = sphi 0, %s67
      %s70 = sphi 0, %s69
      %s84 = sphi 0, %s70
      %s88 = sphi 0, %s88
      %s90 = sphi 0, %s88
      %s91 = sphi 0, %s90
      %s105 = sphi 0, %s91
      %s109 = sphi 0, %s109
      %s111 = sphi 0, %s109
      %s112 = sphi 0, %s111
      %s126 = sphi 0, %s112
      %s132 = sphi 0, %s134
      %s135 = sphi 0, %s132
      %s136 = sphi 0, %s135
      %s152 = sphi 0, %s136
    $region4: #{model2_forward.6} parent=1 // loop_header_branch
      %15 = sbr.rel (%p13) target = $region8
    $region5: #{model2_forward.6} parent=1 // loop_body
      %s17 = ssub.s32 %s12, 1
      %s18 = ssub.s32 %s12, 2
      %s19 = sadd.s32 %s12, 1
      %s20 = ssub.s32 %s12, %s19
      %p21 = scmp.eq.s32.totalorder %s20, 0
      %s23 = sadd.s32 %s22, 1
      %s24 = scalar_select %p21, %s22, %s23
      %p27 = pneg %p21
      %p28 = scmp.eq.s32.totalorder %s12, 1
      %p29 = por %p27, %p28
      %p30 = scmp.ne.s32.totalorder %s22, %s25
      %p31 = scmp.eq.s32.totalorder %s12, 0
      %p32 = por %p30, %p31
      %p33 = scmp.ne.s32.totalorder %s22, %s25
      %p34 = scmp.eq.s32.totalorder %s17, 1
      %p35 = por %p33, %p34
      %p36 = scmp.ne.s32.totalorder %s25, %s26
      %p37 = scmp.eq.s32.totalorder %s17, 0
      %p38 = por %p36, %p37
      %p39 = scmp.ne.s32.totalorder %s25, %s26
      %p40 = scmp.eq.s32.totalorder %s18, 1
      %p41 = por %p39, %p40
      %p43 = scmp.ne.s32.totalorder %s26, %s42
      %p44 = scmp.eq.s32.totalorder %s18, 0
      %p45 = por %p43, %p44
      %s47 = sadd.s32 %s46, 1
      %p50 = scmp.eq.s32.totalorder %s12, 1
      %p51 = scmp.ne.s32.totalorder %s46, %s48
      %p52 = scmp.eq.s32.totalorder %s12, 0
      %p53 = por %p51, %p52
      %p54 = scmp.ne.s32.totalorder %s46, %s48
      %p55 = scmp.eq.s32.totalorder %s17, 1
      %p56 = por %p54, %p55
      %p57 = scmp.ne.s32.totalorder %s48, %s49
      %p58 = scmp.eq.s32.totalorder %s17, 0
      %p59 = por %p57, %p58
      %p60 = scmp.ne.s32.totalorder %s48, %s49
      %p61 = scmp.eq.s32.totalorder %s18, 1
      %p62 = por %p60, %p61
      %p64 = scmp.ne.s32.totalorder %s49, %s63
      %p65 = scmp.eq.s32.totalorder %s18, 0
      %p66 = por %p64, %p65
      %s68 = sadd.s32 %s67, 1
      %p71 = scmp.eq.s32.totalorder %s12, 1
      %p72 = scmp.ne.s32.totalorder %s67, %s69
      %p73 = scmp.eq.s32.totalorder %s12, 0
      %p74 = por %p72, %p73
      %p75 = scmp.ne.s32.totalorder %s67, %s69
      %p76 = scmp.eq.s32.totalorder %s17, 1
      %p77 = por %p75, %p76
      %p78 = scmp.ne.s32.totalorder %s69, %s70
      %p79 = scmp.eq.s32.totalorder %s17, 0
      %p80 = por %p78, %p79
      %p81 = scmp.ne.s32.totalorder %s69, %s70
      %p82 = scmp.eq.s32.totalorder %s18, 1
      %p83 = por %p81, %p82
      %p85 = scmp.ne.s32.totalorder %s70, %s84
      %p86 = scmp.eq.s32.totalorder %s18, 0
      %p87 = por %p85, %p86
      %s89 = sadd.s32 %s88, 1
      %p92 = scmp.eq.s32.totalorder %s12, 1
      %p93 = scmp.ne.s32.totalorder %s88, %s90
      %p94 = scmp.eq.s32.totalorder %s12, 0
      %p95 = por %p93, %p94
      %p96 = scmp.ne.s32.totalorder %s88, %s90
      %p97 = scmp.eq.s32.totalorder %s17, 1
      %p98 = por %p96, %p97
      %p99 = scmp.ne.s32.totalorder %s90, %s91
      %p100 = scmp.eq.s32.totalorder %s17, 0
      %p101 = por %p99, %p100
      %p102 = scmp.ne.s32.totalorder %s90, %s91
      %p103 = scmp.eq.s32.totalorder %s18, 1
      %p104 = por %p102, %p103
      %p106 = scmp.ne.s32.totalorder %s91, %s105
      %p107 = scmp.eq.s32.totalorder %s18, 0
      %p108 = por %p106, %p107
      %s110 = sadd.s32 %s109, 1
      %p113 = scmp.eq.s32.totalorder %s12, 1
      %p114 = scmp.ne.s32.totalorder %s109, %s111
      %p115 = scmp.eq.s32.totalorder %s12, 0
      %p116 = por %p114, %p115
      %p117 = scmp.ne.s32.totalorder %s109, %s111
      %p118 = scmp.eq.s32.totalorder %s17, 1
      %p119 = por %p117, %p118
      %p120 = scmp.ne.s32.totalorder %s111, %s112
      %p121 = scmp.eq.s32.totalorder %s17, 0
      %p122 = por %p120, %p121
      %p123 = scmp.ne.s32.totalorder %s111, %s112
      %p124 = scmp.eq.s32.totalorder %s18, 1
      %p125 = por %p123, %p124
      %p127 = scmp.ne.s32.totalorder %s112, %s126
      %p128 = scmp.eq.s32.totalorder %s18, 0
      %p129 = por %p127, %p128
      %s130 = ssub.s32 %s12, %s19
      %p131 = scmp.eq.s32.totalorder %s130, 0
      %s133 = sadd.s32 %s132, 1
      %s134 = scalar_select %p131, %s132, %s133
      %p137 = pneg %p131
      %p138 = scmp.eq.s32.totalorder %s12, 1
      %p139 = por %p137, %p138
      %p140 = scmp.ne.s32.totalorder %s132, %s135
      %p141 = scmp.eq.s32.totalorder %s12, 0
      %p142 = por %p140, %p141
      %p143 = scmp.ne.s32.totalorder %s132, %s135
      %p144 = scmp.eq.s32.totalorder %s17, 1
      %p145 = por %p143, %p144
      %p146 = scmp.ne.s32.totalorder %s135, %s136
      %p147 = scmp.eq.s32.totalorder %s17, 0
      %p148 = por %p146, %p147
      %p149 = scmp.ne.s32.totalorder %s135, %s136
      %p150 = scmp.eq.s32.totalorder %s18, 1
      %p151 = por %p149, %p150
      %p153 = scmp.ne.s32.totalorder %s136, %s152
      %p154 = scmp.eq.s32.totalorder %s18, 0
      %p155 = por %p153, %p154
      %p156 = scmp.le.s32.totalorder 1, %s12
      %p157 = scmp.lt.s32.totalorder %s12, 3
      %p158 = pnand %p156, %p157
      %p159 = pneg %p158
      // Predicated region
      $region9: #{model2_forward.6} parent=5 // pred_check
        _
      $region10: #{model2_forward.6} parent=5 // pred_check_branch
        %161 = sbr.rel (%p158) target = $region12
      $region11: #{model2_forward.6} parent=5 // pred_region
        %s162 = ssub.s32 %s12, 1
        // Predicated region
        $region13: #{model2_forward.6} parent=11 // pred_check
          %p163 = pneg %p59
        $region14: #{model2_forward.6} parent=11 // pred_check_branch
          %165 = sbr.rel (%p163) target = $region16
        $region15: #{model2_forward.6} parent=11 // pred_region
          _
        $region16: #{model2_forward.6} parent=11 // pred_fallthru
          _
        // Predicated region
        $region17: #{model2_forward.6} parent=11 // pred_check
          %p166 = pneg %p80
        $region18: #{model2_forward.6} parent=11 // pred_check_branch
          %168 = sbr.rel (%p166) target = $region20
        $region19: #{model2_forward.6} parent=11 // pred_region
          _
        $region20: #{model2_forward.6} parent=11 // pred_fallthru
          _
        // Predicated region
        $region21: #{model2_forward.6} parent=11 // pred_check
          %p169 = pneg %p101
        $region22: #{model2_forward.6} parent=11 // pred_check_branch
          %171 = sbr.rel (%p169) target = $region24
        $region23: #{model2_forward.6} parent=11 // pred_region
          %s173 = ssub.s32 2048, 2048
          %174 = vsyncadd [#allocation3], %s173
          %s175 = sshll.u32 [#allocation2], 4
          %s176 = int_to_ptr.vmem [resolvable:$true] %s175
          %181 = dma.hbm_to_vmem [thread:$0]  %s3, 2048, %s176, [#allocation3], 256, 256, 16
        $region24: #{model2_forward.6} parent=11 // pred_fallthru
          _
        // Predicated region
        $region25: #{model2_forward.6} parent=11 // pred_check
          %p182 = pneg %p122
        $region26: #{model2_forward.6} parent=11 // pred_check_branch
          %184 = sbr.rel (%p182) target = $region28
        $region27: #{model2_forward.6} parent=11 // pred_region
          _
        $region28: #{model2_forward.6} parent=11 // pred_fallthru
          _
      $region12: #{model2_forward.6} parent=5 // pred_fallthru
        _
      %p185 = scmp.lt.s32.totalorder %s12, 2
      // Predicated region
      $region29: #{model2_forward.6} parent=5 // pred_check
        %p186 = pneg %p185
      $region30: #{model2_forward.6} parent=5 // pred_check_branch
        %188 = sbr.rel (%p186) target = $region32
      $region31: #{model2_forward.6} parent=5 // pred_region
        // Predicated region
        $region33: #{model2_forward.6} parent=31 // pred_check
          %p189 = pneg %p32
        $region34: #{model2_forward.6} parent=31 // pred_check_branch
          %191 = sbr.rel (%p189) target = $region36
        $region35: #{model2_forward.6} parent=31 // pred_region
          %p192 = scmp.lt.s32.totalorder %s12, 1
          %s193 = scalar_select %p192, %s12, 1
          %s194 = smul.addr %s193, 8
          %s195 = smul.addr %s194, 8
          %s196 = scalar_lea.vmem %s0, %s195
        $region36: #{model2_forward.6} parent=31 // pred_fallthru
          _
      $region32: #{model2_forward.6} parent=5 // pred_fallthru
        _
      %p197 = scmp.le.s32.totalorder 1, %s12
      %p198 = scmp.lt.s32.totalorder %s12, 3
      %p199 = pnand %p197, %p198
      %p200 = pneg %p199
      // Predicated region
      $region37: #{model2_forward.6} parent=5 // pred_check
        _
      $region38: #{model2_forward.6} parent=5 // pred_check_branch
        %202 = sbr.rel (%p199) target = $region40
      $region39: #{model2_forward.6} parent=5 // pred_region
        %s203 = ssub.s32 %s12, 1
        // Predicated region
        $region41: #{model2_forward.6} parent=39 // pred_check
          %p204 = pneg %p101
        $region42: #{model2_forward.6} parent=39 // pred_check_branch
          %206 = sbr.rel (%p204) target = $region44
        $region43: #{model2_forward.6} parent=39 // pred_region
          %207 = dma.done [#allocation3], 2048
        $region44: #{model2_forward.6} parent=39 // pred_fallthru
          _
        %p208 = scmp.lt.s32.totalorder %s17, 1
        %s209 = scalar_select %p208, %s17, 1
        %s210 = smul.addr %s209, 8
        %s211 = smul.addr %s210, 8
        %s212 = scalar_lea.vmem %s0, %s211
        %p213 = pneg %p38
        %p214 = pneg %p35
        %p215 = pneg %p59
        %p216 = pneg %p56
        %p217 = pneg %p80
        %p218 = pneg %p77
        %p219 = pneg %p101
        %p220 = pneg %p98
        %p221 = pneg %p122
        %p222 = pneg %p119
        %p223 = pneg %p148
        %p224 = pneg %p145
        %p225 = scmp.lt.s32.totalorder %s17, 1
        %s226 = scalar_select %p225, %s17, 1
        %s227 = smul.addr %s226, 16
        %s228 = smul.addr %s227, 8
        %s229 = scalar_lea.vmem %s5, %s228
        %p230 = scmp.lt.s32.totalorder %s17, 1
        %s231 = scalar_select %p230, %s17, 1
        %s232 = smul.addr %s231, 8
        %s233 = smul.addr %s232, 8
        %s234 = scalar_lea.vmem %s0, %s233
        %p235 = scmp.lt.s32.totalorder %s17, 1
        %s236 = scalar_select %p235, %s17, 1
        %s237 = smul.addr %s236, 16
        %s238 = smul.addr %s237, 8
        %s239 = scalar_lea.vmem %s5, %s238
        %v240 = vld [vmem:[%s1] sm:$0xff]
        %v241 = vld [vmem:[%s1 + $0x8] sm:$0xff]
        %v242 = vld [vmem:[%s1 + $0x10] sm:$0xff]
        %v243 = vld [vmem:[%s1 + $0x18] sm:$0xff]
        %v244 = vld [vmem:[%s2] sm:$0xff]
        %v245 = vld [vmem:[%s2 + $0x8] sm:$0xff]
        %v246 = vld [vmem:[%s2 + $0x10] sm:$0xff]
        %v247 = vld [vmem:[%s2 + $0x18] sm:$0xff]
        %v248 = vld [vmem:[%s234] sm:$0x1f]
        %v249 = vld [vmem:[%s234 + $0x8] sm:$0x1f]
        %251 = vset.pattern.permute.xlu0 0
        %252 = vperm.xlu0 %251, %v240
        %v253 = vpop.permute.xlu0 %252
        %256 = vset.pattern.permute.xlu0 0
        %257 = vperm.xlu0 %256, %v241
        %v258 = vpop.permute.xlu0 %257
        %261 = vset.pattern.permute.xlu0 0
        %262 = vperm.xlu0 %261, %v242
        %v263 = vpop.permute.xlu0 %262
        %266 = vset.pattern.permute.xlu0 0
        %267 = vperm.xlu0 %266, %v243
        %v268 = vpop.permute.xlu0 %267
        %v270 = vlaneseq
        %v271 = vshrl.u32 %v270, 7
        %v272 = vsub.s32 0, %v271
        %v273 = vrot.slane %v248, %v272
        %v274 = vlaneseq
        %v275 = vshrl.u32 %v274, 7
        %v276 = vsub.s32 0, %v275
        %v277 = vrot.slane %v249, %v276
        %v278 = vmul.f32 %v253, %v273
        %v279 = vmul.f32 %v253, %v277
        %v280 = vmul.f32 %v258, %v273
        %v281 = vmul.f32 %v258, %v277
        %v282 = vmul.f32 %v263, %v273
        %v283 = vmul.f32 %v263, %v277
        %v284 = vmul.f32 %v268, %v273
        %v285 = vmul.f32 %v268, %v277
        %v286 = vadd.f32 %v278, 0.0
        %v287 = vadd.f32 %v279, 0.0
        %v288 = vadd.f32 %v280, 0.0
        %v289 = vadd.f32 %v281, 0.0
        %v290 = vadd.f32 %v282, 0.0
        %v291 = vadd.f32 %v283, 0.0
        %v292 = vadd.f32 %v284, 0.0
        %v293 = vadd.f32 %v285, 0.0
        %294 = vset.pattern.permute.xlu0 1
        %295 = vperm.xlu0 %294, %v240
        %v296 = vpop.permute.xlu0 %295
        %298 = vset.pattern.permute.xlu0 1
        %299 = vperm.xlu0 %298, %v241
        %v300 = vpop.permute.xlu0 %299
        %302 = vset.pattern.permute.xlu0 1
        %303 = vperm.xlu0 %302, %v242
        %v304 = vpop.permute.xlu0 %303
        %306 = vset.pattern.permute.xlu0 1
        %307 = vperm.xlu0 %306, %v243
        %v308 = vpop.permute.xlu0 %307
        %v310 = vlaneseq
        %v311 = vshrl.u32 %v310, 7
        %v312 = vsub.s32 1, %v311
        %v313 = vrot.slane %v248, %v312
        %v314 = vlaneseq
        %v315 = vshrl.u32 %v314, 7
        %v316 = vsub.s32 1, %v315
        %v317 = vrot.slane %v249, %v316
        %v318 = vmul.f32 %v296, %v313
        %v319 = vmul.f32 %v296, %v317
        %v320 = vmul.f32 %v300, %v313
        %v321 = vmul.f32 %v300, %v317
        %v322 = vmul.f32 %v304, %v313
        %v323 = vmul.f32 %v304, %v317
        %v324 = vmul.f32 %v308, %v313
        %v325 = vmul.f32 %v308, %v317
        %v326 = vadd.f32 %v286, %v318
        %v327 = vadd.f32 %v287, %v319
        %v328 = vadd.f32 %v288, %v320
        %v329 = vadd.f32 %v289, %v321
        %v330 = vadd.f32 %v290, %v322
        %v331 = vadd.f32 %v291, %v323
        %v332 = vadd.f32 %v292, %v324
        %v333 = vadd.f32 %v293, %v325
        %334 = vset.pattern.permute.xlu0 2
        %335 = vperm.xlu0 %334, %v240
        %v336 = vpop.permute.xlu0 %335
        %338 = vset.pattern.permute.xlu0 2
        %339 = vperm.xlu0 %338, %v241
        %v340 = vpop.permute.xlu0 %339
        %342 = vset.pattern.permute.xlu0 2
        %343 = vperm.xlu0 %342, %v242
        %v344 = vpop.permute.xlu0 %343
        %346 = vset.pattern.permute.xlu0 2
        %347 = vperm.xlu0 %346, %v243
        %v348 = vpop.permute.xlu0 %347
        %v350 = vlaneseq
        %v351 = vshrl.u32 %v350, 7
        %v352 = vsub.s32 2, %v351
        %v353 = vrot.slane %v248, %v352
        %v354 = vlaneseq
        %v355 = vshrl.u32 %v354, 7
        %v356 = vsub.s32 2, %v355
        %v357 = vrot.slane %v249, %v356
        %v358 = vmul.f32 %v336, %v353
        %v359 = vmul.f32 %v336, %v357
        %v360 = vmul.f32 %v340, %v353
        %v361 = vmul.f32 %v340, %v357
        %v362 = vmul.f32 %v344, %v353
        %v363 = vmul.f32 %v344, %v357
        %v364 = vmul.f32 %v348, %v353
        %v365 = vmul.f32 %v348, %v357
        %v366 = vadd.f32 %v326, %v358
        %v367 = vadd.f32 %v327, %v359
        %v368 = vadd.f32 %v328, %v360
        %v369 = vadd.f32 %v329, %v361
        %v370 = vadd.f32 %v330, %v362
        %v371 = vadd.f32 %v331, %v363
        %v372 = vadd.f32 %v332, %v364
        %v373 = vadd.f32 %v333, %v365
        %374 = vset.pattern.permute.xlu0 3
        %375 = vperm.xlu0 %374, %v240
        %v376 = vpop.permute.xlu0 %375
        %378 = vset.pattern.permute.xlu0 3
        %379 = vperm.xlu0 %378, %v241
        %v380 = vpop.permute.xlu0 %379
        %382 = vset.pattern.permute.xlu0 3
        %383 = vperm.xlu0 %382, %v242
        %v384 = vpop.permute.xlu0 %383
        %386 = vset.pattern.permute.xlu0 3
        %387 = vperm.xlu0 %386, %v243
        %v388 = vpop.permute.xlu0 %387
        %v390 = vlaneseq
        %v391 = vshrl.u32 %v390, 7
        %v392 = vsub.s32 3, %v391
        %v393 = vrot.slane %v248, %v392
        %v394 = vlaneseq
        %v395 = vshrl.u32 %v394, 7
        %v396 = vsub.s32 3, %v395
        %v397 = vrot.slane %v249, %v396
        %v398 = vmul.f32 %v376, %v393
        %v399 = vmul.f32 %v376, %v397
        %v400 = vmul.f32 %v380, %v393
        %v401 = vmul.f32 %v380, %v397
        %v402 = vmul.f32 %v384, %v393
        %v403 = vmul.f32 %v384, %v397
        %v404 = vmul.f32 %v388, %v393
        %v405 = vmul.f32 %v388, %v397
        %v406 = vadd.f32 %v366, %v398
        %v407 = vadd.f32 %v367, %v399
        %v408 = vadd.f32 %v368, %v400
        %v409 = vadd.f32 %v369, %v401
        %v410 = vadd.f32 %v370, %v402
        %v411 = vadd.f32 %v371, %v403
        %v412 = vadd.f32 %v372, %v404
        %v413 = vadd.f32 %v373, %v405
        %414 = vset.pattern.permute.xlu0 4
        %415 = vperm.xlu0 %414, %v240
        %v416 = vpop.permute.xlu0 %415
        %418 = vset.pattern.permute.xlu0 4
        %419 = vperm.xlu0 %418, %v241
        %v420 = vpop.permute.xlu0 %419
        %422 = vset.pattern.permute.xlu0 4
        %423 = vperm.xlu0 %422, %v242
        %v424 = vpop.permute.xlu0 %423
        %426 = vset.pattern.permute.xlu0 4
        %427 = vperm.xlu0 %426, %v243
        %v428 = vpop.permute.xlu0 %427
        %v430 = vlaneseq
        %v431 = vshrl.u32 %v430, 7
        %v432 = vsub.s32 4, %v431
        %v433 = vrot.slane %v248, %v432
        %v434 = vlaneseq
        %v435 = vshrl.u32 %v434, 7
        %v436 = vsub.s32 4, %v435
        %v437 = vrot.slane %v249, %v436
        %v438 = vmul.f32 %v416, %v433
        %v439 = vmul.f32 %v416, %v437
        %v440 = vmul.f32 %v420, %v433
        %v441 = vmul.f32 %v420, %v437
        %v442 = vmul.f32 %v424, %v433
        %v443 = vmul.f32 %v424, %v437
        %v444 = vmul.f32 %v428, %v433
        %v445 = vmul.f32 %v428, %v437
        %v446 = vadd.f32 %v406, %v438
        %v447 = vadd.f32 %v407, %v439
        %v448 = vadd.f32 %v408, %v440
        %v449 = vadd.f32 %v409, %v441
        %v450 = vadd.f32 %v410, %v442
        %v451 = vadd.f32 %v411, %v443
        %v452 = vadd.f32 %v412, %v444
        %v453 = vadd.f32 %v413, %v445
        %455 = vset.pattern.permute.xlu0 0
        %456 = vperm.xlu0 %455, %v244
        %v457 = vpop.permute.xlu0 %456
        %460 = vset.pattern.permute.xlu0 0
        %461 = vperm.xlu0 %460, %v245
        %v462 = vpop.permute.xlu0 %461
        %465 = vset.pattern.permute.xlu0 0
        %466 = vperm.xlu0 %465, %v246
        %v467 = vpop.permute.xlu0 %466
        %470 = vset.pattern.permute.xlu0 0
        %471 = vperm.xlu0 %470, %v247
        %v472 = vpop.permute.xlu0 %471
        %v474 = vadd.f32 %v446, %v457
        %v475 = vadd.f32 %v447, %v457
        %v476 = vadd.f32 %v448, %v462
        %v477 = vadd.f32 %v449, %v462
        %v478 = vadd.f32 %v450, %v467
        %v479 = vadd.f32 %v451, %v467
        %v480 = vadd.f32 %v452, %v472
        %v481 = vadd.f32 %v453, %v472
        %v482 = vmax.f32 %v474, 0.0
        %v483 = vmax.f32 %v475, 0.0
        %v484 = vmax.f32 %v476, 0.0
        %v485 = vmax.f32 %v477, 0.0
        %v486 = vmax.f32 %v478, 0.0
        %v487 = vmax.f32 %v479, 0.0
        %v488 = vmax.f32 %v480, 0.0
        %v489 = vmax.f32 %v481, 0.0
        %s490 = scalar_lea.vmem %s234, 16
        %v491 = vld [vmem:[%s490] sm:$0x1f]
        %v492 = vld [vmem:[%s490 + $0x8] sm:$0x1f]
        %v493 = vlaneseq
        %v494 = vshrl.u32 %v493, 7
        %v495 = vsub.s32 0, %v494
        %v496 = vrot.slane %v491, %v495
        %v497 = vlaneseq
        %v498 = vshrl.u32 %v497, 7
        %v499 = vsub.s32 0, %v498
        %v500 = vrot.slane %v492, %v499
        %v501 = vmul.f32 %v253, %v496
        %v502 = vmul.f32 %v253, %v500
        %v503 = vmul.f32 %v258, %v496
        %v504 = vmul.f32 %v258, %v500
        %v505 = vmul.f32 %v263, %v496
        %v506 = vmul.f32 %v263, %v500
        %v507 = vmul.f32 %v268, %v496
        %v508 = vmul.f32 %v268, %v500
        %v509 = vadd.f32 %v501, 0.0
        %v510 = vadd.f32 %v502, 0.0
        %v511 = vadd.f32 %v503, 0.0
        %v512 = vadd.f32 %v504, 0.0
        %v513 = vadd.f32 %v505, 0.0
        %v514 = vadd.f32 %v506, 0.0
        %v515 = vadd.f32 %v507, 0.0
        %v516 = vadd.f32 %v508, 0.0
        %v517 = vlaneseq
        %v518 = vshrl.u32 %v517, 7
        %v519 = vsub.s32 1, %v518
        %v520 = vrot.slane %v491, %v519
        %v521 = vlaneseq
        %v522 = vshrl.u32 %v521, 7
        %v523 = vsub.s32 1, %v522
        %v524 = vrot.slane %v492, %v523
        %v525 = vmul.f32 %v296, %v520
        %v526 = vmul.f32 %v296, %v524
        %v527 = vmul.f32 %v300, %v520
        %v528 = vmul.f32 %v300, %v524
        %v529 = vmul.f32 %v304, %v520
        %v530 = vmul.f32 %v304, %v524
        %v531 = vmul.f32 %v308, %v520
        %v532 = vmul.f32 %v308, %v524
        %v533 = vadd.f32 %v509, %v525
        %v534 = vadd.f32 %v510, %v526
        %v535 = vadd.f32 %v511, %v527
        %v536 = vadd.f32 %v512, %v528
        %v537 = vadd.f32 %v513, %v529
        %v538 = vadd.f32 %v514, %v530
        %v539 = vadd.f32 %v515, %v531
        %v540 = vadd.f32 %v516, %v532
        %v541 = vlaneseq
        %v542 = vshrl.u32 %v541, 7
        %v543 = vsub.s32 2, %v542
        %v544 = vrot.slane %v491, %v543
        %v545 = vlaneseq
        %v546 = vshrl.u32 %v545, 7
        %v547 = vsub.s32 2, %v546
        %v548 = vrot.slane %v492, %v547
        %v549 = vmul.f32 %v336, %v544
        %v550 = vmul.f32 %v336, %v548
        %v551 = vmul.f32 %v340, %v544
        %v552 = vmul.f32 %v340, %v548
        %v553 = vmul.f32 %v344, %v544
        %v554 = vmul.f32 %v344, %v548
        %v555 = vmul.f32 %v348, %v544
        %v556 = vmul.f32 %v348, %v548
        %v557 = vadd.f32 %v533, %v549
        %v558 = vadd.f32 %v534, %v550
        %v559 = vadd.f32 %v535, %v551
        %v560 = vadd.f32 %v536, %v552
        %v561 = vadd.f32 %v537, %v553
        %v562 = vadd.f32 %v538, %v554
        %v563 = vadd.f32 %v539, %v555
        %v564 = vadd.f32 %v540, %v556
        %v565 = vlaneseq
        %v566 = vshrl.u32 %v565, 7
        %v567 = vsub.s32 3, %v566
        %v568 = vrot.slane %v491, %v567
        %v569 = vlaneseq
        %v570 = vshrl.u32 %v569, 7
        %v571 = vsub.s32 3, %v570
        %v572 = vrot.slane %v492, %v571
        %v573 = vmul.f32 %v376, %v568
        %v574 = vmul.f32 %v376, %v572
        %v575 = vmul.f32 %v380, %v568
        %v576 = vmul.f32 %v380, %v572
        %v577 = vmul.f32 %v384, %v568
        %v578 = vmul.f32 %v384, %v572
        %v579 = vmul.f32 %v388, %v568
        %v580 = vmul.f32 %v388, %v572
        %v581 = vadd.f32 %v557, %v573
        %v582 = vadd.f32 %v558, %v574
        %v583 = vadd.f32 %v559, %v575
        %v584 = vadd.f32 %v560, %v576
        %v585 = vadd.f32 %v561, %v577
        %v586 = vadd.f32 %v562, %v578
        %v587 = vadd.f32 %v563, %v579
        %v588 = vadd.f32 %v564, %v580
        %v589 = vlaneseq
        %v590 = vshrl.u32 %v589, 7
        %v591 = vsub.s32 4, %v590
        %v592 = vrot.slane %v491, %v591
        %v593 = vlaneseq
        %v594 = vshrl.u32 %v593, 7
        %v595 = vsub.s32 4, %v594
        %v596 = vrot.slane %v492, %v595
        %v597 = vmul.f32 %v416, %v592
        %v598 = vmul.f32 %v416, %v596
        %v599 = vmul.f32 %v420, %v592
        %v600 = vmul.f32 %v420, %v596
        %v601 = vmul.f32 %v424, %v592
        %v602 = vmul.f32 %v424, %v596
        %v603 = vmul.f32 %v428, %v592
        %v604 = vmul.f32 %v428, %v596
        %v605 = vadd.f32 %v581, %v597
        %v606 = vadd.f32 %v582, %v598
        %v607 = vadd.f32 %v583, %v599
        %v608 = vadd.f32 %v584, %v600
        %v609 = vadd.f32 %v585, %v601
        %v610 = vadd.f32 %v586, %v602
        %v611 = vadd.f32 %v587, %v603
        %v612 = vadd.f32 %v588, %v604
        %v613 = vadd.f32 %v605, %v457
        %v614 = vadd.f32 %v606, %v457
        %v615 = vadd.f32 %v607, %v462
        %v616 = vadd.f32 %v608, %v462
        %v617 = vadd.f32 %v609, %v467
        %v618 = vadd.f32 %v610, %v467
        %v619 = vadd.f32 %v611, %v472
        %v620 = vadd.f32 %v612, %v472
        %v621 = vmax.f32 %v613, 0.0
        %v622 = vmax.f32 %v614, 0.0
        %v623 = vmax.f32 %v615, 0.0
        %v624 = vmax.f32 %v616, 0.0
        %v625 = vmax.f32 %v617, 0.0
        %v626 = vmax.f32 %v618, 0.0
        %v627 = vmax.f32 %v619, 0.0
        %v628 = vmax.f32 %v620, 0.0
        %s629 = scalar_lea.vmem %s234, 32
        %v630 = vld [vmem:[%s629] sm:$0x1f]
        %v631 = vld [vmem:[%s629 + $0x8] sm:$0x1f]
        %v632 = vlaneseq
        %v633 = vshrl.u32 %v632, 7
        %v634 = vsub.s32 0, %v633
        %v635 = vrot.slane %v630, %v634
        %v636 = vlaneseq
        %v637 = vshrl.u32 %v636, 7
        %v638 = vsub.s32 0, %v637
        %v639 = vrot.slane %v631, %v638
        %v640 = vmul.f32 %v253, %v635
        %v641 = vmul.f32 %v253, %v639
        %v642 = vmul.f32 %v258, %v635
        %v643 = vmul.f32 %v258, %v639
        %v644 = vmul.f32 %v263, %v635
        %v645 = vmul.f32 %v263, %v639
        %v646 = vmul.f32 %v268, %v635
        %v647 = vmul.f32 %v268, %v639
        %v648 = vadd.f32 %v640, 0.0
        %v649 = vadd.f32 %v641, 0.0
        %v650 = vadd.f32 %v642, 0.0
        %v651 = vadd.f32 %v643, 0.0
        %v652 = vadd.f32 %v644, 0.0
        %v653 = vadd.f32 %v645, 0.0
        %v654 = vadd.f32 %v646, 0.0
        %v655 = vadd.f32 %v647, 0.0
        %v656 = vlaneseq
        %v657 = vshrl.u32 %v656, 7
        %v658 = vsub.s32 1, %v657
        %v659 = vrot.slane %v630, %v658
        %v660 = vlaneseq
        %v661 = vshrl.u32 %v660, 7
        %v662 = vsub.s32 1, %v661
        %v663 = vrot.slane %v631, %v662
        %v664 = vmul.f32 %v296, %v659
        %v665 = vmul.f32 %v296, %v663
        %v666 = vmul.f32 %v300, %v659
        %v667 = vmul.f32 %v300, %v663
        %v668 = vmul.f32 %v304, %v659
        %v669 = vmul.f32 %v304, %v663
        %v670 = vmul.f32 %v308, %v659
        %v671 = vmul.f32 %v308, %v663
        %v672 = vadd.f32 %v648, %v664
        %v673 = vadd.f32 %v649, %v665
        %v674 = vadd.f32 %v650, %v666
        %v675 = vadd.f32 %v651, %v667
        %v676 = vadd.f32 %v652, %v668
        %v677 = vadd.f32 %v653, %v669
        %v678 = vadd.f32 %v654, %v670
        %v679 = vadd.f32 %v655, %v671
        %v680 = vlaneseq
        %v681 = vshrl.u32 %v680, 7
        %v682 = vsub.s32 2, %v681
        %v683 = vrot.slane %v630, %v682
        %v684 = vlaneseq
        %v685 = vshrl.u32 %v684, 7
        %v686 = vsub.s32 2, %v685
        %v687 = vrot.slane %v631, %v686
        %v688 = vmul.f32 %v336, %v683
        %v689 = vmul.f32 %v336, %v687
        %v690 = vmul.f32 %v340, %v683
        %v691 = vmul.f32 %v340, %v687
        %v692 = vmul.f32 %v344, %v683
        %v693 = vmul.f32 %v344, %v687
        %v694 = vmul.f32 %v348, %v683
        %v695 = vmul.f32 %v348, %v687
        %v696 = vadd.f32 %v672, %v688
        %v697 = vadd.f32 %v673, %v689
        %v698 = vadd.f32 %v674, %v690
        %v699 = vadd.f32 %v675, %v691
        %v700 = vadd.f32 %v676, %v692
        %v701 = vadd.f32 %v677, %v693
        %v702 = vadd.f32 %v678, %v694
        %v703 = vadd.f32 %v679, %v695
        %v704 = vlaneseq
        %v705 = vshrl.u32 %v704, 7
        %v706 = vsub.s32 3, %v705
        %v707 = vrot.slane %v630, %v706
        %v708 = vlaneseq
        %v709 = vshrl.u32 %v708, 7
        %v710 = vsub.s32 3, %v709
        %v711 = vrot.slane %v631, %v710
        %v712 = vmul.f32 %v376, %v707
        %v713 = vmul.f32 %v376, %v711
        %v714 = vmul.f32 %v380, %v707
        %v715 = vmul.f32 %v380, %v711
        %v716 = vmul.f32 %v384, %v707
        %v717 = vmul.f32 %v384, %v711
        %v718 = vmul.f32 %v388, %v707
        %v719 = vmul.f32 %v388, %v711
        %v720 = vadd.f32 %v696, %v712
        %v721 = vadd.f32 %v697, %v713
        %v722 = vadd.f32 %v698, %v714
        %v723 = vadd.f32 %v699, %v715
        %v724 = vadd.f32 %v700, %v716
        %v725 = vadd.f32 %v701, %v717
        %v726 = vadd.f32 %v702, %v718
        %v727 = vadd.f32 %v703, %v719
        %v728 = vlaneseq
        %v729 = vshrl.u32 %v728, 7
        %v730 = vsub.s32 4, %v729
        %v731 = vrot.slane %v630, %v730
        %v732 = vlaneseq
        %v733 = vshrl.u32 %v732, 7
        %v734 = vsub.s32 4, %v733
        %v735 = vrot.slane %v631, %v734
        %v736 = vmul.f32 %v416, %v731
        %v737 = vmul.f32 %v416, %v735
        %v738 = vmul.f32 %v420, %v731
        %v739 = vmul.f32 %v420, %v735
        %v740 = vmul.f32 %v424, %v731
        %v741 = vmul.f32 %v424, %v735
        %v742 = vmul.f32 %v428, %v731
        %v743 = vmul.f32 %v428, %v735
        %v744 = vadd.f32 %v720, %v736
        %v745 = vadd.f32 %v721, %v737
        %v746 = vadd.f32 %v722, %v738
        %v747 = vadd.f32 %v723, %v739
        %v748 = vadd.f32 %v724, %v740
        %v749 = vadd.f32 %v725, %v741
        %v750 = vadd.f32 %v726, %v742
        %v751 = vadd.f32 %v727, %v743
        %v752 = vadd.f32 %v744, %v457
        %v753 = vadd.f32 %v745, %v457
        %v754 = vadd.f32 %v746, %v462
        %v755 = vadd.f32 %v747, %v462
        %v756 = vadd.f32 %v748, %v467
        %v757 = vadd.f32 %v749, %v467
        %v758 = vadd.f32 %v750, %v472
        %v759 = vadd.f32 %v751, %v472
        %v760 = vmax.f32 %v752, 0.0
        %v761 = vmax.f32 %v753, 0.0
        %v762 = vmax.f32 %v754, 0.0
        %v763 = vmax.f32 %v755, 0.0
        %v764 = vmax.f32 %v756, 0.0
        %v765 = vmax.f32 %v757, 0.0
        %v766 = vmax.f32 %v758, 0.0
        %v767 = vmax.f32 %v759, 0.0
        %s768 = scalar_lea.vmem %s234, 48
        %v769 = vld [vmem:[%s768] sm:$0x1f]
        %v770 = vld [vmem:[%s768 + $0x8] sm:$0x1f]
        %v771 = vlaneseq
        %v772 = vshrl.u32 %v771, 7
        %v773 = vsub.s32 0, %v772
        %v774 = vrot.slane %v769, %v773
        %v775 = vlaneseq
        %v776 = vshrl.u32 %v775, 7
        %v777 = vsub.s32 0, %v776
        %v778 = vrot.slane %v770, %v777
        %v779 = vmul.f32 %v253, %v774
        %v780 = vmul.f32 %v253, %v778
        %v781 = vmul.f32 %v258, %v774
        %v782 = vmul.f32 %v258, %v778
        %v783 = vmul.f32 %v263, %v774
        %v784 = vmul.f32 %v263, %v778
        %v785 = vmul.f32 %v268, %v774
        %v786 = vmul.f32 %v268, %v778
        %v787 = vadd.f32 %v779, 0.0
        %v788 = vadd.f32 %v780, 0.0
        %v789 = vadd.f32 %v781, 0.0
        %v790 = vadd.f32 %v782, 0.0
        %v791 = vadd.f32 %v783, 0.0
        %v792 = vadd.f32 %v784, 0.0
        %v793 = vadd.f32 %v785, 0.0
        %v794 = vadd.f32 %v786, 0.0
        %v795 = vlaneseq
        %v796 = vshrl.u32 %v795, 7
        %v797 = vsub.s32 1, %v796
        %v798 = vrot.slane %v769, %v797
        %v799 = vlaneseq
        %v800 = vshrl.u32 %v799, 7
        %v801 = vsub.s32 1, %v800
        %v802 = vrot.slane %v770, %v801
        %v803 = vmul.f32 %v296, %v798
        %v804 = vmul.f32 %v296, %v802
        %v805 = vmul.f32 %v300, %v798
        %v806 = vmul.f32 %v300, %v802
        %v807 = vmul.f32 %v304, %v798
        %v808 = vmul.f32 %v304, %v802
        %v809 = vmul.f32 %v308, %v798
        %v810 = vmul.f32 %v308, %v802
        %v811 = vadd.f32 %v787, %v803
        %v812 = vadd.f32 %v788, %v804
        %v813 = vadd.f32 %v789, %v805
        %v814 = vadd.f32 %v790, %v806
        %v815 = vadd.f32 %v791, %v807
        %v816 = vadd.f32 %v792, %v808
        %v817 = vadd.f32 %v793, %v809
        %v818 = vadd.f32 %v794, %v810
        %v819 = vlaneseq
        %v820 = vshrl.u32 %v819, 7
        %v821 = vsub.s32 2, %v820
        %v822 = vrot.slane %v769, %v821
        %v823 = vlaneseq
        %v824 = vshrl.u32 %v823, 7
        %v825 = vsub.s32 2, %v824
        %v826 = vrot.slane %v770, %v825
        %v827 = vmul.f32 %v336, %v822
        %v828 = vmul.f32 %v336, %v826
        %v829 = vmul.f32 %v340, %v822
        %v830 = vmul.f32 %v340, %v826
        %v831 = vmul.f32 %v344, %v822
        %v832 = vmul.f32 %v344, %v826
        %v833 = vmul.f32 %v348, %v822
        %v834 = vmul.f32 %v348, %v826
        %v835 = vadd.f32 %v811, %v827
        %v836 = vadd.f32 %v812, %v828
        %v837 = vadd.f32 %v813, %v829
        %v838 = vadd.f32 %v814, %v830
        %v839 = vadd.f32 %v815, %v831
        %v840 = vadd.f32 %v816, %v832
        %v841 = vadd.f32 %v817, %v833
        %v842 = vadd.f32 %v818, %v834
        %v843 = vlaneseq
        %v844 = vshrl.u32 %v843, 7
        %v845 = vsub.s32 3, %v844
        %v846 = vrot.slane %v769, %v845
        %v847 = vlaneseq
        %v848 = vshrl.u32 %v847, 7
        %v849 = vsub.s32 3, %v848
        %v850 = vrot.slane %v770, %v849
        %v851 = vmul.f32 %v376, %v846
        %v852 = vmul.f32 %v376, %v850
        %v853 = vmul.f32 %v380, %v846
        %v854 = vmul.f32 %v380, %v850
        %v855 = vmul.f32 %v384, %v846
        %v856 = vmul.f32 %v384, %v850
        %v857 = vmul.f32 %v388, %v846
        %v858 = vmul.f32 %v388, %v850
        %v859 = vadd.f32 %v835, %v851
        %v860 = vadd.f32 %v836, %v852
        %v861 = vadd.f32 %v837, %v853
        %v862 = vadd.f32 %v838, %v854
        %v863 = vadd.f32 %v839, %v855
        %v864 = vadd.f32 %v840, %v856
        %v865 = vadd.f32 %v841, %v857
        %v866 = vadd.f32 %v842, %v858
        %v867 = vlaneseq
        %v868 = vshrl.u32 %v867, 7
        %v869 = vsub.s32 4, %v868
        %v870 = vrot.slane %v769, %v869
        %v871 = vlaneseq
        %v872 = vshrl.u32 %v871, 7
        %v873 = vsub.s32 4, %v872
        %v874 = vrot.slane %v770, %v873
        %v875 = vmul.f32 %v416, %v870
        %v876 = vmul.f32 %v416, %v874
        %v877 = vmul.f32 %v420, %v870
        %v878 = vmul.f32 %v420, %v874
        %v879 = vmul.f32 %v424, %v870
        %v880 = vmul.f32 %v424, %v874
        %v881 = vmul.f32 %v428, %v870
        %v882 = vmul.f32 %v428, %v874
        %v883 = vadd.f32 %v859, %v875
        %v884 = vadd.f32 %v860, %v876
        %v885 = vadd.f32 %v861, %v877
        %v886 = vadd.f32 %v862, %v878
        %v887 = vadd.f32 %v863, %v879
        %v888 = vadd.f32 %v864, %v880
        %v889 = vadd.f32 %v865, %v881
        %v890 = vadd.f32 %v866, %v882
        %v891 = vadd.f32 %v883, %v457
        %v892 = vadd.f32 %v884, %v457
        %v893 = vadd.f32 %v885, %v462
        %v894 = vadd.f32 %v886, %v462
        %v895 = vadd.f32 %v887, %v467
        %v896 = vadd.f32 %v888, %v467
        %v897 = vadd.f32 %v889, %v472
        %v898 = vadd.f32 %v890, %v472
        %v899 = vmax.f32 %v891, 0.0
        %v900 = vmax.f32 %v892, 0.0
        %v901 = vmax.f32 %v893, 0.0
        %v902 = vmax.f32 %v894, 0.0
        %v903 = vmax.f32 %v895, 0.0
        %v904 = vmax.f32 %v896, 0.0
        %v905 = vmax.f32 %v897, 0.0
        %v906 = vmax.f32 %v898, 0.0
        %v907 = vmax.f32 %v482, %v621
        %v908 = vmax.f32 %v483, %v622
        %v909 = vmax.f32 %v484, %v623
        %v910 = vmax.f32 %v485, %v624
        %v911 = vmax.f32 %v486, %v625
        %v912 = vmax.f32 %v487, %v626
        %v913 = vmax.f32 %v488, %v627
        %v914 = vmax.f32 %v489, %v628
        %v915 = vmax.f32 %v760, %v899
        %v916 = vmax.f32 %v761, %v900
        %v917 = vmax.f32 %v762, %v901
        %v918 = vmax.f32 %v763, %v902
        %v919 = vmax.f32 %v764, %v903
        %v920 = vmax.f32 %v765, %v904
        %v921 = vmax.f32 %v766, %v905
        %v922 = vmax.f32 %v767, %v906
        %v923 = vlaneseq
        %v924 = vshrl.u32 %v923, 7
        %v925 = vadd.s32 %v924, 8
        %v926 = vadd.s32 %v924, 16
        %v927 = vadd.s32 %v924, 24
        %v928 = vadd.s32 %v924, 32
        %v929 = vadd.s32 %v924, 40
        %v930 = vadd.s32 %v924, 48
        %v931 = vadd.s32 %v924, 56
        %v932 = vadd.s32 %v924, 64
        %v933 = vadd.s32 %v924, 72
        %v934 = vadd.s32 %v924, 80
        %v935 = vadd.s32 %v924, 88
        %v936 = vadd.s32 %v924, 96
        %v937 = vadd.s32 %v924, 104
        %v938 = vadd.s32 %v924, 112
        %v939 = vadd.s32 %v924, 120
        %v940 = vadd.s32 %v924, 128
        %v941 = vadd.s32 %v924, 136
        %v942 = vadd.s32 %v924, 144
        %v943 = vadd.s32 %v924, 152
        %v944 = vadd.s32 %v924, 160
        %v945 = vadd.s32 %v924, 168
        %v946 = vadd.s32 %v924, 176
        %v947 = vadd.s32 %v924, 184
        %v948 = vadd.s32 %v924, 192
        %v949 = vadd.s32 %v924, 200
        %v950 = vadd.s32 %v924, 208
        %v951 = vadd.s32 %v924, 216
        %v952 = vadd.s32 %v924, 224
        %v953 = vadd.s32 %v924, 232
        %v954 = vadd.s32 %v924, 240
        %v955 = vadd.s32 %v924, 248
        %v956 = vlaneseq
        %v957 = vand.u32 %v956, 127
        %v958 = vadd.s32 %v957, 128
        %v959 = vsub.s32 %v957, 1
        %v960 = vsub.s32 %v958, 1
        %vm961 = vcmp.eq.s32.totalorder %v924, %v959
        %vm962 = vcmp.eq.s32.totalorder %v924, %v960
        %vm963 = vcmp.eq.s32.totalorder %v925, %v959
        %vm964 = vcmp.eq.s32.totalorder %v925, %v960
        %vm965 = vcmp.eq.s32.totalorder %v926, %v959
        %vm966 = vcmp.eq.s32.totalorder %v926, %v960
        %vm967 = vcmp.eq.s32.totalorder %v927, %v959
        %vm968 = vcmp.eq.s32.totalorder %v927, %v960
        %vm969 = vcmp.eq.s32.totalorder %v928, %v959
        %vm970 = vcmp.eq.s32.totalorder %v928, %v960
        %vm971 = vcmp.eq.s32.totalorder %v929, %v959
        %vm972 = vcmp.eq.s32.totalorder %v929, %v960
        %vm973 = vcmp.eq.s32.totalorder %v930, %v959
        %vm974 = vcmp.eq.s32.totalorder %v930, %v960
        %vm975 = vcmp.eq.s32.totalorder %v931, %v959
        %vm976 = vcmp.eq.s32.totalorder %v931, %v960
        %vm977 = vcmp.eq.s32.totalorder %v932, %v959
        %vm978 = vcmp.eq.s32.totalorder %v932, %v960
        %vm979 = vcmp.eq.s32.totalorder %v933, %v959
        %vm980 = vcmp.eq.s32.totalorder %v933, %v960
        %vm981 = vcmp.eq.s32.totalorder %v934, %v959
        %vm982 = vcmp.eq.s32.totalorder %v934, %v960
        %vm983 = vcmp.eq.s32.totalorder %v935, %v959
        %vm984 = vcmp.eq.s32.totalorder %v935, %v960
        %vm985 = vcmp.eq.s32.totalorder %v936, %v959
        %vm986 = vcmp.eq.s32.totalorder %v936, %v960
        %vm987 = vcmp.eq.s32.totalorder %v937, %v959
        %vm988 = vcmp.eq.s32.totalorder %v937, %v960
        %vm989 = vcmp.eq.s32.totalorder %v938, %v959
        %vm990 = vcmp.eq.s32.totalorder %v938, %v960
        %vm991 = vcmp.eq.s32.totalorder %v939, %v959
        %vm992 = vcmp.eq.s32.totalorder %v939, %v960
        %vm993 = vcmp.eq.s32.totalorder %v940, %v959
        %vm994 = vcmp.eq.s32.totalorder %v940, %v960
        %vm995 = vcmp.eq.s32.totalorder %v941, %v959
        %vm996 = vcmp.eq.s32.totalorder %v941, %v960
        %vm997 = vcmp.eq.s32.totalorder %v942, %v959
        %vm998 = vcmp.eq.s32.totalorder %v942, %v960
        %vm999 = vcmp.eq.s32.totalorder %v943, %v959
        %vm1000 = vcmp.eq.s32.totalorder %v943, %v960
        %vm1001 = vcmp.eq.s32.totalorder %v944, %v959
        %vm1002 = vcmp.eq.s32.totalorder %v944, %v960
        %vm1003 = vcmp.eq.s32.totalorder %v945, %v959
        %vm1004 = vcmp.eq.s32.totalorder %v945, %v960
        %vm1005 = vcmp.eq.s32.totalorder %v946, %v959
        %vm1006 = vcmp.eq.s32.totalorder %v946, %v960
        %vm1007 = vcmp.eq.s32.totalorder %v947, %v959
        %vm1008 = vcmp.eq.s32.totalorder %v947, %v960
        %vm1009 = vcmp.eq.s32.totalorder %v948, %v959
        %vm1010 = vcmp.eq.s32.totalorder %v948, %v960
        %vm1011 = vcmp.eq.s32.totalorder %v949, %v959
        %vm1012 = vcmp.eq.s32.totalorder %v949, %v960
        %vm1013 = vcmp.eq.s32.totalorder %v950, %v959
        %vm1014 = vcmp.eq.s32.totalorder %v950, %v960
        %vm1015 = vcmp.eq.s32.totalorder %v951, %v959
        %vm1016 = vcmp.eq.s32.totalorder %v951, %v960
        %vm1017 = vcmp.eq.s32.totalorder %v952, %v959
        %vm1018 = vcmp.eq.s32.totalorder %v952, %v960
        %vm1019 = vcmp.eq.s32.totalorder %v953, %v959
        %vm1020 = vcmp.eq.s32.totalorder %v953, %v960
        %vm1021 = vcmp.eq.s32.totalorder %v954, %v959
        %vm1022 = vcmp.eq.s32.totalorder %v954, %v960
        %vm1023 = vcmp.eq.s32.totalorder %v955, %v959
        %vm1024 = vcmp.eq.s32.totalorder %v955, %v960
        %v1025 = vsel %vm961, 1, 0
        %v1026 = vsel %vm962, 1, 0
        %v1027 = vsel %vm963, 1, 0
        %v1028 = vsel %vm964, 1, 0
        %v1029 = vsel %vm965, 1, 0
        %v1030 = vsel %vm966, 1, 0
        %v1031 = vsel %vm967, 1, 0
        %v1032 = vsel %vm968, 1, 0
        %v1033 = vsel %vm969, 1, 0
        %v1034 = vsel %vm970, 1, 0
        %v1035 = vsel %vm971, 1, 0
        %v1036 = vsel %vm972, 1, 0
        %v1037 = vsel %vm973, 1, 0
        %v1038 = vsel %vm974, 1, 0
        %v1039 = vsel %vm975, 1, 0
        %v1040 = vsel %vm976, 1, 0
        %v1041 = vsel %vm977, 1, 0
        %v1042 = vsel %vm978, 1, 0
        %v1043 = vsel %vm979, 1, 0
        %v1044 = vsel %vm980, 1, 0
        %v1045 = vsel %vm981, 1, 0
        %v1046 = vsel %vm982, 1, 0
        %v1047 = vsel %vm983, 1, 0
        %v1048 = vsel %vm984, 1, 0
        %v1049 = vsel %vm985, 1, 0
        %v1050 = vsel %vm986, 1, 0
        %v1051 = vsel %vm987, 1, 0
        %v1052 = vsel %vm988, 1, 0
        %v1053 = vsel %vm989, 1, 0
        %v1054 = vsel %vm990, 1, 0
        %v1055 = vsel %vm991, 1, 0
        %v1056 = vsel %vm992, 1, 0
        %v1057 = vsel %vm993, 1, 0
        %v1058 = vsel %vm994, 1, 0
        %v1059 = vsel %vm995, 1, 0
        %v1060 = vsel %vm996, 1, 0
        %v1061 = vsel %vm997, 1, 0
        %v1062 = vsel %vm998, 1, 0
        %v1063 = vsel %vm999, 1, 0
        %v1064 = vsel %vm1000, 1, 0
        %v1065 = vsel %vm1001, 1, 0
        %v1066 = vsel %vm1002, 1, 0
        %v1067 = vsel %vm1003, 1, 0
        %v1068 = vsel %vm1004, 1, 0
        %v1069 = vsel %vm1005, 1, 0
        %v1070 = vsel %vm1006, 1, 0
        %v1071 = vsel %vm1007, 1, 0
        %v1072 = vsel %vm1008, 1, 0
        %v1073 = vsel %vm1009, 1, 0
        %v1074 = vsel %vm1010, 1, 0
        %v1075 = vsel %vm1011, 1, 0
        %v1076 = vsel %vm1012, 1, 0
        %v1077 = vsel %vm1013, 1, 0
        %v1078 = vsel %vm1014, 1, 0
        %v1079 = vsel %vm1015, 1, 0
        %v1080 = vsel %vm1016, 1, 0
        %v1081 = vsel %vm1017, 1, 0
        %v1082 = vsel %vm1018, 1, 0
        %v1083 = vsel %vm1019, 1, 0
        %v1084 = vsel %vm1020, 1, 0
        %v1085 = vsel %vm1021, 1, 0
        %v1086 = vsel %vm1022, 1, 0
        %v1087 = vsel %vm1023, 1, 0
        %v1088 = vsel %vm1024, 1, 0
        %v1089 = vcvt.s32.f32 %v1025
        %v1090 = vcvt.s32.f32 %v1026
        %v1091 = vcvt.s32.f32 %v1027
        %v1092 = vcvt.s32.f32 %v1028
        %v1093 = vcvt.s32.f32 %v1029
        %v1094 = vcvt.s32.f32 %v1030
        %v1095 = vcvt.s32.f32 %v1031
        %v1096 = vcvt.s32.f32 %v1032
        %v1097 = vcvt.s32.f32 %v1033
        %v1098 = vcvt.s32.f32 %v1034
        %v1099 = vcvt.s32.f32 %v1035
        %v1100 = vcvt.s32.f32 %v1036
        %v1101 = vcvt.s32.f32 %v1037
        %v1102 = vcvt.s32.f32 %v1038
        %v1103 = vcvt.s32.f32 %v1039
        %v1104 = vcvt.s32.f32 %v1040
        %v1105 = vcvt.s32.f32 %v1041
        %v1106 = vcvt.s32.f32 %v1042
        %v1107 = vcvt.s32.f32 %v1043
        %v1108 = vcvt.s32.f32 %v1044
        %v1109 = vcvt.s32.f32 %v1045
        %v1110 = vcvt.s32.f32 %v1046
        %v1111 = vcvt.s32.f32 %v1047
        %v1112 = vcvt.s32.f32 %v1048
        %v1113 = vcvt.s32.f32 %v1049
        %v1114 = vcvt.s32.f32 %v1050
        %v1115 = vcvt.s32.f32 %v1051
        %v1116 = vcvt.s32.f32 %v1052
        %v1117 = vcvt.s32.f32 %v1053
        %v1118 = vcvt.s32.f32 %v1054
        %v1119 = vcvt.s32.f32 %v1055
        %v1120 = vcvt.s32.f32 %v1056
        %v1121 = vcvt.s32.f32 %v1057
        %v1122 = vcvt.s32.f32 %v1058
        %v1123 = vcvt.s32.f32 %v1059
        %v1124 = vcvt.s32.f32 %v1060
        %v1125 = vcvt.s32.f32 %v1061
        %v1126 = vcvt.s32.f32 %v1062
        %v1127 = vcvt.s32.f32 %v1063
        %v1128 = vcvt.s32.f32 %v1064
        %v1129 = vcvt.s32.f32 %v1065
        %v1130 = vcvt.s32.f32 %v1066
        %v1131 = vcvt.s32.f32 %v1067
        %v1132 = vcvt.s32.f32 %v1068
        %v1133 = vcvt.s32.f32 %v1069
        %v1134 = vcvt.s32.f32 %v1070
        %v1135 = vcvt.s32.f32 %v1071
        %v1136 = vcvt.s32.f32 %v1072
        %v1137 = vcvt.s32.f32 %v1073
        %v1138 = vcvt.s32.f32 %v1074
        %v1139 = vcvt.s32.f32 %v1075
        %v1140 = vcvt.s32.f32 %v1076
        %v1141 = vcvt.s32.f32 %v1077
        %v1142 = vcvt.s32.f32 %v1078
        %v1143 = vcvt.s32.f32 %v1079
        %v1144 = vcvt.s32.f32 %v1080
        %v1145 = vcvt.s32.f32 %v1081
        %v1146 = vcvt.s32.f32 %v1082
        %v1147 = vcvt.s32.f32 %v1083
        %v1148 = vcvt.s32.f32 %v1084
        %v1149 = vcvt.s32.f32 %v1085
        %v1150 = vcvt.s32.f32 %v1086
        %v1151 = vcvt.s32.f32 %v1087
        %v1152 = vcvt.s32.f32 %v1088
        %v1153 = vadd.s32 %v957, 1
        %v1154 = vadd.s32 %v958, 1
        %vm1155 = vcmp.eq.s32.totalorder %v924, %v1153
        %vm1156 = vcmp.eq.s32.totalorder %v924, %v1154
        %vm1157 = vcmp.eq.s32.totalorder %v925, %v1153
        %vm1158 = vcmp.eq.s32.totalorder %v925, %v1154
        %vm1159 = vcmp.eq.s32.totalorder %v926, %v1153
        %vm1160 = vcmp.eq.s32.totalorder %v926, %v1154
        %vm1161 = vcmp.eq.s32.totalorder %v927, %v1153
        %vm1162 = vcmp.eq.s32.totalorder %v927, %v1154
        %vm1163 = vcmp.eq.s32.totalorder %v928, %v1153
        %vm1164 = vcmp.eq.s32.totalorder %v928, %v1154
        %vm1165 = vcmp.eq.s32.totalorder %v929, %v1153
        %vm1166 = vcmp.eq.s32.totalorder %v929, %v1154
        %vm1167 = vcmp.eq.s32.totalorder %v930, %v1153
        %vm1168 = vcmp.eq.s32.totalorder %v930, %v1154
        %vm1169 = vcmp.eq.s32.totalorder %v931, %v1153
        %vm1170 = vcmp.eq.s32.totalorder %v931, %v1154
        %vm1171 = vcmp.eq.s32.totalorder %v932, %v1153
        %vm1172 = vcmp.eq.s32.totalorder %v932, %v1154
        %vm1173 = vcmp.eq.s32.totalorder %v933, %v1153
        %vm1174 = vcmp.eq.s32.totalorder %v933, %v1154
        %vm1175 = vcmp.eq.s32.totalorder %v934, %v1153
        %vm1176 = vcmp.eq.s32.totalorder %v934, %v1154
        %vm1177 = vcmp.eq.s32.totalorder %v935, %v1153
        %vm1178 = vcmp.eq.s32.totalorder %v935, %v1154
        %vm1179 = vcmp.eq.s32.totalorder %v936, %v1153
        %vm1180 = vcmp.eq.s32.totalorder %v936, %v1154
        %vm1181 = vcmp.eq.s32.totalorder %v937, %v1153
        %vm1182 = vcmp.eq.s32.totalorder %v937, %v1154
        %vm1183 = vcmp.eq.s32.totalorder %v938, %v1153
        %vm1184 = vcmp.eq.s32.totalorder %v938, %v1154
        %vm1185 = vcmp.eq.s32.totalorder %v939, %v1153
        %vm1186 = vcmp.eq.s32.totalorder %v939, %v1154
        %vm1187 = vcmp.eq.s32.totalorder %v940, %v1153
        %vm1188 = vcmp.eq.s32.totalorder %v940, %v1154
        %vm1189 = vcmp.eq.s32.totalorder %v941, %v1153
        %vm1190 = vcmp.eq.s32.totalorder %v941, %v1154
        %vm1191 = vcmp.eq.s32.totalorder %v942, %v1153
        %vm1192 = vcmp.eq.s32.totalorder %v942, %v1154
        %vm1193 = vcmp.eq.s32.totalorder %v943, %v1153
        %vm1194 = vcmp.eq.s32.totalorder %v943, %v1154
        %vm1195 = vcmp.eq.s32.totalorder %v944, %v1153
        %vm1196 = vcmp.eq.s32.totalorder %v944, %v1154
        %vm1197 = vcmp.eq.s32.totalorder %v945, %v1153
        %vm1198 = vcmp.eq.s32.totalorder %v945, %v1154
        %vm1199 = vcmp.eq.s32.totalorder %v946, %v1153
        %vm1200 = vcmp.eq.s32.totalorder %v946, %v1154
        %vm1201 = vcmp.eq.s32.totalorder %v947, %v1153
        %vm1202 = vcmp.eq.s32.totalorder %v947, %v1154
        %vm1203 = vcmp.eq.s32.totalorder %v948, %v1153
        %vm1204 = vcmp.eq.s32.totalorder %v948, %v1154
        %vm1205 = vcmp.eq.s32.totalorder %v949, %v1153
        %vm1206 = vcmp.eq.s32.totalorder %v949, %v1154
        %vm1207 = vcmp.eq.s32.totalorder %v950, %v1153
        %vm1208 = vcmp.eq.s32.totalorder %v950, %v1154
        %vm1209 = vcmp.eq.s32.totalorder %v951, %v1153
        %vm1210 = vcmp.eq.s32.totalorder %v951, %v1154
        %vm1211 = vcmp.eq.s32.totalorder %v952, %v1153
        %vm1212 = vcmp.eq.s32.totalorder %v952, %v1154
        %vm1213 = vcmp.eq.s32.totalorder %v953, %v1153
        %vm1214 = vcmp.eq.s32.totalorder %v953, %v1154
        %vm1215 = vcmp.eq.s32.totalorder %v954, %v1153
        %vm1216 = vcmp.eq.s32.totalorder %v954, %v1154
        %vm1217 = vcmp.eq.s32.totalorder %v955, %v1153
        %vm1218 = vcmp.eq.s32.totalorder %v955, %v1154
        %v1219 = vsel %vm1155, 1, 0
        %v1220 = vsel %vm1156, 1, 0
        %v1221 = vsel %vm1157, 1, 0
        %v1222 = vsel %vm1158, 1, 0
        %v1223 = vsel %vm1159, 1, 0
        %v1224 = vsel %vm1160, 1, 0
        %v1225 = vsel %vm1161, 1, 0
        %v1226 = vsel %vm1162, 1, 0
        %v1227 = vsel %vm1163, 1, 0
        %v1228 = vsel %vm1164, 1, 0
        %v1229 = vsel %vm1165, 1, 0
        %v1230 = vsel %vm1166, 1, 0
        %v1231 = vsel %vm1167, 1, 0
        %v1232 = vsel %vm1168, 1, 0
        %v1233 = vsel %vm1169, 1, 0
        %v1234 = vsel %vm1170, 1, 0
        %v1235 = vsel %vm1171, 1, 0
        %v1236 = vsel %vm1172, 1, 0
        %v1237 = vsel %vm1173, 1, 0
        %v1238 = vsel %vm1174, 1, 0
        %v1239 = vsel %vm1175, 1, 0
        %v1240 = vsel %vm1176, 1, 0
        %v1241 = vsel %vm1177, 1, 0
        %v1242 = vsel %vm1178, 1, 0
        %v1243 = vsel %vm1179, 1, 0
        %v1244 = vsel %vm1180, 1, 0
        %v1245 = vsel %vm1181, 1, 0
        %v1246 = vsel %vm1182, 1, 0
        %v1247 = vsel %vm1183, 1, 0
        %v1248 = vsel %vm1184, 1, 0
        %v1249 = vsel %vm1185, 1, 0
        %v1250 = vsel %vm1186, 1, 0
        %v1251 = vsel %vm1187, 1, 0
        %v1252 = vsel %vm1188, 1, 0
        %v1253 = vsel %vm1189, 1, 0
        %v1254 = vsel %vm1190, 1, 0
        %v1255 = vsel %vm1191, 1, 0
        %v1256 = vsel %vm1192, 1, 0
        %v1257 = vsel %vm1193, 1, 0
        %v1258 = vsel %vm1194, 1, 0
        %v1259 = vsel %vm1195, 1, 0
        %v1260 = vsel %vm1196, 1, 0
        %v1261 = vsel %vm1197, 1, 0
        %v1262 = vsel %vm1198, 1, 0
        %v1263 = vsel %vm1199, 1, 0
        %v1264 = vsel %vm1200, 1, 0
        %v1265 = vsel %vm1201, 1, 0
        %v1266 = vsel %vm1202, 1, 0
        %v1267 = vsel %vm1203, 1, 0
        %v1268 = vsel %vm1204, 1, 0
        %v1269 = vsel %vm1205, 1, 0
        %v1270 = vsel %vm1206, 1, 0
        %v1271 = vsel %vm1207, 1, 0
        %v1272 = vsel %vm1208, 1, 0
        %v1273 = vsel %vm1209, 1, 0
        %v1274 = vsel %vm1210, 1, 0
        %v1275 = vsel %vm1211, 1, 0
        %v1276 = vsel %vm1212, 1, 0
        %v1277 = vsel %vm1213, 1, 0
        %v1278 = vsel %vm1214, 1, 0
        %v1279 = vsel %vm1215, 1, 0
        %v1280 = vsel %vm1216, 1, 0
        %v1281 = vsel %vm1217, 1, 0
        %v1282 = vsel %vm1218, 1, 0
        %v1283 = vcvt.s32.f32 %v1219
        %v1284 = vcvt.s32.f32 %v1220
        %v1285 = vcvt.s32.f32 %v1221
        %v1286 = vcvt.s32.f32 %v1222
        %v1287 = vcvt.s32.f32 %v1223
        %v1288 = vcvt.s32.f32 %v1224
        %v1289 = vcvt.s32.f32 %v1225
        %v1290 = vcvt.s32.f32 %v1226
        %v1291 = vcvt.s32.f32 %v1227
        %v1292 = vcvt.s32.f32 %v1228
        %v1293 = vcvt.s32.f32 %v1229
        %v1294 = vcvt.s32.f32 %v1230
        %v1295 = vcvt.s32.f32 %v1231
        %v1296 = vcvt.s32.f32 %v1232
        %v1297 = vcvt.s32.f32 %v1233
        %v1298 = vcvt.s32.f32 %v1234
        %v1299 = vcvt.s32.f32 %v1235
        %v1300 = vcvt.s32.f32 %v1236
        %v1301 = vcvt.s32.f32 %v1237
        %v1302 = vcvt.s32.f32 %v1238
        %v1303 = vcvt.s32.f32 %v1239
        %v1304 = vcvt.s32.f32 %v1240
        %v1305 = vcvt.s32.f32 %v1241
        %v1306 = vcvt.s32.f32 %v1242
        %v1307 = vcvt.s32.f32 %v1243
        %v1308 = vcvt.s32.f32 %v1244
        %v1309 = vcvt.s32.f32 %v1245
        %v1310 = vcvt.s32.f32 %v1246
        %v1311 = vcvt.s32.f32 %v1247
        %v1312 = vcvt.s32.f32 %v1248
        %v1313 = vcvt.s32.f32 %v1249
        %v1314 = vcvt.s32.f32 %v1250
        %v1315 = vcvt.s32.f32 %v1251
        %v1316 = vcvt.s32.f32 %v1252
        %v1317 = vcvt.s32.f32 %v1253
        %v1318 = vcvt.s32.f32 %v1254
        %v1319 = vcvt.s32.f32 %v1255
        %v1320 = vcvt.s32.f32 %v1256
        %v1321 = vcvt.s32.f32 %v1257
        %v1322 = vcvt.s32.f32 %v1258
        %v1323 = vcvt.s32.f32 %v1259
        %v1324 = vcvt.s32.f32 %v1260
        %v1325 = vcvt.s32.f32 %v1261
        %v1326 = vcvt.s32.f32 %v1262
        %v1327 = vcvt.s32.f32 %v1263
        %v1328 = vcvt.s32.f32 %v1264
        %v1329 = vcvt.s32.f32 %v1265
        %v1330 = vcvt.s32.f32 %v1266
        %v1331 = vcvt.s32.f32 %v1267
        %v1332 = vcvt.s32.f32 %v1268
        %v1333 = vcvt.s32.f32 %v1269
        %v1334 = vcvt.s32.f32 %v1270
        %v1335 = vcvt.s32.f32 %v1271
        %v1336 = vcvt.s32.f32 %v1272
        %v1337 = vcvt.s32.f32 %v1273
        %v1338 = vcvt.s32.f32 %v1274
        %v1339 = vcvt.s32.f32 %v1275
        %v1340 = vcvt.s32.f32 %v1276
        %v1341 = vcvt.s32.f32 %v1277
        %v1342 = vcvt.s32.f32 %v1278
        %v1343 = vcvt.s32.f32 %v1279
        %v1344 = vcvt.s32.f32 %v1280
        %v1345 = vcvt.s32.f32 %v1281
        %v1346 = vcvt.s32.f32 %v1282
        %vm1347 = vcmask 998400
        %v1349 = vsel %vm1347, %v908, 0
        %v1352 = vsel %vm1347, %v910, 0
        %v1355 = vsel %vm1347, %v912, 0
        %v1358 = vsel %vm1347, %v914, 0
        %vm1360 = vcmask 1041408
        %v1362 = vsel %vm1360, %v1151, 0
        %v1365 = vsel %vm1360, %v1152, 0
        %1367 = vmatprep.subr.mxu0 %v1120
        %1368 = vmatpush1.msra.mxu0 %v1119
        %1369 = vmatprep.subr.mxu0 %v1118
        %1370 = vmatpush1.msra.mxu0 %v1117
        %1371 = vmatprep.subr.mxu0 %v1116
        %1372 = vmatpush1.msra.mxu0 %v1115
        %1373 = vmatprep.subr.mxu0 %v1114
        %1374 = vmatpush1.msra.mxu0 %v1113
        %1375 = vmatprep.subr.mxu0 %v1112
        %1376 = vmatpush1.msra.mxu0 %v1111
        %1377 = vmatprep.subr.mxu0 %v1110
        %1378 = vmatpush1.msra.mxu0 %v1109
        %1379 = vmatprep.subr.mxu0 %v1108
        %1380 = vmatpush1.msra.mxu0 %v1107
        %1381 = vmatprep.subr.mxu0 %v1106
        %1382 = vmatpush1.msra.mxu0 %v1105
        %1383 = vmatprep.subr.mxu0 %v1104
        %1384 = vmatpush1.msra.mxu0 %v1103
        %1385 = vmatprep.subr.mxu0 %v1102
        %1386 = vmatpush1.msra.mxu0 %v1101
        %1387 = vmatprep.subr.mxu0 %v1100
        %1388 = vmatpush1.msra.mxu0 %v1099
        %1389 = vmatprep.subr.mxu0 %v1098
        %1390 = vmatpush1.msra.mxu0 %v1097
        %1391 = vmatprep.subr.mxu0 %v1096
        %1392 = vmatpush1.msra.mxu0 %v1095
        %1393 = vmatprep.subr.mxu0 %v1094
        %1394 = vmatpush1.msra.mxu0 %v1093
        %1395 = vmatprep.subr.mxu0 %v1092
        %1396 = vmatpush1.msra.mxu0 %v1091
        %1397 = vmatprep.subr.mxu0 %v1090
        %1398 = vmatpush1.msra.mxu0 %v1089
        %1399 = vmatprep.subr.mxu0 %v1365
        %1400 = vmatpush2.msra.mxu0 %v1362
        %1401 = vmatprep.subr.mxu0 %v1150
        %1402 = vmatpush2.msra.mxu0 %v1149
        %1403 = vmatprep.subr.mxu0 %v1148
        %1404 = vmatpush2.msra.mxu0 %v1147
        %1405 = vmatprep.subr.mxu0 %v1146
        %1406 = vmatpush2.msra.mxu0 %v1145
        %1407 = vmatprep.subr.mxu0 %v1144
        %1408 = vmatpush2.msra.mxu0 %v1143
        %1409 = vmatprep.subr.mxu0 %v1142
        %1410 = vmatpush2.msra.mxu0 %v1141
        %1411 = vmatprep.subr.mxu0 %v1140
        %1412 = vmatpush2.msra.mxu0 %v1139
        %1413 = vmatprep.subr.mxu0 %v1138
        %1414 = vmatpush2.msra.mxu0 %v1137
        %1415 = vmatprep.subr.mxu0 %v1136
        %1416 = vmatpush2.msra.mxu0 %v1135
        %1417 = vmatprep.subr.mxu0 %v1134
        %1418 = vmatpush2.msra.mxu0 %v1133
        %1419 = vmatprep.subr.mxu0 %v1132
        %1420 = vmatpush2.msra.mxu0 %v1131
        %1421 = vmatprep.subr.mxu0 %v1130
        %1422 = vmatpush2.msra.mxu0 %v1129
        %1423 = vmatprep.subr.mxu0 %v1128
        %1424 = vmatpush2.msra.mxu0 %v1127
        %1425 = vmatprep.subr.mxu0 %v1126
        %1426 = vmatpush2.msra.mxu0 %v1125
        %1427 = vmatprep.subr.mxu0 %v1124
        %1428 = vmatpush2.msra.mxu0 %v1123
        %1429 = vmatprep.subr.mxu0 %v1122
        %1430 = vmatpush2.msra.mxu0 %v1121
        %1431 = vmatprep.mubr.f32.mxu0 %v1349
        %1432 = vmatmul.mubr.f32.gmra.mxu0 %v907
        %v1433 = vpop.f32.mrf.mxu0
        %v1434 = vadd.f32 0.0, %v1433
        %v1435 = vpop.f32.mrf.mxu0
        %v1436 = vadd.f32 0.0, %v1435
        %1437 = vmatprep.mubr.f32.mxu0 %v1352
        %1438 = vmatmul.mubr.f32.gmra.mxu0 %v909
        %v1439 = vpop.f32.mrf.mxu0
        %v1440 = vadd.f32 0.0, %v1439
        %v1441 = vpop.f32.mrf.mxu0
        %v1442 = vadd.f32 0.0, %v1441
        %1443 = vmatprep.mubr.f32.mxu0 %v1355
        %1444 = vmatmul.mubr.f32.gmra.mxu0 %v911
        %v1445 = vpop.f32.mrf.mxu0
        %v1446 = vadd.f32 0.0, %v1445
        %v1447 = vpop.f32.mrf.mxu0
        %v1448 = vadd.f32 0.0, %v1447
        %1449 = vmatprep.mubr.f32.mxu0 %v1358
        %1450 = vmatmul.mubr.f32.gmra.mxu0 %v913
        %v1451 = vpop.f32.mrf.mxu0
        %v1452 = vadd.f32 0.0, %v1451
        %v1453 = vpop.f32.mrf.mxu0
        %v1454 = vadd.f32 0.0, %v1453
        %1455 = vdwg.mxu0
        %v1457 = vsel %vm1347, %v916, 0
        %v1460 = vsel %vm1347, %v918, 0
        %v1463 = vsel %vm1347, %v920, 0
        %v1466 = vsel %vm1347, %v922, 0
        %1468 = vmatprep.subr.mxu0 %v1120
        %1469 = vmatpush1.msra.mxu0 %v1119
        %1470 = vmatprep.subr.mxu0 %v1118
        %1471 = vmatpush1.msra.mxu0 %v1117
        %1472 = vmatprep.subr.mxu0 %v1116
        %1473 = vmatpush1.msra.mxu0 %v1115
        %1474 = vmatprep.subr.mxu0 %v1114
        %1475 = vmatpush1.msra.mxu0 %v1113
        %1476 = vmatprep.subr.mxu0 %v1112
        %1477 = vmatpush1.msra.mxu0 %v1111
        %1478 = vmatprep.subr.mxu0 %v1110
        %1479 = vmatpush1.msra.mxu0 %v1109
        %1480 = vmatprep.subr.mxu0 %v1108
        %1481 = vmatpush1.msra.mxu0 %v1107
        %1482 = vmatprep.subr.mxu0 %v1106
        %1483 = vmatpush1.msra.mxu0 %v1105
        %1484 = vmatprep.subr.mxu0 %v1104
        %1485 = vmatpush1.msra.mxu0 %v1103
        %1486 = vmatprep.subr.mxu0 %v1102
        %1487 = vmatpush1.msra.mxu0 %v1101
        %1488 = vmatprep.subr.mxu0 %v1100
        %1489 = vmatpush1.msra.mxu0 %v1099
        %1490 = vmatprep.subr.mxu0 %v1098
        %1491 = vmatpush1.msra.mxu0 %v1097
        %1492 = vmatprep.subr.mxu0 %v1096
        %1493 = vmatpush1.msra.mxu0 %v1095
        %1494 = vmatprep.subr.mxu0 %v1094
        %1495 = vmatpush1.msra.mxu0 %v1093
        %1496 = vmatprep.subr.mxu0 %v1092
        %1497 = vmatpush1.msra.mxu0 %v1091
        %1498 = vmatprep.subr.mxu0 %v1090
        %1499 = vmatpush1.msra.mxu0 %v1089
        %1500 = vmatprep.subr.mxu0 %v1365
        %1501 = vmatpush2.msra.mxu0 %v1362
        %1502 = vmatprep.subr.mxu0 %v1150
        %1503 = vmatpush2.msra.mxu0 %v1149
        %1504 = vmatprep.subr.mxu0 %v1148
        %1505 = vmatpush2.msra.mxu0 %v1147
        %1506 = vmatprep.subr.mxu0 %v1146
        %1507 = vmatpush2.msra.mxu0 %v1145
        %1508 = vmatprep.subr.mxu0 %v1144
        %1509 = vmatpush2.msra.mxu0 %v1143
        %1510 = vmatprep.subr.mxu0 %v1142
        %1511 = vmatpush2.msra.mxu0 %v1141
        %1512 = vmatprep.subr.mxu0 %v1140
        %1513 = vmatpush2.msra.mxu0 %v1139
        %1514 = vmatprep.subr.mxu0 %v1138
        %1515 = vmatpush2.msra.mxu0 %v1137
        %1516 = vmatprep.subr.mxu0 %v1136
        %1517 = vmatpush2.msra.mxu0 %v1135
        %1518 = vmatprep.subr.mxu0 %v1134
        %1519 = vmatpush2.msra.mxu0 %v1133
        %1520 = vmatprep.subr.mxu0 %v1132
        %1521 = vmatpush2.msra.mxu0 %v1131
        %1522 = vmatprep.subr.mxu0 %v1130
        %1523 = vmatpush2.msra.mxu0 %v1129
        %1524 = vmatprep.subr.mxu0 %v1128
        %1525 = vmatpush2.msra.mxu0 %v1127
        %1526 = vmatprep.subr.mxu0 %v1126
        %1527 = vmatpush2.msra.mxu0 %v1125
        %1528 = vmatprep.subr.mxu0 %v1124
        %1529 = vmatpush2.msra.mxu0 %v1123
        %1530 = vmatprep.subr.mxu0 %v1122
        %1531 = vmatpush2.msra.mxu0 %v1121
        %1532 = vmatprep.mubr.f32.mxu0 %v1457
        %1533 = vmatmul.mubr.f32.gmra.mxu0 %v915
        %v1534 = vpop.f32.mrf.mxu0
        %v1535 = vadd.f32 0.0, %v1534
        %v1536 = vpop.f32.mrf.mxu0
        %v1537 = vadd.f32 0.0, %v1536
        %1538 = vmatprep.mubr.f32.mxu0 %v1460
        %1539 = vmatmul.mubr.f32.gmra.mxu0 %v917
        %v1540 = vpop.f32.mrf.mxu0
        %v1541 = vadd.f32 0.0, %v1540
        %v1542 = vpop.f32.mrf.mxu0
        %v1543 = vadd.f32 0.0, %v1542
        %1544 = vmatprep.mubr.f32.mxu0 %v1463
        %1545 = vmatmul.mubr.f32.gmra.mxu0 %v919
        %v1546 = vpop.f32.mrf.mxu0
        %v1547 = vadd.f32 0.0, %v1546
        %v1548 = vpop.f32.mrf.mxu0
        %v1549 = vadd.f32 0.0, %v1548
        %1550 = vmatprep.mubr.f32.mxu0 %v1466
        %1551 = vmatmul.mubr.f32.gmra.mxu0 %v921
        %v1552 = vpop.f32.mrf.mxu0
        %v1553 = vadd.f32 0.0, %v1552
        %v1554 = vpop.f32.mrf.mxu0
        %v1555 = vadd.f32 0.0, %v1554
        %1556 = vdwg.mxu0
        %v1558 = vsel %vm1360, %v1345, 0
        %v1561 = vsel %vm1360, %v1346, 0
        %1563 = vmatprep.subr.mxu0 %v1314
        %1564 = vmatpush1.msra.mxu0 %v1313
        %1565 = vmatprep.subr.mxu0 %v1312
        %1566 = vmatpush1.msra.mxu0 %v1311
        %1567 = vmatprep.subr.mxu0 %v1310
        %1568 = vmatpush1.msra.mxu0 %v1309
        %1569 = vmatprep.subr.mxu0 %v1308
        %1570 = vmatpush1.msra.mxu0 %v1307
        %1571 = vmatprep.subr.mxu0 %v1306
        %1572 = vmatpush1.msra.mxu0 %v1305
        %1573 = vmatprep.subr.mxu0 %v1304
        %1574 = vmatpush1.msra.mxu0 %v1303
        %1575 = vmatprep.subr.mxu0 %v1302
        %1576 = vmatpush1.msra.mxu0 %v1301
        %1577 = vmatprep.subr.mxu0 %v1300
        %1578 = vmatpush1.msra.mxu0 %v1299
        %1579 = vmatprep.subr.mxu0 %v1298
        %1580 = vmatpush1.msra.mxu0 %v1297
        %1581 = vmatprep.subr.mxu0 %v1296
        %1582 = vmatpush1.msra.mxu0 %v1295
        %1583 = vmatprep.subr.mxu0 %v1294
        %1584 = vmatpush1.msra.mxu0 %v1293
        %1585 = vmatprep.subr.mxu0 %v1292
        %1586 = vmatpush1.msra.mxu0 %v1291
        %1587 = vmatprep.subr.mxu0 %v1290
        %1588 = vmatpush1.msra.mxu0 %v1289
        %1589 = vmatprep.subr.mxu0 %v1288
        %1590 = vmatpush1.msra.mxu0 %v1287
        %1591 = vmatprep.subr.mxu0 %v1286
        %1592 = vmatpush1.msra.mxu0 %v1285
        %1593 = vmatprep.subr.mxu0 %v1284
        %1594 = vmatpush1.msra.mxu0 %v1283
        %1595 = vmatprep.subr.mxu0 %v1561
        %1596 = vmatpush2.msra.mxu0 %v1558
        %1597 = vmatprep.subr.mxu0 %v1344
        %1598 = vmatpush2.msra.mxu0 %v1343
        %1599 = vmatprep.subr.mxu0 %v1342
        %1600 = vmatpush2.msra.mxu0 %v1341
        %1601 = vmatprep.subr.mxu0 %v1340
        %1602 = vmatpush2.msra.mxu0 %v1339
        %1603 = vmatprep.subr.mxu0 %v1338
        %1604 = vmatpush2.msra.mxu0 %v1337
        %1605 = vmatprep.subr.mxu0 %v1336
        %1606 = vmatpush2.msra.mxu0 %v1335
        %1607 = vmatprep.subr.mxu0 %v1334
        %1608 = vmatpush2.msra.mxu0 %v1333
        %1609 = vmatprep.subr.mxu0 %v1332
        %1610 = vmatpush2.msra.mxu0 %v1331
        %1611 = vmatprep.subr.mxu0 %v1330
        %1612 = vmatpush2.msra.mxu0 %v1329
        %1613 = vmatprep.subr.mxu0 %v1328
        %1614 = vmatpush2.msra.mxu0 %v1327
        %1615 = vmatprep.subr.mxu0 %v1326
        %1616 = vmatpush2.msra.mxu0 %v1325
        %1617 = vmatprep.subr.mxu0 %v1324
        %1618 = vmatpush2.msra.mxu0 %v1323
        %1619 = vmatprep.subr.mxu0 %v1322
        %1620 = vmatpush2.msra.mxu0 %v1321
        %1621 = vmatprep.subr.mxu0 %v1320
        %1622 = vmatpush2.msra.mxu0 %v1319
        %1623 = vmatprep.subr.mxu0 %v1318
        %1624 = vmatpush2.msra.mxu0 %v1317
        %1625 = vmatprep.subr.mxu0 %v1316
        %1626 = vmatpush2.msra.mxu0 %v1315
        %1627 = vmatprep.mubr.f32.mxu0 %v1349
        %1628 = vmatmul.mubr.f32.gmra.mxu0 %v907
        %v1629 = vpop.f32.mrf.mxu0
        %v1630 = vadd.f32 0.0, %v1629
        %v1631 = vpop.f32.mrf.mxu0
        %v1632 = vadd.f32 0.0, %v1631
        %1633 = vmatprep.mubr.f32.mxu0 %v1352
        %1634 = vmatmul.mubr.f32.gmra.mxu0 %v909
        %v1635 = vpop.f32.mrf.mxu0
        %v1636 = vadd.f32 0.0, %v1635
        %v1637 = vpop.f32.mrf.mxu0
        %v1638 = vadd.f32 0.0, %v1637
        %1639 = vmatprep.mubr.f32.mxu0 %v1355
        %1640 = vmatmul.mubr.f32.gmra.mxu0 %v911
        %v1641 = vpop.f32.mrf.mxu0
        %v1642 = vadd.f32 0.0, %v1641
        %v1643 = vpop.f32.mrf.mxu0
        %v1644 = vadd.f32 0.0, %v1643
        %1645 = vmatprep.mubr.f32.mxu0 %v1358
        %1646 = vmatmul.mubr.f32.gmra.mxu0 %v913
        %v1647 = vpop.f32.mrf.mxu0
        %v1648 = vadd.f32 0.0, %v1647
        %v1649 = vpop.f32.mrf.mxu0
        %v1650 = vadd.f32 0.0, %v1649
        %1651 = vdwg.mxu0
        %1652 = vmatprep.subr.mxu0 %v1314
        %1653 = vmatpush1.msra.mxu0 %v1313
        %1654 = vmatprep.subr.mxu0 %v1312
        %1655 = vmatpush1.msra.mxu0 %v1311
        %1656 = vmatprep.subr.mxu0 %v1310
        %1657 = vmatpush1.msra.mxu0 %v1309
        %1658 = vmatprep.subr.mxu0 %v1308
        %1659 = vmatpush1.msra.mxu0 %v1307
        %1660 = vmatprep.subr.mxu0 %v1306
        %1661 = vmatpush1.msra.mxu0 %v1305
        %1662 = vmatprep.subr.mxu0 %v1304
        %1663 = vmatpush1.msra.mxu0 %v1303
        %1664 = vmatprep.subr.mxu0 %v1302
        %1665 = vmatpush1.msra.mxu0 %v1301
        %1666 = vmatprep.subr.mxu0 %v1300
        %1667 = vmatpush1.msra.mxu0 %v1299
        %1668 = vmatprep.subr.mxu0 %v1298
        %1669 = vmatpush1.msra.mxu0 %v1297
        %1670 = vmatprep.subr.mxu0 %v1296
        %1671 = vmatpush1.msra.mxu0 %v1295
        %1672 = vmatprep.subr.mxu0 %v1294
        %1673 = vmatpush1.msra.mxu0 %v1293
        %1674 = vmatprep.subr.mxu0 %v1292
        %1675 = vmatpush1.msra.mxu0 %v1291
        %1676 = vmatprep.subr.mxu0 %v1290
        %1677 = vmatpush1.msra.mxu0 %v1289
        %1678 = vmatprep.subr.mxu0 %v1288
        %1679 = vmatpush1.msra.mxu0 %v1287
        %1680 = vmatprep.subr.mxu0 %v1286
        %1681 = vmatpush1.msra.mxu0 %v1285
        %1682 = vmatprep.subr.mxu0 %v1284
        %1683 = vmatpush1.msra.mxu0 %v1283
        %1684 = vmatprep.subr.mxu0 %v1561
        %1685 = vmatpush2.msra.mxu0 %v1558
        %1686 = vmatprep.subr.mxu0 %v1344
        %1687 = vmatpush2.msra.mxu0 %v1343
        %1688 = vmatprep.subr.mxu0 %v1342
        %1689 = vmatpush2.msra.mxu0 %v1341
        %1690 = vmatprep.subr.mxu0 %v1340
        %1691 = vmatpush2.msra.mxu0 %v1339
        %1692 = vmatprep.subr.mxu0 %v1338
        %1693 = vmatpush2.msra.mxu0 %v1337
        %1694 = vmatprep.subr.mxu0 %v1336
        %1695 = vmatpush2.msra.mxu0 %v1335
        %1696 = vmatprep.subr.mxu0 %v1334
        %1697 = vmatpush2.msra.mxu0 %v1333
        %1698 = vmatprep.subr.mxu0 %v1332
        %1699 = vmatpush2.msra.mxu0 %v1331
        %1700 = vmatprep.subr.mxu0 %v1330
        %1701 = vmatpush2.msra.mxu0 %v1329
        %1702 = vmatprep.subr.mxu0 %v1328
        %1703 = vmatpush2.msra.mxu0 %v1327
        %1704 = vmatprep.subr.mxu0 %v1326
        %1705 = vmatpush2.msra.mxu0 %v1325
        %1706 = vmatprep.subr.mxu0 %v1324
        %1707 = vmatpush2.msra.mxu0 %v1323
        %1708 = vmatprep.subr.mxu0 %v1322
        %1709 = vmatpush2.msra.mxu0 %v1321
        %1710 = vmatprep.subr.mxu0 %v1320
        %1711 = vmatpush2.msra.mxu0 %v1319
        %1712 = vmatprep.subr.mxu0 %v1318
        %1713 = vmatpush2.msra.mxu0 %v1317
        %1714 = vmatprep.subr.mxu0 %v1316
        %1715 = vmatpush2.msra.mxu0 %v1315
        %1716 = vmatprep.mubr.f32.mxu0 %v1457
        %1717 = vmatmul.mubr.f32.gmra.mxu0 %v915
        %v1718 = vpop.f32.mrf.mxu0
        %v1719 = vadd.f32 0.0, %v1718
        %v1720 = vpop.f32.mrf.mxu0
        %v1721 = vadd.f32 0.0, %v1720
        %1722 = vmatprep.mubr.f32.mxu0 %v1460
        %1723 = vmatmul.mubr.f32.gmra.mxu0 %v917
        %v1724 = vpop.f32.mrf.mxu0
        %v1725 = vadd.f32 0.0, %v1724
        %v1726 = vpop.f32.mrf.mxu0
        %v1727 = vadd.f32 0.0, %v1726
        %1728 = vmatprep.mubr.f32.mxu0 %v1463
        %1729 = vmatmul.mubr.f32.gmra.mxu0 %v919
        %v1730 = vpop.f32.mrf.mxu0
        %v1731 = vadd.f32 0.0, %v1730
        %v1732 = vpop.f32.mrf.mxu0
        %v1733 = vadd.f32 0.0, %v1732
        %1734 = vmatprep.mubr.f32.mxu0 %v1466
        %1735 = vmatmul.mubr.f32.gmra.mxu0 %v921
        %v1736 = vpop.f32.mrf.mxu0
        %v1737 = vadd.f32 0.0, %v1736
        %v1738 = vpop.f32.mrf.mxu0
        %v1739 = vadd.f32 0.0, %v1738
        %1740 = vdwg.mxu0
        %v1741 = vld [vmem:[#allocation2] sm:$0xff]
        %v1742 = vld [vmem:[#allocation2 + $0x8] sm:$0xff]
        %v1743 = vld [vmem:[#allocation2 + $0x10] sm:$0xff]
        %v1744 = vld [vmem:[#allocation2 + $0x18] sm:$0xff]
        %v1745 = vld [vmem:[#allocation2 + $0x20] sm:$0xff]
        %v1746 = vld [vmem:[#allocation2 + $0x28] sm:$0xff]
        %v1747 = vld [vmem:[#allocation2 + $0x30] sm:$0xff]
        %v1748 = vld [vmem:[#allocation2 + $0x38] sm:$0xff]
        %v1749 = vld [vmem:[#allocation2 + $0x40] sm:$0xff]
        %v1750 = vld [vmem:[#allocation2 + $0x48] sm:$0xff]
        %v1751 = vld [vmem:[#allocation2 + $0x50] sm:$0xff]
        %v1752 = vld [vmem:[#allocation2 + $0x58] sm:$0xff]
        %v1753 = vld [vmem:[#allocation2 + $0x60] sm:$0xff]
        %v1754 = vld [vmem:[#allocation2 + $0x68] sm:$0xff]
        %v1755 = vld [vmem:[#allocation2 + $0x70] sm:$0xff]
        %v1756 = vld [vmem:[#allocation2 + $0x78] sm:$0xff]
        %v1757 = vld [vmem:[%s4] sm:$0xff]
        %v1758 = vld [vmem:[%s4 + $0x8] sm:$0xff]
        %v1759 = vld [vmem:[%s4 + $0x10] sm:$0xff]
        %v1760 = vld [vmem:[%s4 + $0x18] sm:$0xff]
        %v1761 = vld [vmem:[%s4 + $0x20] sm:$0xff]
        %v1762 = vld [vmem:[%s4 + $0x28] sm:$0xff]
        %v1763 = vld [vmem:[%s4 + $0x30] sm:$0xff]
        %v1764 = vld [vmem:[%s4 + $0x38] sm:$0xff]
        %1766 = vset.pattern.permute.xlu0 0
        %1767 = vperm.xlu0 %1766, %v1757
        %v1768 = vpop.permute.xlu0 %1767
        %1771 = vset.pattern.permute.xlu0 0
        %1772 = vperm.xlu0 %1771, %v1758
        %v1773 = vpop.permute.xlu0 %1772
        %1776 = vset.pattern.permute.xlu0 0
        %1777 = vperm.xlu0 %1776, %v1759
        %v1778 = vpop.permute.xlu0 %1777
        %1781 = vset.pattern.permute.xlu0 0
        %1782 = vperm.xlu0 %1781, %v1760
        %v1783 = vpop.permute.xlu0 %1782
        %1786 = vset.pattern.permute.xlu0 0
        %1787 = vperm.xlu0 %1786, %v1761
        %v1788 = vpop.permute.xlu0 %1787
        %1791 = vset.pattern.permute.xlu0 0
        %1792 = vperm.xlu0 %1791, %v1762
        %v1793 = vpop.permute.xlu0 %1792
        %1796 = vset.pattern.permute.xlu0 0
        %1797 = vperm.xlu0 %1796, %v1763
        %v1798 = vpop.permute.xlu0 %1797
        %1801 = vset.pattern.permute.xlu0 0
        %1802 = vperm.xlu0 %1801, %v1764
        %v1803 = vpop.permute.xlu0 %1802
        %vm1805 = vcmask 261120
        %v1807 = vsel %vm1805, %v1742, 0
        %v1810 = vsel %vm1805, %v1744, 0
        %v1813 = vsel %vm1805, %v1746, 0
        %v1816 = vsel %vm1805, %v1748, 0
        %v1819 = vsel %vm1805, %v1750, 0
        %v1822 = vsel %vm1805, %v1752, 0
        %v1825 = vsel %vm1805, %v1754, 0
        %v1828 = vsel %vm1805, %v1756, 0
        %1830 = vmatprep.subr.mxu0 %v922
        %1831 = vmatpush1.msra.mxu0 %v921
        %1832 = vmatprep.subr.mxu0 %v920
        %1833 = vmatpush1.msra.mxu0 %v919
        %1834 = vmatprep.subr.mxu0 %v918
        %1835 = vmatpush1.msra.mxu0 %v917
        %1836 = vmatprep.subr.mxu0 %v916
        %1837 = vmatpush1.msra.mxu0 %v915
        %1838 = vmatprep.subr.mxu0 %v914
        %1839 = vmatpush1.msra.mxu0 %v913
        %1840 = vmatprep.subr.mxu0 %v912
        %1841 = vmatpush1.msra.mxu0 %v911
        %1842 = vmatprep.subr.mxu0 %v910
        %1843 = vmatpush1.msra.mxu0 %v909
        %1844 = vmatprep.subr.mxu0 %v908
        %1845 = vmatpush1.msra.mxu0 %v907
        %1846 = vmatprep.subr.mxu0 %v1555
        %1847 = vmatpush1.msra.mxu0 %v1553
        %1848 = vmatprep.subr.mxu0 %v1549
        %1849 = vmatpush1.msra.mxu0 %v1547
        %1850 = vmatprep.subr.mxu0 %v1543
        %1851 = vmatpush1.msra.mxu0 %v1541
        %1852 = vmatprep.subr.mxu0 %v1537
        %1853 = vmatpush1.msra.mxu0 %v1535
        %1854 = vmatprep.subr.mxu0 %v1454
        %1855 = vmatpush1.msra.mxu0 %v1452
        %1856 = vmatprep.subr.mxu0 %v1448
        %1857 = vmatpush1.msra.mxu0 %v1446
        %1858 = vmatprep.subr.mxu0 %v1442
        %1859 = vmatpush1.msra.mxu0 %v1440
        %1860 = vmatprep.subr.mxu0 %v1436
        %1861 = vmatpush1.msra.mxu0 %v1434
        %1862 = vmatprep.subr.mxu0 0.0
        %1863 = vmatpush2.msra.mxu0 0.0
        %1864 = vmatprep.subr.mxu0 0.0
        %1865 = vmatpush2.msra.mxu0 0.0
        %1866 = vmatprep.subr.mxu0 0.0
        %1867 = vmatpush2.msra.mxu0 0.0
        %1868 = vmatprep.subr.mxu0 0.0
        %1869 = vmatpush2.msra.mxu0 0.0
        %1870 = vmatprep.subr.mxu0 0.0
        %1871 = vmatpush2.msra.mxu0 0.0
        %1872 = vmatprep.subr.mxu0 0.0
        %1873 = vmatpush2.msra.mxu0 0.0
        %1874 = vmatprep.subr.mxu0 0.0
        %1875 = vmatpush2.msra.mxu0 0.0
        %1876 = vmatprep.subr.mxu0 0.0
        %1877 = vmatpush2.msra.mxu0 0.0
        %1878 = vmatprep.subr.mxu0 0.0
        %1879 = vmatpush2.msra.mxu0 0.0
        %1880 = vmatprep.subr.mxu0 0.0
        %1881 = vmatpush2.msra.mxu0 0.0
        %1882 = vmatprep.subr.mxu0 0.0
        %1883 = vmatpush2.msra.mxu0 0.0
        %1884 = vmatprep.subr.mxu0 0.0
        %1885 = vmatpush2.msra.mxu0 0.0
        %1886 = vmatprep.subr.mxu0 %v1650
        %1887 = vmatpush2.msra.mxu0 %v1648
        %1888 = vmatprep.subr.mxu0 %v1644
        %1889 = vmatpush2.msra.mxu0 %v1642
        %1890 = vmatprep.subr.mxu0 %v1638
        %1891 = vmatpush2.msra.mxu0 %v1636
        %1892 = vmatprep.subr.mxu0 %v1632
        %1893 = vmatpush2.msra.mxu0 %v1630
        %1894 = vmatprep.mubr.f32.mxu0 %v1807
        %1895 = vmatmul.mubr.f32.gmra.mxu0 %v1741
        %v1896 = vpop.f32.mrf.mxu0
        %v1897 = vadd.f32 %v1768, %v1896
        %v1898 = vpop.f32.mrf.mxu0
        %v1899 = vadd.f32 %v1768, %v1898
        %1900 = vmatprep.mubr.f32.mxu0 %v1810
        %1901 = vmatmul.mubr.f32.gmra.mxu0 %v1743
        %v1902 = vpop.f32.mrf.mxu0
        %v1903 = vadd.f32 %v1773, %v1902
        %v1904 = vpop.f32.mrf.mxu0
        %v1905 = vadd.f32 %v1773, %v1904
        %1906 = vmatprep.mubr.f32.mxu0 %v1813
        %1907 = vmatmul.mubr.f32.gmra.mxu0 %v1745
        %v1908 = vpop.f32.mrf.mxu0
        %v1909 = vadd.f32 %v1778, %v1908
        %v1910 = vpop.f32.mrf.mxu0
        %v1911 = vadd.f32 %v1778, %v1910
        %1912 = vmatprep.mubr.f32.mxu0 %v1816
        %1913 = vmatmul.mubr.f32.gmra.mxu0 %v1747
        %v1914 = vpop.f32.mrf.mxu0
        %v1915 = vadd.f32 %v1783, %v1914
        %v1916 = vpop.f32.mrf.mxu0
        %v1917 = vadd.f32 %v1783, %v1916
        %1918 = vmatprep.mubr.f32.mxu0 %v1819
        %1919 = vmatmul.mubr.f32.gmra.mxu0 %v1749
        %v1920 = vpop.f32.mrf.mxu0
        %v1921 = vadd.f32 %v1788, %v1920
        %v1922 = vpop.f32.mrf.mxu0
        %v1923 = vadd.f32 %v1788, %v1922
        %1924 = vmatprep.mubr.f32.mxu0 %v1822
        %1925 = vmatmul.mubr.f32.gmra.mxu0 %v1751
        %v1926 = vpop.f32.mrf.mxu0
        %v1927 = vadd.f32 %v1793, %v1926
        %v1928 = vpop.f32.mrf.mxu0
        %v1929 = vadd.f32 %v1793, %v1928
        %1930 = vmatprep.mubr.f32.mxu0 %v1825
        %1931 = vmatmul.mubr.f32.gmra.mxu0 %v1753
        %v1932 = vpop.f32.mrf.mxu0
        %v1933 = vadd.f32 %v1798, %v1932
        %v1934 = vpop.f32.mrf.mxu0
        %v1935 = vadd.f32 %v1798, %v1934
        %1936 = vmatprep.mubr.f32.mxu0 %v1828
        %1937 = vmatmul.mubr.f32.gmra.mxu0 %v1755
        %v1938 = vpop.f32.mrf.mxu0
        %v1939 = vadd.f32 %v1803, %v1938
        %v1940 = vpop.f32.mrf.mxu0
        %v1941 = vadd.f32 %v1803, %v1940
        %1942 = vdwg.mxu0
        %v1943 = vmax.f32 %v1897, 0.0
        %v1944 = vmax.f32 %v1899, 0.0
        %v1945 = vmax.f32 %v1903, 0.0
        %v1946 = vmax.f32 %v1905, 0.0
        %v1947 = vmax.f32 %v1909, 0.0
        %v1948 = vmax.f32 %v1911, 0.0
        %v1949 = vmax.f32 %v1915, 0.0
        %v1950 = vmax.f32 %v1917, 0.0
        %v1951 = vmax.f32 %v1921, 0.0
        %v1952 = vmax.f32 %v1923, 0.0
        %v1953 = vmax.f32 %v1927, 0.0
        %v1954 = vmax.f32 %v1929, 0.0
        %v1955 = vmax.f32 %v1933, 0.0
        %v1956 = vmax.f32 %v1935, 0.0
        %v1957 = vmax.f32 %v1939, 0.0
        %v1958 = vmax.f32 %v1941, 0.0
        %1959 = vmatprep.subr.mxu0 %v1650
        %1960 = vmatpush1.msra.mxu0 %v1648
        %1961 = vmatprep.subr.mxu0 %v1644
        %1962 = vmatpush1.msra.mxu0 %v1642
        %1963 = vmatprep.subr.mxu0 %v1638
        %1964 = vmatpush1.msra.mxu0 %v1636
        %1965 = vmatprep.subr.mxu0 %v1632
        %1966 = vmatpush1.msra.mxu0 %v1630
        %1967 = vmatprep.subr.mxu0 %v922
        %1968 = vmatpush1.msra.mxu0 %v921
        %1969 = vmatprep.subr.mxu0 %v920
        %1970 = vmatpush1.msra.mxu0 %v919
        %1971 = vmatprep.subr.mxu0 %v918
        %1972 = vmatpush1.msra.mxu0 %v917
        %1973 = vmatprep.subr.mxu0 %v916
        %1974 = vmatpush1.msra.mxu0 %v915
        %1975 = vmatprep.subr.mxu0 %v914
        %1976 = vmatpush1.msra.mxu0 %v913
        %1977 = vmatprep.subr.mxu0 %v912
        %1978 = vmatpush1.msra.mxu0 %v911
        %1979 = vmatprep.subr.mxu0 %v910
        %1980 = vmatpush1.msra.mxu0 %v909
        %1981 = vmatprep.subr.mxu0 %v908
        %1982 = vmatpush1.msra.mxu0 %v907
        %1983 = vmatprep.subr.mxu0 %v1555
        %1984 = vmatpush1.msra.mxu0 %v1553
        %1985 = vmatprep.subr.mxu0 %v1549
        %1986 = vmatpush1.msra.mxu0 %v1547
        %1987 = vmatprep.subr.mxu0 %v1543
        %1988 = vmatpush1.msra.mxu0 %v1541
        %1989 = vmatprep.subr.mxu0 %v1537
        %1990 = vmatpush1.msra.mxu0 %v1535
        %1991 = vmatprep.subr.mxu0 0.0
        %1992 = vmatpush2.msra.mxu0 0.0
        %1993 = vmatprep.subr.mxu0 0.0
        %1994 = vmatpush2.msra.mxu0 0.0
        %1995 = vmatprep.subr.mxu0 0.0
        %1996 = vmatpush2.msra.mxu0 0.0
        %1997 = vmatprep.subr.mxu0 0.0
        %1998 = vmatpush2.msra.mxu0 0.0
        %1999 = vmatprep.subr.mxu0 0.0
        %2000 = vmatpush2.msra.mxu0 0.0
        %2001 = vmatprep.subr.mxu0 0.0
        %2002 = vmatpush2.msra.mxu0 0.0
        %2003 = vmatprep.subr.mxu0 0.0
        %2004 = vmatpush2.msra.mxu0 0.0
        %2005 = vmatprep.subr.mxu0 0.0
        %2006 = vmatpush2.msra.mxu0 0.0
        %2007 = vmatprep.subr.mxu0 0.0
        %2008 = vmatpush2.msra.mxu0 0.0
        %2009 = vmatprep.subr.mxu0 0.0
        %2010 = vmatpush2.msra.mxu0 0.0
        %2011 = vmatprep.subr.mxu0 0.0
        %2012 = vmatpush2.msra.mxu0 0.0
        %2013 = vmatprep.subr.mxu0 0.0
        %2014 = vmatpush2.msra.mxu0 0.0
        %2015 = vmatprep.subr.mxu0 %v1739
        %2016 = vmatpush2.msra.mxu0 %v1737
        %2017 = vmatprep.subr.mxu0 %v1733
        %2018 = vmatpush2.msra.mxu0 %v1731
        %2019 = vmatprep.subr.mxu0 %v1727
        %2020 = vmatpush2.msra.mxu0 %v1725
        %2021 = vmatprep.subr.mxu0 %v1721
        %2022 = vmatpush2.msra.mxu0 %v1719
        %2023 = vmatprep.mubr.f32.mxu0 %v1807
        %2024 = vmatmul.mubr.f32.gmra.mxu0 %v1741
        %v2025 = vpop.f32.mrf.mxu0
        %v2026 = vadd.f32 %v1768, %v2025
        %v2027 = vpop.f32.mrf.mxu0
        %v2028 = vadd.f32 %v1768, %v2027
        %2029 = vmatprep.mubr.f32.mxu0 %v1810
        %2030 = vmatmul.mubr.f32.gmra.mxu0 %v1743
        %v2031 = vpop.f32.mrf.mxu0
        %v2032 = vadd.f32 %v1773, %v2031
        %v2033 = vpop.f32.mrf.mxu0
        %v2034 = vadd.f32 %v1773, %v2033
        %2035 = vmatprep.mubr.f32.mxu0 %v1813
        %2036 = vmatmul.mubr.f32.gmra.mxu0 %v1745
        %v2037 = vpop.f32.mrf.mxu0
        %v2038 = vadd.f32 %v1778, %v2037
        %v2039 = vpop.f32.mrf.mxu0
        %v2040 = vadd.f32 %v1778, %v2039
        %2041 = vmatprep.mubr.f32.mxu0 %v1816
        %2042 = vmatmul.mubr.f32.gmra.mxu0 %v1747
        %v2043 = vpop.f32.mrf.mxu0
        %v2044 = vadd.f32 %v1783, %v2043
        %v2045 = vpop.f32.mrf.mxu0
        %v2046 = vadd.f32 %v1783, %v2045
        %2047 = vmatprep.mubr.f32.mxu0 %v1819
        %2048 = vmatmul.mubr.f32.gmra.mxu0 %v1749
        %v2049 = vpop.f32.mrf.mxu0
        %v2050 = vadd.f32 %v1788, %v2049
        %v2051 = vpop.f32.mrf.mxu0
        %v2052 = vadd.f32 %v1788, %v2051
        %2053 = vmatprep.mubr.f32.mxu0 %v1822
        %2054 = vmatmul.mubr.f32.gmra.mxu0 %v1751
        %v2055 = vpop.f32.mrf.mxu0
        %v2056 = vadd.f32 %v1793, %v2055
        %v2057 = vpop.f32.mrf.mxu0
        %v2058 = vadd.f32 %v1793, %v2057
        %2059 = vmatprep.mubr.f32.mxu0 %v1825
        %2060 = vmatmul.mubr.f32.gmra.mxu0 %v1753
        %v2061 = vpop.f32.mrf.mxu0
        %v2062 = vadd.f32 %v1798, %v2061
        %v2063 = vpop.f32.mrf.mxu0
        %v2064 = vadd.f32 %v1798, %v2063
        %2065 = vmatprep.mubr.f32.mxu0 %v1828
        %2066 = vmatmul.mubr.f32.gmra.mxu0 %v1755
        %v2067 = vpop.f32.mrf.mxu0
        %v2068 = vadd.f32 %v1803, %v2067
        %v2069 = vpop.f32.mrf.mxu0
        %v2070 = vadd.f32 %v1803, %v2069
        %2071 = vdwg.mxu0
        %v2072 = vmax.f32 %v2026, 0.0
        %v2073 = vmax.f32 %v2028, 0.0
        %v2074 = vmax.f32 %v2032, 0.0
        %v2075 = vmax.f32 %v2034, 0.0
        %v2076 = vmax.f32 %v2038, 0.0
        %v2077 = vmax.f32 %v2040, 0.0
        %v2078 = vmax.f32 %v2044, 0.0
        %v2079 = vmax.f32 %v2046, 0.0
        %v2080 = vmax.f32 %v2050, 0.0
        %v2081 = vmax.f32 %v2052, 0.0
        %v2082 = vmax.f32 %v2056, 0.0
        %v2083 = vmax.f32 %v2058, 0.0
        %v2084 = vmax.f32 %v2062, 0.0
        %v2085 = vmax.f32 %v2064, 0.0
        %v2086 = vmax.f32 %v2068, 0.0
        %v2087 = vmax.f32 %v2070, 0.0
        %v2088 = vmax.f32 %v1943, %v2072
        %v2089 = vmax.f32 %v1944, %v2073
        %v2090 = vmax.f32 %v1945, %v2074
        %v2091 = vmax.f32 %v1946, %v2075
        %v2092 = vmax.f32 %v1947, %v2076
        %v2093 = vmax.f32 %v1948, %v2077
        %v2094 = vmax.f32 %v1949, %v2078
        %v2095 = vmax.f32 %v1950, %v2079
        %v2096 = vmax.f32 %v1951, %v2080
        %v2097 = vmax.f32 %v1952, %v2081
        %v2098 = vmax.f32 %v1953, %v2082
        %v2099 = vmax.f32 %v1954, %v2083
        %v2100 = vmax.f32 %v1955, %v2084
        %v2101 = vmax.f32 %v1956, %v2085
        %v2102 = vmax.f32 %v1957, %v2086
        %v2103 = vmax.f32 %v1958, %v2087
        %2104 = vst [vmem:[%s239] sm:$0xff] %v2088
        %2105 = vst.msk [vmem:[%s239 + $0x8] sm:$0xff] %vm1347, %v2089
        %2106 = vst [vmem:[%s239 + $0x10] sm:$0xff] %v2090
        %2107 = vst.msk [vmem:[%s239 + $0x18] sm:$0xff] %vm1347, %v2091
        %2108 = vst [vmem:[%s239 + $0x20] sm:$0xff] %v2092
        %2109 = vst.msk [vmem:[%s239 + $0x28] sm:$0xff] %vm1347, %v2093
        %2110 = vst [vmem:[%s239 + $0x30] sm:$0xff] %v2094
        %2111 = vst.msk [vmem:[%s239 + $0x38] sm:$0xff] %vm1347, %v2095
        %2112 = vst [vmem:[%s239 + $0x40] sm:$0xff] %v2096
        %2113 = vst.msk [vmem:[%s239 + $0x48] sm:$0xff] %vm1347, %v2097
        %2114 = vst [vmem:[%s239 + $0x50] sm:$0xff] %v2098
        %2115 = vst.msk [vmem:[%s239 + $0x58] sm:$0xff] %vm1347, %v2099
        %2116 = vst [vmem:[%s239 + $0x60] sm:$0xff] %v2100
        %2117 = vst.msk [vmem:[%s239 + $0x68] sm:$0xff] %vm1347, %v2101
        %2118 = vst [vmem:[%s239 + $0x70] sm:$0xff] %v2102
        %2119 = vst.msk [vmem:[%s239 + $0x78] sm:$0xff] %vm1347, %v2103
        %p2120 = scmp.lt.s32.totalorder %s17, 1
        %s2121 = scalar_select %p2120, %s17, 1
        %s2122 = smul.addr %s2121, 16
        %s2123 = smul.addr %s2122, 8
        %s2124 = scalar_lea.vmem %s5, %s2123
        // Predicated region
        $region45: #{model2_forward.6} parent=39 // pred_check
          %p2125 = pneg %p145
        $region46: #{model2_forward.6} parent=39 // pred_check_branch
          %2127 = sbr.rel (%p2125) target = $region48
        $region47: #{model2_forward.6} parent=39 // pred_region
          _
        $region48: #{model2_forward.6} parent=39 // pred_fallthru
          _
      $region40: #{model2_forward.6} parent=5 // pred_fallthru
        _
      %p2128 = scmp.le.s32.totalorder 2, %s12
      // Predicated region
      $region49: #{model2_forward.6} parent=5 // pred_check
        %p2129 = pneg %p2128
      $region50: #{model2_forward.6} parent=5 // pred_check_branch
        %2131 = sbr.rel (%p2129) target = $region52
      $region51: #{model2_forward.6} parent=5 // pred_region
        %s2132 = ssub.s32 %s12, 2
        // Predicated region
        $region53: #{model2_forward.6} parent=51 // pred_check
          %p2133 = pneg %p151
        $region54: #{model2_forward.6} parent=51 // pred_check_branch
          %2135 = sbr.rel (%p2133) target = $region56
        $region55: #{model2_forward.6} parent=51 // pred_region
          %p2136 = scmp.lt.s32.totalorder %s18, 1
          %s2137 = scalar_select %p2136, %s18, 1
          %s2138 = smul.addr %s2137, 16
          %s2139 = smul.addr %s2138, 8
          %s2140 = scalar_lea.vmem %s5, %s2139
        $region56: #{model2_forward.6} parent=51 // pred_fallthru
          _
      $region52: #{model2_forward.6} parent=5 // pred_fallthru
        _
    $region6: #{model2_forward.6} parent=1 // loop_footer
      %s16 = sadd.s32 1, %s12
    $region7: #{model2_forward.6} parent=1 // loop_footer_branch
      %11 = sbr.rel target = $region3
    $region8: #{model2_forward.6} parent=1 // loop_exit
      _
    %2141 = vsyncpa [#allocation3], 1
    %s2142 = scalar_lea.sflag [#allocation3], 1
    %2143 = vsyncpa %s2142, 1

// kernel: model2_forward.7
$region0: #{model2_forward.7}
  #allocation0 [shape = 'u32[]', space=smem, size = 0x4, offset = 0x4, fixed_abs, tag = 'smem constant byte address 0x4 - core index']
  #allocation1 [shape = 'u32[144,128]{1,0:T(1,128)}', space=vmem, size = 0x12000, scoped, tag = 'internal scratch']
  #allocation2 [shape = 'f32[2,128]{1,0:T(2,128)}', space=vmem, size = 0x400, scoped, tag = 'scratch operand']
  %s0 = inlined_call_operand.vmem [shape: f32[2,16000], index: 0, kind: input, shape index: {}]
  %s1 = inlined_call_operand.hbm [shape: bf16[16000,128], index: 1, kind: input, shape index: {}]
  %s2 = inlined_call_operand.hbm [shape: f32[1,128], index: 2, kind: input, shape index: {}]
  %s3 = inlined_call_operand.vmem [shape: f32[128,64], index: 3, kind: input, shape index: {}]
  %s4 = inlined_call_operand.hbm [shape: f32[1,64], index: 4, kind: input, shape index: {}]
  %s5 = inlined_call_operand.vmem [shape: f32[64,12], index: 5, kind: input, shape index: {}]
  %s6 = inlined_call_operand.hbm [shape: f32[1,12], index: 6, kind: input, shape index: {}]
  %s7 = inlined_call_operand.hbm [shape: f32[2,12], index: 7, kind: output, shape index: {}]
  %s8 = sld [smem:[#allocation0]]
  $region85: #{model2_forward.7} parent=0
    _
  %s10 = ssub.s32 1, %s8
  %s11 = scalar_select 0, %s10, %s8
  $region1: #{model2_forward.7} parent=0
    #allocation3 [shape = 'u8[1638400]{0}', space=vmem, size = 0x190000, scoped, tag = 'input window, operand 1']
    #allocation4 [shape = 's32[2]{0}', space=sflag, size = 0x8, scoped, tag = 'scoped memory for model2_forward.7']
    #allocation5 [shape = 's32[2]{0}', space=sflag, size = 0x8, scoped, tag = 'scoped memory for model2_forward.7']
    #allocation6 [shape = 'u8[512]{0}', space=vmem, size = 0x400, scoped, tag = 'input window, operand 2, single buffered']
    #allocation7 [shape = 's32[1]{0}', space=sflag, size = 0x4, scoped, tag = 'scoped memory for model2_forward.7']
    #allocation8 [shape = 'u8[512]{0}', space=vmem, size = 0x400, scoped, tag = 'input window, operand 4, single buffered']
    #allocation9 [shape = 'u8[512]{0}', space=vmem, size = 0x400, scoped, tag = 'input window, operand 6, single buffered']
    #allocation10 [shape = 's32[1]{0}', space=sflag, size = 0x4, scoped, tag = 'scoped memory for model2_forward.7']
    #allocation11 [shape = 'u8[1024]{0}', space=vmem, size = 0x400, scoped, tag = 'output window, operand 0, single buffered']
    %12 = vsyncpa [#allocation4], 0
    %s13 = scalar_lea.sflag [#allocation4], 1
    %14 = vsyncpa %s13, 0
    %15 = vsyncpa [#allocation7], 0
    %16 = vsyncpa [#allocation10], 0
    %17 = vsyncpa [#allocation5], 0
    loop: start=0, step=1, limit=7
    $region2: #{model2_forward.7} parent=1 // loop_pre_header
      _
    $region3: #{model2_forward.7} parent=1 // loop_header
      %s19 = sphi 0, %s23
      %p20 = scmp.ge.s32.totalorder %s19, 7
      %s29 = sphi 0, %s31
      %s32 = sphi 0, %s29
      %s33 = sphi 0, %s32
      %s49 = sphi 0, %s33
      %s55 = sphi 0, %s57
      %s58 = sphi 0, %s55
      %s59 = sphi 0, %s58
      %s75 = sphi 0, %s59
      %s79 = sphi 0, %s79
      %s81 = sphi 0, %s79
      %s82 = sphi 0, %s81
      %s96 = sphi 0, %s82
      %s100 = sphi 0, %s100
      %s102 = sphi 0, %s100
      %s103 = sphi 0, %s102
      %s117 = sphi 0, %s103
      %s121 = sphi 0, %s121
      %s123 = sphi 0, %s121
      %s124 = sphi 0, %s123
      %s138 = sphi 0, %s124
      %s142 = sphi 0, %s142
      %s144 = sphi 0, %s142
      %s145 = sphi 0, %s144
      %s159 = sphi 0, %s145
      %s163 = sphi 0, %s163
      %s165 = sphi 0, %s163
      %s166 = sphi 0, %s165
      %s180 = sphi 0, %s166
      %s184 = sphi 0, %s184
      %s186 = sphi 0, %s184
      %s187 = sphi 0, %s186
      %s201 = sphi 0, %s187
    $region4: #{model2_forward.7} parent=1 // loop_header_branch
      %22 = sbr.rel (%p20) target = $region8
    $region5: #{model2_forward.7} parent=1 // loop_body
      %s24 = ssub.s32 %s19, 1
      %s25 = ssub.s32 %s19, 2
      %s26 = sadd.s32 %s19, 1
      %s27 = ssub.s32 %s19, %s26
      %p28 = scmp.eq.s32.totalorder %s27, 0
      %s30 = sadd.s32 %s29, 1
      %s31 = scalar_select %p28, %s29, %s30
      %p34 = pneg %p28
      %p35 = scmp.eq.s32.totalorder %s19, 4
      %p36 = por %p34, %p35
      %p37 = scmp.ne.s32.totalorder %s29, %s32
      %p38 = scmp.eq.s32.totalorder %s19, 0
      %p39 = por %p37, %p38
      %p40 = scmp.ne.s32.totalorder %s29, %s32
      %p41 = scmp.eq.s32.totalorder %s24, 4
      %p42 = por %p40, %p41
      %p43 = scmp.ne.s32.totalorder %s32, %s33
      %p44 = scmp.eq.s32.totalorder %s24, 0
      %p45 = por %p43, %p44
      %p46 = scmp.ne.s32.totalorder %s32, %s33
      %p47 = scmp.eq.s32.totalorder %s25, 4
      %p48 = por %p46, %p47
      %p50 = scmp.ne.s32.totalorder %s33, %s49
      %p51 = scmp.eq.s32.totalorder %s25, 0
      %p52 = por %p50, %p51
      %s53 = ssub.s32 %s19, %s26
      %p54 = scmp.eq.s32.totalorder %s53, 0
      %s56 = sadd.s32 %s55, 1
      %s57 = scalar_select %p54, %s55, %s56
      %p60 = pneg %p54
      %p61 = scmp.eq.s32.totalorder %s19, 4
      %p62 = por %p60, %p61
      %p63 = scmp.ne.s32.totalorder %s55, %s58
      %p64 = scmp.eq.s32.totalorder %s19, 0
      %p65 = por %p63, %p64
      %p66 = scmp.ne.s32.totalorder %s55, %s58
      %p67 = scmp.eq.s32.totalorder %s24, 4
      %p68 = por %p66, %p67
      %p69 = scmp.ne.s32.totalorder %s58, %s59
      %p70 = scmp.eq.s32.totalorder %s24, 0
      %p71 = por %p69, %p70
      %p72 = scmp.ne.s32.totalorder %s58, %s59
      %p73 = scmp.eq.s32.totalorder %s25, 4
      %p74 = por %p72, %p73
      %p76 = scmp.ne.s32.totalorder %s59, %s75
      %p77 = scmp.eq.s32.totalorder %s25, 0
      %p78 = por %p76, %p77
      %s80 = sadd.s32 %s79, 1
      %p83 = scmp.eq.s32.totalorder %s19, 4
      %p84 = scmp.ne.s32.totalorder %s79, %s81
      %p85 = scmp.eq.s32.totalorder %s19, 0
      %p86 = por %p84, %p85
      %p87 = scmp.ne.s32.totalorder %s79, %s81
      %p88 = scmp.eq.s32.totalorder %s24, 4
      %p89 = por %p87, %p88
      %p90 = scmp.ne.s32.totalorder %s81, %s82
      %p91 = scmp.eq.s32.totalorder %s24, 0
      %p92 = por %p90, %p91
      %p93 = scmp.ne.s32.totalorder %s81, %s82
      %p94 = scmp.eq.s32.totalorder %s25, 4
      %p95 = por %p93, %p94
      %p97 = scmp.ne.s32.totalorder %s82, %s96
      %p98 = scmp.eq.s32.totalorder %s25, 0
      %p99 = por %p97, %p98
      %s101 = sadd.s32 %s100, 1
      %p104 = scmp.eq.s32.totalorder %s19, 4
      %p105 = scmp.ne.s32.totalorder %s100, %s102
      %p106 = scmp.eq.s32.totalorder %s19, 0
      %p107 = por %p105, %p106
      %p108 = scmp.ne.s32.totalorder %s100, %s102
      %p109 = scmp.eq.s32.totalorder %s24, 4
      %p110 = por %p108, %p109
      %p111 = scmp.ne.s32.totalorder %s102, %s103
      %p112 = scmp.eq.s32.totalorder %s24, 0
      %p113 = por %p111, %p112
      %p114 = scmp.ne.s32.totalorder %s102, %s103
      %p115 = scmp.eq.s32.totalorder %s25, 4
      %p116 = por %p114, %p115
      %p118 = scmp.ne.s32.totalorder %s103, %s117
      %p119 = scmp.eq.s32.totalorder %s25, 0
      %p120 = por %p118, %p119
      %s122 = sadd.s32 %s121, 1
      %p125 = scmp.eq.s32.totalorder %s19, 4
      %p126 = scmp.ne.s32.totalorder %s121, %s123
      %p127 = scmp.eq.s32.totalorder %s19, 0
      %p128 = por %p126, %p127
      %p129 = scmp.ne.s32.totalorder %s121, %s123
      %p130 = scmp.eq.s32.totalorder %s24, 4
      %p131 = por %p129, %p130
      %p132 = scmp.ne.s32.totalorder %s123, %s124
      %p133 = scmp.eq.s32.totalorder %s24, 0
      %p134 = por %p132, %p133
      %p135 = scmp.ne.s32.totalorder %s123, %s124
      %p136 = scmp.eq.s32.totalorder %s25, 4
      %p137 = por %p135, %p136
      %p139 = scmp.ne.s32.totalorder %s124, %s138
      %p140 = scmp.eq.s32.totalorder %s25, 0
      %p141 = por %p139, %p140
      %s143 = sadd.s32 %s142, 1
      %p146 = scmp.eq.s32.totalorder %s19, 4
      %p147 = scmp.ne.s32.totalorder %s142, %s144
      %p148 = scmp.eq.s32.totalorder %s19, 0
      %p149 = por %p147, %p148
      %p150 = scmp.ne.s32.totalorder %s142, %s144
      %p151 = scmp.eq.s32.totalorder %s24, 4
      %p152 = por %p150, %p151
      %p153 = scmp.ne.s32.totalorder %s144, %s145
      %p154 = scmp.eq.s32.totalorder %s24, 0
      %p155 = por %p153, %p154
      %p156 = scmp.ne.s32.totalorder %s144, %s145
      %p157 = scmp.eq.s32.totalorder %s25, 4
      %p158 = por %p156, %p157
      %p160 = scmp.ne.s32.totalorder %s145, %s159
      %p161 = scmp.eq.s32.totalorder %s25, 0
      %p162 = por %p160, %p161
      %s164 = sadd.s32 %s163, 1
      %p167 = scmp.eq.s32.totalorder %s19, 4
      %p168 = scmp.ne.s32.totalorder %s163, %s165
      %p169 = scmp.eq.s32.totalorder %s19, 0
      %p170 = por %p168, %p169
      %p171 = scmp.ne.s32.totalorder %s163, %s165
      %p172 = scmp.eq.s32.totalorder %s24, 4
      %p173 = por %p171, %p172
      %p174 = scmp.ne.s32.totalorder %s165, %s166
      %p175 = scmp.eq.s32.totalorder %s24, 0
      %p176 = por %p174, %p175
      %p177 = scmp.ne.s32.totalorder %s165, %s166
      %p178 = scmp.eq.s32.totalorder %s25, 4
      %p179 = por %p177, %p178
      %p181 = scmp.ne.s32.totalorder %s166, %s180
      %p182 = scmp.eq.s32.totalorder %s25, 0
      %p183 = por %p181, %p182
      %s185 = sadd.s32 %s184, 1
      %p188 = scmp.eq.s32.totalorder %s19, 4
      %p189 = scmp.ne.s32.totalorder %s184, %s186
      %p190 = scmp.eq.s32.totalorder %s19, 0
      %p191 = por %p189, %p190
      %p192 = scmp.ne.s32.totalorder %s184, %s186
      %p193 = scmp.eq.s32.totalorder %s24, 4
      %p194 = por %p192, %p193
      %p195 = scmp.ne.s32.totalorder %s186, %s187
      %p196 = scmp.eq.s32.totalorder %s24, 0
      %p197 = por %p195, %p196
      %p198 = scmp.ne.s32.totalorder %s186, %s187
      %p199 = scmp.eq.s32.totalorder %s25, 4
      %p200 = por %p198, %p199
      %p202 = scmp.ne.s32.totalorder %s187, %s201
      %p203 = scmp.eq.s32.totalorder %s25, 0
      %p204 = por %p202, %p203
      %p205 = scmp.le.s32.totalorder 1, %s19
      %p206 = scmp.lt.s32.totalorder %s19, 6
      %p207 = pnand %p205, %p206
      %p208 = pneg %p207
      // Predicated region
      $region9: #{model2_forward.7} parent=5 // pred_check
        _
      $region10: #{model2_forward.7} parent=5 // pred_check_branch
        %210 = sbr.rel (%p207) target = $region12
      $region11: #{model2_forward.7} parent=5 // pred_region
        %s211 = ssub.s32 %s19, 1
        // Predicated region
        $region13: #{model2_forward.7} parent=11 // pred_check
          %p212 = pneg %p92
        $region14: #{model2_forward.7} parent=11 // pred_check_branch
          %214 = sbr.rel (%p212) target = $region16
        $region15: #{model2_forward.7} parent=11 // pred_region
          %s216 = ssub.s32 16, 16
          %217 = vsyncadd [#allocation7], %s216
          %s219 = sshll.u32 [#allocation6], 4
          %s220 = int_to_ptr.vmem [resolvable:$true] %s219
          %222 = dma.hbm_to_vmem [thread:$0]  %s2, 16, %s220, [#allocation7]
        $region16: #{model2_forward.7} parent=11 // pred_fallthru
          _
        // Predicated region
        $region17: #{model2_forward.7} parent=11 // pred_check
          %p223 = pneg %p113
        $region18: #{model2_forward.7} parent=11 // pred_check_branch
          %225 = sbr.rel (%p223) target = $region20
        $region19: #{model2_forward.7} parent=11 // pred_region
          _
        $region20: #{model2_forward.7} parent=11 // pred_fallthru
          _
        // Predicated region
        $region21: #{model2_forward.7} parent=11 // pred_check
          %p226 = pneg %p134
        $region22: #{model2_forward.7} parent=11 // pred_check_branch
          %228 = sbr.rel (%p226) target = $region24
        $region23: #{model2_forward.7} parent=11 // pred_region
          %s230 = ssub.s32 16, 16
          %231 = vsyncadd [#allocation7], %s230
          %s233 = sshll.u32 [#allocation8], 4
          %s234 = int_to_ptr.vmem [resolvable:$true] %s233
          %236 = dma.hbm_to_vmem [thread:$0]  %s4, 16, %s234, [#allocation7]
        $region24: #{model2_forward.7} parent=11 // pred_fallthru
          _
        // Predicated region
        $region25: #{model2_forward.7} parent=11 // pred_check
          %p237 = pneg %p155
        $region26: #{model2_forward.7} parent=11 // pred_check_branch
          %239 = sbr.rel (%p237) target = $region28
        $region27: #{model2_forward.7} parent=11 // pred_region
          _
        $region28: #{model2_forward.7} parent=11 // pred_fallthru
          _
        // Predicated region
        $region29: #{model2_forward.7} parent=11 // pred_check
          %p240 = pneg %p176
        $region30: #{model2_forward.7} parent=11 // pred_check_branch
          %242 = sbr.rel (%p240) target = $region32
        $region31: #{model2_forward.7} parent=11 // pred_region
          %s244 = ssub.s32 16, 16
          %245 = vsyncadd [#allocation10], %s244
          %s247 = sshll.u32 [#allocation9], 4
          %s248 = int_to_ptr.vmem [resolvable:$true] %s247
          %250 = dma.hbm_to_vmem [thread:$0]  %s6, 16, %s248, [#allocation10]
        $region32: #{model2_forward.7} parent=11 // pred_fallthru
          _
      $region12: #{model2_forward.7} parent=5 // pred_fallthru
        _
      %p251 = scmp.lt.s32.totalorder %s19, 5
      // Predicated region
      $region33: #{model2_forward.7} parent=5 // pred_check
        %p252 = pneg %p251
      $region34: #{model2_forward.7} parent=5 // pred_check_branch
        %254 = sbr.rel (%p252) target = $region36
      $region35: #{model2_forward.7} parent=5 // pred_region
        // Predicated region
        $region37: #{model2_forward.7} parent=35 // pred_check
          %p255 = pneg %p39
        $region38: #{model2_forward.7} parent=35 // pred_check_branch
          %257 = sbr.rel (%p255) target = $region40
        $region39: #{model2_forward.7} parent=35 // pred_region
          %s258 = smul.u32 25, %s19
          %p259 = scmp.lt.s32.totalorder %s258, 124
          %s260 = scalar_select %p259, %s258, 124
          %s261 = smul.addr %s260, 2
          %s262 = scalar_lea.vmem %s0, %s261
          %s263 = smul.u32 25, %s19
        $region40: #{model2_forward.7} parent=35 // pred_fallthru
          _
        // Predicated region
        $region41: #{model2_forward.7} parent=35 // pred_check
          %p264 = pneg %p65
        $region42: #{model2_forward.7} parent=35 // pred_check_branch
          %266 = sbr.rel (%p264) target = $region44
        $region43: #{model2_forward.7} parent=35 // pred_region
          %s267 = sand.u32 %s55, 1
          %s268 = scalar_lea.sflag [#allocation4], %s267
          %s269 = sand.u32 %s55, 1
          %s270 = smul.addr %s269, 1600
          %s271 = scalar_lea.vmem [#allocation3], %s270
          %s272 = smul.u32 400, %s19
          %s274 = ssub.s32 25600, 25600
          %275 = vsyncadd %s268, %s274
          %s276 = smul.addr %s272, 64
          %s277 = scalar_lea.hbm %s1, %s276
          %s278 = sshll.u32 %s271, 4
          %s279 = int_to_ptr.vmem [resolvable:$true] %s278
          %284 = dma.hbm_to_vmem [thread:$0]  %s277, 25600, %s279, %s268, 64, 64, 4
        $region44: #{model2_forward.7} parent=35 // pred_fallthru
          _
      $region36: #{model2_forward.7} parent=5 // pred_fallthru
        _
      %p285 = scmp.le.s32.totalorder 1, %s19
      %p286 = scmp.lt.s32.totalorder %s19, 6
      %p287 = pnand %p285, %p286
      %p288 = pneg %p287
      // Predicated region
      $region45: #{model2_forward.7} parent=5 // pred_check
        _
      $region46: #{model2_forward.7} parent=5 // pred_check_branch
        %290 = sbr.rel (%p287) target = $region48
      $region47: #{model2_forward.7} parent=5 // pred_region
        %s291 = ssub.s32 %s19, 1
        %s292 = sand.u32 %s58, 1
        %s293 = scalar_lea.sflag [#allocation4], %s292
        %s294 = sand.u32 %s58, 1
        %s295 = smul.addr %s294, 1600
        %s296 = scalar_lea.vmem [#allocation3], %s295
        // Predicated region
        $region49: #{model2_forward.7} parent=47 // pred_check
          %p297 = pneg %p71
        $region50: #{model2_forward.7} parent=47 // pred_check_branch
          %299 = sbr.rel (%p297) target = $region52
        $region51: #{model2_forward.7} parent=47 // pred_region
          %300 = dma.done %s293, 25600
        $region52: #{model2_forward.7} parent=47 // pred_fallthru
          _
        // Predicated region
        $region53: #{model2_forward.7} parent=47 // pred_check
          %p301 = pneg %p92
        $region54: #{model2_forward.7} parent=47 // pred_check_branch
          %303 = sbr.rel (%p301) target = $region56
        $region55: #{model2_forward.7} parent=47 // pred_region
          %304 = dma.done [#allocation7], 16
        $region56: #{model2_forward.7} parent=47 // pred_fallthru
          _
        // Predicated region
        $region57: #{model2_forward.7} parent=47 // pred_check
          %p305 = pneg %p134
        $region58: #{model2_forward.7} parent=47 // pred_check_branch
          %307 = sbr.rel (%p305) target = $region60
        $region59: #{model2_forward.7} parent=47 // pred_region
          %308 = dma.done [#allocation7], 16
        $region60: #{model2_forward.7} parent=47 // pred_fallthru
          _
        // Predicated region
        $region61: #{model2_forward.7} parent=47 // pred_check
          %p309 = pneg %p176
        $region62: #{model2_forward.7} parent=47 // pred_check_branch
          %311 = sbr.rel (%p309) target = $region64
        $region63: #{model2_forward.7} parent=47 // pred_region
          %312 = dma.done [#allocation10], 16
        $region64: #{model2_forward.7} parent=47 // pred_fallthru
          _
        %s313 = smul.u32 25, %s24
        %p314 = scmp.lt.s32.totalorder %s313, 124
        %s315 = scalar_select %p314, %s313, 124
        %s316 = smul.addr %s315, 2
        %s317 = scalar_lea.vmem %s0, %s316
        %p318 = pneg %p45
        %p319 = pneg %p42
        %s320 = sand.u32 %s58, 1
        %s321 = scalar_lea.sflag [#allocation4], %s320
        %s322 = sand.u32 %s58, 1
        %s323 = smul.addr %s322, 1600
        %s324 = scalar_lea.vmem [#allocation3], %s323
        %p325 = pneg %p71
        %p326 = pneg %p68
        %p327 = pneg %p92
        %p328 = pneg %p89
        %p329 = pneg %p113
        %p330 = pneg %p110
        %p331 = pneg %p134
        %p332 = pneg %p131
        %p333 = pneg %p155
        %p334 = pneg %p152
        %p335 = pneg %p176
        %p336 = pneg %p173
        %p337 = pneg %p197
        %p338 = pneg %p194
        %s339 = smul.u32 25, %s24
        %p340 = scmp.lt.s32.totalorder %s339, 124
        %s341 = scalar_select %p340, %s339, 124
        %s342 = smul.addr %s341, 2
        %s343 = scalar_lea.vmem %s0, %s342
        %s344 = smul.u32 25, %s24
        %s345 = smul.u32 400, %s24
        %p347 = scmp.eq.s32.totalorder %s24, 0
        // Predicated region
        $region65: #{model2_forward.7} parent=47 // pred_check
          %p348 = pneg %p347
        $region66: #{model2_forward.7} parent=47 // pred_check_branch
          %350 = sbr.rel (%p348) target = $region68
        $region67: #{model2_forward.7} parent=47 // pred_region
          %351 = vst [vmem:[#allocation2] sm:$0x3] 0.0
        $region68: #{model2_forward.7} parent=47 // pred_fallthru
          _
        %v352 = vld [vmem:[#allocation2] sm:$0x3]
        %v353 = vld [vmem:[%s343] sm:$0xff]
        %v354 = vld [vmem:[%s343 + $0x8] sm:$0xff]
        %v355 = vld [vmem:[%s343 + $0x10] sm:$0xff]
        %v356 = vld [vmem:[%s343 + $0x18] sm:$0xff]
        %v357 = vld [vmem:[%s343 + $0x20] sm:$0xff]
        %v358 = vld [vmem:[%s343 + $0x28] sm:$0xff]
        %v359 = vld [vmem:[%s343 + $0x30] sm:$0x3]
        %v367 = vcombine.high %v353, %v353
        %v369 = vunpack.c.l.s4 1983009808
        %v370 = vunpack.c.0.s8 %v369
        %v371 = vlaneseq
        %v372 = vshrl.u32 %v371, 7
        %v373 = vsub.s32 %v370, %v372
        %v374 = vrot.slane %v353, %v373
        %v376 = vunpack.c.l.s4 1983009808
        %v377 = vunpack.c.0.s8 %v376
        %v378 = vlaneseq
        %v379 = vshrl.u32 %v378, 7
        %v380 = vsub.s32 %v377, %v379
        %v381 = vrot.slane %v367, %v380
        %v382 = vcombine.high %v374, %v374
        %v383 = vcombine.high %v381, %v381
        %v384 = vcombine.high %v354, %v354
        %v386 = vunpack.c.l.s4 1983009808
        %v387 = vunpack.c.0.s8 %v386
        %v388 = vlaneseq
        %v389 = vshrl.u32 %v388, 7
        %v390 = vsub.s32 %v387, %v389
        %v391 = vrot.slane %v354, %v390
        %v393 = vunpack.c.l.s4 1983009808
        %v394 = vunpack.c.0.s8 %v393
        %v395 = vlaneseq
        %v396 = vshrl.u32 %v395, 7
        %v397 = vsub.s32 %v394, %v396
        %v398 = vrot.slane %v384, %v397
        %v399 = vcombine.high %v391, %v391
        %v400 = vcombine.high %v398, %v398
        %v401 = vcombine.high %v355, %v355
        %v403 = vunpack.c.l.s4 1983009808
        %v404 = vunpack.c.0.s8 %v403
        %v405 = vlaneseq
        %v406 = vshrl.u32 %v405, 7
        %v407 = vsub.s32 %v404, %v406
        %v408 = vrot.slane %v355, %v407
        %v410 = vunpack.c.l.s4 1983009808
        %v411 = vunpack.c.0.s8 %v410
        %v412 = vlaneseq
        %v413 = vshrl.u32 %v412, 7
        %v414 = vsub.s32 %v411, %v413
        %v415 = vrot.slane %v401, %v414
        %v416 = vcombine.high %v408, %v408
        %v417 = vcombine.high %v415, %v415
        %v418 = vcombine.high %v356, %v356
        %v420 = vunpack.c.l.s4 1983009808
        %v421 = vunpack.c.0.s8 %v420
        %v422 = vlaneseq
        %v423 = vshrl.u32 %v422, 7
        %v424 = vsub.s32 %v421, %v423
        %v425 = vrot.slane %v356, %v424
        %v427 = vunpack.c.l.s4 1983009808
        %v428 = vunpack.c.0.s8 %v427
        %v429 = vlaneseq
        %v430 = vshrl.u32 %v429, 7
        %v431 = vsub.s32 %v428, %v430
        %v432 = vrot.slane %v418, %v431
        %v433 = vcombine.high %v425, %v425
        %v434 = vcombine.high %v432, %v432
        %v435 = vcombine.high %v357, %v357
        %v437 = vunpack.c.l.s4 1983009808
        %v438 = vunpack.c.0.s8 %v437
        %v439 = vlaneseq
        %v440 = vshrl.u32 %v439, 7
        %v441 = vsub.s32 %v438, %v440
        %v442 = vrot.slane %v357, %v441
        %v444 = vunpack.c.l.s4 1983009808
        %v445 = vunpack.c.0.s8 %v444
        %v446 = vlaneseq
        %v447 = vshrl.u32 %v446, 7
        %v448 = vsub.s32 %v445, %v447
        %v449 = vrot.slane %v435, %v448
        %v450 = vcombine.high %v442, %v442
        %v451 = vcombine.high %v449, %v449
        %v452 = vcombine.high %v358, %v358
        %v454 = vunpack.c.l.s4 1983009808
        %v455 = vunpack.c.0.s8 %v454
        %v456 = vlaneseq
        %v457 = vshrl.u32 %v456, 7
        %v458 = vsub.s32 %v455, %v457
        %v459 = vrot.slane %v358, %v458
        %v461 = vunpack.c.l.s4 1983009808
        %v462 = vunpack.c.0.s8 %v461
        %v463 = vlaneseq
        %v464 = vshrl.u32 %v463, 7
        %v465 = vsub.s32 %v462, %v464
        %v466 = vrot.slane %v452, %v465
        %v467 = vcombine.high %v459, %v459
        %v468 = vcombine.high %v466, %v466
        %v470 = vunpack.c.l.s4 1983009808
        %v471 = vunpack.c.0.s8 %v470
        %v472 = vlaneseq
        %v473 = vshrl.u32 %v472, 7
        %v474 = vsub.s32 %v471, %v473
        %v475 = vrot.slane %v359, %v474
        %v501 = vpack.c.bf16 %v374, %v374
        %v502 = vpack.c.bf16 %v382, %v382
        %v503 = vpack.c.bf16 %v381, %v381
        %v504 = vpack.c.bf16 %v383, %v383
        %v505 = vpack.c.bf16 %v391, %v391
        %v506 = vpack.c.bf16 %v399, %v399
        %v507 = vpack.c.bf16 %v398, %v398
        %v508 = vpack.c.bf16 %v400, %v400
        %v509 = vpack.c.bf16 %v408, %v408
        %v510 = vpack.c.bf16 %v416, %v416
        %v511 = vpack.c.bf16 %v415, %v415
        %v512 = vpack.c.bf16 %v417, %v417
        %v513 = vpack.c.bf16 %v425, %v425
        %v514 = vpack.c.bf16 %v433, %v433
        %v515 = vpack.c.bf16 %v432, %v432
        %v516 = vpack.c.bf16 %v434, %v434
        %v517 = vpack.c.bf16 %v442, %v442
        %v518 = vpack.c.bf16 %v450, %v450
        %v519 = vpack.c.bf16 %v449, %v449
        %v520 = vpack.c.bf16 %v451, %v451
        %v521 = vpack.c.bf16 %v459, %v459
        %v522 = vpack.c.bf16 %v467, %v467
        %v523 = vpack.c.bf16 %v466, %v466
        %v524 = vpack.c.bf16 %v468, %v468
        %v525 = vpack.c.bf16 %v475, %v475
        %v526 = vld [vmem:[%s296] sm:$0xf]
        %v527 = vld [vmem:[%s296 + $0x4] sm:$0xf]
        %v528 = vld [vmem:[%s296 + $0x8] sm:$0xf]
        %v529 = vld [vmem:[%s296 + $0xc] sm:$0xf]
        %v530 = vld [vmem:[%s296 + $0x10] sm:$0xf]
        %v531 = vld [vmem:[%s296 + $0x14] sm:$0xf]
        %v532 = vld [vmem:[%s296 + $0x18] sm:$0xf]
        %v533 = vld [vmem:[%s296 + $0x1c] sm:$0xf]
        %v534 = vld [vmem:[%s296 + $0x20] sm:$0xf]
        %v535 = vld [vmem:[%s296 + $0x24] sm:$0xf]
        %v536 = vld [vmem:[%s296 + $0x28] sm:$0xf]
        %v537 = vld [vmem:[%s296 + $0x2c] sm:$0xf]
        %v538 = vld [vmem:[%s296 + $0x30] sm:$0xf]
        %v539 = vld [vmem:[%s296 + $0x34] sm:$0xf]
        %v540 = vld [vmem:[%s296 + $0x38] sm:$0xf]
        %v541 = vld [vmem:[%s296 + $0x3c] sm:$0xf]
        %v542 = vld [vmem:[%s296 + $0x40] sm:$0xf]
        %v543 = vld [vmem:[%s296 + $0x44] sm:$0xf]
        %v544 = vld [vmem:[%s296 + $0x48] sm:$0xf]
        %v545 = vld [vmem:[%s296 + $0x4c] sm:$0xf]
        %v546 = vld [vmem:[%s296 + $0x50] sm:$0xf]
        %v547 = vld [vmem:[%s296 + $0x54] sm:$0xf]
        %v548 = vld [vmem:[%s296 + $0x58] sm:$0xf]
        %v549 = vld [vmem:[%s296 + $0x5c] sm:$0xf]
        %v550 = vld [vmem:[%s296 + $0x60] sm:$0xf]
        %v551 = vld [vmem:[%s296 + $0x64] sm:$0xf]
        %v552 = vld [vmem:[%s296 + $0x68] sm:$0xf]
        %v553 = vld [vmem:[%s296 + $0x6c] sm:$0xf]
        %v554 = vld [vmem:[%s296 + $0x70] sm:$0xf]
        %v555 = vld [vmem:[%s296 + $0x74] sm:$0xf]
        %v556 = vld [vmem:[%s296 + $0x78] sm:$0xf]
        %v557 = vld [vmem:[%s296 + $0x7c] sm:$0xf]
        %v558 = vld [vmem:[%s296 + $0x80] sm:$0xf]
        %v559 = vld [vmem:[%s296 + $0x84] sm:$0xf]
        %v560 = vld [vmem:[%s296 + $0x88] sm:$0xf]
        %v561 = vld [vmem:[%s296 + $0x8c] sm:$0xf]
        %v562 = vld [vmem:[%s296 + $0x90] sm:$0xf]
        %v563 = vld [vmem:[%s296 + $0x94] sm:$0xf]
        %v564 = vld [vmem:[%s296 + $0x98] sm:$0xf]
        %v565 = vld [vmem:[%s296 + $0x9c] sm:$0xf]
        %v566 = vld [vmem:[%s296 + $0xa0] sm:$0xf]
        %v567 = vld [vmem:[%s296 + $0xa4] sm:$0xf]
        %v568 = vld [vmem:[%s296 + $0xa8] sm:$0xf]
        %v569 = vld [vmem:[%s296 + $0xac] sm:$0xf]
        %v570 = vld [vmem:[%s296 + $0xb0] sm:$0xf]
        %v571 = vld [vmem:[%s296 + $0xb4] sm:$0xf]
        %v572 = vld [vmem:[%s296 + $0xb8] sm:$0xf]
        %v573 = vld [vmem:[%s296 + $0xbc] sm:$0xf]
        %v574 = vld [vmem:[%s296 + $0xc0] sm:$0xf]
        %v575 = vld [vmem:[%s296 + $0xc4] sm:$0xf]
        %v576 = vld [vmem:[%s296 + $0xc8] sm:$0xf]
        %v577 = vld [vmem:[%s296 + $0xcc] sm:$0xf]
        %v578 = vld [vmem:[%s296 + $0xd0] sm:$0xf]
        %v579 = vld [vmem:[%s296 + $0xd4] sm:$0xf]
        %v580 = vld [vmem:[%s296 + $0xd8] sm:$0xf]
        %v581 = vld [vmem:[%s296 + $0xdc] sm:$0xf]
        %v582 = vld [vmem:[%s296 + $0xe0] sm:$0xf]
        %v583 = vld [vmem:[%s296 + $0xe4] sm:$0xf]
        %v584 = vld [vmem:[%s296 + $0xe8] sm:$0xf]
        %v585 = vld [vmem:[%s296 + $0xec] sm:$0xf]
        %v586 = vld [vmem:[%s296 + $0xf0] sm:$0xf]
        %v587 = vld [vmem:[%s296 + $0xf4] sm:$0xf]
        %v588 = vld [vmem:[%s296 + $0xf8] sm:$0xf]
        %v589 = vld [vmem:[%s296 + $0xfc] sm:$0xf]
        %v590 = vld [vmem:[%s296 + $0x100] sm:$0xf]
        %v591 = vld [vmem:[%s296 + $0x104] sm:$0xf]
        %v592 = vld [vmem:[%s296 + $0x108] sm:$0xf]
        %v593 = vld [vmem:[%s296 + $0x10c] sm:$0xf]
        %v594 = vld [vmem:[%s296 + $0x110] sm:$0xf]
        %v595 = vld [vmem:[%s296 + $0x114] sm:$0xf]
        %v596 = vld [vmem:[%s296 + $0x118] sm:$0xf]
        %v597 = vld [vmem:[%s296 + $0x11c] sm:$0xf]
        %v598 = vld [vmem:[%s296 + $0x120] sm:$0xf]
        %v599 = vld [vmem:[%s296 + $0x124] sm:$0xf]
        %v600 = vld [vmem:[%s296 + $0x128] sm:$0xf]
        %v601 = vld [vmem:[%s296 + $0x12c] sm:$0xf]
        %v602 = vld [vmem:[%s296 + $0x130] sm:$0xf]
        %v603 = vld [vmem:[%s296 + $0x134] sm:$0xf]
        %v604 = vld [vmem:[%s296 + $0x138] sm:$0xf]
        %v605 = vld [vmem:[%s296 + $0x13c] sm:$0xf]
        %v606 = vld [vmem:[%s296 + $0x140] sm:$0xf]
        %v607 = vld [vmem:[%s296 + $0x144] sm:$0xf]
        %v608 = vld [vmem:[%s296 + $0x148] sm:$0xf]
        %v609 = vld [vmem:[%s296 + $0x14c] sm:$0xf]
        %v610 = vld [vmem:[%s296 + $0x150] sm:$0xf]
        %v611 = vld [vmem:[%s296 + $0x154] sm:$0xf]
        %v612 = vld [vmem:[%s296 + $0x158] sm:$0xf]
        %v613 = vld [vmem:[%s296 + $0x15c] sm:$0xf]
        %v614 = vld [vmem:[%s296 + $0x160] sm:$0xf]
        %v615 = vld [vmem:[%s296 + $0x164] sm:$0xf]
        %v616 = vld [vmem:[%s296 + $0x168] sm:$0xf]
        %v617 = vld [vmem:[%s296 + $0x16c] sm:$0xf]
        %v618 = vld [vmem:[%s296 + $0x170] sm:$0xf]
        %v619 = vld [vmem:[%s296 + $0x174] sm:$0xf]
        %v620 = vld [vmem:[%s296 + $0x178] sm:$0xf]
        %v621 = vld [vmem:[%s296 + $0x17c] sm:$0xf]
        %v622 = vld [vmem:[%s296 + $0x180] sm:$0xf]
        %v623 = vld [vmem:[%s296 + $0x184] sm:$0xf]
        %v624 = vld [vmem:[%s296 + $0x188] sm:$0xf]
        %v625 = vld [vmem:[%s296 + $0x18c] sm:$0xf]
        %v626 = vld [vmem:[%s296 + $0x190] sm:$0xf]
        %v627 = vld [vmem:[%s296 + $0x194] sm:$0xf]
        %v628 = vld [vmem:[%s296 + $0x198] sm:$0xf]
        %v629 = vld [vmem:[%s296 + $0x19c] sm:$0xf]
        %v630 = vld [vmem:[%s296 + $0x1a0] sm:$0xf]
        %v631 = vld [vmem:[%s296 + $0x1a4] sm:$0xf]
        %v632 = vld [vmem:[%s296 + $0x1a8] sm:$0xf]
        %v633 = vld [vmem:[%s296 + $0x1ac] sm:$0xf]
        %v634 = vld [vmem:[%s296 + $0x1b0] sm:$0xf]
        %v635 = vld [vmem:[%s296 + $0x1b4] sm:$0xf]
        %v636 = vld [vmem:[%s296 + $0x1b8] sm:$0xf]
        %v637 = vld [vmem:[%s296 + $0x1bc] sm:$0xf]
        %v638 = vld [vmem:[%s296 + $0x1c0] sm:$0xf]
        %v639 = vld [vmem:[%s296 + $0x1c4] sm:$0xf]
        %v640 = vld [vmem:[%s296 + $0x1c8] sm:$0xf]
        %v641 = vld [vmem:[%s296 + $0x1cc] sm:$0xf]
        %v642 = vld [vmem:[%s296 + $0x1d0] sm:$0xf]
        %v643 = vld [vmem:[%s296 + $0x1d4] sm:$0xf]
        %v644 = vld [vmem:[%s296 + $0x1d8] sm:$0xf]
        %v645 = vld [vmem:[%s296 + $0x1dc] sm:$0xf]
        %v646 = vld [vmem:[%s296 + $0x1e0] sm:$0xf]
        %v647 = vld [vmem:[%s296 + $0x1e4] sm:$0xf]
        %v648 = vld [vmem:[%s296 + $0x1e8] sm:$0xf]
        %v649 = vld [vmem:[%s296 + $0x1ec] sm:$0xf]
        %v650 = vld [vmem:[%s296 + $0x1f0] sm:$0xf]
        %v651 = vld [vmem:[%s296 + $0x1f4] sm:$0xf]
        %v652 = vld [vmem:[%s296 + $0x1f8] sm:$0xf]
        %v653 = vld [vmem:[%s296 + $0x1fc] sm:$0xf]
        %v654 = vld [vmem:[%s296 + $0x200] sm:$0xf]
        %v655 = vld [vmem:[%s296 + $0x204] sm:$0xf]
        %v656 = vld [vmem:[%s296 + $0x208] sm:$0xf]
        %v657 = vld [vmem:[%s296 + $0x20c] sm:$0xf]
        %v658 = vld [vmem:[%s296 + $0x210] sm:$0xf]
        %v659 = vld [vmem:[%s296 + $0x214] sm:$0xf]
        %v660 = vld [vmem:[%s296 + $0x218] sm:$0xf]
        %v661 = vld [vmem:[%s296 + $0x21c] sm:$0xf]
        %v662 = vld [vmem:[%s296 + $0x220] sm:$0xf]
        %v663 = vld [vmem:[%s296 + $0x224] sm:$0xf]
        %v664 = vld [vmem:[%s296 + $0x228] sm:$0xf]
        %v665 = vld [vmem:[%s296 + $0x22c] sm:$0xf]
        %v666 = vld [vmem:[%s296 + $0x230] sm:$0xf]
        %v667 = vld [vmem:[%s296 + $0x234] sm:$0xf]
        %v668 = vld [vmem:[%s296 + $0x238] sm:$0xf]
        %v669 = vld [vmem:[%s296 + $0x23c] sm:$0xf]
        %v670 = vld [vmem:[%s296 + $0x240] sm:$0xf]
        %v671 = vld [vmem:[%s296 + $0x244] sm:$0xf]
        %v672 = vld [vmem:[%s296 + $0x248] sm:$0xf]
        %v673 = vld [vmem:[%s296 + $0x24c] sm:$0xf]
        %v674 = vld [vmem:[%s296 + $0x250] sm:$0xf]
        %v675 = vld [vmem:[%s296 + $0x254] sm:$0xf]
        %v676 = vld [vmem:[%s296 + $0x258] sm:$0xf]
        %v677 = vld [vmem:[%s296 + $0x25c] sm:$0xf]
        %v678 = vld [vmem:[%s296 + $0x260] sm:$0xf]
        %v679 = vld [vmem:[%s296 + $0x264] sm:$0xf]
        %v680 = vld [vmem:[%s296 + $0x268] sm:$0xf]
        %v681 = vld [vmem:[%s296 + $0x26c] sm:$0xf]
        %v682 = vld [vmem:[%s296 + $0x270] sm:$0xf]
        %v683 = vld [vmem:[%s296 + $0x274] sm:$0xf]
        %v684 = vld [vmem:[%s296 + $0x278] sm:$0xf]
        %v685 = vld [vmem:[%s296 + $0x27c] sm:$0xf]
        %v686 = vld [vmem:[%s296 + $0x280] sm:$0xf]
        %v687 = vld [vmem:[%s296 + $0x284] sm:$0xf]
        %v688 = vld [vmem:[%s296 + $0x288] sm:$0xf]
        %v689 = vld [vmem:[%s296 + $0x28c] sm:$0xf]
        %v690 = vld [vmem:[%s296 + $0x290] sm:$0xf]
        %v691 = vld [vmem:[%s296 + $0x294] sm:$0xf]
        %v692 = vld [vmem:[%s296 + $0x298] sm:$0xf]
        %v693 = vld [vmem:[%s296 + $0x29c] sm:$0xf]
        %v694 = vld [vmem:[%s296 + $0x2a0] sm:$0xf]
        %v695 = vld [vmem:[%s296 + $0x2a4] sm:$0xf]
        %v696 = vld [vmem:[%s296 + $0x2a8] sm:$0xf]
        %v697 = vld [vmem:[%s296 + $0x2ac] sm:$0xf]
        %v698 = vld [vmem:[%s296 + $0x2b0] sm:$0xf]
        %v699 = vld [vmem:[%s296 + $0x2b4] sm:$0xf]
        %v700 = vld [vmem:[%s296 + $0x2b8] sm:$0xf]
        %v701 = vld [vmem:[%s296 + $0x2bc] sm:$0xf]
        %v702 = vld [vmem:[%s296 + $0x2c0] sm:$0xf]
        %v703 = vld [vmem:[%s296 + $0x2c4] sm:$0xf]
        %v704 = vld [vmem:[%s296 + $0x2c8] sm:$0xf]
        %v705 = vld [vmem:[%s296 + $0x2cc] sm:$0xf]
        %v706 = vld [vmem:[%s296 + $0x2d0] sm:$0xf]
        %v707 = vld [vmem:[%s296 + $0x2d4] sm:$0xf]
        %v708 = vld [vmem:[%s296 + $0x2d8] sm:$0xf]
        %v709 = vld [vmem:[%s296 + $0x2dc] sm:$0xf]
        %v710 = vld [vmem:[%s296 + $0x2e0] sm:$0xf]
        %v711 = vld [vmem:[%s296 + $0x2e4] sm:$0xf]
        %v712 = vld [vmem:[%s296 + $0x2e8] sm:$0xf]
        %v713 = vld [vmem:[%s296 + $0x2ec] sm:$0xf]
        %v714 = vld [vmem:[%s296 + $0x2f0] sm:$0xf]
        %v715 = vld [vmem:[%s296 + $0x2f4] sm:$0xf]
        %v716 = vld [vmem:[%s296 + $0x2f8] sm:$0xf]
        %v717 = vld [vmem:[%s296 + $0x2fc] sm:$0xf]
        %v718 = vld [vmem:[%s296 + $0x300] sm:$0xf]
        %v719 = vld [vmem:[%s296 + $0x304] sm:$0xf]
        %v720 = vld [vmem:[%s296 + $0x308] sm:$0xf]
        %v721 = vld [vmem:[%s296 + $0x30c] sm:$0xf]
        %v722 = vld [vmem:[%s296 + $0x310] sm:$0xf]
        %v723 = vld [vmem:[%s296 + $0x314] sm:$0xf]
        %v724 = vld [vmem:[%s296 + $0x318] sm:$0xf]
        %v725 = vld [vmem:[%s296 + $0x31c] sm:$0xf]
        %v726 = vld [vmem:[%s296 + $0x320] sm:$0xf]
        %v727 = vld [vmem:[%s296 + $0x324] sm:$0xf]
        %v728 = vld [vmem:[%s296 + $0x328] sm:$0xf]
        %v729 = vld [vmem:[%s296 + $0x32c] sm:$0xf]
        %v730 = vld [vmem:[%s296 + $0x330] sm:$0xf]
        %v731 = vld [vmem:[%s296 + $0x334] sm:$0xf]
        %v732 = vld [vmem:[%s296 + $0x338] sm:$0xf]
        %v733 = vld [vmem:[%s296 + $0x33c] sm:$0xf]
        %v734 = vld [vmem:[%s296 + $0x340] sm:$0xf]
        %v735 = vld [vmem:[%s296 + $0x344] sm:$0xf]
        %v736 = vld [vmem:[%s296 + $0x348] sm:$0xf]
        %v737 = vld [vmem:[%s296 + $0x34c] sm:$0xf]
        %v738 = vld [vmem:[%s296 + $0x350] sm:$0xf]
        %v739 = vld [vmem:[%s296 + $0x354] sm:$0xf]
        %v740 = vld [vmem:[%s296 + $0x358] sm:$0xf]
        %v741 = vld [vmem:[%s296 + $0x35c] sm:$0xf]
        %v742 = vld [vmem:[%s296 + $0x360] sm:$0xf]
        %v743 = vld [vmem:[%s296 + $0x364] sm:$0xf]
        %v744 = vld [vmem:[%s296 + $0x368] sm:$0xf]
        %v745 = vld [vmem:[%s296 + $0x36c] sm:$0xf]
        %v746 = vld [vmem:[%s296 + $0x370] sm:$0xf]
        %v747 = vld [vmem:[%s296 + $0x374] sm:$0xf]
        %v748 = vld [vmem:[%s296 + $0x378] sm:$0xf]
        %v749 = vld [vmem:[%s296 + $0x37c] sm:$0xf]
        %v750 = vld [vmem:[%s296 + $0x380] sm:$0xf]
        %v751 = vld [vmem:[%s296 + $0x384] sm:$0xf]
        %v752 = vld [vmem:[%s296 + $0x388] sm:$0xf]
        %v753 = vld [vmem:[%s296 + $0x38c] sm:$0xf]
        %v754 = vld [vmem:[%s296 + $0x390] sm:$0xf]
        %v755 = vld [vmem:[%s296 + $0x394] sm:$0xf]
        %v756 = vld [vmem:[%s296 + $0x398] sm:$0xf]
        %v757 = vld [vmem:[%s296 + $0x39c] sm:$0xf]
        %v758 = vld [vmem:[%s296 + $0x3a0] sm:$0xf]
        %v759 = vld [vmem:[%s296 + $0x3a4] sm:$0xf]
        %v760 = vld [vmem:[%s296 + $0x3a8] sm:$0xf]
        %v761 = vld [vmem:[%s296 + $0x3ac] sm:$0xf]
        %v762 = vld [vmem:[%s296 + $0x3b0] sm:$0xf]
        %v763 = vld [vmem:[%s296 + $0x3b4] sm:$0xf]
        %v764 = vld [vmem:[%s296 + $0x3b8] sm:$0xf]
        %v765 = vld [vmem:[%s296 + $0x3bc] sm:$0xf]
        %v766 = vld [vmem:[%s296 + $0x3c0] sm:$0xf]
        %v767 = vld [vmem:[%s296 + $0x3c4] sm:$0xf]
        %v768 = vld [vmem:[%s296 + $0x3c8] sm:$0xf]
        %v769 = vld [vmem:[%s296 + $0x3cc] sm:$0xf]
        %v770 = vld [vmem:[%s296 + $0x3d0] sm:$0xf]
        %v771 = vld [vmem:[%s296 + $0x3d4] sm:$0xf]
        %v772 = vld [vmem:[%s296 + $0x3d8] sm:$0xf]
        %v773 = vld [vmem:[%s296 + $0x3dc] sm:$0xf]
        %v774 = vld [vmem:[%s296 + $0x3e0] sm:$0xf]
        %v775 = vld [vmem:[%s296 + $0x3e4] sm:$0xf]
        %v776 = vld [vmem:[%s296 + $0x3e8] sm:$0xf]
        %v777 = vld [vmem:[%s296 + $0x3ec] sm:$0xf]
        %v778 = vld [vmem:[%s296 + $0x3f0] sm:$0xf]
        %v779 = vld [vmem:[%s296 + $0x3f4] sm:$0xf]
        %v780 = vld [vmem:[%s296 + $0x3f8] sm:$0xf]
        %v781 = vld [vmem:[%s296 + $0x3fc] sm:$0xf]
        %v782 = vld [vmem:[%s296 + $0x400] sm:$0xf]
        %v783 = vld [vmem:[%s296 + $0x404] sm:$0xf]
        %v784 = vld [vmem:[%s296 + $0x408] sm:$0xf]
        %v785 = vld [vmem:[%s296 + $0x40c] sm:$0xf]
        %v786 = vld [vmem:[%s296 + $0x410] sm:$0xf]
        %v787 = vld [vmem:[%s296 + $0x414] sm:$0xf]
        %v788 = vld [vmem:[%s296 + $0x418] sm:$0xf]
        %v789 = vld [vmem:[%s296 + $0x41c] sm:$0xf]
        %v790 = vld [vmem:[%s296 + $0x420] sm:$0xf]
        %v791 = vld [vmem:[%s296 + $0x424] sm:$0xf]
        %v792 = vld [vmem:[%s296 + $0x428] sm:$0xf]
        %v793 = vld [vmem:[%s296 + $0x42c] sm:$0xf]
        %v794 = vld [vmem:[%s296 + $0x430] sm:$0xf]
        %v795 = vld [vmem:[%s296 + $0x434] sm:$0xf]
        %v796 = vld [vmem:[%s296 + $0x438] sm:$0xf]
        %v797 = vld [vmem:[%s296 + $0x43c] sm:$0xf]
        %v798 = vld [vmem:[%s296 + $0x440] sm:$0xf]
        %v799 = vld [vmem:[%s296 + $0x444] sm:$0xf]
        %v800 = vld [vmem:[%s296 + $0x448] sm:$0xf]
        %v801 = vld [vmem:[%s296 + $0x44c] sm:$0xf]
        %v802 = vld [vmem:[%s296 + $0x450] sm:$0xf]
        %v803 = vld [vmem:[%s296 + $0x454] sm:$0xf]
        %v804 = vld [vmem:[%s296 + $0x458] sm:$0xf]
        %v805 = vld [vmem:[%s296 + $0x45c] sm:$0xf]
        %v806 = vld [vmem:[%s296 + $0x460] sm:$0xf]
        %v807 = vld [vmem:[%s296 + $0x464] sm:$0xf]
        %v808 = vld [vmem:[%s296 + $0x468] sm:$0xf]
        %v809 = vld [vmem:[%s296 + $0x46c] sm:$0xf]
        %v810 = vld [vmem:[%s296 + $0x470] sm:$0xf]
        %v811 = vld [vmem:[%s296 + $0x474] sm:$0xf]
        %v812 = vld [vmem:[%s296 + $0x478] sm:$0xf]
        %v813 = vld [vmem:[%s296 + $0x47c] sm:$0xf]
        %v814 = vld [vmem:[%s296 + $0x480] sm:$0xf]
        %v815 = vld [vmem:[%s296 + $0x484] sm:$0xf]
        %v816 = vld [vmem:[%s296 + $0x488] sm:$0xf]
        %v817 = vld [vmem:[%s296 + $0x48c] sm:$0xf]
        %v818 = vld [vmem:[%s296 + $0x490] sm:$0xf]
        %v819 = vld [vmem:[%s296 + $0x494] sm:$0xf]
        %v820 = vld [vmem:[%s296 + $0x498] sm:$0xf]
        %v821 = vld [vmem:[%s296 + $0x49c] sm:$0xf]
        %v822 = vld [vmem:[%s296 + $0x4a0] sm:$0xf]
        %v823 = vld [vmem:[%s296 + $0x4a4] sm:$0xf]
        %v824 = vld [vmem:[%s296 + $0x4a8] sm:$0xf]
        %v825 = vld [vmem:[%s296 + $0x4ac] sm:$0xf]
        %v826 = vld [vmem:[%s296 + $0x4b0] sm:$0xf]
        %v827 = vld [vmem:[%s296 + $0x4b4] sm:$0xf]
        %v828 = vld [vmem:[%s296 + $0x4b8] sm:$0xf]
        %v829 = vld [vmem:[%s296 + $0x4bc] sm:$0xf]
        %v830 = vld [vmem:[%s296 + $0x4c0] sm:$0xf]
        %v831 = vld [vmem:[%s296 + $0x4c4] sm:$0xf]
        %v832 = vld [vmem:[%s296 + $0x4c8] sm:$0xf]
        %v833 = vld [vmem:[%s296 + $0x4cc] sm:$0xf]
        %v834 = vld [vmem:[%s296 + $0x4d0] sm:$0xf]
        %v835 = vld [vmem:[%s296 + $0x4d4] sm:$0xf]
        %v836 = vld [vmem:[%s296 + $0x4d8] sm:$0xf]
        %v837 = vld [vmem:[%s296 + $0x4dc] sm:$0xf]
        %v838 = vld [vmem:[%s296 + $0x4e0] sm:$0xf]
        %v839 = vld [vmem:[%s296 + $0x4e4] sm:$0xf]
        %v840 = vld [vmem:[%s296 + $0x4e8] sm:$0xf]
        %v841 = vld [vmem:[%s296 + $0x4ec] sm:$0xf]
        %v842 = vld [vmem:[%s296 + $0x4f0] sm:$0xf]
        %v843 = vld [vmem:[%s296 + $0x4f4] sm:$0xf]
        %v844 = vld [vmem:[%s296 + $0x4f8] sm:$0xf]
        %v845 = vld [vmem:[%s296 + $0x4fc] sm:$0xf]
        %v846 = vld [vmem:[%s296 + $0x500] sm:$0xf]
        %v847 = vld [vmem:[%s296 + $0x504] sm:$0xf]
        %v848 = vld [vmem:[%s296 + $0x508] sm:$0xf]
        %v849 = vld [vmem:[%s296 + $0x50c] sm:$0xf]
        %v850 = vld [vmem:[%s296 + $0x510] sm:$0xf]
        %v851 = vld [vmem:[%s296 + $0x514] sm:$0xf]
        %v852 = vld [vmem:[%s296 + $0x518] sm:$0xf]
        %v853 = vld [vmem:[%s296 + $0x51c] sm:$0xf]
        %v854 = vld [vmem:[%s296 + $0x520] sm:$0xf]
        %v855 = vld [vmem:[%s296 + $0x524] sm:$0xf]
        %v856 = vld [vmem:[%s296 + $0x528] sm:$0xf]
        %v857 = vld [vmem:[%s296 + $0x52c] sm:$0xf]
        %v858 = vld [vmem:[%s296 + $0x530] sm:$0xf]
        %v859 = vld [vmem:[%s296 + $0x534] sm:$0xf]
        %v860 = vld [vmem:[%s296 + $0x538] sm:$0xf]
        %v861 = vld [vmem:[%s296 + $0x53c] sm:$0xf]
        %v862 = vld [vmem:[%s296 + $0x540] sm:$0xf]
        %v863 = vld [vmem:[%s296 + $0x544] sm:$0xf]
        %v864 = vld [vmem:[%s296 + $0x548] sm:$0xf]
        %v865 = vld [vmem:[%s296 + $0x54c] sm:$0xf]
        %v866 = vld [vmem:[%s296 + $0x550] sm:$0xf]
        %v867 = vld [vmem:[%s296 + $0x554] sm:$0xf]
        %v868 = vld [vmem:[%s296 + $0x558] sm:$0xf]
        %v869 = vld [vmem:[%s296 + $0x55c] sm:$0xf]
        %v870 = vld [vmem:[%s296 + $0x560] sm:$0xf]
        %v871 = vld [vmem:[%s296 + $0x564] sm:$0xf]
        %v872 = vld [vmem:[%s296 + $0x568] sm:$0xf]
        %v873 = vld [vmem:[%s296 + $0x56c] sm:$0xf]
        %v874 = vld [vmem:[%s296 + $0x570] sm:$0xf]
        %v875 = vld [vmem:[%s296 + $0x574] sm:$0xf]
        %v876 = vld [vmem:[%s296 + $0x578] sm:$0xf]
        %v877 = vld [vmem:[%s296 + $0x57c] sm:$0xf]
        %v878 = vld [vmem:[%s296 + $0x580] sm:$0xf]
        %v879 = vld [vmem:[%s296 + $0x584] sm:$0xf]
        %v880 = vld [vmem:[%s296 + $0x588] sm:$0xf]
        %v881 = vld [vmem:[%s296 + $0x58c] sm:$0xf]
        %v882 = vld [vmem:[%s296 + $0x590] sm:$0xf]
        %v883 = vld [vmem:[%s296 + $0x594] sm:$0xf]
        %v884 = vld [vmem:[%s296 + $0x598] sm:$0xf]
        %v885 = vld [vmem:[%s296 + $0x59c] sm:$0xf]
        %v886 = vld [vmem:[%s296 + $0x5a0] sm:$0xf]
        %v887 = vld [vmem:[%s296 + $0x5a4] sm:$0xf]
        %v888 = vld [vmem:[%s296 + $0x5a8] sm:$0xf]
        %v889 = vld [vmem:[%s296 + $0x5ac] sm:$0xf]
        %v890 = vld [vmem:[%s296 + $0x5b0] sm:$0xf]
        %v891 = vld [vmem:[%s296 + $0x5b4] sm:$0xf]
        %v892 = vld [vmem:[%s296 + $0x5b8] sm:$0xf]
        %v893 = vld [vmem:[%s296 + $0x5bc] sm:$0xf]
        %v894 = vld [vmem:[%s296 + $0x5c0] sm:$0xf]
        %v895 = vld [vmem:[%s296 + $0x5c4] sm:$0xf]
        %v896 = vld [vmem:[%s296 + $0x5c8] sm:$0xf]
        %v897 = vld [vmem:[%s296 + $0x5cc] sm:$0xf]
        %v898 = vld [vmem:[%s296 + $0x5d0] sm:$0xf]
        %v899 = vld [vmem:[%s296 + $0x5d4] sm:$0xf]
        %v900 = vld [vmem:[%s296 + $0x5d8] sm:$0xf]
        %v901 = vld [vmem:[%s296 + $0x5dc] sm:$0xf]
        %v902 = vld [vmem:[%s296 + $0x5e0] sm:$0xf]
        %v903 = vld [vmem:[%s296 + $0x5e4] sm:$0xf]
        %v904 = vld [vmem:[%s296 + $0x5e8] sm:$0xf]
        %v905 = vld [vmem:[%s296 + $0x5ec] sm:$0xf]
        %v906 = vld [vmem:[%s296 + $0x5f0] sm:$0xf]
        %v907 = vld [vmem:[%s296 + $0x5f4] sm:$0xf]
        %v908 = vld [vmem:[%s296 + $0x5f8] sm:$0xf]
        %v909 = vld [vmem:[%s296 + $0x5fc] sm:$0xf]
        %v910 = vld [vmem:[%s296 + $0x600] sm:$0xf]
        %v911 = vld [vmem:[%s296 + $0x604] sm:$0xf]
        %v912 = vld [vmem:[%s296 + $0x608] sm:$0xf]
        %v913 = vld [vmem:[%s296 + $0x60c] sm:$0xf]
        %v914 = vld [vmem:[%s296 + $0x610] sm:$0xf]
        %v915 = vld [vmem:[%s296 + $0x614] sm:$0xf]
        %v916 = vld [vmem:[%s296 + $0x618] sm:$0xf]
        %v917 = vld [vmem:[%s296 + $0x61c] sm:$0xf]
        %v918 = vld [vmem:[%s296 + $0x620] sm:$0xf]
        %v919 = vld [vmem:[%s296 + $0x624] sm:$0xf]
        %v920 = vld [vmem:[%s296 + $0x628] sm:$0xf]
        %v921 = vld [vmem:[%s296 + $0x62c] sm:$0xf]
        %v922 = vld [vmem:[%s296 + $0x630] sm:$0xf]
        %v923 = vld [vmem:[%s296 + $0x634] sm:$0xf]
        %v924 = vld [vmem:[%s296 + $0x638] sm:$0xf]
        %v925 = vld [vmem:[%s296 + $0x63c] sm:$0xf]
        %v1326 = vunpack.c.l.b16 %v526
        %v1327 = vunpack.c.l.b16 %v527
        %v1328 = vunpack.c.l.b16 %v528
        %v1329 = vunpack.c.l.b16 %v529
        %v1330 = vunpack.c.l.b16 %v530
        %v1331 = vunpack.c.l.b16 %v531
        %v1332 = vunpack.c.l.b16 %v532
        %v1333 = vunpack.c.l.b16 %v533
        %v1334 = vunpack.c.l.b16 %v534
        %v1335 = vunpack.c.l.b16 %v535
        %v1336 = vunpack.c.l.b16 %v536
        %v1337 = vunpack.c.l.b16 %v537
        %v1338 = vunpack.c.l.b16 %v538
        %v1339 = vunpack.c.l.b16 %v539
        %v1340 = vunpack.c.l.b16 %v540
        %v1341 = vunpack.c.l.b16 %v541
        %v1342 = vunpack.c.l.b16 %v542
        %v1343 = vunpack.c.l.b16 %v543
        %v1344 = vunpack.c.l.b16 %v544
        %v1345 = vunpack.c.l.b16 %v545
        %v1346 = vunpack.c.l.b16 %v546
        %v1347 = vunpack.c.l.b16 %v547
        %v1348 = vunpack.c.l.b16 %v548
        %v1349 = vunpack.c.l.b16 %v549
        %v1350 = vunpack.c.l.b16 %v550
        %v1351 = vunpack.c.l.b16 %v551
        %v1352 = vunpack.c.l.b16 %v552
        %v1353 = vunpack.c.l.b16 %v553
        %v1354 = vunpack.c.l.b16 %v554
        %v1355 = vunpack.c.l.b16 %v555
        %v1356 = vunpack.c.l.b16 %v556
        %v1357 = vunpack.c.l.b16 %v557
        %v1358 = vunpack.c.l.b16 %v558
        %v1359 = vunpack.c.l.b16 %v559
        %v1360 = vunpack.c.l.b16 %v560
        %v1361 = vunpack.c.l.b16 %v561
        %v1362 = vunpack.c.l.b16 %v562
        %v1363 = vunpack.c.l.b16 %v563
        %v1364 = vunpack.c.l.b16 %v564
        %v1365 = vunpack.c.l.b16 %v565
        %v1366 = vunpack.c.l.b16 %v566
        %v1367 = vunpack.c.l.b16 %v567
        %v1368 = vunpack.c.l.b16 %v568
        %v1369 = vunpack.c.l.b16 %v569
        %v1370 = vunpack.c.l.b16 %v570
        %v1371 = vunpack.c.l.b16 %v571
        %v1372 = vunpack.c.l.b16 %v572
        %v1373 = vunpack.c.l.b16 %v573
        %v1374 = vunpack.c.l.b16 %v574
        %v1375 = vunpack.c.l.b16 %v575
        %v1376 = vunpack.c.l.b16 %v576
        %v1377 = vunpack.c.l.b16 %v577
        %v1378 = vunpack.c.l.b16 %v578
        %v1379 = vunpack.c.l.b16 %v579
        %v1380 = vunpack.c.l.b16 %v580
        %v1381 = vunpack.c.l.b16 %v581
        %v1382 = vunpack.c.l.b16 %v582
        %v1383 = vunpack.c.l.b16 %v583
        %v1384 = vunpack.c.l.b16 %v584
        %v1385 = vunpack.c.l.b16 %v585
        %v1386 = vunpack.c.l.b16 %v586
        %v1387 = vunpack.c.l.b16 %v587
        %v1388 = vunpack.c.l.b16 %v588
        %v1389 = vunpack.c.l.b16 %v589
        %v1390 = vunpack.c.l.b16 %v590
        %v1391 = vunpack.c.l.b16 %v591
        %v1392 = vunpack.c.l.b16 %v592
        %v1393 = vunpack.c.l.b16 %v593
        %v1394 = vunpack.c.l.b16 %v594
        %v1395 = vunpack.c.l.b16 %v595
        %v1396 = vunpack.c.l.b16 %v596
        %v1397 = vunpack.c.l.b16 %v597
        %v1398 = vunpack.c.l.b16 %v598
        %v1399 = vunpack.c.l.b16 %v599
        %v1400 = vunpack.c.l.b16 %v600
        %v1401 = vunpack.c.l.b16 %v601
        %v1402 = vunpack.c.l.b16 %v602
        %v1403 = vunpack.c.l.b16 %v603
        %v1404 = vunpack.c.l.b16 %v604
        %v1405 = vunpack.c.l.b16 %v605
        %v1406 = vunpack.c.l.b16 %v606
        %v1407 = vunpack.c.l.b16 %v607
        %v1408 = vunpack.c.l.b16 %v608
        %v1409 = vunpack.c.l.b16 %v609
        %v1410 = vunpack.c.l.b16 %v610
        %v1411 = vunpack.c.l.b16 %v611
        %v1412 = vunpack.c.l.b16 %v612
        %v1413 = vunpack.c.l.b16 %v613
        %v1414 = vunpack.c.l.b16 %v614
        %v1415 = vunpack.c.l.b16 %v615
        %v1416 = vunpack.c.l.b16 %v616
        %v1417 = vunpack.c.l.b16 %v617
        %v1418 = vunpack.c.l.b16 %v618
        %v1419 = vunpack.c.l.b16 %v619
        %v1420 = vunpack.c.l.b16 %v620
        %v1421 = vunpack.c.l.b16 %v621
        %v1422 = vunpack.c.l.b16 %v622
        %v1423 = vunpack.c.l.b16 %v623
        %v1424 = vunpack.c.l.b16 %v624
        %v1425 = vunpack.c.l.b16 %v625
        %v1426 = vunpack.c.l.b16 %v626
        %v1427 = vunpack.c.l.b16 %v627
        %v1428 = vunpack.c.l.b16 %v628
        %v1429 = vunpack.c.l.b16 %v629
        %v1430 = vunpack.c.l.b16 %v630
        %v1431 = vunpack.c.l.b16 %v631
        %v1432 = vunpack.c.l.b16 %v632
        %v1433 = vunpack.c.l.b16 %v633
        %v1434 = vunpack.c.l.b16 %v634
        %v1435 = vunpack.c.l.b16 %v635
        %v1436 = vunpack.c.l.b16 %v636
        %v1437 = vunpack.c.l.b16 %v637
        %v1438 = vunpack.c.l.b16 %v638
        %v1439 = vunpack.c.l.b16 %v639
        %v1440 = vunpack.c.l.b16 %v640
        %v1441 = vunpack.c.l.b16 %v641
        %v1442 = vunpack.c.l.b16 %v642
        %v1443 = vunpack.c.l.b16 %v643
        %v1444 = vunpack.c.l.b16 %v644
        %v1445 = vunpack.c.l.b16 %v645
        %v1446 = vunpack.c.l.b16 %v646
        %v1447 = vunpack.c.l.b16 %v647
        %v1448 = vunpack.c.l.b16 %v648
        %v1449 = vunpack.c.l.b16 %v649
        %v1450 = vunpack.c.l.b16 %v650
        %v1451 = vunpack.c.l.b16 %v651
        %v1452 = vunpack.c.l.b16 %v652
        %v1453 = vunpack.c.l.b16 %v653
        %v1454 = vunpack.c.l.b16 %v654
        %v1455 = vunpack.c.l.b16 %v655
        %v1456 = vunpack.c.l.b16 %v656
        %v1457 = vunpack.c.l.b16 %v657
        %v1458 = vunpack.c.l.b16 %v658
        %v1459 = vunpack.c.l.b16 %v659
        %v1460 = vunpack.c.l.b16 %v660
        %v1461 = vunpack.c.l.b16 %v661
        %v1462 = vunpack.c.l.b16 %v662
        %v1463 = vunpack.c.l.b16 %v663
        %v1464 = vunpack.c.l.b16 %v664
        %v1465 = vunpack.c.l.b16 %v665
        %v1466 = vunpack.c.l.b16 %v666
        %v1467 = vunpack.c.l.b16 %v667
        %v1468 = vunpack.c.l.b16 %v668
        %v1469 = vunpack.c.l.b16 %v669
        %v1470 = vunpack.c.l.b16 %v670
        %v1471 = vunpack.c.l.b16 %v671
        %v1472 = vunpack.c.l.b16 %v672
        %v1473 = vunpack.c.l.b16 %v673
        %v1474 = vunpack.c.l.b16 %v674
        %v1475 = vunpack.c.l.b16 %v675
        %v1476 = vunpack.c.l.b16 %v676
        %v1477 = vunpack.c.l.b16 %v677
        %v1478 = vunpack.c.l.b16 %v678
        %v1479 = vunpack.c.l.b16 %v679
        %v1480 = vunpack.c.l.b16 %v680
        %v1481 = vunpack.c.l.b16 %v681
        %v1482 = vunpack.c.l.b16 %v682
        %v1483 = vunpack.c.l.b16 %v683
        %v1484 = vunpack.c.l.b16 %v684
        %v1485 = vunpack.c.l.b16 %v685
        %v1486 = vunpack.c.l.b16 %v686
        %v1487 = vunpack.c.l.b16 %v687
        %v1488 = vunpack.c.l.b16 %v688
        %v1489 = vunpack.c.l.b16 %v689
        %v1490 = vunpack.c.l.b16 %v690
        %v1491 = vunpack.c.l.b16 %v691
        %v1492 = vunpack.c.l.b16 %v692
        %v1493 = vunpack.c.l.b16 %v693
        %v1494 = vunpack.c.l.b16 %v694
        %v1495 = vunpack.c.l.b16 %v695
        %v1496 = vunpack.c.l.b16 %v696
        %v1497 = vunpack.c.l.b16 %v697
        %v1498 = vunpack.c.l.b16 %v698
        %v1499 = vunpack.c.l.b16 %v699
        %v1500 = vunpack.c.l.b16 %v700
        %v1501 = vunpack.c.l.b16 %v701
        %v1502 = vunpack.c.l.b16 %v702
        %v1503 = vunpack.c.l.b16 %v703
        %v1504 = vunpack.c.l.b16 %v704
        %v1505 = vunpack.c.l.b16 %v705
        %v1506 = vunpack.c.l.b16 %v706
        %v1507 = vunpack.c.l.b16 %v707
        %v1508 = vunpack.c.l.b16 %v708
        %v1509 = vunpack.c.l.b16 %v709
        %v1510 = vunpack.c.l.b16 %v710
        %v1511 = vunpack.c.l.b16 %v711
        %v1512 = vunpack.c.l.b16 %v712
        %v1513 = vunpack.c.l.b16 %v713
        %v1514 = vunpack.c.l.b16 %v714
        %v1515 = vunpack.c.l.b16 %v715
        %v1516 = vunpack.c.l.b16 %v716
        %v1517 = vunpack.c.l.b16 %v717
        %v1518 = vunpack.c.l.b16 %v718
        %v1519 = vunpack.c.l.b16 %v719
        %v1520 = vunpack.c.l.b16 %v720
        %v1521 = vunpack.c.l.b16 %v721
        %v1522 = vunpack.c.l.b16 %v722
        %v1523 = vunpack.c.l.b16 %v723
        %v1524 = vunpack.c.l.b16 %v724
        %v1525 = vunpack.c.l.b16 %v725
        %v1526 = vunpack.c.l.b16 %v726
        %v1527 = vunpack.c.l.b16 %v727
        %v1528 = vunpack.c.l.b16 %v728
        %v1529 = vunpack.c.l.b16 %v729
        %v1530 = vunpack.c.l.b16 %v730
        %v1531 = vunpack.c.l.b16 %v731
        %v1532 = vunpack.c.l.b16 %v732
        %v1533 = vunpack.c.l.b16 %v733
        %v1534 = vunpack.c.l.b16 %v734
        %v1535 = vunpack.c.l.b16 %v735
        %v1536 = vunpack.c.l.b16 %v736
        %v1537 = vunpack.c.l.b16 %v737
        %v1538 = vunpack.c.l.b16 %v738
        %v1539 = vunpack.c.l.b16 %v739
        %v1540 = vunpack.c.l.b16 %v740
        %v1541 = vunpack.c.l.b16 %v741
        %v1542 = vunpack.c.l.b16 %v742
        %v1543 = vunpack.c.l.b16 %v743
        %v1544 = vunpack.c.l.b16 %v744
        %v1545 = vunpack.c.l.b16 %v745
        %v1546 = vunpack.c.l.b16 %v746
        %v1547 = vunpack.c.l.b16 %v747
        %v1548 = vunpack.c.l.b16 %v748
        %v1549 = vunpack.c.l.b16 %v749
        %v1550 = vunpack.c.l.b16 %v750
        %v1551 = vunpack.c.l.b16 %v751
        %v1552 = vunpack.c.l.b16 %v752
        %v1553 = vunpack.c.l.b16 %v753
        %v1554 = vunpack.c.l.b16 %v754
        %v1555 = vunpack.c.l.b16 %v755
        %v1556 = vunpack.c.l.b16 %v756
        %v1557 = vunpack.c.l.b16 %v757
        %v1558 = vunpack.c.l.b16 %v758
        %v1559 = vunpack.c.l.b16 %v759
        %v1560 = vunpack.c.l.b16 %v760
        %v1561 = vunpack.c.l.b16 %v761
        %v1562 = vunpack.c.l.b16 %v762
        %v1563 = vunpack.c.l.b16 %v763
        %v1564 = vunpack.c.l.b16 %v764
        %v1565 = vunpack.c.l.b16 %v765
        %v1566 = vunpack.c.l.b16 %v766
        %v1567 = vunpack.c.l.b16 %v767
        %v1568 = vunpack.c.l.b16 %v768
        %v1569 = vunpack.c.l.b16 %v769
        %v1570 = vunpack.c.l.b16 %v770
        %v1571 = vunpack.c.l.b16 %v771
        %v1572 = vunpack.c.l.b16 %v772
        %v1573 = vunpack.c.l.b16 %v773
        %v1574 = vunpack.c.l.b16 %v774
        %v1575 = vunpack.c.l.b16 %v775
        %v1576 = vunpack.c.l.b16 %v776
        %v1577 = vunpack.c.l.b16 %v777
        %v1578 = vunpack.c.l.b16 %v778
        %v1579 = vunpack.c.l.b16 %v779
        %v1580 = vunpack.c.l.b16 %v780
        %v1581 = vunpack.c.l.b16 %v781
        %v1582 = vunpack.c.l.b16 %v782
        %v1583 = vunpack.c.l.b16 %v783
        %v1584 = vunpack.c.l.b16 %v784
        %v1585 = vunpack.c.l.b16 %v785
        %v1586 = vunpack.c.l.b16 %v786
        %v1587 = vunpack.c.l.b16 %v787
        %v1588 = vunpack.c.l.b16 %v788
        %v1589 = vunpack.c.l.b16 %v789
        %v1590 = vunpack.c.l.b16 %v790
        %v1591 = vunpack.c.l.b16 %v791
        %v1592 = vunpack.c.l.b16 %v792
        %v1593 = vunpack.c.l.b16 %v793
        %v1594 = vunpack.c.l.b16 %v794
        %v1595 = vunpack.c.l.b16 %v795
        %v1596 = vunpack.c.l.b16 %v796
        %v1597 = vunpack.c.l.b16 %v797
        %v1598 = vunpack.c.l.b16 %v798
        %v1599 = vunpack.c.l.b16 %v799
        %v1600 = vunpack.c.l.b16 %v800
        %v1601 = vunpack.c.l.b16 %v801
        %v1602 = vunpack.c.l.b16 %v802
        %v1603 = vunpack.c.l.b16 %v803
        %v1604 = vunpack.c.l.b16 %v804
        %v1605 = vunpack.c.l.b16 %v805
        %v1606 = vunpack.c.l.b16 %v806
        %v1607 = vunpack.c.l.b16 %v807
        %v1608 = vunpack.c.l.b16 %v808
        %v1609 = vunpack.c.l.b16 %v809
        %v1610 = vunpack.c.l.b16 %v810
        %v1611 = vunpack.c.l.b16 %v811
        %v1612 = vunpack.c.l.b16 %v812
        %v1613 = vunpack.c.l.b16 %v813
        %v1614 = vunpack.c.l.b16 %v814
        %v1615 = vunpack.c.l.b16 %v815
        %v1616 = vunpack.c.l.b16 %v816
        %v1617 = vunpack.c.l.b16 %v817
        %v1618 = vunpack.c.l.b16 %v818
        %v1619 = vunpack.c.l.b16 %v819
        %v1620 = vunpack.c.l.b16 %v820
        %v1621 = vunpack.c.l.b16 %v821
        %v1622 = vunpack.c.l.b16 %v822
        %v1623 = vunpack.c.l.b16 %v823
        %v1624 = vunpack.c.l.b16 %v824
        %v1625 = vunpack.c.l.b16 %v825
        %v1626 = vunpack.c.l.b16 %v826
        %v1627 = vunpack.c.l.b16 %v827
        %v1628 = vunpack.c.l.b16 %v828
        %v1629 = vunpack.c.l.b16 %v829
        %v1630 = vunpack.c.l.b16 %v830
        %v1631 = vunpack.c.l.b16 %v831
        %v1632 = vunpack.c.l.b16 %v832
        %v1633 = vunpack.c.l.b16 %v833
        %v1634 = vunpack.c.l.b16 %v834
        %v1635 = vunpack.c.l.b16 %v835
        %v1636 = vunpack.c.l.b16 %v836
        %v1637 = vunpack.c.l.b16 %v837
        %v1638 = vunpack.c.l.b16 %v838
        %v1639 = vunpack.c.l.b16 %v839
        %v1640 = vunpack.c.l.b16 %v840
        %v1641 = vunpack.c.l.b16 %v841
        %v1642 = vunpack.c.l.b16 %v842
        %v1643 = vunpack.c.l.b16 %v843
        %v1644 = vunpack.c.l.b16 %v844
        %v1645 = vunpack.c.l.b16 %v845
        %v1646 = vunpack.c.l.b16 %v846
        %v1647 = vunpack.c.l.b16 %v847
        %v1648 = vunpack.c.l.b16 %v848
        %v1649 = vunpack.c.l.b16 %v849
        %v1650 = vunpack.c.l.b16 %v850
        %v1651 = vunpack.c.l.b16 %v851
        %v1652 = vunpack.c.l.b16 %v852
        %v1653 = vunpack.c.l.b16 %v853
        %v1654 = vunpack.c.l.b16 %v854
        %v1655 = vunpack.c.l.b16 %v855
        %v1656 = vunpack.c.l.b16 %v856
        %v1657 = vunpack.c.l.b16 %v857
        %v1658 = vunpack.c.l.b16 %v858
        %v1659 = vunpack.c.l.b16 %v859
        %v1660 = vunpack.c.l.b16 %v860
        %v1661 = vunpack.c.l.b16 %v861
        %v1662 = vunpack.c.l.b16 %v862
        %v1663 = vunpack.c.l.b16 %v863
        %v1664 = vunpack.c.l.b16 %v864
        %v1665 = vunpack.c.l.b16 %v865
        %v1666 = vunpack.c.l.b16 %v866
        %v1667 = vunpack.c.l.b16 %v867
        %v1668 = vunpack.c.l.b16 %v868
        %v1669 = vunpack.c.l.b16 %v869
        %v1670 = vunpack.c.l.b16 %v870
        %v1671 = vunpack.c.l.b16 %v871
        %v1672 = vunpack.c.l.b16 %v872
        %v1673 = vunpack.c.l.b16 %v873
        %v1674 = vunpack.c.l.b16 %v874
        %v1675 = vunpack.c.l.b16 %v875
        %v1676 = vunpack.c.l.b16 %v876
        %v1677 = vunpack.c.l.b16 %v877
        %v1678 = vunpack.c.l.b16 %v878
        %v1679 = vunpack.c.l.b16 %v879
        %v1680 = vunpack.c.l.b16 %v880
        %v1681 = vunpack.c.l.b16 %v881
        %v1682 = vunpack.c.l.b16 %v882
        %v1683 = vunpack.c.l.b16 %v883
        %v1684 = vunpack.c.l.b16 %v884
        %v1685 = vunpack.c.l.b16 %v885
        %v1686 = vunpack.c.l.b16 %v886
        %v1687 = vunpack.c.l.b16 %v887
        %v1688 = vunpack.c.l.b16 %v888
        %v1689 = vunpack.c.l.b16 %v889
        %v1690 = vunpack.c.l.b16 %v890
        %v1691 = vunpack.c.l.b16 %v891
        %v1692 = vunpack.c.l.b16 %v892
        %v1693 = vunpack.c.l.b16 %v893
        %v1694 = vunpack.c.l.b16 %v894
        %v1695 = vunpack.c.l.b16 %v895
        %v1696 = vunpack.c.l.b16 %v896
        %v1697 = vunpack.c.l.b16 %v897
        %v1698 = vunpack.c.l.b16 %v898
        %v1699 = vunpack.c.l.b16 %v899
        %v1700 = vunpack.c.l.b16 %v900
        %v1701 = vunpack.c.l.b16 %v901
        %v1702 = vunpack.c.l.b16 %v902
        %v1703 = vunpack.c.l.b16 %v903
        %v1704 = vunpack.c.l.b16 %v904
        %v1705 = vunpack.c.l.b16 %v905
        %v1706 = vunpack.c.l.b16 %v906
        %v1707 = vunpack.c.l.b16 %v907
        %v1708 = vunpack.c.l.b16 %v908
        %v1709 = vunpack.c.l.b16 %v909
        %v1710 = vunpack.c.l.b16 %v910
        %v1711 = vunpack.c.l.b16 %v911
        %v1712 = vunpack.c.l.b16 %v912
        %v1713 = vunpack.c.l.b16 %v913
        %v1714 = vunpack.c.l.b16 %v914
        %v1715 = vunpack.c.l.b16 %v915
        %v1716 = vunpack.c.l.b16 %v916
        %v1717 = vunpack.c.l.b16 %v917
        %v1718 = vunpack.c.l.b16 %v918
        %v1719 = vunpack.c.l.b16 %v919
        %v1720 = vunpack.c.l.b16 %v920
        %v1721 = vunpack.c.l.b16 %v921
        %v1722 = vunpack.c.l.b16 %v922
        %v1723 = vunpack.c.l.b16 %v923
        %v1724 = vunpack.c.l.b16 %v924
        %v1725 = vunpack.c.l.b16 %v925
        %v1726 = vpack.c.b16 %v1327, %v1326
        %v1727 = vpack.c.b16 %v1329, %v1328
        %v1728 = vpack.c.b16 %v1331, %v1330
        %v1729 = vpack.c.b16 %v1333, %v1332
        %v1730 = vpack.c.b16 %v1335, %v1334
        %v1731 = vpack.c.b16 %v1337, %v1336
        %v1732 = vpack.c.b16 %v1339, %v1338
        %v1733 = vpack.c.b16 %v1341, %v1340
        %v1734 = vpack.c.b16 %v1343, %v1342
        %v1735 = vpack.c.b16 %v1345, %v1344
        %v1736 = vpack.c.b16 %v1347, %v1346
        %v1737 = vpack.c.b16 %v1349, %v1348
        %v1738 = vpack.c.b16 %v1351, %v1350
        %v1739 = vpack.c.b16 %v1353, %v1352
        %v1740 = vpack.c.b16 %v1355, %v1354
        %v1741 = vpack.c.b16 %v1357, %v1356
        %v1742 = vpack.c.b16 %v1359, %v1358
        %v1743 = vpack.c.b16 %v1361, %v1360
        %v1744 = vpack.c.b16 %v1363, %v1362
        %v1745 = vpack.c.b16 %v1365, %v1364
        %v1746 = vpack.c.b16 %v1367, %v1366
        %v1747 = vpack.c.b16 %v1369, %v1368
        %v1748 = vpack.c.b16 %v1371, %v1370
        %v1749 = vpack.c.b16 %v1373, %v1372
        %v1750 = vpack.c.b16 %v1375, %v1374
        %v1751 = vpack.c.b16 %v1377, %v1376
        %v1752 = vpack.c.b16 %v1379, %v1378
        %v1753 = vpack.c.b16 %v1381, %v1380
        %v1754 = vpack.c.b16 %v1383, %v1382
        %v1755 = vpack.c.b16 %v1385, %v1384
        %v1756 = vpack.c.b16 %v1387, %v1386
        %v1757 = vpack.c.b16 %v1389, %v1388
        %v1758 = vpack.c.b16 %v1391, %v1390
        %v1759 = vpack.c.b16 %v1393, %v1392
        %v1760 = vpack.c.b16 %v1395, %v1394
        %v1761 = vpack.c.b16 %v1397, %v1396
        %v1762 = vpack.c.b16 %v1399, %v1398
        %v1763 = vpack.c.b16 %v1401, %v1400
        %v1764 = vpack.c.b16 %v1403, %v1402
        %v1765 = vpack.c.b16 %v1405, %v1404
        %v1766 = vpack.c.b16 %v1407, %v1406
        %v1767 = vpack.c.b16 %v1409, %v1408
        %v1768 = vpack.c.b16 %v1411, %v1410
        %v1769 = vpack.c.b16 %v1413, %v1412
        %v1770 = vpack.c.b16 %v1415, %v1414
        %v1771 = vpack.c.b16 %v1417, %v1416
        %v1772 = vpack.c.b16 %v1419, %v1418
        %v1773 = vpack.c.b16 %v1421, %v1420
        %v1774 = vpack.c.b16 %v1423, %v1422
        %v1775 = vpack.c.b16 %v1425, %v1424
        %v1776 = vpack.c.b16 %v1427, %v1426
        %v1777 = vpack.c.b16 %v1429, %v1428
        %v1778 = vpack.c.b16 %v1431, %v1430
        %v1779 = vpack.c.b16 %v1433, %v1432
        %v1780 = vpack.c.b16 %v1435, %v1434
        %v1781 = vpack.c.b16 %v1437, %v1436
        %v1782 = vpack.c.b16 %v1439, %v1438
        %v1783 = vpack.c.b16 %v1441, %v1440
        %v1784 = vpack.c.b16 %v1443, %v1442
        %v1785 = vpack.c.b16 %v1445, %v1444
        %v1786 = vpack.c.b16 %v1447, %v1446
        %v1787 = vpack.c.b16 %v1449, %v1448
        %v1788 = vpack.c.b16 %v1451, %v1450
        %v1789 = vpack.c.b16 %v1453, %v1452
        %v1790 = vpack.c.b16 %v1455, %v1454
        %v1791 = vpack.c.b16 %v1457, %v1456
        %v1792 = vpack.c.b16 %v1459, %v1458
        %v1793 = vpack.c.b16 %v1461, %v1460
        %v1794 = vpack.c.b16 %v1463, %v1462
        %v1795 = vpack.c.b16 %v1465, %v1464
        %v1796 = vpack.c.b16 %v1467, %v1466
        %v1797 = vpack.c.b16 %v1469, %v1468
        %v1798 = vpack.c.b16 %v1471, %v1470
        %v1799 = vpack.c.b16 %v1473, %v1472
        %v1800 = vpack.c.b16 %v1475, %v1474
        %v1801 = vpack.c.b16 %v1477, %v1476
        %v1802 = vpack.c.b16 %v1479, %v1478
        %v1803 = vpack.c.b16 %v1481, %v1480
        %v1804 = vpack.c.b16 %v1483, %v1482
        %v1805 = vpack.c.b16 %v1485, %v1484
        %v1806 = vpack.c.b16 %v1487, %v1486
        %v1807 = vpack.c.b16 %v1489, %v1488
        %v1808 = vpack.c.b16 %v1491, %v1490
        %v1809 = vpack.c.b16 %v1493, %v1492
        %v1810 = vpack.c.b16 %v1495, %v1494
        %v1811 = vpack.c.b16 %v1497, %v1496
        %v1812 = vpack.c.b16 %v1499, %v1498
        %v1813 = vpack.c.b16 %v1501, %v1500
        %v1814 = vpack.c.b16 %v1503, %v1502
        %v1815 = vpack.c.b16 %v1505, %v1504
        %v1816 = vpack.c.b16 %v1507, %v1506
        %v1817 = vpack.c.b16 %v1509, %v1508
        %v1818 = vpack.c.b16 %v1511, %v1510
        %v1819 = vpack.c.b16 %v1513, %v1512
        %v1820 = vpack.c.b16 %v1515, %v1514
        %v1821 = vpack.c.b16 %v1517, %v1516
        %v1822 = vpack.c.b16 %v1519, %v1518
        %v1823 = vpack.c.b16 %v1521, %v1520
        %v1824 = vpack.c.b16 %v1523, %v1522
        %v1825 = vpack.c.b16 %v1525, %v1524
        %v1826 = vpack.c.b16 %v1527, %v1526
        %v1827 = vpack.c.b16 %v1529, %v1528
        %v1828 = vpack.c.b16 %v1531, %v1530
        %v1829 = vpack.c.b16 %v1533, %v1532
        %v1830 = vpack.c.b16 %v1535, %v1534
        %v1831 = vpack.c.b16 %v1537, %v1536
        %v1832 = vpack.c.b16 %v1539, %v1538
        %v1833 = vpack.c.b16 %v1541, %v1540
        %v1834 = vpack.c.b16 %v1543, %v1542
        %v1835 = vpack.c.b16 %v1545, %v1544
        %v1836 = vpack.c.b16 %v1547, %v1546
        %v1837 = vpack.c.b16 %v1549, %v1548
        %v1838 = vpack.c.b16 %v1551, %v1550
        %v1839 = vpack.c.b16 %v1553, %v1552
        %v1840 = vpack.c.b16 %v1555, %v1554
        %v1841 = vpack.c.b16 %v1557, %v1556
        %v1842 = vpack.c.b16 %v1559, %v1558
        %v1843 = vpack.c.b16 %v1561, %v1560
        %v1844 = vpack.c.b16 %v1563, %v1562
        %v1845 = vpack.c.b16 %v1565, %v1564
        %v1846 = vpack.c.b16 %v1567, %v1566
        %v1847 = vpack.c.b16 %v1569, %v1568
        %v1848 = vpack.c.b16 %v1571, %v1570
        %v1849 = vpack.c.b16 %v1573, %v1572
        %v1850 = vpack.c.b16 %v1575, %v1574
        %v1851 = vpack.c.b16 %v1577, %v1576
        %v1852 = vpack.c.b16 %v1579, %v1578
        %v1853 = vpack.c.b16 %v1581, %v1580
        %v1854 = vpack.c.b16 %v1583, %v1582
        %v1855 = vpack.c.b16 %v1585, %v1584
        %v1856 = vpack.c.b16 %v1587, %v1586
        %v1857 = vpack.c.b16 %v1589, %v1588
        %v1858 = vpack.c.b16 %v1591, %v1590
        %v1859 = vpack.c.b16 %v1593, %v1592
        %v1860 = vpack.c.b16 %v1595, %v1594
        %v1861 = vpack.c.b16 %v1597, %v1596
        %v1862 = vpack.c.b16 %v1599, %v1598
        %v1863 = vpack.c.b16 %v1601, %v1600
        %v1864 = vpack.c.b16 %v1603, %v1602
        %v1865 = vpack.c.b16 %v1605, %v1604
        %v1866 = vpack.c.b16 %v1607, %v1606
        %v1867 = vpack.c.b16 %v1609, %v1608
        %v1868 = vpack.c.b16 %v1611, %v1610
        %v1869 = vpack.c.b16 %v1613, %v1612
        %v1870 = vpack.c.b16 %v1615, %v1614
        %v1871 = vpack.c.b16 %v1617, %v1616
        %v1872 = vpack.c.b16 %v1619, %v1618
        %v1873 = vpack.c.b16 %v1621, %v1620
        %v1874 = vpack.c.b16 %v1623, %v1622
        %v1875 = vpack.c.b16 %v1625, %v1624
        %v1876 = vpack.c.b16 %v1627, %v1626
        %v1877 = vpack.c.b16 %v1629, %v1628
        %v1878 = vpack.c.b16 %v1631, %v1630
        %v1879 = vpack.c.b16 %v1633, %v1632
        %v1880 = vpack.c.b16 %v1635, %v1634
        %v1881 = vpack.c.b16 %v1637, %v1636
        %v1882 = vpack.c.b16 %v1639, %v1638
        %v1883 = vpack.c.b16 %v1641, %v1640
        %v1884 = vpack.c.b16 %v1643, %v1642
        %v1885 = vpack.c.b16 %v1645, %v1644
        %v1886 = vpack.c.b16 %v1647, %v1646
        %v1887 = vpack.c.b16 %v1649, %v1648
        %v1888 = vpack.c.b16 %v1651, %v1650
        %v1889 = vpack.c.b16 %v1653, %v1652
        %v1890 = vpack.c.b16 %v1655, %v1654
        %v1891 = vpack.c.b16 %v1657, %v1656
        %v1892 = vpack.c.b16 %v1659, %v1658
        %v1893 = vpack.c.b16 %v1661, %v1660
        %v1894 = vpack.c.b16 %v1663, %v1662
        %v1895 = vpack.c.b16 %v1665, %v1664
        %v1896 = vpack.c.b16 %v1667, %v1666
        %v1897 = vpack.c.b16 %v1669, %v1668
        %v1898 = vpack.c.b16 %v1671, %v1670
        %v1899 = vpack.c.b16 %v1673, %v1672
        %v1900 = vpack.c.b16 %v1675, %v1674
        %v1901 = vpack.c.b16 %v1677, %v1676
        %v1902 = vpack.c.b16 %v1679, %v1678
        %v1903 = vpack.c.b16 %v1681, %v1680
        %v1904 = vpack.c.b16 %v1683, %v1682
        %v1905 = vpack.c.b16 %v1685, %v1684
        %v1906 = vpack.c.b16 %v1687, %v1686
        %v1907 = vpack.c.b16 %v1689, %v1688
        %v1908 = vpack.c.b16 %v1691, %v1690
        %v1909 = vpack.c.b16 %v1693, %v1692
        %v1910 = vpack.c.b16 %v1695, %v1694
        %v1911 = vpack.c.b16 %v1697, %v1696
        %v1912 = vpack.c.b16 %v1699, %v1698
        %v1913 = vpack.c.b16 %v1701, %v1700
        %v1914 = vpack.c.b16 %v1703, %v1702
        %v1915 = vpack.c.b16 %v1705, %v1704
        %v1916 = vpack.c.b16 %v1707, %v1706
        %v1917 = vpack.c.b16 %v1709, %v1708
        %v1918 = vpack.c.b16 %v1711, %v1710
        %v1919 = vpack.c.b16 %v1713, %v1712
        %v1920 = vpack.c.b16 %v1715, %v1714
        %v1921 = vpack.c.b16 %v1717, %v1716
        %v1922 = vpack.c.b16 %v1719, %v1718
        %v1923 = vpack.c.b16 %v1721, %v1720
        %v1924 = vpack.c.b16 %v1723, %v1722
        %v1925 = vpack.c.b16 %v1725, %v1724
        %2126 = vmatprep.subr.bf16.mxu0 0
        %2127 = vmatpush1.bf16.msra.mxu0 %v1733
        %2128 = vmatprep.subr.bf16.mxu0 0
        %2129 = vmatpush1.bf16.msra.mxu0 %v1732
        %2130 = vmatprep.subr.bf16.mxu0 0
        %2131 = vmatpush1.bf16.msra.mxu0 %v1731
        %2132 = vmatprep.subr.bf16.mxu0 0
        %2133 = vmatpush1.bf16.msra.mxu0 %v1730
        %2134 = vmatprep.subr.bf16.mxu0 0
        %2135 = vmatpush1.bf16.msra.mxu0 %v1729
        %2136 = vmatprep.subr.bf16.mxu0 0
        %2137 = vmatpush1.bf16.msra.mxu0 %v1728
        %2138 = vmatprep.subr.bf16.mxu0 0
        %2139 = vmatpush1.bf16.msra.mxu0 %v1727
        %2140 = vmatprep.subr.bf16.mxu0 0
        %2141 = vmatpush1.bf16.msra.mxu0 %v1726
        %2142 = vmatprep.subr.bf16.mxu0 0
        %2143 = vmatpush2.bf16.msra.mxu0 %v1741
        %2144 = vmatprep.subr.bf16.mxu0 0
        %2145 = vmatpush2.bf16.msra.mxu0 %v1740
        %2146 = vmatprep.subr.bf16.mxu0 0
        %2147 = vmatpush2.bf16.msra.mxu0 %v1739
        %2148 = vmatprep.subr.bf16.mxu0 0
        %2149 = vmatpush2.bf16.msra.mxu0 %v1738
        %2150 = vmatprep.subr.bf16.mxu0 0
        %2151 = vmatpush2.bf16.msra.mxu0 %v1737
        %2152 = vmatprep.subr.bf16.mxu0 0
        %2153 = vmatpush2.bf16.msra.mxu0 %v1736
        %2154 = vmatprep.subr.bf16.mxu0 0
        %2155 = vmatpush2.bf16.msra.mxu0 %v1735
        %2156 = vmatprep.subr.bf16.mxu0 0
        %2157 = vmatpush2.bf16.msra.mxu0 %v1734
        %2158 = vmatprep.mubr.bf16.mxu0 %v502
        %2159 = vmatmul.mubr.bf16.gmra.mxu0 %v501
        %v2160 = vpop.f32.mrf.mxu0
        %v2161 = vadd.f32 0.0, %v2160
        %v2162 = vpop.f32.mrf.mxu0
        %v2163 = vpop.f32.mrf.mxu0
        %v2164 = vpop.f32.mrf.mxu0
        %2165 = vdwg.mxu0
        %2166 = vmatprep.subr.bf16.mxu0 0
        %2167 = vmatpush1.bf16.msra.mxu0 %v1749
        %2168 = vmatprep.subr.bf16.mxu0 0
        %2169 = vmatpush1.bf16.msra.mxu0 %v1748
        %2170 = vmatprep.subr.bf16.mxu0 0
        %2171 = vmatpush1.bf16.msra.mxu0 %v1747
        %2172 = vmatprep.subr.bf16.mxu0 0
        %2173 = vmatpush1.bf16.msra.mxu0 %v1746
        %2174 = vmatprep.subr.bf16.mxu0 0
        %2175 = vmatpush1.bf16.msra.mxu0 %v1745
        %2176 = vmatprep.subr.bf16.mxu0 0
        %2177 = vmatpush1.bf16.msra.mxu0 %v1744
        %2178 = vmatprep.subr.bf16.mxu0 0
        %2179 = vmatpush1.bf16.msra.mxu0 %v1743
        %2180 = vmatprep.subr.bf16.mxu0 0
        %2181 = vmatpush1.bf16.msra.mxu0 %v1742
        %2182 = vmatprep.subr.bf16.mxu0 0
        %2183 = vmatpush2.bf16.msra.mxu0 %v1757
        %2184 = vmatprep.subr.bf16.mxu0 0
        %2185 = vmatpush2.bf16.msra.mxu0 %v1756
        %2186 = vmatprep.subr.bf16.mxu0 0
        %2187 = vmatpush2.bf16.msra.mxu0 %v1755
        %2188 = vmatprep.subr.bf16.mxu0 0
        %2189 = vmatpush2.bf16.msra.mxu0 %v1754
        %2190 = vmatprep.subr.bf16.mxu0 0
        %2191 = vmatpush2.bf16.msra.mxu0 %v1753
        %2192 = vmatprep.subr.bf16.mxu0 0
        %2193 = vmatpush2.bf16.msra.mxu0 %v1752
        %2194 = vmatprep.subr.bf16.mxu0 0
        %2195 = vmatpush2.bf16.msra.mxu0 %v1751
        %2196 = vmatprep.subr.bf16.mxu0 0
        %2197 = vmatpush2.bf16.msra.mxu0 %v1750
        %2198 = vmatprep.mubr.bf16.mxu0 %v504
        %2199 = vmatmul.mubr.bf16.gmra.mxu0 %v503
        %v2200 = vpop.f32.mrf.mxu0
        %v2201 = vadd.f32 %v2161, %v2200
        %v2202 = vpop.f32.mrf.mxu0
        %v2203 = vpop.f32.mrf.mxu0
        %v2204 = vpop.f32.mrf.mxu0
        %2205 = vdwg.mxu0
        %2206 = vmatprep.subr.bf16.mxu0 0
        %2207 = vmatpush1.bf16.msra.mxu0 %v1765
        %2208 = vmatprep.subr.bf16.mxu0 0
        %2209 = vmatpush1.bf16.msra.mxu0 %v1764
        %2210 = vmatprep.subr.bf16.mxu0 0
        %2211 = vmatpush1.bf16.msra.mxu0 %v1763
        %2212 = vmatprep.subr.bf16.mxu0 0
        %2213 = vmatpush1.bf16.msra.mxu0 %v1762
        %2214 = vmatprep.subr.bf16.mxu0 0
        %2215 = vmatpush1.bf16.msra.mxu0 %v1761
        %2216 = vmatprep.subr.bf16.mxu0 0
        %2217 = vmatpush1.bf16.msra.mxu0 %v1760
        %2218 = vmatprep.subr.bf16.mxu0 0
        %2219 = vmatpush1.bf16.msra.mxu0 %v1759
        %2220 = vmatprep.subr.bf16.mxu0 0
        %2221 = vmatpush1.bf16.msra.mxu0 %v1758
        %2222 = vmatprep.subr.bf16.mxu0 0
        %2223 = vmatpush2.bf16.msra.mxu0 %v1773
        %2224 = vmatprep.subr.bf16.mxu0 0
        %2225 = vmatpush2.bf16.msra.mxu0 %v1772
        %2226 = vmatprep.subr.bf16.mxu0 0
        %2227 = vmatpush2.bf16.msra.mxu0 %v1771
        %2228 = vmatprep.subr.bf16.mxu0 0
        %2229 = vmatpush2.bf16.msra.mxu0 %v1770
        %2230 = vmatprep.subr.bf16.mxu0 0
        %2231 = vmatpush2.bf16.msra.mxu0 %v1769
        %2232 = vmatprep.subr.bf16.mxu0 0
        %2233 = vmatpush2.bf16.msra.mxu0 %v1768
        %2234 = vmatprep.subr.bf16.mxu0 0
        %2235 = vmatpush2.bf16.msra.mxu0 %v1767
        %2236 = vmatprep.subr.bf16.mxu0 0
        %2237 = vmatpush2.bf16.msra.mxu0 %v1766
        %2238 = vmatprep.mubr.bf16.mxu0 %v506
        %2239 = vmatmul.mubr.bf16.gmra.mxu0 %v505
        %v2240 = vpop.f32.mrf.mxu0
        %v2241 = vadd.f32 %v2201, %v2240
        %v2242 = vpop.f32.mrf.mxu0
        %v2243 = vpop.f32.mrf.mxu0
        %v2244 = vpop.f32.mrf.mxu0
        %2245 = vdwg.mxu0
        %2246 = vmatprep.subr.bf16.mxu0 0
        %2247 = vmatpush1.bf16.msra.mxu0 %v1781
        %2248 = vmatprep.subr.bf16.mxu0 0
        %2249 = vmatpush1.bf16.msra.mxu0 %v1780
        %2250 = vmatprep.subr.bf16.mxu0 0
        %2251 = vmatpush1.bf16.msra.mxu0 %v1779
        %2252 = vmatprep.subr.bf16.mxu0 0
        %2253 = vmatpush1.bf16.msra.mxu0 %v1778
        %2254 = vmatprep.subr.bf16.mxu0 0
        %2255 = vmatpush1.bf16.msra.mxu0 %v1777
        %2256 = vmatprep.subr.bf16.mxu0 0
        %2257 = vmatpush1.bf16.msra.mxu0 %v1776
        %2258 = vmatprep.subr.bf16.mxu0 0
        %2259 = vmatpush1.bf16.msra.mxu0 %v1775
        %2260 = vmatprep.subr.bf16.mxu0 0
        %2261 = vmatpush1.bf16.msra.mxu0 %v1774
        %2262 = vmatprep.subr.bf16.mxu0 0
        %2263 = vmatpush2.bf16.msra.mxu0 %v1789
        %2264 = vmatprep.subr.bf16.mxu0 0
        %2265 = vmatpush2.bf16.msra.mxu0 %v1788
        %2266 = vmatprep.subr.bf16.mxu0 0
        %2267 = vmatpush2.bf16.msra.mxu0 %v1787
        %2268 = vmatprep.subr.bf16.mxu0 0
        %2269 = vmatpush2.bf16.msra.mxu0 %v1786
        %2270 = vmatprep.subr.bf16.mxu0 0
        %2271 = vmatpush2.bf16.msra.mxu0 %v1785
        %2272 = vmatprep.subr.bf16.mxu0 0
        %2273 = vmatpush2.bf16.msra.mxu0 %v1784
        %2274 = vmatprep.subr.bf16.mxu0 0
        %2275 = vmatpush2.bf16.msra.mxu0 %v1783
        %2276 = vmatprep.subr.bf16.mxu0 0
        %2277 = vmatpush2.bf16.msra.mxu0 %v1782
        %2278 = vmatprep.mubr.bf16.mxu0 %v508
        %2279 = vmatmul.mubr.bf16.gmra.mxu0 %v507
        %v2280 = vpop.f32.mrf.mxu0
        %v2281 = vadd.f32 %v2241, %v2280
        %v2282 = vpop.f32.mrf.mxu0
        %v2283 = vpop.f32.mrf.mxu0
        %v2284 = vpop.f32.mrf.mxu0
        %2285 = vdwg.mxu0
        %2286 = vmatprep.subr.bf16.mxu0 0
        %2287 = vmatpush1.bf16.msra.mxu0 %v1797
        %2288 = vmatprep.subr.bf16.mxu0 0
        %2289 = vmatpush1.bf16.msra.mxu0 %v1796
        %2290 = vmatprep.subr.bf16.mxu0 0
        %2291 = vmatpush1.bf16.msra.mxu0 %v1795
        %2292 = vmatprep.subr.bf16.mxu0 0
        %2293 = vmatpush1.bf16.msra.mxu0 %v1794
        %2294 = vmatprep.subr.bf16.mxu0 0
        %2295 = vmatpush1.bf16.msra.mxu0 %v1793
        %2296 = vmatprep.subr.bf16.mxu0 0
        %2297 = vmatpush1.bf16.msra.mxu0 %v1792
        %2298 = vmatprep.subr.bf16.mxu0 0
        %2299 = vmatpush1.bf16.msra.mxu0 %v1791
        %2300 = vmatprep.subr.bf16.mxu0 0
        %2301 = vmatpush1.bf16.msra.mxu0 %v1790
        %2302 = vmatprep.subr.bf16.mxu0 0
        %2303 = vmatpush2.bf16.msra.mxu0 %v1805
        %2304 = vmatprep.subr.bf16.mxu0 0
        %2305 = vmatpush2.bf16.msra.mxu0 %v1804
        %2306 = vmatprep.subr.bf16.mxu0 0
        %2307 = vmatpush2.bf16.msra.mxu0 %v1803
        %2308 = vmatprep.subr.bf16.mxu0 0
        %2309 = vmatpush2.bf16.msra.mxu0 %v1802
        %2310 = vmatprep.subr.bf16.mxu0 0
        %2311 = vmatpush2.bf16.msra.mxu0 %v1801
        %2312 = vmatprep.subr.bf16.mxu0 0
        %2313 = vmatpush2.bf16.msra.mxu0 %v1800
        %2314 = vmatprep.subr.bf16.mxu0 0
        %2315 = vmatpush2.bf16.msra.mxu0 %v1799
        %2316 = vmatprep.subr.bf16.mxu0 0
        %2317 = vmatpush2.bf16.msra.mxu0 %v1798
        %2318 = vmatprep.mubr.bf16.mxu0 %v510
        %2319 = vmatmul.mubr.bf16.gmra.mxu0 %v509
        %v2320 = vpop.f32.mrf.mxu0
        %v2321 = vadd.f32 %v2281, %v2320
        %v2322 = vpop.f32.mrf.mxu0
        %v2323 = vpop.f32.mrf.mxu0
        %v2324 = vpop.f32.mrf.mxu0
        %2325 = vdwg.mxu0
        %2326 = vmatprep.subr.bf16.mxu0 0
        %2327 = vmatpush1.bf16.msra.mxu0 %v1813
        %2328 = vmatprep.subr.bf16.mxu0 0
        %2329 = vmatpush1.bf16.msra.mxu0 %v1812
        %2330 = vmatprep.subr.bf16.mxu0 0
        %2331 = vmatpush1.bf16.msra.mxu0 %v1811
        %2332 = vmatprep.subr.bf16.mxu0 0
        %2333 = vmatpush1.bf16.msra.mxu0 %v1810
        %2334 = vmatprep.subr.bf16.mxu0 0
        %2335 = vmatpush1.bf16.msra.mxu0 %v1809
        %2336 = vmatprep.subr.bf16.mxu0 0
        %2337 = vmatpush1.bf16.msra.mxu0 %v1808
        %2338 = vmatprep.subr.bf16.mxu0 0
        %2339 = vmatpush1.bf16.msra.mxu0 %v1807
        %2340 = vmatprep.subr.bf16.mxu0 0
        %2341 = vmatpush1.bf16.msra.mxu0 %v1806
        %2342 = vmatprep.subr.bf16.mxu0 0
        %2343 = vmatpush2.bf16.msra.mxu0 %v1821
        %2344 = vmatprep.subr.bf16.mxu0 0
        %2345 = vmatpush2.bf16.msra.mxu0 %v1820
        %2346 = vmatprep.subr.bf16.mxu0 0
        %2347 = vmatpush2.bf16.msra.mxu0 %v1819
        %2348 = vmatprep.subr.bf16.mxu0 0
        %2349 = vmatpush2.bf16.msra.mxu0 %v1818
        %2350 = vmatprep.subr.bf16.mxu0 0
        %2351 = vmatpush2.bf16.msra.mxu0 %v1817
        %2352 = vmatprep.subr.bf16.mxu0 0
        %2353 = vmatpush2.bf16.msra.mxu0 %v1816
        %2354 = vmatprep.subr.bf16.mxu0 0
        %2355 = vmatpush2.bf16.msra.mxu0 %v1815
        %2356 = vmatprep.subr.bf16.mxu0 0
        %2357 = vmatpush2.bf16.msra.mxu0 %v1814
        %2358 = vmatprep.mubr.bf16.mxu0 %v512
        %2359 = vmatmul.mubr.bf16.gmra.mxu0 %v511
        %v2360 = vpop.f32.mrf.mxu0
        %v2361 = vadd.f32 %v2321, %v2360
        %v2362 = vpop.f32.mrf.mxu0
        %v2363 = vpop.f32.mrf.mxu0
        %v2364 = vpop.f32.mrf.mxu0
        %2365 = vdwg.mxu0
        %2366 = vmatprep.subr.bf16.mxu0 0
        %2367 = vmatpush1.bf16.msra.mxu0 %v1829
        %2368 = vmatprep.subr.bf16.mxu0 0
        %2369 = vmatpush1.bf16.msra.mxu0 %v1828
        %2370 = vmatprep.subr.bf16.mxu0 0
        %2371 = vmatpush1.bf16.msra.mxu0 %v1827
        %2372 = vmatprep.subr.bf16.mxu0 0
        %2373 = vmatpush1.bf16.msra.mxu0 %v1826
        %2374 = vmatprep.subr.bf16.mxu0 0
        %2375 = vmatpush1.bf16.msra.mxu0 %v1825
        %2376 = vmatprep.subr.bf16.mxu0 0
        %2377 = vmatpush1.bf16.msra.mxu0 %v1824
        %2378 = vmatprep.subr.bf16.mxu0 0
        %2379 = vmatpush1.bf16.msra.mxu0 %v1823
        %2380 = vmatprep.subr.bf16.mxu0 0
        %2381 = vmatpush1.bf16.msra.mxu0 %v1822
        %2382 = vmatprep.subr.bf16.mxu0 0
        %2383 = vmatpush2.bf16.msra.mxu0 %v1837
        %2384 = vmatprep.subr.bf16.mxu0 0
        %2385 = vmatpush2.bf16.msra.mxu0 %v1836
        %2386 = vmatprep.subr.bf16.mxu0 0
        %2387 = vmatpush2.bf16.msra.mxu0 %v1835
        %2388 = vmatprep.subr.bf16.mxu0 0
        %2389 = vmatpush2.bf16.msra.mxu0 %v1834
        %2390 = vmatprep.subr.bf16.mxu0 0
        %2391 = vmatpush2.bf16.msra.mxu0 %v1833
        %2392 = vmatprep.subr.bf16.mxu0 0
        %2393 = vmatpush2.bf16.msra.mxu0 %v1832
        %2394 = vmatprep.subr.bf16.mxu0 0
        %2395 = vmatpush2.bf16.msra.mxu0 %v1831
        %2396 = vmatprep.subr.bf16.mxu0 0
        %2397 = vmatpush2.bf16.msra.mxu0 %v1830
        %2398 = vmatprep.mubr.bf16.mxu0 %v514
        %2399 = vmatmul.mubr.bf16.gmra.mxu0 %v513
        %v2400 = vpop.f32.mrf.mxu0
        %v2401 = vadd.f32 %v2361, %v2400
        %v2402 = vpop.f32.mrf.mxu0
        %v2403 = vpop.f32.mrf.mxu0
        %v2404 = vpop.f32.mrf.mxu0
        %2405 = vdwg.mxu0
        %2406 = vmatprep.subr.bf16.mxu0 0
        %2407 = vmatpush1.bf16.msra.mxu0 %v1845
        %2408 = vmatprep.subr.bf16.mxu0 0
        %2409 = vmatpush1.bf16.msra.mxu0 %v1844
        %2410 = vmatprep.subr.bf16.mxu0 0
        %2411 = vmatpush1.bf16.msra.mxu0 %v1843
        %2412 = vmatprep.subr.bf16.mxu0 0
        %2413 = vmatpush1.bf16.msra.mxu0 %v1842
        %2414 = vmatprep.subr.bf16.mxu0 0
        %2415 = vmatpush1.bf16.msra.mxu0 %v1841
        %2416 = vmatprep.subr.bf16.mxu0 0
        %2417 = vmatpush1.bf16.msra.mxu0 %v1840
        %2418 = vmatprep.subr.bf16.mxu0 0
        %2419 = vmatpush1.bf16.msra.mxu0 %v1839
        %2420 = vmatprep.subr.bf16.mxu0 0
        %2421 = vmatpush1.bf16.msra.mxu0 %v1838
        %2422 = vmatprep.subr.bf16.mxu0 0
        %2423 = vmatpush2.bf16.msra.mxu0 %v1853
        %2424 = vmatprep.subr.bf16.mxu0 0
        %2425 = vmatpush2.bf16.msra.mxu0 %v1852
        %2426 = vmatprep.subr.bf16.mxu0 0
        %2427 = vmatpush2.bf16.msra.mxu0 %v1851
        %2428 = vmatprep.subr.bf16.mxu0 0
        %2429 = vmatpush2.bf16.msra.mxu0 %v1850
        %2430 = vmatprep.subr.bf16.mxu0 0
        %2431 = vmatpush2.bf16.msra.mxu0 %v1849
        %2432 = vmatprep.subr.bf16.mxu0 0
        %2433 = vmatpush2.bf16.msra.mxu0 %v1848
        %2434 = vmatprep.subr.bf16.mxu0 0
        %2435 = vmatpush2.bf16.msra.mxu0 %v1847
        %2436 = vmatprep.subr.bf16.mxu0 0
        %2437 = vmatpush2.bf16.msra.mxu0 %v1846
        %2438 = vmatprep.mubr.bf16.mxu0 %v516
        %2439 = vmatmul.mubr.bf16.gmra.mxu0 %v515
        %v2440 = vpop.f32.mrf.mxu0
        %v2441 = vadd.f32 %v2401, %v2440
        %v2442 = vpop.f32.mrf.mxu0
        %v2443 = vpop.f32.mrf.mxu0
        %v2444 = vpop.f32.mrf.mxu0
        %2445 = vdwg.mxu0
        %2446 = vmatprep.subr.bf16.mxu0 0
        %2447 = vmatpush1.bf16.msra.mxu0 %v1861
        %2448 = vmatprep.subr.bf16.mxu0 0
        %2449 = vmatpush1.bf16.msra.mxu0 %v1860
        %2450 = vmatprep.subr.bf16.mxu0 0
        %2451 = vmatpush1.bf16.msra.mxu0 %v1859
        %2452 = vmatprep.subr.bf16.mxu0 0
        %2453 = vmatpush1.bf16.msra.mxu0 %v1858
        %2454 = vmatprep.subr.bf16.mxu0 0
        %2455 = vmatpush1.bf16.msra.mxu0 %v1857
        %2456 = vmatprep.subr.bf16.mxu0 0
        %2457 = vmatpush1.bf16.msra.mxu0 %v1856
        %2458 = vmatprep.subr.bf16.mxu0 0
        %2459 = vmatpush1.bf16.msra.mxu0 %v1855
        %2460 = vmatprep.subr.bf16.mxu0 0
        %2461 = vmatpush1.bf16.msra.mxu0 %v1854
        %2462 = vmatprep.subr.bf16.mxu0 0
        %2463 = vmatpush2.bf16.msra.mxu0 %v1869
        %2464 = vmatprep.subr.bf16.mxu0 0
        %2465 = vmatpush2.bf16.msra.mxu0 %v1868
        %2466 = vmatprep.subr.bf16.mxu0 0
        %2467 = vmatpush2.bf16.msra.mxu0 %v1867
        %2468 = vmatprep.subr.bf16.mxu0 0
        %2469 = vmatpush2.bf16.msra.mxu0 %v1866
        %2470 = vmatprep.subr.bf16.mxu0 0
        %2471 = vmatpush2.bf16.msra.mxu0 %v1865
        %2472 = vmatprep.subr.bf16.mxu0 0
        %2473 = vmatpush2.bf16.msra.mxu0 %v1864
        %2474 = vmatprep.subr.bf16.mxu0 0
        %2475 = vmatpush2.bf16.msra.mxu0 %v1863
        %2476 = vmatprep.subr.bf16.mxu0 0
        %2477 = vmatpush2.bf16.msra.mxu0 %v1862
        %2478 = vmatprep.mubr.bf16.mxu0 %v518
        %2479 = vmatmul.mubr.bf16.gmra.mxu0 %v517
        %v2480 = vpop.f32.mrf.mxu0
        %v2481 = vadd.f32 %v2441, %v2480
        %v2482 = vpop.f32.mrf.mxu0
        %v2483 = vpop.f32.mrf.mxu0
        %v2484 = vpop.f32.mrf.mxu0
        %2485 = vdwg.mxu0
        %2486 = vmatprep.subr.bf16.mxu0 0
        %2487 = vmatpush1.bf16.msra.mxu0 %v1877
        %2488 = vmatprep.subr.bf16.mxu0 0
        %2489 = vmatpush1.bf16.msra.mxu0 %v1876
        %2490 = vmatprep.subr.bf16.mxu0 0
        %2491 = vmatpush1.bf16.msra.mxu0 %v1875
        %2492 = vmatprep.subr.bf16.mxu0 0
        %2493 = vmatpush1.bf16.msra.mxu0 %v1874
        %2494 = vmatprep.subr.bf16.mxu0 0
        %2495 = vmatpush1.bf16.msra.mxu0 %v1873
        %2496 = vmatprep.subr.bf16.mxu0 0
        %2497 = vmatpush1.bf16.msra.mxu0 %v1872
        %2498 = vmatprep.subr.bf16.mxu0 0
        %2499 = vmatpush1.bf16.msra.mxu0 %v1871
        %2500 = vmatprep.subr.bf16.mxu0 0
        %2501 = vmatpush1.bf16.msra.mxu0 %v1870
        %2502 = vmatprep.subr.bf16.mxu0 0
        %2503 = vmatpush2.bf16.msra.mxu0 %v1885
        %2504 = vmatprep.subr.bf16.mxu0 0
        %2505 = vmatpush2.bf16.msra.mxu0 %v1884
        %2506 = vmatprep.subr.bf16.mxu0 0
        %2507 = vmatpush2.bf16.msra.mxu0 %v1883
        %2508 = vmatprep.subr.bf16.mxu0 0
        %2509 = vmatpush2.bf16.msra.mxu0 %v1882
        %2510 = vmatprep.subr.bf16.mxu0 0
        %2511 = vmatpush2.bf16.msra.mxu0 %v1881
        %2512 = vmatprep.subr.bf16.mxu0 0
        %2513 = vmatpush2.bf16.msra.mxu0 %v1880
        %2514 = vmatprep.subr.bf16.mxu0 0
        %2515 = vmatpush2.bf16.msra.mxu0 %v1879
        %2516 = vmatprep.subr.bf16.mxu0 0
        %2517 = vmatpush2.bf16.msra.mxu0 %v1878
        %2518 = vmatprep.mubr.bf16.mxu0 %v520
        %2519 = vmatmul.mubr.bf16.gmra.mxu0 %v519
        %v2520 = vpop.f32.mrf.mxu0
        %v2521 = vadd.f32 %v2481, %v2520
        %v2522 = vpop.f32.mrf.mxu0
        %v2523 = vpop.f32.mrf.mxu0
        %v2524 = vpop.f32.mrf.mxu0
        %2525 = vdwg.mxu0
        %2526 = vmatprep.subr.bf16.mxu0 0
        %2527 = vmatpush1.bf16.msra.mxu0 %v1893
        %2528 = vmatprep.subr.bf16.mxu0 0
        %2529 = vmatpush1.bf16.msra.mxu0 %v1892
        %2530 = vmatprep.subr.bf16.mxu0 0
        %2531 = vmatpush1.bf16.msra.mxu0 %v1891
        %2532 = vmatprep.subr.bf16.mxu0 0
        %2533 = vmatpush1.bf16.msra.mxu0 %v1890
        %2534 = vmatprep.subr.bf16.mxu0 0
        %2535 = vmatpush1.bf16.msra.mxu0 %v1889
        %2536 = vmatprep.subr.bf16.mxu0 0
        %2537 = vmatpush1.bf16.msra.mxu0 %v1888
        %2538 = vmatprep.subr.bf16.mxu0 0
        %2539 = vmatpush1.bf16.msra.mxu0 %v1887
        %2540 = vmatprep.subr.bf16.mxu0 0
        %2541 = vmatpush1.bf16.msra.mxu0 %v1886
        %2542 = vmatprep.subr.bf16.mxu0 0
        %2543 = vmatpush2.bf16.msra.mxu0 %v1901
        %2544 = vmatprep.subr.bf16.mxu0 0
        %2545 = vmatpush2.bf16.msra.mxu0 %v1900
        %2546 = vmatprep.subr.bf16.mxu0 0
        %2547 = vmatpush2.bf16.msra.mxu0 %v1899
        %2548 = vmatprep.subr.bf16.mxu0 0
        %2549 = vmatpush2.bf16.msra.mxu0 %v1898
        %2550 = vmatprep.subr.bf16.mxu0 0
        %2551 = vmatpush2.bf16.msra.mxu0 %v1897
        %2552 = vmatprep.subr.bf16.mxu0 0
        %2553 = vmatpush2.bf16.msra.mxu0 %v1896
        %2554 = vmatprep.subr.bf16.mxu0 0
        %2555 = vmatpush2.bf16.msra.mxu0 %v1895
        %2556 = vmatprep.subr.bf16.mxu0 0
        %2557 = vmatpush2.bf16.msra.mxu0 %v1894
        %2558 = vmatprep.mubr.bf16.mxu0 %v522
        %2559 = vmatmul.mubr.bf16.gmra.mxu0 %v521
        %v2560 = vpop.f32.mrf.mxu0
        %v2561 = vadd.f32 %v2521, %v2560
        %v2562 = vpop.f32.mrf.mxu0
        %v2563 = vpop.f32.mrf.mxu0
        %v2564 = vpop.f32.mrf.mxu0
        %2565 = vdwg.mxu0
        %2566 = vmatprep.subr.bf16.mxu0 0
        %2567 = vmatpush1.bf16.msra.mxu0 %v1909
        %2568 = vmatprep.subr.bf16.mxu0 0
        %2569 = vmatpush1.bf16.msra.mxu0 %v1908
        %2570 = vmatprep.subr.bf16.mxu0 0
        %2571 = vmatpush1.bf16.msra.mxu0 %v1907
        %2572 = vmatprep.subr.bf16.mxu0 0
        %2573 = vmatpush1.bf16.msra.mxu0 %v1906
        %2574 = vmatprep.subr.bf16.mxu0 0
        %2575 = vmatpush1.bf16.msra.mxu0 %v1905
        %2576 = vmatprep.subr.bf16.mxu0 0
        %2577 = vmatpush1.bf16.msra.mxu0 %v1904
        %2578 = vmatprep.subr.bf16.mxu0 0
        %2579 = vmatpush1.bf16.msra.mxu0 %v1903
        %2580 = vmatprep.subr.bf16.mxu0 0
        %2581 = vmatpush1.bf16.msra.mxu0 %v1902
        %2582 = vmatprep.subr.bf16.mxu0 0
        %2583 = vmatpush2.bf16.msra.mxu0 %v1917
        %2584 = vmatprep.subr.bf16.mxu0 0
        %2585 = vmatpush2.bf16.msra.mxu0 %v1916
        %2586 = vmatprep.subr.bf16.mxu0 0
        %2587 = vmatpush2.bf16.msra.mxu0 %v1915
        %2588 = vmatprep.subr.bf16.mxu0 0
        %2589 = vmatpush2.bf16.msra.mxu0 %v1914
        %2590 = vmatprep.subr.bf16.mxu0 0
        %2591 = vmatpush2.bf16.msra.mxu0 %v1913
        %2592 = vmatprep.subr.bf16.mxu0 0
        %2593 = vmatpush2.bf16.msra.mxu0 %v1912
        %2594 = vmatprep.subr.bf16.mxu0 0
        %2595 = vmatpush2.bf16.msra.mxu0 %v1911
        %2596 = vmatprep.subr.bf16.mxu0 0
        %2597 = vmatpush2.bf16.msra.mxu0 %v1910
        %2598 = vmatprep.mubr.bf16.mxu0 %v524
        %2599 = vmatmul.mubr.bf16.gmra.mxu0 %v523
        %v2600 = vpop.f32.mrf.mxu0
        %v2601 = vadd.f32 %v2561, %v2600
        %v2602 = vpop.f32.mrf.mxu0
        %v2603 = vpop.f32.mrf.mxu0
        %v2604 = vpop.f32.mrf.mxu0
        %2605 = vdwg.mxu0
        %2606 = vmatprep.subr.bf16.mxu0 0
        %2607 = vmatpush1.bf16.msra.mxu0 %v1925
        %2608 = vmatprep.subr.bf16.mxu0 0
        %2609 = vmatpush1.bf16.msra.mxu0 %v1924
        %2610 = vmatprep.subr.bf16.mxu0 0
        %2611 = vmatpush1.bf16.msra.mxu0 %v1923
        %2612 = vmatprep.subr.bf16.mxu0 0
        %2613 = vmatpush1.bf16.msra.mxu0 %v1922
        %2614 = vmatprep.subr.bf16.mxu0 0
        %2615 = vmatpush1.bf16.msra.mxu0 %v1921
        %2616 = vmatprep.subr.bf16.mxu0 0
        %2617 = vmatpush1.bf16.msra.mxu0 %v1920
        %2618 = vmatprep.subr.bf16.mxu0 0
        %2619 = vmatpush1.bf16.msra.mxu0 %v1919
        %2620 = vmatprep.subr.bf16.mxu0 0
        %2621 = vmatpush1.bf16.msra.mxu0 %v1918
        %2622 = vmatprep.subr.bf16.mxu0 0
        %2623 = vmatpush2.bf16.msra.mxu0 0
        %2624 = vmatprep.subr.bf16.mxu0 0
        %2625 = vmatpush2.bf16.msra.mxu0 0
        %2626 = vmatprep.subr.bf16.mxu0 0
        %2627 = vmatpush2.bf16.msra.mxu0 0
        %2628 = vmatprep.subr.bf16.mxu0 0
        %2629 = vmatpush2.bf16.msra.mxu0 0
        %2630 = vmatprep.subr.bf16.mxu0 0
        %2631 = vmatpush2.bf16.msra.mxu0 0
        %2632 = vmatprep.subr.bf16.mxu0 0
        %2633 = vmatpush2.bf16.msra.mxu0 0
        %2634 = vmatprep.subr.bf16.mxu0 0
        %2635 = vmatpush2.bf16.msra.mxu0 0
        %2636 = vmatprep.subr.bf16.mxu0 0
        %2637 = vmatpush2.bf16.msra.mxu0 0
        %2638 = vmatprep.mubr.bf16.mxu0 0
        %2639 = vmatmul.mubr.bf16.gmra.mxu0 %v525
        %v2640 = vpop.f32.mrf.mxu0
        %v2641 = vadd.f32 %v2601, %v2640
        %v2642 = vpop.f32.mrf.mxu0
        %v2643 = vpop.f32.mrf.mxu0
        %v2644 = vpop.f32.mrf.mxu0
        %2645 = vdwg.mxu0
        %v2646 = vadd.f32 %v352, %v2641
        %2647 = vst [vmem:[#allocation2] sm:$0x3] %v2646
        %p2648 = scmp.eq.s32.totalorder %s24, 4
        // Predicated region
        $region69: #{model2_forward.7} parent=47 // pred_check
          %p2649 = pneg %p2648
        $region70: #{model2_forward.7} parent=47 // pred_check_branch
          %2651 = sbr.rel (%p2649) target = $region72
        $region71: #{model2_forward.7} parent=47 // pred_region
          %v2652 = vld [vmem:[#allocation2] sm:$0x3]
          %v2653 = vld [vmem:[#allocation6] sm:$0x1]
          %v2655 = vlaneseq
          %v2656 = vshrl.u32 %v2655, 7
          %v2657 = vsub.s32 0, %v2656
          %v2658 = vrot.slane %v2653, %v2657
          %v2660 = vadd.f32 %v2652, %v2658
          %v2661 = vld [vmem:[%s3] sm:$0xff]
          %v2662 = vld [vmem:[%s3 + $0x8] sm:$0xff]
          %v2663 = vld [vmem:[%s3 + $0x10] sm:$0xff]
          %v2664 = vld [vmem:[%s3 + $0x18] sm:$0xff]
          %v2665 = vld [vmem:[%s3 + $0x20] sm:$0xff]
          %v2666 = vld [vmem:[%s3 + $0x28] sm:$0xff]
          %v2667 = vld [vmem:[%s3 + $0x30] sm:$0xff]
          %v2668 = vld [vmem:[%s3 + $0x38] sm:$0xff]
          %v2669 = vld [vmem:[%s3 + $0x40] sm:$0xff]
          %v2670 = vld [vmem:[%s3 + $0x48] sm:$0xff]
          %v2671 = vld [vmem:[%s3 + $0x50] sm:$0xff]
          %v2672 = vld [vmem:[%s3 + $0x58] sm:$0xff]
          %v2673 = vld [vmem:[%s3 + $0x60] sm:$0xff]
          %v2674 = vld [vmem:[%s3 + $0x68] sm:$0xff]
          %v2675 = vld [vmem:[%s3 + $0x70] sm:$0xff]
          %v2676 = vld [vmem:[%s3 + $0x78] sm:$0xff]
          %v2677 = vld [vmem:[#allocation8] sm:$0x1]
          %v2679 = vlaneseq
          %v2680 = vshrl.u32 %v2679, 7
          %v2681 = vsub.s32 0, %v2680
          %v2682 = vrot.slane %v2677, %v2681
          %2684 = vmatprep.subr.mxu0 0.0
          %2685 = vmatpush1.msra.mxu0 %v2676
          %2686 = vmatprep.subr.mxu0 0.0
          %2687 = vmatpush1.msra.mxu0 %v2675
          %2688 = vmatprep.subr.mxu0 0.0
          %2689 = vmatpush1.msra.mxu0 %v2674
          %2690 = vmatprep.subr.mxu0 0.0
          %2691 = vmatpush1.msra.mxu0 %v2673
          %2692 = vmatprep.subr.mxu0 0.0
          %2693 = vmatpush1.msra.mxu0 %v2672
          %2694 = vmatprep.subr.mxu0 0.0
          %2695 = vmatpush1.msra.mxu0 %v2671
          %2696 = vmatprep.subr.mxu0 0.0
          %2697 = vmatpush1.msra.mxu0 %v2670
          %2698 = vmatprep.subr.mxu0 0.0
          %2699 = vmatpush1.msra.mxu0 %v2669
          %2700 = vmatprep.subr.mxu0 0.0
          %2701 = vmatpush1.msra.mxu0 %v2668
          %2702 = vmatprep.subr.mxu0 0.0
          %2703 = vmatpush1.msra.mxu0 %v2667
          %2704 = vmatprep.subr.mxu0 0.0
          %2705 = vmatpush1.msra.mxu0 %v2666
          %2706 = vmatprep.subr.mxu0 0.0
          %2707 = vmatpush1.msra.mxu0 %v2665
          %2708 = vmatprep.subr.mxu0 0.0
          %2709 = vmatpush1.msra.mxu0 %v2664
          %2710 = vmatprep.subr.mxu0 0.0
          %2711 = vmatpush1.msra.mxu0 %v2663
          %2712 = vmatprep.subr.mxu0 0.0
          %2713 = vmatpush1.msra.mxu0 %v2662
          %2714 = vmatprep.subr.mxu0 0.0
          %2715 = vmatpush1.msra.mxu0 %v2661
          %2716 = vmatprep.subr.mxu0 0.0
          %2717 = vmatpush2.msra.mxu0 0.0
          %2718 = vmatprep.subr.mxu0 0.0
          %2719 = vmatpush2.msra.mxu0 0.0
          %2720 = vmatprep.subr.mxu0 0.0
          %2721 = vmatpush2.msra.mxu0 0.0
          %2722 = vmatprep.subr.mxu0 0.0
          %2723 = vmatpush2.msra.mxu0 0.0
          %2724 = vmatprep.subr.mxu0 0.0
          %2725 = vmatpush2.msra.mxu0 0.0
          %2726 = vmatprep.subr.mxu0 0.0
          %2727 = vmatpush2.msra.mxu0 0.0
          %2728 = vmatprep.subr.mxu0 0.0
          %2729 = vmatpush2.msra.mxu0 0.0
          %2730 = vmatprep.subr.mxu0 0.0
          %2731 = vmatpush2.msra.mxu0 0.0
          %2732 = vmatprep.subr.mxu0 0.0
          %2733 = vmatpush2.msra.mxu0 0.0
          %2734 = vmatprep.subr.mxu0 0.0
          %2735 = vmatpush2.msra.mxu0 0.0
          %2736 = vmatprep.subr.mxu0 0.0
          %2737 = vmatpush2.msra.mxu0 0.0
          %2738 = vmatprep.subr.mxu0 0.0
          %2739 = vmatpush2.msra.mxu0 0.0
          %2740 = vmatprep.subr.mxu0 0.0
          %2741 = vmatpush2.msra.mxu0 0.0
          %2742 = vmatprep.subr.mxu0 0.0
          %2743 = vmatpush2.msra.mxu0 0.0
          %2744 = vmatprep.subr.mxu0 0.0
          %2745 = vmatpush2.msra.mxu0 0.0
          %2746 = vmatprep.subr.mxu0 0.0
          %2747 = vmatpush2.msra.mxu0 0.0
          %2748 = vmatprep.mubr.f32.mxu0 0.0
          %2749 = vmatmul.mubr.f32.gmra.mxu0 %v2660
          %v2750 = vpop.f32.mrf.mxu0
          %v2751 = vadd.f32 %v2682, %v2750
          %v2752 = vpop.f32.mrf.mxu0
          %2753 = vdwg.mxu0
          %v2754 = vmax.f32 %v2751, 0.0
          %v2755 = vld [vmem:[%s5] sm:$0xff]
          %v2756 = vld [vmem:[%s5 + $0x8] sm:$0xff]
          %v2757 = vld [vmem:[%s5 + $0x10] sm:$0xff]
          %v2758 = vld [vmem:[%s5 + $0x18] sm:$0xff]
          %v2759 = vld [vmem:[%s5 + $0x20] sm:$0xff]
          %v2760 = vld [vmem:[%s5 + $0x28] sm:$0xff]
          %v2761 = vld [vmem:[%s5 + $0x30] sm:$0xff]
          %v2762 = vld [vmem:[%s5 + $0x38] sm:$0xff]
          %v2763 = vld [vmem:[#allocation9] sm:$0x1]
          %v2765 = vlaneseq
          %v2766 = vshrl.u32 %v2765, 7
          %v2767 = vsub.s32 0, %v2766
          %v2768 = vrot.slane %v2763, %v2767
          %vm2770 = vcmask 523264
          %v2772 = vsel %vm2770, %v2754, 0
          %2774 = vmatprep.subr.mxu0 0.0
          %2775 = vmatpush1.msra.mxu0 0.0
          %2776 = vmatprep.subr.mxu0 0.0
          %2777 = vmatpush1.msra.mxu0 0.0
          %2778 = vmatprep.subr.mxu0 0.0
          %2779 = vmatpush1.msra.mxu0 0.0
          %2780 = vmatprep.subr.mxu0 0.0
          %2781 = vmatpush1.msra.mxu0 0.0
          %2782 = vmatprep.subr.mxu0 0.0
          %2783 = vmatpush1.msra.mxu0 0.0
          %2784 = vmatprep.subr.mxu0 0.0
          %2785 = vmatpush1.msra.mxu0 0.0
          %2786 = vmatprep.subr.mxu0 0.0
          %2787 = vmatpush1.msra.mxu0 0.0
          %2788 = vmatprep.subr.mxu0 0.0
          %2789 = vmatpush1.msra.mxu0 0.0
          %2790 = vmatprep.subr.mxu0 0.0
          %2791 = vmatpush1.msra.mxu0 %v2762
          %2792 = vmatprep.subr.mxu0 0.0
          %2793 = vmatpush1.msra.mxu0 %v2761
          %2794 = vmatprep.subr.mxu0 0.0
          %2795 = vmatpush1.msra.mxu0 %v2760
          %2796 = vmatprep.subr.mxu0 0.0
          %2797 = vmatpush1.msra.mxu0 %v2759
          %2798 = vmatprep.subr.mxu0 0.0
          %2799 = vmatpush1.msra.mxu0 %v2758
          %2800 = vmatprep.subr.mxu0 0.0
          %2801 = vmatpush1.msra.mxu0 %v2757
          %2802 = vmatprep.subr.mxu0 0.0
          %2803 = vmatpush1.msra.mxu0 %v2756
          %2804 = vmatprep.subr.mxu0 0.0
          %2805 = vmatpush1.msra.mxu0 %v2755
          %2806 = vmatprep.subr.mxu0 0.0
          %2807 = vmatpush2.msra.mxu0 0.0
          %2808 = vmatprep.subr.mxu0 0.0
          %2809 = vmatpush2.msra.mxu0 0.0
          %2810 = vmatprep.subr.mxu0 0.0
          %2811 = vmatpush2.msra.mxu0 0.0
          %2812 = vmatprep.subr.mxu0 0.0
          %2813 = vmatpush2.msra.mxu0 0.0
          %2814 = vmatprep.subr.mxu0 0.0
          %2815 = vmatpush2.msra.mxu0 0.0
          %2816 = vmatprep.subr.mxu0 0.0
          %2817 = vmatpush2.msra.mxu0 0.0
          %2818 = vmatprep.subr.mxu0 0.0
          %2819 = vmatpush2.msra.mxu0 0.0
          %2820 = vmatprep.subr.mxu0 0.0
          %2821 = vmatpush2.msra.mxu0 0.0
          %2822 = vmatprep.subr.mxu0 0.0
          %2823 = vmatpush2.msra.mxu0 0.0
          %2824 = vmatprep.subr.mxu0 0.0
          %2825 = vmatpush2.msra.mxu0 0.0
          %2826 = vmatprep.subr.mxu0 0.0
          %2827 = vmatpush2.msra.mxu0 0.0
          %2828 = vmatprep.subr.mxu0 0.0
          %2829 = vmatpush2.msra.mxu0 0.0
          %2830 = vmatprep.subr.mxu0 0.0
          %2831 = vmatpush2.msra.mxu0 0.0
          %2832 = vmatprep.subr.mxu0 0.0
          %2833 = vmatpush2.msra.mxu0 0.0
          %2834 = vmatprep.subr.mxu0 0.0
          %2835 = vmatpush2.msra.mxu0 0.0
          %2836 = vmatprep.subr.mxu0 0.0
          %2837 = vmatpush2.msra.mxu0 0.0
          %2838 = vmatprep.mubr.f32.mxu0 0.0
          %2839 = vmatmul.mubr.f32.gmra.mxu0 %v2772
          %v2840 = vpop.f32.mrf.mxu0
          %v2841 = vadd.f32 %v2768, %v2840
          %v2842 = vpop.f32.mrf.mxu0
          %2843 = vdwg.mxu0
          %vm2844 = vcmask 91136
          %v2845 = vsel %vm2844, %v2841, -inf
          %2846 = vmax.xlane.f32.xlu0 %v2845
          %v2847 = vpop.xlane.xlu0 %2846
          %v2848 = vsub.f32 %v2841, %v2847
          %v2849 = vmul.f32 %v2848, 1.442695
          %v2850 = vpow.pop %v2849
          %v2851 = vsel %vm2844, %v2850, 0.0
          %2852 = vadd.xlane.f32.xlu0 %v2851
          %v2853 = vpop.xlane.xlu0 %2852
          %v2854 = vlog2.pop %v2853
          %v2855 = vmul.f32 %v2854, 0.6931472
          %v2856 = vadd.f32 %v2847, %v2855
          %v2857 = vsub.f32 %v2841, %v2856
          %2858 = vst.msk [vmem:[#allocation11] sm:$0x3] %vm2844, %v2857
        $region72: #{model2_forward.7} parent=47 // pred_fallthru
          _
        // Predicated region
        $region73: #{model2_forward.7} parent=47 // pred_check
          %p2859 = pneg %p194
        $region74: #{model2_forward.7} parent=47 // pred_check_branch
          %2861 = sbr.rel (%p2859) target = $region76
        $region75: #{model2_forward.7} parent=47 // pred_region
          %s2863 = ssub.s32 32, 32
          %2864 = vsyncadd [#allocation5], %s2863
          %s2866 = sshll.u32 [#allocation11], 4
          %s2867 = int_to_ptr.vmem [resolvable:$true] %s2866
          %2869 = dma.vmem_to_hbm [thread:$0]  %s2867, 32, %s7, [#allocation5]
        $region76: #{model2_forward.7} parent=47 // pred_fallthru
          _
        // Predicated region
        $region77: #{model2_forward.7} parent=47 // pred_check
          %p2870 = pneg %p194
        $region78: #{model2_forward.7} parent=47 // pred_check_branch
          %2872 = sbr.rel (%p2870) target = $region80
        $region79: #{model2_forward.7} parent=47 // pred_region
          %2873 = dma.done [#allocation5], 32
        $region80: #{model2_forward.7} parent=47 // pred_fallthru
          _
      $region48: #{model2_forward.7} parent=5 // pred_fallthru
        _
      %p2874 = scmp.le.s32.totalorder 2, %s19
      // Predicated region
      $region81: #{model2_forward.7} parent=5 // pred_check
        %p2875 = pneg %p2874
      $region82: #{model2_forward.7} parent=5 // pred_check_branch
        %2877 = sbr.rel (%p2875) target = $region84
      $region83: #{model2_forward.7} parent=5 // pred_region
        %s2878 = ssub.s32 %s19, 2
      $region84: #{model2_forward.7} parent=5 // pred_fallthru
        _
    $region6: #{model2_forward.7} parent=1 // loop_footer
      %s23 = sadd.s32 1, %s19
    $region7: #{model2_forward.7} parent=1 // loop_footer_branch
      %18 = sbr.rel target = $region3
    $region8: #{model2_forward.7} parent=1 // loop_exit
      _
    %2879 = vsyncpa [#allocation4], 1
    %s2880 = scalar_lea.sflag [#allocation4], 1
    %2881 = vsyncpa %s2880, 1
    %2882 = vsyncpa [#allocation7], 1
    %2883 = vsyncpa [#allocation10], 1
    %2884 = vsyncpa [#allocation5], 1
    %s2885 = scalar_lea.sflag [#allocation5], 1
    %2886 = vsyncpa %s2885, 1

</llo_original>
